<compile_context>
chip_gen: v7x
topology: tpu7x:2x2x1
jax: 0.10.0
libtpu: 0.0.40
codegen_flags: <defaults>
</compile_context>

<pallas_src>
import jax
import jax.numpy as jnp
from jax.experimental import pallas as pl
from jax.experimental.pallas import tpu as pltpu

K = 7                          # Conv1d kernel size (all three convs)
STRIDE = 4                     # Conv1d stride (all three convs)
L3 = 27                        # conv3 output length required by the Linear
S = STRIDE * (K - 1) + K       # 31   conv1-output phase offsets needed downstream
T = STRIDE * (S - 1) + K       # 127  input taps needed per final position
SEG = STRIDE ** 3              # 64   composed stride of the three convs
NSEG = L3 + 1                  # 28   64-tap segments needed per sample (1792 taps)


def _round_up(v, m):
    return (v + m - 1) // m * m


# ----------------------------------------------------------------------------
# Fused kernel: whole Encoder_Blue forward for one batch tile, VMEM-resident.
# Column layout of every activation: col = m*Bt + n  (m = conv3 position,
# n = sample within the tile) -> all slices below are 128-lane aligned.
# ----------------------------------------------------------------------------
def _encoder_kernel(x_ref, w1lo_ref, w1hi_ref, b1_ref, w2_ref, b2_ref,
                    w3_ref, b3_ref, wl_ref, bl_ref, o_ref):
    bt = o_ref.shape[1]                     # samples per tile
    cols = L3 * bt

    xt = x_ref[0]                           # (64, 28*Bt): xt[r, p*Bt+n] = x_n[64p+r]
    lo = xt[:, :cols]                       # taps 64m + t,      t in [0, 64)
    hi = xt[:, bt:bt + cols]                # taps 64m + 64 + r, r in [0, 64) (r=63 zero-weighted)

    a1 = jnp.maximum(
        jnp.dot(w1lo_ref[...], lo, preferred_element_type=jnp.float32)
        + jnp.dot(w1hi_ref[...], hi, preferred_element_type=jnp.float32)
        + b1_ref[...], 0.0)                 # (128, 27*Bt)  phase-split conv1 out
    a2 = jnp.maximum(
        jnp.dot(w2_ref[...], a1, preferred_element_type=jnp.float32)
        + b2_ref[...], 0.0)                 # (56, 27*Bt)   phase-split conv2 out
    a3 = jnp.maximum(
        jnp.dot(w3_ref[...], a2, preferred_element_type=jnp.float32)
        + b3_ref[...], 0.0)                 # (16, 27*Bt)   conv3 out, relu'd

    # Final Linear: one small lane-dense matmul per conv3 position (27 per
    # TILE of Bt samples), accumulated in f32.
    acc = jnp.dot(wl_ref[0], a3[:, :bt], preferred_element_type=jnp.float32)
    for m in range(1, L3):
        acc = acc + jnp.dot(wl_ref[m], a3[:, m * bt:(m + 1) * bt],
                            preferred_element_type=jnp.float32)
    o_ref[...] = (acc + bl_ref[...]).astype(o_ref.dtype)   # (latent, Bt)


# ----------------------------------------------------------------------------
# PyTorch-style parameter init (reference layout).
# ----------------------------------------------------------------------------
def init_params(key, filters, latent_dim):
    def uni(k, shape, fan_in):
        bound = 1.0 / jnp.sqrt(fan_in)
        return jax.random.uniform(k, shape, jnp.float32, -bound, bound)

    ks = jax.random.split(key, 8)
    f = filters
    return {
        "w1": uni(ks[0], (f, 1, K), 1 * K),
        "b1": uni(ks[1], (f,), 1 * K),
        "w2": uni(ks[2], (2 * f, f, K), f * K),
        "b2": uni(ks[3], (2 * f,), f * K),
        "w3": uni(ks[4], (4 * f, 2 * f, K), 2 * f * K),
        "b3": uni(ks[5], (4 * f,), 2 * f * K),
        "wl": uni(ks[6], (latent_dim, 4 * f * L3), 4 * f * L3),
        "bl": uni(ks[7], (latent_dim,), 4 * f * L3),
    }


# ----------------------------------------------------------------------------
# One-time weight repacking (PyTorch layout -> kernel layout).
# ----------------------------------------------------------------------------
def prepare_params(params):
    f = params["w1"].shape[0]
    latent = params["wl"].shape[0]
    f32 = jnp.float32
    r1 = _round_up(S * f, 8)        # 124 -> 128
    r2 = _round_up(K * 2 * f, 8)    # 56
    r3 = _round_up(4 * f, 8)        # 16

    # conv1 folded: W1_big[s*f + c, STRIDE*s + k] = w1[c, 0, k]
    w1 = params["w1"].reshape(f, K).astype(f32)
    s_i = jnp.arange(S)[:, None, None]
    c_i = jnp.arange(f)[None, :, None]
    k_i = jnp.arange(K)[None, None, :]
    shp1 = (S, f, K)
    w1_big = jnp.zeros((r1, T), f32).at[
        jnp.broadcast_to(s_i * f + c_i, shp1),
        jnp.broadcast_to(STRIDE * s_i + k_i, shp1)].set(
            jnp.broadcast_to(w1[None], shp1))
    w1_lo = w1_big[:, :SEG]                                   # taps [0, 64)
    w1_hi = jnp.zeros((r1, SEG), f32).at[:, :T - SEG].set(w1_big[:, SEG:])
    b1 = jnp.zeros((r1, 1), f32).at[:S * f, 0].set(
        jnp.tile(params["b1"].astype(f32), S))

    # conv2 folded: W2_big[u*2f + c2, (STRIDE*u + k)*f + c1] = w2[c2, c1, k]
    w2 = params["w2"].astype(f32)
    u_i = jnp.arange(K)[:, None, None, None]
    c2_i = jnp.arange(2 * f)[None, :, None, None]
    c1_i = jnp.arange(f)[None, None, :, None]
    k2_i = jnp.arange(K)[None, None, None, :]
    shp2 = (K, 2 * f, f, K)
    w2_big = jnp.zeros((r2, r1), f32).at[
        jnp.broadcast_to(u_i * (2 * f) + c2_i, shp2),
        jnp.broadcast_to((STRIDE * u_i + k2_i) * f + c1_i, shp2)].set(
            jnp.broadcast_to(w2[None], shp2))
    b2 = jnp.zeros((r2, 1), f32).at[:K * 2 * f, 0].set(
        jnp.tile(params["b2"].astype(f32), K))

    # conv3 (dense): W3[c3, k*2f + c2] = w3[c3, c2, k]
    w3 = jnp.transpose(params["w3"].astype(f32), (0, 2, 1)).reshape(
        4 * f, K * 2 * f)
    w3p = jnp.zeros((r3, r2), f32).at[:4 * f, :K * 2 * f].set(w3)
    b3 = jnp.zeros((r3, 1), f32).at[:4 * f, 0].set(params["b3"].astype(f32))

    # Linear, split per conv3 position: WLs[m, d, c3] = wl[d, c3*27 + m]
    wl = params["wl"].astype(f32).reshape(latent, 4 * f, L3)
    wls = jnp.zeros((L3, latent, r3), f32).at[:, :, :4 * f].set(
        jnp.transpose(wl, (2, 0, 1)))
    bl = params["bl"].astype(f32)[:, None]                    # (latent, 1)

    return {"w1_lo": w1_lo, "w1_hi": w1_hi, "b1": b1,
            "w2": w2_big, "b2": b2, "w3": w3p, "b3": b3,
            "wl": wls, "bl": bl}


# ----------------------------------------------------------------------------
# Forward pass: cheap host-side transpose (no slab expansion) + one fused
# pallas_call over batch tiles.
# ----------------------------------------------------------------------------
def encoder_blue_forward(x, prep, *, batch_tile=128):
    """x: (N, 1, L) f32 -> (N, 1, latent_dim) f32, matching Encoder_Blue.forward."""
    n, c_in, length = x.shape
    assert c_in == 1
    l1 = (length - K) // STRIDE + 1
    l2 = (l1 - K) // STRIDE + 1
    l3 = (l2 - K) // STRIDE + 1
    assert l3 == L3, f"Encoder_Blue needs conv3 output length {L3}, got {l3}"

    latent = prep["bl"].shape[0]
    bt = batch_tile
    n_pad = _round_up(n, bt)
    ntiles = n_pad // bt

    xt = x[:, 0, :].astype(jnp.float32)
    need = NSEG * SEG                                # 1792 (index 1791 zero-weighted)
    if length >= need:
        xt = xt[:, :need]
    else:
        xt = jnp.pad(xt, ((0, 0), (0, need - length)))
    if n_pad != n:
        xt = jnp.pad(xt, ((0, n_pad - n), (0, 0)))
    # (ntiles, Bt, 28, 64) -> (ntiles, 64, 28, Bt) -> (ntiles, 64, 28*Bt)
    xtr = jnp.transpose(xt.reshape(ntiles, bt, NSEG, SEG), (0, 3, 2, 1))
    xtr = xtr.reshape(ntiles, SEG, NSEG * bt)

    def const2d(a):
        return pl.BlockSpec(a.shape, lambda i: (0, 0))

    def const3d(a):
        return pl.BlockSpec(a.shape, lambda i: (0, 0, 0))

    out = pl.pallas_call(
        _encoder_kernel,
        out_shape=jax.ShapeDtypeStruct((latent, n_pad), jnp.float32),
        grid=(ntiles,),
        in_specs=[
            pl.BlockSpec((1, SEG, NSEG * bt), lambda i: (i, 0, 0)),
            const2d(prep["w1_lo"]), const2d(prep["w1_hi"]), const2d(prep["b1"]),
            const2d(prep["w2"]), const2d(prep["b2"]),
            const2d(prep["w3"]), const2d(prep["b3"]),
            const3d(prep["wl"]), const2d(prep["bl"]),
        ],
        out_specs=pl.BlockSpec((latent, bt), lambda i: (0, i)),
        compiler_params=pltpu.CompilerParams(
            dimension_semantics=("parallel",),
            vmem_limit_bytes=32 * 1024 * 1024),
    )(xtr, prep["w1_lo"], prep["w1_hi"], prep["b1"], prep["w2"], prep["b2"],
      prep["w3"], prep["b3"], prep["wl"], prep["bl"])

    return jnp.transpose(out[:, :n]).reshape(n, 1, latent)


# ----------------------------------------------------------------------------
# Pure-JAX replica of the PyTorch module (test-only reference).
# ----------------------------------------------------------------------------
def _reference_forward(x, params):
    def conv1d(h, w, b):
        n, c_in, length = h.shape
        c_out, _, k = w.shape
        l_out = (length - k) // STRIDE + 1
        taps = jnp.arange(l_out)[:, None] * STRIDE + jnp.arange(k)[None, :]
        p = jnp.transpose(h[:, :, taps], (0, 2, 1, 3)).reshape(n * l_out, c_in * k)
        o = p @ w.reshape(c_out, c_in * k).T + b[None, :]
        return jnp.transpose(o.reshape(n, l_out, c_out), (0, 2, 1))

    h = jax.nn.relu(conv1d(x, params["w1"], params["b1"]))
    h = jax.nn.relu(conv1d(h, params["w2"], params["b2"]))
    h = conv1d(h, params["w3"], params["b3"])
    h = jax.nn.relu(h.reshape(x.shape[0], 1, -1))        # view((-1, 1, 4f*27))
    return h @ params["wl"].T + params["bl"][None, None, :]


if __name__ == "__main__":
    filters = 4
    latent_dim = 8
    batch = 2
    length = 1800          # conv lengths: 1800 -> 449 -> 111 -> 27 (Linear needs 27)

    key = jax.random.PRNGKey(0)
    k_x, k_p = jax.random.split(key)
    x = jax.random.normal(k_x, (batch, 1, length), dtype=jnp.float32)
    params = init_params(k_p, filters, latent_dim)
    prep = prepare_params(params)            # one-time weight repack (not hot path)

    fwd = jax.jit(encoder_blue_forward)
    out = jax.block_until_ready(fwd(x, prep))
    assert out.shape == (batch, 1, latent_dim), out.shape

    with jax.default_matmul_precision("highest"):
        ref = jax.block_until_ready(_reference_forward(x, params))
    err = float(jnp.max(jnp.abs(out - ref)))
    assert err < 5e-3, f"max abs error vs reference: {err}"

    print("KERNEL_OK")
</pallas_src>

<mosaic_0001>
module attributes {stable_mosaic.version = 11 : i64} {
  func.func @_encoder_kernel(%arg0: i32, %arg1: memref<1x64x3584xf32, #tpu.memory_space<vmem>>, %arg2: memref<128x64xf32, #tpu.memory_space<vmem>>, %arg3: memref<128x64xf32, #tpu.memory_space<vmem>>, %arg4: memref<128x1xf32, #tpu.memory_space<vmem>>, %arg5: memref<56x128xf32, #tpu.memory_space<vmem>>, %arg6: memref<56x1xf32, #tpu.memory_space<vmem>>, %arg7: memref<16x56xf32, #tpu.memory_space<vmem>>, %arg8: memref<16x1xf32, #tpu.memory_space<vmem>>, %arg9: memref<27x8x16xf32, #tpu.memory_space<vmem>>, %arg10: memref<8x1xf32, #tpu.memory_space<vmem>>, %arg11: memref<8x128xf32, #tpu.memory_space<vmem>>) attributes {dimension_semantics = [#tpu.dimension_semantics<parallel>], iteration_bounds = array<i64: 1>, scalar_prefetch = 0 : i64, scratch_operands = 0 : i64, tpu.core_type = #tpu.core_type<tc>, window_params = [{transform_indices = @transform_0, window_bounds = array<i64: 1, 64, 3584>}, {pipeline_mode = #tpu.pipeline_mode<synchronous>, transform_indices = @transform_1, window_bounds = array<i64: 128, 64>}, {pipeline_mode = #tpu.pipeline_mode<synchronous>, transform_indices = @transform_2, window_bounds = array<i64: 128, 64>}, {pipeline_mode = #tpu.pipeline_mode<synchronous>, transform_indices = @transform_3, window_bounds = array<i64: 128, 1>}, {pipeline_mode = #tpu.pipeline_mode<synchronous>, transform_indices = @transform_4, window_bounds = array<i64: 56, 128>}, {pipeline_mode = #tpu.pipeline_mode<synchronous>, transform_indices = @transform_5, window_bounds = array<i64: 56, 1>}, {pipeline_mode = #tpu.pipeline_mode<synchronous>, transform_indices = @transform_6, window_bounds = array<i64: 16, 56>}, {pipeline_mode = #tpu.pipeline_mode<synchronous>, transform_indices = @transform_7, window_bounds = array<i64: 16, 1>}, {pipeline_mode = #tpu.pipeline_mode<synchronous>, transform_indices = @transform_8, window_bounds = array<i64: 27, 8, 16>}, {pipeline_mode = #tpu.pipeline_mode<synchronous>, transform_indices = @transform_9, window_bounds = array<i64: 8, 1>}, {transform_indices = @transform_10, window_bounds = array<i64: 8, 128>}]} {
    %c0 = arith.constant 0 : index
    %c0_0 = arith.constant 0 : index
    %c0_1 = arith.constant 0 : index
    %0 = vector.load %arg1[%c0, %c0_0, %c0_1] : memref<1x64x3584xf32, #tpu.memory_space<vmem>>, vector<1x64x3584xf32>
    %1 = vector.shape_cast %0 : vector<1x64x3584xf32> to vector<64x3584xf32>
    %2 = vector.extract_strided_slice %1 {offsets = [0, 0], sizes = [64, 3456], strides = [1, 1]} : vector<64x3584xf32> to vector<64x3456xf32>
    %3 = vector.extract_strided_slice %1 {offsets = [0, 128], sizes = [64, 3456], strides = [1, 1]} : vector<64x3584xf32> to vector<64x3456xf32>
    %c0_2 = arith.constant 0 : index
    %c0_3 = arith.constant 0 : index
    %4 = vector.load %arg2[%c0_2, %c0_3] : memref<128x64xf32, #tpu.memory_space<vmem>>, vector<128x64xf32>
    %cst = arith.constant dense<0.000000e+00> : vector<128x3456xf32>
    %5 = tpu.matmul %4, %2, %cst {dimension_numbers = #tpu.dot_dimension_numbers<[1], [0], [0], [1], [0, 0, 1, 1], [], []>} : vector<128x64xf32>, vector<64x3456xf32>, vector<128x3456xf32> -> vector<128x3456xf32>
    %c0_4 = arith.constant 0 : index
    %c0_5 = arith.constant 0 : index
    %6 = vector.load %arg3[%c0_4, %c0_5] : memref<128x64xf32, #tpu.memory_space<vmem>>, vector<128x64xf32>
    %cst_6 = arith.constant dense<0.000000e+00> : vector<128x3456xf32>
    %7 = tpu.matmul %6, %3, %cst_6 {dimension_numbers = #tpu.dot_dimension_numbers<[1], [0], [0], [1], [0, 0, 1, 1], [], []>} : vector<128x64xf32>, vector<64x3456xf32>, vector<128x3456xf32> -> vector<128x3456xf32>
    %8 = arith.addf %5, %7 : vector<128x3456xf32>
    %c0_7 = arith.constant 0 : index
    %c0_8 = arith.constant 0 : index
    %9 = vector.load %arg4[%c0_7, %c0_8] : memref<128x1xf32, #tpu.memory_space<vmem>>, vector<128x1xf32>
    %10 = vector.broadcast %9 : vector<128x1xf32> to vector<128x3456xf32>
    %11 = arith.addf %8, %10 : vector<128x3456xf32>
    %cst_9 = arith.constant 0.000000e+00 : f32
    %12 = vector.broadcast %cst_9 : f32 to vector<128x3456xf32>
    %13 = arith.maximumf %11, %12 : vector<128x3456xf32>
    %c0_10 = arith.constant 0 : index
    %c0_11 = arith.constant 0 : index
    %14 = vector.load %arg5[%c0_10, %c0_11] : memref<56x128xf32, #tpu.memory_space<vmem>>, vector<56x128xf32>
    %cst_12 = arith.constant dense<0.000000e+00> : vector<56x3456xf32>
    %15 = tpu.matmul %14, %13, %cst_12 {dimension_numbers = #tpu.dot_dimension_numbers<[1], [0], [0], [1], [0, 0, 1, 1], [], []>} : vector<56x128xf32>, vector<128x3456xf32>, vector<56x3456xf32> -> vector<56x3456xf32>
    %c0_13 = arith.constant 0 : index
    %c0_14 = arith.constant 0 : index
    %16 = vector.load %arg6[%c0_13, %c0_14] : memref<56x1xf32, #tpu.memory_space<vmem>>, vector<56x1xf32>
    %17 = vector.broadcast %16 : vector<56x1xf32> to vector<56x3456xf32>
    %18 = arith.addf %15, %17 : vector<56x3456xf32>
    %cst_15 = arith.constant 0.000000e+00 : f32
    %19 = vector.broadcast %cst_15 : f32 to vector<56x3456xf32>
    %20 = arith.maximumf %18, %19 : vector<56x3456xf32>
    %c0_16 = arith.constant 0 : index
    %c0_17 = arith.constant 0 : index
    %21 = vector.load %arg7[%c0_16, %c0_17] : memref<16x56xf32, #tpu.memory_space<vmem>>, vector<16x56xf32>
    %cst_18 = arith.constant dense<0.000000e+00> : vector<16x3456xf32>
    %22 = tpu.matmul %21, %20, %cst_18 {dimension_numbers = #tpu.dot_dimension_numbers<[1], [0], [0], [1], [0, 0, 1, 1], [], []>} : vector<16x56xf32>, vector<56x3456xf32>, vector<16x3456xf32> -> vector<16x3456xf32>
    %c0_19 = arith.constant 0 : index
    %c0_20 = arith.constant 0 : index
    %23 = vector.load %arg8[%c0_19, %c0_20] : memref<16x1xf32, #tpu.memory_space<vmem>>, vector<16x1xf32>
    %24 = vector.broadcast %23 : vector<16x1xf32> to vector<16x3456xf32>
    %25 = arith.addf %22, %24 : vector<16x3456xf32>
    %cst_21 = arith.constant 0.000000e+00 : f32
    %26 = vector.broadcast %cst_21 : f32 to vector<16x3456xf32>
    %27 = arith.maximumf %25, %26 : vector<16x3456xf32>
    %c0_22 = arith.constant 0 : index
    %c0_23 = arith.constant 0 : index
    %c0_24 = arith.constant 0 : index
    %28 = vector.load %arg9[%c0_22, %c0_23, %c0_24] : memref<27x8x16xf32, #tpu.memory_space<vmem>>, vector<1x8x16xf32>
    %29 = vector.shape_cast %28 : vector<1x8x16xf32> to vector<8x16xf32>
    %30 = vector.extract_strided_slice %27 {offsets = [0, 0], sizes = [16, 128], strides = [1, 1]} : vector<16x3456xf32> to vector<16x128xf32>
    %cst_25 = arith.constant dense<0.000000e+00> : vector<8x128xf32>
    %31 = tpu.matmul %29, %30, %cst_25 {dimension_numbers = #tpu.dot_dimension_numbers<[1], [0], [0], [1], [0, 0, 1, 1], [], []>} : vector<8x16xf32>, vector<16x128xf32>, vector<8x128xf32> -> vector<8x128xf32>
    %c1 = arith.constant 1 : index
    %c0_26 = arith.constant 0 : index
    %c0_27 = arith.constant 0 : index
    %32 = vector.load %arg9[%c1, %c0_26, %c0_27] : memref<27x8x16xf32, #tpu.memory_space<vmem>>, vector<1x8x16xf32>
    %33 = vector.shape_cast %32 : vector<1x8x16xf32> to vector<8x16xf32>
    %34 = vector.extract_strided_slice %27 {offsets = [0, 128], sizes = [16, 128], strides = [1, 1]} : vector<16x3456xf32> to vector<16x128xf32>
    %cst_28 = arith.constant dense<0.000000e+00> : vector<8x128xf32>
    %35 = tpu.matmul %33, %34, %cst_28 {dimension_numbers = #tpu.dot_dimension_numbers<[1], [0], [0], [1], [0, 0, 1, 1], [], []>} : vector<8x16xf32>, vector<16x128xf32>, vector<8x128xf32> -> vector<8x128xf32>
    %36 = arith.addf %31, %35 : vector<8x128xf32>
    %c2 = arith.constant 2 : index
    %c0_29 = arith.constant 0 : index
    %c0_30 = arith.constant 0 : index
    %37 = vector.load %arg9[%c2, %c0_29, %c0_30] : memref<27x8x16xf32, #tpu.memory_space<vmem>>, vector<1x8x16xf32>
    %38 = vector.shape_cast %37 : vector<1x8x16xf32> to vector<8x16xf32>
    %39 = vector.extract_strided_slice %27 {offsets = [0, 256], sizes = [16, 128], strides = [1, 1]} : vector<16x3456xf32> to vector<16x128xf32>
    %cst_31 = arith.constant dense<0.000000e+00> : vector<8x128xf32>
    %40 = tpu.matmul %38, %39, %cst_31 {dimension_numbers = #tpu.dot_dimension_numbers<[1], [0], [0], [1], [0, 0, 1, 1], [], []>} : vector<8x16xf32>, vector<16x128xf32>, vector<8x128xf32> -> vector<8x128xf32>
    %41 = arith.addf %36, %40 : vector<8x128xf32>
    %c3 = arith.constant 3 : index
    %c0_32 = arith.constant 0 : index
    %c0_33 = arith.constant 0 : index
    %42 = vector.load %arg9[%c3, %c0_32, %c0_33] : memref<27x8x16xf32, #tpu.memory_space<vmem>>, vector<1x8x16xf32>
    %43 = vector.shape_cast %42 : vector<1x8x16xf32> to vector<8x16xf32>
    %44 = vector.extract_strided_slice %27 {offsets = [0, 384], sizes = [16, 128], strides = [1, 1]} : vector<16x3456xf32> to vector<16x128xf32>
    %cst_34 = arith.constant dense<0.000000e+00> : vector<8x128xf32>
    %45 = tpu.matmul %43, %44, %cst_34 {dimension_numbers = #tpu.dot_dimension_numbers<[1], [0], [0], [1], [0, 0, 1, 1], [], []>} : vector<8x16xf32>, vector<16x128xf32>, vector<8x128xf32> -> vector<8x128xf32>
    %46 = arith.addf %41, %45 : vector<8x128xf32>
    %c4 = arith.constant 4 : index
    %c0_35 = arith.constant 0 : index
    %c0_36 = arith.constant 0 : index
    %47 = vector.load %arg9[%c4, %c0_35, %c0_36] : memref<27x8x16xf32, #tpu.memory_space<vmem>>, vector<1x8x16xf32>
    %48 = vector.shape_cast %47 : vector<1x8x16xf32> to vector<8x16xf32>
    %49 = vector.extract_strided_slice %27 {offsets = [0, 512], sizes = [16, 128], strides = [1, 1]} : vector<16x3456xf32> to vector<16x128xf32>
    %cst_37 = arith.constant dense<0.000000e+00> : vector<8x128xf32>
    %50 = tpu.matmul %48, %49, %cst_37 {dimension_numbers = #tpu.dot_dimension_numbers<[1], [0], [0], [1], [0, 0, 1, 1], [], []>} : vector<8x16xf32>, vector<16x128xf32>, vector<8x128xf32> -> vector<8x128xf32>
    %51 = arith.addf %46, %50 : vector<8x128xf32>
    %c5 = arith.constant 5 : index
    %c0_38 = arith.constant 0 : index
    %c0_39 = arith.constant 0 : index
    %52 = vector.load %arg9[%c5, %c0_38, %c0_39] : memref<27x8x16xf32, #tpu.memory_space<vmem>>, vector<1x8x16xf32>
    %53 = vector.shape_cast %52 : vector<1x8x16xf32> to vector<8x16xf32>
    %54 = vector.extract_strided_slice %27 {offsets = [0, 640], sizes = [16, 128], strides = [1, 1]} : vector<16x3456xf32> to vector<16x128xf32>
    %cst_40 = arith.constant dense<0.000000e+00> : vector<8x128xf32>
    %55 = tpu.matmul %53, %54, %cst_40 {dimension_numbers = #tpu.dot_dimension_numbers<[1], [0], [0], [1], [0, 0, 1, 1], [], []>} : vector<8x16xf32>, vector<16x128xf32>, vector<8x128xf32> -> vector<8x128xf32>
    %56 = arith.addf %51, %55 : vector<8x128xf32>
    %c6 = arith.constant 6 : index
    %c0_41 = arith.constant 0 : index
    %c0_42 = arith.constant 0 : index
    %57 = vector.load %arg9[%c6, %c0_41, %c0_42] : memref<27x8x16xf32, #tpu.memory_space<vmem>>, vector<1x8x16xf32>
    %58 = vector.shape_cast %57 : vector<1x8x16xf32> to vector<8x16xf32>
    %59 = vector.extract_strided_slice %27 {offsets = [0, 768], sizes = [16, 128], strides = [1, 1]} : vector<16x3456xf32> to vector<16x128xf32>
    %cst_43 = arith.constant dense<0.000000e+00> : vector<8x128xf32>
    %60 = tpu.matmul %58, %59, %cst_43 {dimension_numbers = #tpu.dot_dimension_numbers<[1], [0], [0], [1], [0, 0, 1, 1], [], []>} : vector<8x16xf32>, vector<16x128xf32>, vector<8x128xf32> -> vector<8x128xf32>
    %61 = arith.addf %56, %60 : vector<8x128xf32>
    %c7 = arith.constant 7 : index
    %c0_44 = arith.constant 0 : index
    %c0_45 = arith.constant 0 : index
    %62 = vector.load %arg9[%c7, %c0_44, %c0_45] : memref<27x8x16xf32, #tpu.memory_space<vmem>>, vector<1x8x16xf32>
    %63 = vector.shape_cast %62 : vector<1x8x16xf32> to vector<8x16xf32>
    %64 = vector.extract_strided_slice %27 {offsets = [0, 896], sizes = [16, 128], strides = [1, 1]} : vector<16x3456xf32> to vector<16x128xf32>
    %cst_46 = arith.constant dense<0.000000e+00> : vector<8x128xf32>
    %65 = tpu.matmul %63, %64, %cst_46 {dimension_numbers = #tpu.dot_dimension_numbers<[1], [0], [0], [1], [0, 0, 1, 1], [], []>} : vector<8x16xf32>, vector<16x128xf32>, vector<8x128xf32> -> vector<8x128xf32>
    %66 = arith.addf %61, %65 : vector<8x128xf32>
    %c8 = arith.constant 8 : index
    %c0_47 = arith.constant 0 : index
    %c0_48 = arith.constant 0 : index
    %67 = vector.load %arg9[%c8, %c0_47, %c0_48] : memref<27x8x16xf32, #tpu.memory_space<vmem>>, vector<1x8x16xf32>
    %68 = vector.shape_cast %67 : vector<1x8x16xf32> to vector<8x16xf32>
    %69 = vector.extract_strided_slice %27 {offsets = [0, 1024], sizes = [16, 128], strides = [1, 1]} : vector<16x3456xf32> to vector<16x128xf32>
    %cst_49 = arith.constant dense<0.000000e+00> : vector<8x128xf32>
    %70 = tpu.matmul %68, %69, %cst_49 {dimension_numbers = #tpu.dot_dimension_numbers<[1], [0], [0], [1], [0, 0, 1, 1], [], []>} : vector<8x16xf32>, vector<16x128xf32>, vector<8x128xf32> -> vector<8x128xf32>
    %71 = arith.addf %66, %70 : vector<8x128xf32>
    %c9 = arith.constant 9 : index
    %c0_50 = arith.constant 0 : index
    %c0_51 = arith.constant 0 : index
    %72 = vector.load %arg9[%c9, %c0_50, %c0_51] : memref<27x8x16xf32, #tpu.memory_space<vmem>>, vector<1x8x16xf32>
    %73 = vector.shape_cast %72 : vector<1x8x16xf32> to vector<8x16xf32>
    %74 = vector.extract_strided_slice %27 {offsets = [0, 1152], sizes = [16, 128], strides = [1, 1]} : vector<16x3456xf32> to vector<16x128xf32>
    %cst_52 = arith.constant dense<0.000000e+00> : vector<8x128xf32>
    %75 = tpu.matmul %73, %74, %cst_52 {dimension_numbers = #tpu.dot_dimension_numbers<[1], [0], [0], [1], [0, 0, 1, 1], [], []>} : vector<8x16xf32>, vector<16x128xf32>, vector<8x128xf32> -> vector<8x128xf32>
    %76 = arith.addf %71, %75 : vector<8x128xf32>
    %c10 = arith.constant 10 : index
    %c0_53 = arith.constant 0 : index
    %c0_54 = arith.constant 0 : index
    %77 = vector.load %arg9[%c10, %c0_53, %c0_54] : memref<27x8x16xf32, #tpu.memory_space<vmem>>, vector<1x8x16xf32>
    %78 = vector.shape_cast %77 : vector<1x8x16xf32> to vector<8x16xf32>
    %79 = vector.extract_strided_slice %27 {offsets = [0, 1280], sizes = [16, 128], strides = [1, 1]} : vector<16x3456xf32> to vector<16x128xf32>
    %cst_55 = arith.constant dense<0.000000e+00> : vector<8x128xf32>
    %80 = tpu.matmul %78, %79, %cst_55 {dimension_numbers = #tpu.dot_dimension_numbers<[1], [0], [0], [1], [0, 0, 1, 1], [], []>} : vector<8x16xf32>, vector<16x128xf32>, vector<8x128xf32> -> vector<8x128xf32>
    %81 = arith.addf %76, %80 : vector<8x128xf32>
    %c11 = arith.constant 11 : index
    %c0_56 = arith.constant 0 : index
    %c0_57 = arith.constant 0 : index
    %82 = vector.load %arg9[%c11, %c0_56, %c0_57] : memref<27x8x16xf32, #tpu.memory_space<vmem>>, vector<1x8x16xf32>
    %83 = vector.shape_cast %82 : vector<1x8x16xf32> to vector<8x16xf32>
    %84 = vector.extract_strided_slice %27 {offsets = [0, 1408], sizes = [16, 128], strides = [1, 1]} : vector<16x3456xf32> to vector<16x128xf32>
    %cst_58 = arith.constant dense<0.000000e+00> : vector<8x128xf32>
    %85 = tpu.matmul %83, %84, %cst_58 {dimension_numbers = #tpu.dot_dimension_numbers<[1], [0], [0], [1], [0, 0, 1, 1], [], []>} : vector<8x16xf32>, vector<16x128xf32>, vector<8x128xf32> -> vector<8x128xf32>
    %86 = arith.addf %81, %85 : vector<8x128xf32>
    %c12 = arith.constant 12 : index
    %c0_59 = arith.constant 0 : index
    %c0_60 = arith.constant 0 : index
    %87 = vector.load %arg9[%c12, %c0_59, %c0_60] : memref<27x8x16xf32, #tpu.memory_space<vmem>>, vector<1x8x16xf32>
    %88 = vector.shape_cast %87 : vector<1x8x16xf32> to vector<8x16xf32>
    %89 = vector.extract_strided_slice %27 {offsets = [0, 1536], sizes = [16, 128], strides = [1, 1]} : vector<16x3456xf32> to vector<16x128xf32>
    %cst_61 = arith.constant dense<0.000000e+00> : vector<8x128xf32>
    %90 = tpu.matmul %88, %89, %cst_61 {dimension_numbers = #tpu.dot_dimension_numbers<[1], [0], [0], [1], [0, 0, 1, 1], [], []>} : vector<8x16xf32>, vector<16x128xf32>, vector<8x128xf32> -> vector<8x128xf32>
    %91 = arith.addf %86, %90 : vector<8x128xf32>
    %c13 = arith.constant 13 : index
    %c0_62 = arith.constant 0 : index
    %c0_63 = arith.constant 0 : index
    %92 = vector.load %arg9[%c13, %c0_62, %c0_63] : memref<27x8x16xf32, #tpu.memory_space<vmem>>, vector<1x8x16xf32>
    %93 = vector.shape_cast %92 : vector<1x8x16xf32> to vector<8x16xf32>
    %94 = vector.extract_strided_slice %27 {offsets = [0, 1664], sizes = [16, 128], strides = [1, 1]} : vector<16x3456xf32> to vector<16x128xf32>
    %cst_64 = arith.constant dense<0.000000e+00> : vector<8x128xf32>
    %95 = tpu.matmul %93, %94, %cst_64 {dimension_numbers = #tpu.dot_dimension_numbers<[1], [0], [0], [1], [0, 0, 1, 1], [], []>} : vector<8x16xf32>, vector<16x128xf32>, vector<8x128xf32> -> vector<8x128xf32>
    %96 = arith.addf %91, %95 : vector<8x128xf32>
    %c14 = arith.constant 14 : index
    %c0_65 = arith.constant 0 : index
    %c0_66 = arith.constant 0 : index
    %97 = vector.load %arg9[%c14, %c0_65, %c0_66] : memref<27x8x16xf32, #tpu.memory_space<vmem>>, vector<1x8x16xf32>
    %98 = vector.shape_cast %97 : vector<1x8x16xf32> to vector<8x16xf32>
    %99 = vector.extract_strided_slice %27 {offsets = [0, 1792], sizes = [16, 128], strides = [1, 1]} : vector<16x3456xf32> to vector<16x128xf32>
    %cst_67 = arith.constant dense<0.000000e+00> : vector<8x128xf32>
    %100 = tpu.matmul %98, %99, %cst_67 {dimension_numbers = #tpu.dot_dimension_numbers<[1], [0], [0], [1], [0, 0, 1, 1], [], []>} : vector<8x16xf32>, vector<16x128xf32>, vector<8x128xf32> -> vector<8x128xf32>
    %101 = arith.addf %96, %100 : vector<8x128xf32>
    %c15 = arith.constant 15 : index
    %c0_68 = arith.constant 0 : index
    %c0_69 = arith.constant 0 : index
    %102 = vector.load %arg9[%c15, %c0_68, %c0_69] : memref<27x8x16xf32, #tpu.memory_space<vmem>>, vector<1x8x16xf32>
    %103 = vector.shape_cast %102 : vector<1x8x16xf32> to vector<8x16xf32>
    %104 = vector.extract_strided_slice %27 {offsets = [0, 1920], sizes = [16, 128], strides = [1, 1]} : vector<16x3456xf32> to vector<16x128xf32>
    %cst_70 = arith.constant dense<0.000000e+00> : vector<8x128xf32>
    %105 = tpu.matmul %103, %104, %cst_70 {dimension_numbers = #tpu.dot_dimension_numbers<[1], [0], [0], [1], [0, 0, 1, 1], [], []>} : vector<8x16xf32>, vector<16x128xf32>, vector<8x128xf32> -> vector<8x128xf32>
    %106 = arith.addf %101, %105 : vector<8x128xf32>
    %c16 = arith.constant 16 : index
    %c0_71 = arith.constant 0 : index
    %c0_72 = arith.constant 0 : index
    %107 = vector.load %arg9[%c16, %c0_71, %c0_72] : memref<27x8x16xf32, #tpu.memory_space<vmem>>, vector<1x8x16xf32>
    %108 = vector.shape_cast %107 : vector<1x8x16xf32> to vector<8x16xf32>
    %109 = vector.extract_strided_slice %27 {offsets = [0, 2048], sizes = [16, 128], strides = [1, 1]} : vector<16x3456xf32> to vector<16x128xf32>
    %cst_73 = arith.constant dense<0.000000e+00> : vector<8x128xf32>
    %110 = tpu.matmul %108, %109, %cst_73 {dimension_numbers = #tpu.dot_dimension_numbers<[1], [0], [0], [1], [0, 0, 1, 1], [], []>} : vector<8x16xf32>, vector<16x128xf32>, vector<8x128xf32> -> vector<8x128xf32>
    %111 = arith.addf %106, %110 : vector<8x128xf32>
    %c17 = arith.constant 17 : index
    %c0_74 = arith.constant 0 : index
    %c0_75 = arith.constant 0 : index
    %112 = vector.load %arg9[%c17, %c0_74, %c0_75] : memref<27x8x16xf32, #tpu.memory_space<vmem>>, vector<1x8x16xf32>
    %113 = vector.shape_cast %112 : vector<1x8x16xf32> to vector<8x16xf32>
    %114 = vector.extract_strided_slice %27 {offsets = [0, 2176], sizes = [16, 128], strides = [1, 1]} : vector<16x3456xf32> to vector<16x128xf32>
    %cst_76 = arith.constant dense<0.000000e+00> : vector<8x128xf32>
    %115 = tpu.matmul %113, %114, %cst_76 {dimension_numbers = #tpu.dot_dimension_numbers<[1], [0], [0], [1], [0, 0, 1, 1], [], []>} : vector<8x16xf32>, vector<16x128xf32>, vector<8x128xf32> -> vector<8x128xf32>
    %116 = arith.addf %111, %115 : vector<8x128xf32>
    %c18 = arith.constant 18 : index
    %c0_77 = arith.constant 0 : index
    %c0_78 = arith.constant 0 : index
    %117 = vector.load %arg9[%c18, %c0_77, %c0_78] : memref<27x8x16xf32, #tpu.memory_space<vmem>>, vector<1x8x16xf32>
    %118 = vector.shape_cast %117 : vector<1x8x16xf32> to vector<8x16xf32>
    %119 = vector.extract_strided_slice %27 {offsets = [0, 2304], sizes = [16, 128], strides = [1, 1]} : vector<16x3456xf32> to vector<16x128xf32>
    %cst_79 = arith.constant dense<0.000000e+00> : vector<8x128xf32>
    %120 = tpu.matmul %118, %119, %cst_79 {dimension_numbers = #tpu.dot_dimension_numbers<[1], [0], [0], [1], [0, 0, 1, 1], [], []>} : vector<8x16xf32>, vector<16x128xf32>, vector<8x128xf32> -> vector<8x128xf32>
    %121 = arith.addf %116, %120 : vector<8x128xf32>
    %c19 = arith.constant 19 : index
    %c0_80 = arith.constant 0 : index
    %c0_81 = arith.constant 0 : index
    %122 = vector.load %arg9[%c19, %c0_80, %c0_81] : memref<27x8x16xf32, #tpu.memory_space<vmem>>, vector<1x8x16xf32>
    %123 = vector.shape_cast %122 : vector<1x8x16xf32> to vector<8x16xf32>
    %124 = vector.extract_strided_slice %27 {offsets = [0, 2432], sizes = [16, 128], strides = [1, 1]} : vector<16x3456xf32> to vector<16x128xf32>
    %cst_82 = arith.constant dense<0.000000e+00> : vector<8x128xf32>
    %125 = tpu.matmul %123, %124, %cst_82 {dimension_numbers = #tpu.dot_dimension_numbers<[1], [0], [0], [1], [0, 0, 1, 1], [], []>} : vector<8x16xf32>, vector<16x128xf32>, vector<8x128xf32> -> vector<8x128xf32>
    %126 = arith.addf %121, %125 : vector<8x128xf32>
    %c20 = arith.constant 20 : index
    %c0_83 = arith.constant 0 : index
    %c0_84 = arith.constant 0 : index
    %127 = vector.load %arg9[%c20, %c0_83, %c0_84] : memref<27x8x16xf32, #tpu.memory_space<vmem>>, vector<1x8x16xf32>
    %128 = vector.shape_cast %127 : vector<1x8x16xf32> to vector<8x16xf32>
    %129 = vector.extract_strided_slice %27 {offsets = [0, 2560], sizes = [16, 128], strides = [1, 1]} : vector<16x3456xf32> to vector<16x128xf32>
    %cst_85 = arith.constant dense<0.000000e+00> : vector<8x128xf32>
    %130 = tpu.matmul %128, %129, %cst_85 {dimension_numbers = #tpu.dot_dimension_numbers<[1], [0], [0], [1], [0, 0, 1, 1], [], []>} : vector<8x16xf32>, vector<16x128xf32>, vector<8x128xf32> -> vector<8x128xf32>
    %131 = arith.addf %126, %130 : vector<8x128xf32>
    %c21 = arith.constant 21 : index
    %c0_86 = arith.constant 0 : index
    %c0_87 = arith.constant 0 : index
    %132 = vector.load %arg9[%c21, %c0_86, %c0_87] : memref<27x8x16xf32, #tpu.memory_space<vmem>>, vector<1x8x16xf32>
    %133 = vector.shape_cast %132 : vector<1x8x16xf32> to vector<8x16xf32>
    %134 = vector.extract_strided_slice %27 {offsets = [0, 2688], sizes = [16, 128], strides = [1, 1]} : vector<16x3456xf32> to vector<16x128xf32>
    %cst_88 = arith.constant dense<0.000000e+00> : vector<8x128xf32>
    %135 = tpu.matmul %133, %134, %cst_88 {dimension_numbers = #tpu.dot_dimension_numbers<[1], [0], [0], [1], [0, 0, 1, 1], [], []>} : vector<8x16xf32>, vector<16x128xf32>, vector<8x128xf32> -> vector<8x128xf32>
    %136 = arith.addf %131, %135 : vector<8x128xf32>
    %c22 = arith.constant 22 : index
    %c0_89 = arith.constant 0 : index
    %c0_90 = arith.constant 0 : index
    %137 = vector.load %arg9[%c22, %c0_89, %c0_90] : memref<27x8x16xf32, #tpu.memory_space<vmem>>, vector<1x8x16xf32>
    %138 = vector.shape_cast %137 : vector<1x8x16xf32> to vector<8x16xf32>
    %139 = vector.extract_strided_slice %27 {offsets = [0, 2816], sizes = [16, 128], strides = [1, 1]} : vector<16x3456xf32> to vector<16x128xf32>
    %cst_91 = arith.constant dense<0.000000e+00> : vector<8x128xf32>
    %140 = tpu.matmul %138, %139, %cst_91 {dimension_numbers = #tpu.dot_dimension_numbers<[1], [0], [0], [1], [0, 0, 1, 1], [], []>} : vector<8x16xf32>, vector<16x128xf32>, vector<8x128xf32> -> vector<8x128xf32>
    %141 = arith.addf %136, %140 : vector<8x128xf32>
    %c23 = arith.constant 23 : index
    %c0_92 = arith.constant 0 : index
    %c0_93 = arith.constant 0 : index
    %142 = vector.load %arg9[%c23, %c0_92, %c0_93] : memref<27x8x16xf32, #tpu.memory_space<vmem>>, vector<1x8x16xf32>
    %143 = vector.shape_cast %142 : vector<1x8x16xf32> to vector<8x16xf32>
    %144 = vector.extract_strided_slice %27 {offsets = [0, 2944], sizes = [16, 128], strides = [1, 1]} : vector<16x3456xf32> to vector<16x128xf32>
    %cst_94 = arith.constant dense<0.000000e+00> : vector<8x128xf32>
    %145 = tpu.matmul %143, %144, %cst_94 {dimension_numbers = #tpu.dot_dimension_numbers<[1], [0], [0], [1], [0, 0, 1, 1], [], []>} : vector<8x16xf32>, vector<16x128xf32>, vector<8x128xf32> -> vector<8x128xf32>
    %146 = arith.addf %141, %145 : vector<8x128xf32>
    %c24 = arith.constant 24 : index
    %c0_95 = arith.constant 0 : index
    %c0_96 = arith.constant 0 : index
    %147 = vector.load %arg9[%c24, %c0_95, %c0_96] : memref<27x8x16xf32, #tpu.memory_space<vmem>>, vector<1x8x16xf32>
    %148 = vector.shape_cast %147 : vector<1x8x16xf32> to vector<8x16xf32>
    %149 = vector.extract_strided_slice %27 {offsets = [0, 3072], sizes = [16, 128], strides = [1, 1]} : vector<16x3456xf32> to vector<16x128xf32>
    %cst_97 = arith.constant dense<0.000000e+00> : vector<8x128xf32>
    %150 = tpu.matmul %148, %149, %cst_97 {dimension_numbers = #tpu.dot_dimension_numbers<[1], [0], [0], [1], [0, 0, 1, 1], [], []>} : vector<8x16xf32>, vector<16x128xf32>, vector<8x128xf32> -> vector<8x128xf32>
    %151 = arith.addf %146, %150 : vector<8x128xf32>
    %c25 = arith.constant 25 : index
    %c0_98 = arith.constant 0 : index
    %c0_99 = arith.constant 0 : index
    %152 = vector.load %arg9[%c25, %c0_98, %c0_99] : memref<27x8x16xf32, #tpu.memory_space<vmem>>, vector<1x8x16xf32>
    %153 = vector.shape_cast %152 : vector<1x8x16xf32> to vector<8x16xf32>
    %154 = vector.extract_strided_slice %27 {offsets = [0, 3200], sizes = [16, 128], strides = [1, 1]} : vector<16x3456xf32> to vector<16x128xf32>
    %cst_100 = arith.constant dense<0.000000e+00> : vector<8x128xf32>
    %155 = tpu.matmul %153, %154, %cst_100 {dimension_numbers = #tpu.dot_dimension_numbers<[1], [0], [0], [1], [0, 0, 1, 1], [], []>} : vector<8x16xf32>, vector<16x128xf32>, vector<8x128xf32> -> vector<8x128xf32>
    %156 = arith.addf %151, %155 : vector<8x128xf32>
    %c26 = arith.constant 26 : index
    %c0_101 = arith.constant 0 : index
    %c0_102 = arith.constant 0 : index
    %157 = vector.load %arg9[%c26, %c0_101, %c0_102] : memref<27x8x16xf32, #tpu.memory_space<vmem>>, vector<1x8x16xf32>
    %158 = vector.shape_cast %157 : vector<1x8x16xf32> to vector<8x16xf32>
    %159 = vector.extract_strided_slice %27 {offsets = [0, 3328], sizes = [16, 128], strides = [1, 1]} : vector<16x3456xf32> to vector<16x128xf32>
    %cst_103 = arith.constant dense<0.000000e+00> : vector<8x128xf32>
    %160 = tpu.matmul %158, %159, %cst_103 {dimension_numbers = #tpu.dot_dimension_numbers<[1], [0], [0], [1], [0, 0, 1, 1], [], []>} : vector<8x16xf32>, vector<16x128xf32>, vector<8x128xf32> -> vector<8x128xf32>
    %161 = arith.addf %156, %160 : vector<8x128xf32>
    %c0_104 = arith.constant 0 : index
    %c0_105 = arith.constant 0 : index
    %162 = vector.load %arg10[%c0_104, %c0_105] : memref<8x1xf32, #tpu.memory_space<vmem>>, vector<8x1xf32>
    %163 = vector.broadcast %162 : vector<8x1xf32> to vector<8x128xf32>
    %164 = arith.addf %161, %163 : vector<8x128xf32>
    %c0_106 = arith.constant 0 : index
    %c0_107 = arith.constant 0 : index
    %165 = vector.load %arg11[%c0_106, %c0_107] : memref<8x128xf32, #tpu.memory_space<vmem>>, vector<8x128xf32>
    tpu.vector_store %arg11[%c0_106, %c0_107], %164 {strides = array<i32>} : memref<8x128xf32, #tpu.memory_space<vmem>>, vector<8x128xf32>,
    return
  }
  func.func @transform_0(%arg0: i32) -> (i32, i32, i32) {
    %c0_i32 = arith.constant 0 : i32
    %c0_i32_0 = arith.constant 0 : i32
    %c0_i32_1 = arith.constant 0 : i32
    return %arg0, %c0_i32, %c0_i32_0 : i32, i32, i32
  }
  func.func @transform_1(%arg0: i32) -> (i32, i32) {
    %c0_i32 = arith.constant 0 : i32
    %c0_i32_0 = arith.constant 0 : i32
    %c0_i32_1 = arith.constant 0 : i32
    return %c0_i32, %c0_i32_0 : i32, i32
  }
  func.func @transform_2(%arg0: i32) -> (i32, i32) {
    %c0_i32 = arith.constant 0 : i32
    %c0_i32_0 = arith.constant 0 : i32
    %c0_i32_1 = arith.constant 0 : i32
    return %c0_i32, %c0_i32_0 : i32, i32
  }
  func.func @transform_3(%arg0: i32) -> (i32, i32) {
    %c0_i32 = arith.constant 0 : i32
    %c0_i32_0 = arith.constant 0 : i32
    %c0_i32_1 = arith.constant 0 : i32
    return %c0_i32, %c0_i32_0 : i32, i32
  }
  func.func @transform_4(%arg0: i32) -> (i32, i32) {
    %c0_i32 = arith.constant 0 : i32
    %c0_i32_0 = arith.constant 0 : i32
    %c0_i32_1 = arith.constant 0 : i32
    return %c0_i32, %c0_i32_0 : i32, i32
  }
  func.func @transform_5(%arg0: i32) -> (i32, i32) {
    %c0_i32 = arith.constant 0 : i32
    %c0_i32_0 = arith.constant 0 : i32
    %c0_i32_1 = arith.constant 0 : i32
    return %c0_i32, %c0_i32_0 : i32, i32
  }
  func.func @transform_6(%arg0: i32) -> (i32, i32) {
    %c0_i32 = arith.constant 0 : i32
    %c0_i32_0 = arith.constant 0 : i32
    %c0_i32_1 = arith.constant 0 : i32
    return %c0_i32, %c0_i32_0 : i32, i32
  }
  func.func @transform_7(%arg0: i32) -> (i32, i32) {
    %c0_i32 = arith.constant 0 : i32
    %c0_i32_0 = arith.constant 0 : i32
    %c0_i32_1 = arith.constant 0 : i32
    return %c0_i32, %c0_i32_0 : i32, i32
  }
  func.func @transform_8(%arg0: i32) -> (i32, i32, i32) {
    %c0_i32 = arith.constant 0 : i32
    %c0_i32_0 = arith.constant 0 : i32
    %c0_i32_1 = arith.constant 0 : i32
    %c0_i32_2 = arith.constant 0 : i32
    return %c0_i32, %c0_i32_0, %c0_i32_1 : i32, i32, i32
  }
  func.func @transform_9(%arg0: i32) -> (i32, i32) {
    %c0_i32 = arith.constant 0 : i32
    %c0_i32_0 = arith.constant 0 : i32
    %c0_i32_1 = arith.constant 0 : i32
    return %c0_i32, %c0_i32_0 : i32, i32
  }
  func.func @transform_10(%arg0: i32) -> (i32, i32) {
    %c0_i32 = arith.constant 0 : i32
    %c0_i32_0 = arith.constant 0 : i32
    return %c0_i32, %arg0 : i32, i32
  }
}

</mosaic_0001>

<llo_original>
// kernel: encoder_blue_forward.1
$region0: #{encoder_blue_forward.1}
  #allocation0 [shape = 'u32[]', space=smem, size = 0x4, offset = 0x4, fixed_abs, tag = 'smem constant byte address 0x4 - core index']
  #allocation1 [shape = 'u32[144,128]{1,0:T(1,128)}', space=vmem, size = 0x12000, scoped, tag = 'internal scratch']
  %s0 = inlined_call_operand.vmem [shape: f32[1,64,3584], index: 0, kind: input, shape index: {}]
  %s1 = inlined_call_operand.vmem [shape: f32[128,64], index: 1, kind: input, shape index: {}]
  %s2 = inlined_call_operand.vmem [shape: f32[128,64], index: 2, kind: input, shape index: {}]
  %s3 = inlined_call_operand.vmem [shape: f32[128,1], index: 3, kind: input, shape index: {}]
  %s4 = inlined_call_operand.vmem [shape: f32[56,128], index: 4, kind: input, shape index: {}]
  %s5 = inlined_call_operand.vmem [shape: f32[56,1], index: 5, kind: input, shape index: {}]
  %s6 = inlined_call_operand.vmem [shape: f32[16,56], index: 6, kind: input, shape index: {}]
  %s7 = inlined_call_operand.vmem [shape: f32[16,1], index: 7, kind: input, shape index: {}]
  %s8 = inlined_call_operand.vmem [shape: f32[27,8,16], index: 8, kind: input, shape index: {}]
  %s9 = inlined_call_operand.vmem [shape: f32[8,1], index: 9, kind: input, shape index: {}]
  %s10 = inlined_call_operand.vmem [shape: f32[8,128], index: 10, kind: output, shape index: {}]
  %s11 = sld [smem:[#allocation0]]
  $region50: #{encoder_blue_forward.1} parent=0
    _
  %s13 = ssub.s32 1, %s11
  %s14 = scalar_select 0, %s13, %s11
  // Predicated region
  $region2: #{encoder_blue_forward.1} parent=0 // pred_check
    _
  $region3: #{encoder_blue_forward.1} parent=0 // pred_check_branch
    %16 = sbr.rel (0) target = $region5
  $region4: #{encoder_blue_forward.1} parent=0 // pred_region
    _
  $region5: #{encoder_blue_forward.1} parent=0 // pred_fallthru
    _
  // Predicated region
  $region6: #{encoder_blue_forward.1} parent=0 // pred_check
    _
  $region7: #{encoder_blue_forward.1} parent=0 // pred_check_branch
    %18 = sbr.rel (0) target = $region9
  $region8: #{encoder_blue_forward.1} parent=0 // pred_region
    _
  $region9: #{encoder_blue_forward.1} parent=0 // pred_fallthru
    _
  // Predicated region
  $region10: #{encoder_blue_forward.1} parent=0 // pred_check
    _
  $region11: #{encoder_blue_forward.1} parent=0 // pred_check_branch
    %20 = sbr.rel (0) target = $region13
  $region12: #{encoder_blue_forward.1} parent=0 // pred_region
    _
  $region13: #{encoder_blue_forward.1} parent=0 // pred_fallthru
    _
  // Predicated region
  $region14: #{encoder_blue_forward.1} parent=0 // pred_check
    _
  $region15: #{encoder_blue_forward.1} parent=0 // pred_check_branch
    %22 = sbr.rel (0) target = $region17
  $region16: #{encoder_blue_forward.1} parent=0 // pred_region
    _
  $region17: #{encoder_blue_forward.1} parent=0 // pred_fallthru
    _
  // Predicated region
  $region18: #{encoder_blue_forward.1} parent=0 // pred_check
    _
  $region19: #{encoder_blue_forward.1} parent=0 // pred_check_branch
    %24 = sbr.rel (0) target = $region21
  $region20: #{encoder_blue_forward.1} parent=0 // pred_region
    _
  $region21: #{encoder_blue_forward.1} parent=0 // pred_fallthru
    _
  // Predicated region
  $region22: #{encoder_blue_forward.1} parent=0 // pred_check
    _
  $region23: #{encoder_blue_forward.1} parent=0 // pred_check_branch
    %26 = sbr.rel (0) target = $region25
  $region24: #{encoder_blue_forward.1} parent=0 // pred_region
    _
  $region25: #{encoder_blue_forward.1} parent=0 // pred_fallthru
    _
  // Predicated region
  $region26: #{encoder_blue_forward.1} parent=0 // pred_check
    _
  $region27: #{encoder_blue_forward.1} parent=0 // pred_check_branch
    %28 = sbr.rel (0) target = $region29
  $region28: #{encoder_blue_forward.1} parent=0 // pred_region
    _
  $region29: #{encoder_blue_forward.1} parent=0 // pred_fallthru
    _
  // Predicated region
  $region30: #{encoder_blue_forward.1} parent=0 // pred_check
    _
  $region31: #{encoder_blue_forward.1} parent=0 // pred_check_branch
    %30 = sbr.rel (0) target = $region33
  $region32: #{encoder_blue_forward.1} parent=0 // pred_region
    _
  $region33: #{encoder_blue_forward.1} parent=0 // pred_fallthru
    _
  // Predicated region
  $region34: #{encoder_blue_forward.1} parent=0 // pred_check
    _
  $region35: #{encoder_blue_forward.1} parent=0 // pred_check_branch
    %32 = sbr.rel (0) target = $region37
  $region36: #{encoder_blue_forward.1} parent=0 // pred_region
    _
  $region37: #{encoder_blue_forward.1} parent=0 // pred_fallthru
    _
  // Predicated region
  $region38: #{encoder_blue_forward.1} parent=0 // pred_check
    _
  $region39: #{encoder_blue_forward.1} parent=0 // pred_check_branch
    %34 = sbr.rel (0) target = $region41
  $region40: #{encoder_blue_forward.1} parent=0 // pred_region
    _
  $region41: #{encoder_blue_forward.1} parent=0 // pred_fallthru
    _
  %v35 = vld [vmem:[%s0] sm:$0xff]
  %v36 = vld [vmem:[%s0 + $0x8] sm:$0xff]
  %v37 = vld [vmem:[%s0 + $0x10] sm:$0xff]
  %v38 = vld [vmem:[%s0 + $0x18] sm:$0xff]
  %v39 = vld [vmem:[%s0 + $0x20] sm:$0xff]
  %v40 = vld [vmem:[%s0 + $0x28] sm:$0xff]
  %v41 = vld [vmem:[%s0 + $0x30] sm:$0xff]
  %v42 = vld [vmem:[%s0 + $0x38] sm:$0xff]
  %v43 = vld [vmem:[%s0 + $0x40] sm:$0xff]
  %v44 = vld [vmem:[%s0 + $0x48] sm:$0xff]
  %v45 = vld [vmem:[%s0 + $0x50] sm:$0xff]
  %v46 = vld [vmem:[%s0 + $0x58] sm:$0xff]
  %v47 = vld [vmem:[%s0 + $0x60] sm:$0xff]
  %v48 = vld [vmem:[%s0 + $0x68] sm:$0xff]
  %v49 = vld [vmem:[%s0 + $0x70] sm:$0xff]
  %v50 = vld [vmem:[%s0 + $0x78] sm:$0xff]
  %v51 = vld [vmem:[%s0 + $0x80] sm:$0xff]
  %v52 = vld [vmem:[%s0 + $0x88] sm:$0xff]
  %v53 = vld [vmem:[%s0 + $0x90] sm:$0xff]
  %v54 = vld [vmem:[%s0 + $0x98] sm:$0xff]
  %v55 = vld [vmem:[%s0 + $0xa0] sm:$0xff]
  %v56 = vld [vmem:[%s0 + $0xa8] sm:$0xff]
  %v57 = vld [vmem:[%s0 + $0xb0] sm:$0xff]
  %v58 = vld [vmem:[%s0 + $0xb8] sm:$0xff]
  %v59 = vld [vmem:[%s0 + $0xc0] sm:$0xff]
  %v60 = vld [vmem:[%s0 + $0xc8] sm:$0xff]
  %v61 = vld [vmem:[%s0 + $0xd0] sm:$0xff]
  %v62 = vld [vmem:[%s0 + $0xd8] sm:$0xff]
  %v63 = vld [vmem:[%s0 + $0xe0] sm:$0xff]
  %v64 = vld [vmem:[%s0 + $0xe8] sm:$0xff]
  %v65 = vld [vmem:[%s0 + $0xf0] sm:$0xff]
  %v66 = vld [vmem:[%s0 + $0xf8] sm:$0xff]
  %v67 = vld [vmem:[%s0 + $0x100] sm:$0xff]
  %v68 = vld [vmem:[%s0 + $0x108] sm:$0xff]
  %v69 = vld [vmem:[%s0 + $0x110] sm:$0xff]
  %v70 = vld [vmem:[%s0 + $0x118] sm:$0xff]
  %v71 = vld [vmem:[%s0 + $0x120] sm:$0xff]
  %v72 = vld [vmem:[%s0 + $0x128] sm:$0xff]
  %v73 = vld [vmem:[%s0 + $0x130] sm:$0xff]
  %v74 = vld [vmem:[%s0 + $0x138] sm:$0xff]
  %v75 = vld [vmem:[%s0 + $0x140] sm:$0xff]
  %v76 = vld [vmem:[%s0 + $0x148] sm:$0xff]
  %v77 = vld [vmem:[%s0 + $0x150] sm:$0xff]
  %v78 = vld [vmem:[%s0 + $0x158] sm:$0xff]
  %v79 = vld [vmem:[%s0 + $0x160] sm:$0xff]
  %v80 = vld [vmem:[%s0 + $0x168] sm:$0xff]
  %v81 = vld [vmem:[%s0 + $0x170] sm:$0xff]
  %v82 = vld [vmem:[%s0 + $0x178] sm:$0xff]
  %v83 = vld [vmem:[%s0 + $0x180] sm:$0xff]
  %v84 = vld [vmem:[%s0 + $0x188] sm:$0xff]
  %v85 = vld [vmem:[%s0 + $0x190] sm:$0xff]
  %v86 = vld [vmem:[%s0 + $0x198] sm:$0xff]
  %v87 = vld [vmem:[%s0 + $0x1a0] sm:$0xff]
  %v88 = vld [vmem:[%s0 + $0x1a8] sm:$0xff]
  %v89 = vld [vmem:[%s0 + $0x1b0] sm:$0xff]
  %v90 = vld [vmem:[%s0 + $0x1b8] sm:$0xff]
  %v91 = vld [vmem:[%s0 + $0x1c0] sm:$0xff]
  %v92 = vld [vmem:[%s0 + $0x1c8] sm:$0xff]
  %v93 = vld [vmem:[%s0 + $0x1d0] sm:$0xff]
  %v94 = vld [vmem:[%s0 + $0x1d8] sm:$0xff]
  %v95 = vld [vmem:[%s0 + $0x1e0] sm:$0xff]
  %v96 = vld [vmem:[%s0 + $0x1e8] sm:$0xff]
  %v97 = vld [vmem:[%s0 + $0x1f0] sm:$0xff]
  %v98 = vld [vmem:[%s0 + $0x1f8] sm:$0xff]
  %v99 = vld [vmem:[%s0 + $0x200] sm:$0xff]
  %v100 = vld [vmem:[%s0 + $0x208] sm:$0xff]
  %v101 = vld [vmem:[%s0 + $0x210] sm:$0xff]
  %v102 = vld [vmem:[%s0 + $0x218] sm:$0xff]
  %v103 = vld [vmem:[%s0 + $0x220] sm:$0xff]
  %v104 = vld [vmem:[%s0 + $0x228] sm:$0xff]
  %v105 = vld [vmem:[%s0 + $0x230] sm:$0xff]
  %v106 = vld [vmem:[%s0 + $0x238] sm:$0xff]
  %v107 = vld [vmem:[%s0 + $0x240] sm:$0xff]
  %v108 = vld [vmem:[%s0 + $0x248] sm:$0xff]
  %v109 = vld [vmem:[%s0 + $0x250] sm:$0xff]
  %v110 = vld [vmem:[%s0 + $0x258] sm:$0xff]
  %v111 = vld [vmem:[%s0 + $0x260] sm:$0xff]
  %v112 = vld [vmem:[%s0 + $0x268] sm:$0xff]
  %v113 = vld [vmem:[%s0 + $0x270] sm:$0xff]
  %v114 = vld [vmem:[%s0 + $0x278] sm:$0xff]
  %v115 = vld [vmem:[%s0 + $0x280] sm:$0xff]
  %v116 = vld [vmem:[%s0 + $0x288] sm:$0xff]
  %v117 = vld [vmem:[%s0 + $0x290] sm:$0xff]
  %v118 = vld [vmem:[%s0 + $0x298] sm:$0xff]
  %v119 = vld [vmem:[%s0 + $0x2a0] sm:$0xff]
  %v120 = vld [vmem:[%s0 + $0x2a8] sm:$0xff]
  %v121 = vld [vmem:[%s0 + $0x2b0] sm:$0xff]
  %v122 = vld [vmem:[%s0 + $0x2b8] sm:$0xff]
  %v123 = vld [vmem:[%s0 + $0x2c0] sm:$0xff]
  %v124 = vld [vmem:[%s0 + $0x2c8] sm:$0xff]
  %v125 = vld [vmem:[%s0 + $0x2d0] sm:$0xff]
  %v126 = vld [vmem:[%s0 + $0x2d8] sm:$0xff]
  %v127 = vld [vmem:[%s0 + $0x2e0] sm:$0xff]
  %v128 = vld [vmem:[%s0 + $0x2e8] sm:$0xff]
  %v129 = vld [vmem:[%s0 + $0x2f0] sm:$0xff]
  %v130 = vld [vmem:[%s0 + $0x2f8] sm:$0xff]
  %v131 = vld [vmem:[%s0 + $0x300] sm:$0xff]
  %v132 = vld [vmem:[%s0 + $0x308] sm:$0xff]
  %v133 = vld [vmem:[%s0 + $0x310] sm:$0xff]
  %v134 = vld [vmem:[%s0 + $0x318] sm:$0xff]
  %v135 = vld [vmem:[%s0 + $0x320] sm:$0xff]
  %v136 = vld [vmem:[%s0 + $0x328] sm:$0xff]
  %v137 = vld [vmem:[%s0 + $0x330] sm:$0xff]
  %v138 = vld [vmem:[%s0 + $0x338] sm:$0xff]
  %v139 = vld [vmem:[%s0 + $0x340] sm:$0xff]
  %v140 = vld [vmem:[%s0 + $0x348] sm:$0xff]
  %v141 = vld [vmem:[%s0 + $0x350] sm:$0xff]
  %v142 = vld [vmem:[%s0 + $0x358] sm:$0xff]
  %v143 = vld [vmem:[%s0 + $0x360] sm:$0xff]
  %v144 = vld [vmem:[%s0 + $0x368] sm:$0xff]
  %v145 = vld [vmem:[%s0 + $0x370] sm:$0xff]
  %v146 = vld [vmem:[%s0 + $0x378] sm:$0xff]
  %v147 = vld [vmem:[%s0 + $0x380] sm:$0xff]
  %v148 = vld [vmem:[%s0 + $0x388] sm:$0xff]
  %v149 = vld [vmem:[%s0 + $0x390] sm:$0xff]
  %v150 = vld [vmem:[%s0 + $0x398] sm:$0xff]
  %v151 = vld [vmem:[%s0 + $0x3a0] sm:$0xff]
  %v152 = vld [vmem:[%s0 + $0x3a8] sm:$0xff]
  %v153 = vld [vmem:[%s0 + $0x3b0] sm:$0xff]
  %v154 = vld [vmem:[%s0 + $0x3b8] sm:$0xff]
  %v155 = vld [vmem:[%s0 + $0x3c0] sm:$0xff]
  %v156 = vld [vmem:[%s0 + $0x3c8] sm:$0xff]
  %v157 = vld [vmem:[%s0 + $0x3d0] sm:$0xff]
  %v158 = vld [vmem:[%s0 + $0x3d8] sm:$0xff]
  %v159 = vld [vmem:[%s0 + $0x3e0] sm:$0xff]
  %v160 = vld [vmem:[%s0 + $0x3e8] sm:$0xff]
  %v161 = vld [vmem:[%s0 + $0x3f0] sm:$0xff]
  %v162 = vld [vmem:[%s0 + $0x3f8] sm:$0xff]
  %v163 = vld [vmem:[%s0 + $0x400] sm:$0xff]
  %v164 = vld [vmem:[%s0 + $0x408] sm:$0xff]
  %v165 = vld [vmem:[%s0 + $0x410] sm:$0xff]
  %v166 = vld [vmem:[%s0 + $0x418] sm:$0xff]
  %v167 = vld [vmem:[%s0 + $0x420] sm:$0xff]
  %v168 = vld [vmem:[%s0 + $0x428] sm:$0xff]
  %v169 = vld [vmem:[%s0 + $0x430] sm:$0xff]
  %v170 = vld [vmem:[%s0 + $0x438] sm:$0xff]
  %v171 = vld [vmem:[%s0 + $0x440] sm:$0xff]
  %v172 = vld [vmem:[%s0 + $0x448] sm:$0xff]
  %v173 = vld [vmem:[%s0 + $0x450] sm:$0xff]
  %v174 = vld [vmem:[%s0 + $0x458] sm:$0xff]
  %v175 = vld [vmem:[%s0 + $0x460] sm:$0xff]
  %v176 = vld [vmem:[%s0 + $0x468] sm:$0xff]
  %v177 = vld [vmem:[%s0 + $0x470] sm:$0xff]
  %v178 = vld [vmem:[%s0 + $0x478] sm:$0xff]
  %v179 = vld [vmem:[%s0 + $0x480] sm:$0xff]
  %v180 = vld [vmem:[%s0 + $0x488] sm:$0xff]
  %v181 = vld [vmem:[%s0 + $0x490] sm:$0xff]
  %v182 = vld [vmem:[%s0 + $0x498] sm:$0xff]
  %v183 = vld [vmem:[%s0 + $0x4a0] sm:$0xff]
  %v184 = vld [vmem:[%s0 + $0x4a8] sm:$0xff]
  %v185 = vld [vmem:[%s0 + $0x4b0] sm:$0xff]
  %v186 = vld [vmem:[%s0 + $0x4b8] sm:$0xff]
  %v187 = vld [vmem:[%s0 + $0x4c0] sm:$0xff]
  %v188 = vld [vmem:[%s0 + $0x4c8] sm:$0xff]
  %v189 = vld [vmem:[%s0 + $0x4d0] sm:$0xff]
  %v190 = vld [vmem:[%s0 + $0x4d8] sm:$0xff]
  %v191 = vld [vmem:[%s0 + $0x4e0] sm:$0xff]
  %v192 = vld [vmem:[%s0 + $0x4e8] sm:$0xff]
  %v193 = vld [vmem:[%s0 + $0x4f0] sm:$0xff]
  %v194 = vld [vmem:[%s0 + $0x4f8] sm:$0xff]
  %v195 = vld [vmem:[%s0 + $0x500] sm:$0xff]
  %v196 = vld [vmem:[%s0 + $0x508] sm:$0xff]
  %v197 = vld [vmem:[%s0 + $0x510] sm:$0xff]
  %v198 = vld [vmem:[%s0 + $0x518] sm:$0xff]
  %v199 = vld [vmem:[%s0 + $0x520] sm:$0xff]
  %v200 = vld [vmem:[%s0 + $0x528] sm:$0xff]
  %v201 = vld [vmem:[%s0 + $0x530] sm:$0xff]
  %v202 = vld [vmem:[%s0 + $0x538] sm:$0xff]
  %v203 = vld [vmem:[%s0 + $0x540] sm:$0xff]
  %v204 = vld [vmem:[%s0 + $0x548] sm:$0xff]
  %v205 = vld [vmem:[%s0 + $0x550] sm:$0xff]
  %v206 = vld [vmem:[%s0 + $0x558] sm:$0xff]
  %v207 = vld [vmem:[%s0 + $0x560] sm:$0xff]
  %v208 = vld [vmem:[%s0 + $0x568] sm:$0xff]
  %v209 = vld [vmem:[%s0 + $0x570] sm:$0xff]
  %v210 = vld [vmem:[%s0 + $0x578] sm:$0xff]
  %v211 = vld [vmem:[%s0 + $0x580] sm:$0xff]
  %v212 = vld [vmem:[%s0 + $0x588] sm:$0xff]
  %v213 = vld [vmem:[%s0 + $0x590] sm:$0xff]
  %v214 = vld [vmem:[%s0 + $0x598] sm:$0xff]
  %v215 = vld [vmem:[%s0 + $0x5a0] sm:$0xff]
  %v216 = vld [vmem:[%s0 + $0x5a8] sm:$0xff]
  %v217 = vld [vmem:[%s0 + $0x5b0] sm:$0xff]
  %v218 = vld [vmem:[%s0 + $0x5b8] sm:$0xff]
  %v219 = vld [vmem:[%s0 + $0x5c0] sm:$0xff]
  %v220 = vld [vmem:[%s0 + $0x5c8] sm:$0xff]
  %v221 = vld [vmem:[%s0 + $0x5d0] sm:$0xff]
  %v222 = vld [vmem:[%s0 + $0x5d8] sm:$0xff]
  %v223 = vld [vmem:[%s0 + $0x5e0] sm:$0xff]
  %v224 = vld [vmem:[%s0 + $0x5e8] sm:$0xff]
  %v225 = vld [vmem:[%s0 + $0x5f0] sm:$0xff]
  %v226 = vld [vmem:[%s0 + $0x5f8] sm:$0xff]
  %v227 = vld [vmem:[%s0 + $0x600] sm:$0xff]
  %v228 = vld [vmem:[%s0 + $0x608] sm:$0xff]
  %v229 = vld [vmem:[%s0 + $0x610] sm:$0xff]
  %v230 = vld [vmem:[%s0 + $0x618] sm:$0xff]
  %v231 = vld [vmem:[%s0 + $0x620] sm:$0xff]
  %v232 = vld [vmem:[%s0 + $0x628] sm:$0xff]
  %v233 = vld [vmem:[%s0 + $0x630] sm:$0xff]
  %v234 = vld [vmem:[%s0 + $0x638] sm:$0xff]
  %v235 = vld [vmem:[%s0 + $0x640] sm:$0xff]
  %v236 = vld [vmem:[%s0 + $0x648] sm:$0xff]
  %v237 = vld [vmem:[%s0 + $0x650] sm:$0xff]
  %v238 = vld [vmem:[%s0 + $0x658] sm:$0xff]
  %v239 = vld [vmem:[%s0 + $0x660] sm:$0xff]
  %v240 = vld [vmem:[%s0 + $0x668] sm:$0xff]
  %v241 = vld [vmem:[%s0 + $0x670] sm:$0xff]
  %v242 = vld [vmem:[%s0 + $0x678] sm:$0xff]
  %v243 = vld [vmem:[%s0 + $0x680] sm:$0xff]
  %v244 = vld [vmem:[%s0 + $0x688] sm:$0xff]
  %v245 = vld [vmem:[%s0 + $0x690] sm:$0xff]
  %v246 = vld [vmem:[%s0 + $0x698] sm:$0xff]
  %v247 = vld [vmem:[%s0 + $0x6a0] sm:$0xff]
  %v248 = vld [vmem:[%s0 + $0x6a8] sm:$0xff]
  %v249 = vld [vmem:[%s0 + $0x6b0] sm:$0xff]
  %v250 = vld [vmem:[%s0 + $0x6b8] sm:$0xff]
  %v251 = vld [vmem:[%s0 + $0x6c0] sm:$0xff]
  %v252 = vld [vmem:[%s0 + $0x6c8] sm:$0xff]
  %v253 = vld [vmem:[%s0 + $0x6d0] sm:$0xff]
  %v254 = vld [vmem:[%s0 + $0x6d8] sm:$0xff]
  %v255 = vld [vmem:[%s0 + $0x6e0] sm:$0xff]
  %v256 = vld [vmem:[%s0 + $0x6e8] sm:$0xff]
  %v257 = vld [vmem:[%s0 + $0x6f0] sm:$0xff]
  %v258 = vld [vmem:[%s0 + $0x6f8] sm:$0xff]
  %v259 = vld [vmem:[%s1] sm:$0xff]
  %v260 = vld [vmem:[%s1 + $0x8] sm:$0xff]
  %v261 = vld [vmem:[%s1 + $0x10] sm:$0xff]
  %v262 = vld [vmem:[%s1 + $0x18] sm:$0xff]
  %v263 = vld [vmem:[%s1 + $0x20] sm:$0xff]
  %v264 = vld [vmem:[%s1 + $0x28] sm:$0xff]
  %v265 = vld [vmem:[%s1 + $0x30] sm:$0xff]
  %v266 = vld [vmem:[%s1 + $0x38] sm:$0xff]
  %v267 = vld [vmem:[%s1 + $0x40] sm:$0xff]
  %v268 = vld [vmem:[%s1 + $0x48] sm:$0xff]
  %v269 = vld [vmem:[%s1 + $0x50] sm:$0xff]
  %v270 = vld [vmem:[%s1 + $0x58] sm:$0xff]
  %v271 = vld [vmem:[%s1 + $0x60] sm:$0xff]
  %v272 = vld [vmem:[%s1 + $0x68] sm:$0xff]
  %v273 = vld [vmem:[%s1 + $0x70] sm:$0xff]
  %v274 = vld [vmem:[%s1 + $0x78] sm:$0xff]
  %v275 = vld [vmem:[%s2] sm:$0xff]
  %v276 = vld [vmem:[%s2 + $0x8] sm:$0xff]
  %v277 = vld [vmem:[%s2 + $0x10] sm:$0xff]
  %v278 = vld [vmem:[%s2 + $0x18] sm:$0xff]
  %v279 = vld [vmem:[%s2 + $0x20] sm:$0xff]
  %v280 = vld [vmem:[%s2 + $0x28] sm:$0xff]
  %v281 = vld [vmem:[%s2 + $0x30] sm:$0xff]
  %v282 = vld [vmem:[%s2 + $0x38] sm:$0xff]
  %v283 = vld [vmem:[%s2 + $0x40] sm:$0xff]
  %v284 = vld [vmem:[%s2 + $0x48] sm:$0xff]
  %v285 = vld [vmem:[%s2 + $0x50] sm:$0xff]
  %v286 = vld [vmem:[%s2 + $0x58] sm:$0xff]
  %v287 = vld [vmem:[%s2 + $0x60] sm:$0xff]
  %v288 = vld [vmem:[%s2 + $0x68] sm:$0xff]
  %v289 = vld [vmem:[%s2 + $0x70] sm:$0xff]
  %v290 = vld [vmem:[%s2 + $0x78] sm:$0xff]
  %vm291 = vcmask 523264
  %v293 = vsel %vm291, %v275, 0
  %v296 = vsel %vm291, %v276, 0
  %v299 = vsel %vm291, %v277, 0
  %v302 = vsel %vm291, %v278, 0
  %v305 = vsel %vm291, %v279, 0
  %v308 = vsel %vm291, %v280, 0
  %v311 = vsel %vm291, %v281, 0
  %v314 = vsel %vm291, %v282, 0
  %v317 = vsel %vm291, %v283, 0
  %v320 = vsel %vm291, %v284, 0
  %v323 = vsel %vm291, %v285, 0
  %v326 = vsel %vm291, %v286, 0
  %v329 = vsel %vm291, %v287, 0
  %v332 = vsel %vm291, %v288, 0
  %v335 = vsel %vm291, %v289, 0
  %v338 = vsel %vm291, %v290, 0
  %340 = vmatprep.subr.mxu0 %v37
  %341 = vmatpush1.msra.mxu0 %v36
  %342 = vmatprep.subr.mxu0 %v65
  %343 = vmatpush1.msra.mxu0 %v64
  %344 = vmatprep.subr.mxu0 %v93
  %345 = vmatpush1.msra.mxu0 %v92
  %346 = vmatprep.subr.mxu0 %v121
  %347 = vmatpush1.msra.mxu0 %v120
  %348 = vmatprep.subr.mxu0 %v149
  %349 = vmatpush1.msra.mxu0 %v148
  %350 = vmatprep.subr.mxu0 %v177
  %351 = vmatpush1.msra.mxu0 %v176
  %352 = vmatprep.subr.mxu0 %v205
  %353 = vmatpush1.msra.mxu0 %v204
  %354 = vmatprep.subr.mxu0 %v233
  %355 = vmatpush1.msra.mxu0 %v232
  %356 = vmatprep.subr.mxu0 0.0
  %357 = vmatpush1.msra.mxu0 0.0
  %358 = vmatprep.subr.mxu0 0.0
  %359 = vmatpush1.msra.mxu0 0.0
  %360 = vmatprep.subr.mxu0 0.0
  %361 = vmatpush1.msra.mxu0 0.0
  %362 = vmatprep.subr.mxu0 0.0
  %363 = vmatpush1.msra.mxu0 0.0
  %364 = vmatprep.subr.mxu0 0.0
  %365 = vmatpush1.msra.mxu0 0.0
  %366 = vmatprep.subr.mxu0 0.0
  %367 = vmatpush1.msra.mxu0 0.0
  %368 = vmatprep.subr.mxu0 0.0
  %369 = vmatpush1.msra.mxu0 0.0
  %370 = vmatprep.subr.mxu0 0.0
  %371 = vmatpush1.msra.mxu0 0.0
  %372 = vmatprep.subr.mxu0 0.0
  %373 = vmatpush1.msra.mxu0 0.0
  %374 = vmatprep.subr.mxu0 0.0
  %375 = vmatpush1.msra.mxu0 0.0
  %376 = vmatprep.subr.mxu0 0.0
  %377 = vmatpush1.msra.mxu0 0.0
  %378 = vmatprep.subr.mxu0 0.0
  %379 = vmatpush1.msra.mxu0 0.0
  %380 = vmatprep.subr.mxu0 0.0
  %381 = vmatpush1.msra.mxu0 0.0
  %382 = vmatprep.subr.mxu0 0.0
  %383 = vmatpush1.msra.mxu0 0.0
  %384 = vmatprep.subr.mxu0 0.0
  %385 = vmatpush1.msra.mxu0 0.0
  %386 = vmatprep.subr.mxu0 0.0
  %387 = vmatpush1.msra.mxu0 0.0
  %388 = vmatprep.subr.mxu0 0.0
  %389 = vmatpush1.msra.mxu0 0.0
  %390 = vmatprep.subr.mxu0 0.0
  %391 = vmatpush1.msra.mxu0 0.0
  %392 = vmatprep.subr.mxu0 0.0
  %393 = vmatpush1.msra.mxu0 0.0
  %394 = vmatprep.subr.mxu0 0.0
  %395 = vmatpush1.msra.mxu0 0.0
  %396 = vmatprep.subr.mxu0 0.0
  %397 = vmatpush1.msra.mxu0 0.0
  %398 = vmatprep.subr.mxu0 0.0
  %399 = vmatpush1.msra.mxu0 0.0
  %400 = vmatprep.subr.mxu0 0.0
  %401 = vmatpush1.msra.mxu0 0.0
  %402 = vmatprep.subr.mxu0 0.0
  %403 = vmatpush1.msra.mxu0 0.0
  %404 = vmatprep.mubr.f32.mxu0 0.0
  %405 = vmatmul.mubr.f32.gmra.mrb[0].mxu0 %v293
  %v406 = vpop.f32.mrb[0].mxu0
  %v407 = vadd.f32 0.0, %v406
  %v408 = vpop.f32.mrb[0].mxu0
  %v409 = vadd.f32 0.0, %v408
  %410 = vmatprep.mubr.f32.mxu0 0.0
  %411 = vmatmul.mubr.f32.gmra.mrb[0].mxu0 %v296
  %v412 = vpop.f32.mrb[0].mxu0
  %v413 = vadd.f32 0.0, %v412
  %v414 = vpop.f32.mrb[0].mxu0
  %v415 = vadd.f32 0.0, %v414
  %416 = vmatprep.mubr.f32.mxu0 0.0
  %417 = vmatmul.mubr.f32.gmra.mrb[0].mxu0 %v299
  %v418 = vpop.f32.mrb[0].mxu0
  %v419 = vadd.f32 0.0, %v418
  %v420 = vpop.f32.mrb[0].mxu0
  %v421 = vadd.f32 0.0, %v420
  %422 = vmatprep.mubr.f32.mxu0 0.0
  %423 = vmatmul.mubr.f32.gmra.mrb[0].mxu0 %v302
  %v424 = vpop.f32.mrb[0].mxu0
  %v425 = vadd.f32 0.0, %v424
  %v426 = vpop.f32.mrb[0].mxu0
  %v427 = vadd.f32 0.0, %v426
  %428 = vmatprep.mubr.f32.mxu0 0.0
  %429 = vmatmul.mubr.f32.gmra.mrb[0].mxu0 %v305
  %v430 = vpop.f32.mrb[0].mxu0
  %v431 = vadd.f32 0.0, %v430
  %v432 = vpop.f32.mrb[0].mxu0
  %v433 = vadd.f32 0.0, %v432
  %434 = vmatprep.mubr.f32.mxu0 0.0
  %435 = vmatmul.mubr.f32.gmra.mrb[0].mxu0 %v308
  %v436 = vpop.f32.mrb[0].mxu0
  %v437 = vadd.f32 0.0, %v436
  %v438 = vpop.f32.mrb[0].mxu0
  %v439 = vadd.f32 0.0, %v438
  %440 = vmatprep.mubr.f32.mxu0 0.0
  %441 = vmatmul.mubr.f32.gmra.mrb[0].mxu0 %v311
  %v442 = vpop.f32.mrb[0].mxu0
  %v443 = vadd.f32 0.0, %v442
  %v444 = vpop.f32.mrb[0].mxu0
  %v445 = vadd.f32 0.0, %v444
  %446 = vmatprep.mubr.f32.mxu0 0.0
  %447 = vmatmul.mubr.f32.gmra.mrb[0].mxu0 %v314
  %v448 = vpop.f32.mrb[0].mxu0
  %v449 = vadd.f32 0.0, %v448
  %v450 = vpop.f32.mrb[0].mxu0
  %v451 = vadd.f32 0.0, %v450
  %452 = vmatprep.mubr.f32.mxu0 0.0
  %453 = vmatmul.mubr.f32.gmra.mrb[0].mxu0 %v317
  %v454 = vpop.f32.mrb[0].mxu0
  %v455 = vadd.f32 0.0, %v454
  %v456 = vpop.f32.mrb[0].mxu0
  %v457 = vadd.f32 0.0, %v456
  %458 = vmatprep.mubr.f32.mxu0 0.0
  %459 = vmatmul.mubr.f32.gmra.mrb[0].mxu0 %v320
  %v460 = vpop.f32.mrb[0].mxu0
  %v461 = vadd.f32 0.0, %v460
  %v462 = vpop.f32.mrb[0].mxu0
  %v463 = vadd.f32 0.0, %v462
  %464 = vmatprep.mubr.f32.mxu0 0.0
  %465 = vmatmul.mubr.f32.gmra.mrb[0].mxu0 %v323
  %v466 = vpop.f32.mrb[0].mxu0
  %v467 = vadd.f32 0.0, %v466
  %v468 = vpop.f32.mrb[0].mxu0
  %v469 = vadd.f32 0.0, %v468
  %470 = vmatprep.mubr.f32.mxu0 0.0
  %471 = vmatmul.mubr.f32.gmra.mrb[0].mxu0 %v326
  %v472 = vpop.f32.mrb[0].mxu0
  %v473 = vadd.f32 0.0, %v472
  %v474 = vpop.f32.mrb[0].mxu0
  %v475 = vadd.f32 0.0, %v474
  %476 = vmatprep.mubr.f32.mxu0 0.0
  %477 = vmatmul.mubr.f32.gmra.mrb[0].mxu0 %v329
  %v478 = vpop.f32.mrb[0].mxu0
  %v479 = vadd.f32 0.0, %v478
  %v480 = vpop.f32.mrb[0].mxu0
  %v481 = vadd.f32 0.0, %v480
  %482 = vmatprep.mubr.f32.mxu0 0.0
  %483 = vmatmul.mubr.f32.gmra.mrb[0].mxu0 %v332
  %v484 = vpop.f32.mrb[0].mxu0
  %v485 = vadd.f32 0.0, %v484
  %v486 = vpop.f32.mrb[0].mxu0
  %v487 = vadd.f32 0.0, %v486
  %488 = vmatprep.mubr.f32.mxu0 0.0
  %489 = vmatmul.mubr.f32.gmra.mrb[0].mxu0 %v335
  %v490 = vpop.f32.mrb[0].mxu0
  %v491 = vadd.f32 0.0, %v490
  %v492 = vpop.f32.mrb[0].mxu0
  %v493 = vadd.f32 0.0, %v492
  %494 = vmatprep.mubr.f32.mxu0 0.0
  %495 = vmatmul.mubr.f32.gmra.mrb[0].mxu0 %v338
  %v496 = vpop.f32.mrb[0].mxu0
  %v497 = vadd.f32 0.0, %v496
  %v498 = vpop.f32.mrb[0].mxu0
  %v499 = vadd.f32 0.0, %v498
  %500 = vdwg.mxu0
  %501 = vmatprep.subr.mxu0 %v39
  %502 = vmatpush1.msra.mxu0 %v38
  %503 = vmatprep.subr.mxu0 %v67
  %504 = vmatpush1.msra.mxu0 %v66
  %505 = vmatprep.subr.mxu0 %v95
  %506 = vmatpush1.msra.mxu0 %v94
  %507 = vmatprep.subr.mxu0 %v123
  %508 = vmatpush1.msra.mxu0 %v122
  %509 = vmatprep.subr.mxu0 %v151
  %510 = vmatpush1.msra.mxu0 %v150
  %511 = vmatprep.subr.mxu0 %v179
  %512 = vmatpush1.msra.mxu0 %v178
  %513 = vmatprep.subr.mxu0 %v207
  %514 = vmatpush1.msra.mxu0 %v206
  %515 = vmatprep.subr.mxu0 %v235
  %516 = vmatpush1.msra.mxu0 %v234
  %517 = vmatprep.subr.mxu0 0.0
  %518 = vmatpush1.msra.mxu0 0.0
  %519 = vmatprep.subr.mxu0 0.0
  %520 = vmatpush1.msra.mxu0 0.0
  %521 = vmatprep.subr.mxu0 0.0
  %522 = vmatpush1.msra.mxu0 0.0
  %523 = vmatprep.subr.mxu0 0.0
  %524 = vmatpush1.msra.mxu0 0.0
  %525 = vmatprep.subr.mxu0 0.0
  %526 = vmatpush1.msra.mxu0 0.0
  %527 = vmatprep.subr.mxu0 0.0
  %528 = vmatpush1.msra.mxu0 0.0
  %529 = vmatprep.subr.mxu0 0.0
  %530 = vmatpush1.msra.mxu0 0.0
  %531 = vmatprep.subr.mxu0 0.0
  %532 = vmatpush1.msra.mxu0 0.0
  %533 = vmatprep.subr.mxu0 0.0
  %534 = vmatpush1.msra.mxu0 0.0
  %535 = vmatprep.subr.mxu0 0.0
  %536 = vmatpush1.msra.mxu0 0.0
  %537 = vmatprep.subr.mxu0 0.0
  %538 = vmatpush1.msra.mxu0 0.0
  %539 = vmatprep.subr.mxu0 0.0
  %540 = vmatpush1.msra.mxu0 0.0
  %541 = vmatprep.subr.mxu0 0.0
  %542 = vmatpush1.msra.mxu0 0.0
  %543 = vmatprep.subr.mxu0 0.0
  %544 = vmatpush1.msra.mxu0 0.0
  %545 = vmatprep.subr.mxu0 0.0
  %546 = vmatpush1.msra.mxu0 0.0
  %547 = vmatprep.subr.mxu0 0.0
  %548 = vmatpush1.msra.mxu0 0.0
  %549 = vmatprep.subr.mxu0 0.0
  %550 = vmatpush1.msra.mxu0 0.0
  %551 = vmatprep.subr.mxu0 0.0
  %552 = vmatpush1.msra.mxu0 0.0
  %553 = vmatprep.subr.mxu0 0.0
  %554 = vmatpush1.msra.mxu0 0.0
  %555 = vmatprep.subr.mxu0 0.0
  %556 = vmatpush1.msra.mxu0 0.0
  %557 = vmatprep.subr.mxu0 0.0
  %558 = vmatpush1.msra.mxu0 0.0
  %559 = vmatprep.subr.mxu0 0.0
  %560 = vmatpush1.msra.mxu0 0.0
  %561 = vmatprep.subr.mxu0 0.0
  %562 = vmatpush1.msra.mxu0 0.0
  %563 = vmatprep.subr.mxu0 0.0
  %564 = vmatpush1.msra.mxu0 0.0
  %565 = vmatprep.mubr.f32.mxu0 0.0
  %566 = vmatmul.mubr.f32.gmra.mrb[0].mxu0 %v293
  %v567 = vpop.f32.mrb[0].mxu0
  %v568 = vadd.f32 0.0, %v567
  %v569 = vpop.f32.mrb[0].mxu0
  %v570 = vadd.f32 0.0, %v569
  %571 = vmatprep.mubr.f32.mxu0 0.0
  %572 = vmatmul.mubr.f32.gmra.mrb[0].mxu0 %v296
  %v573 = vpop.f32.mrb[0].mxu0
  %v574 = vadd.f32 0.0, %v573
  %v575 = vpop.f32.mrb[0].mxu0
  %v576 = vadd.f32 0.0, %v575
  %577 = vmatprep.mubr.f32.mxu0 0.0
  %578 = vmatmul.mubr.f32.gmra.mrb[0].mxu0 %v299
  %v579 = vpop.f32.mrb[0].mxu0
  %v580 = vadd.f32 0.0, %v579
  %v581 = vpop.f32.mrb[0].mxu0
  %v582 = vadd.f32 0.0, %v581
  %583 = vmatprep.mubr.f32.mxu0 0.0
  %584 = vmatmul.mubr.f32.gmra.mrb[0].mxu0 %v302
  %v585 = vpop.f32.mrb[0].mxu0
  %v586 = vadd.f32 0.0, %v585
  %v587 = vpop.f32.mrb[0].mxu0
  %v588 = vadd.f32 0.0, %v587
  %589 = vmatprep.mubr.f32.mxu0 0.0
  %590 = vmatmul.mubr.f32.gmra.mrb[0].mxu0 %v305
  %v591 = vpop.f32.mrb[0].mxu0
  %v592 = vadd.f32 0.0, %v591
  %v593 = vpop.f32.mrb[0].mxu0
  %v594 = vadd.f32 0.0, %v593
  %595 = vmatprep.mubr.f32.mxu0 0.0
  %596 = vmatmul.mubr.f32.gmra.mrb[0].mxu0 %v308
  %v597 = vpop.f32.mrb[0].mxu0
  %v598 = vadd.f32 0.0, %v597
  %v599 = vpop.f32.mrb[0].mxu0
  %v600 = vadd.f32 0.0, %v599
  %601 = vmatprep.mubr.f32.mxu0 0.0
  %602 = vmatmul.mubr.f32.gmra.mrb[0].mxu0 %v311
  %v603 = vpop.f32.mrb[0].mxu0
  %v604 = vadd.f32 0.0, %v603
  %v605 = vpop.f32.mrb[0].mxu0
  %v606 = vadd.f32 0.0, %v605
  %607 = vmatprep.mubr.f32.mxu0 0.0
  %608 = vmatmul.mubr.f32.gmra.mrb[0].mxu0 %v314
  %v609 = vpop.f32.mrb[0].mxu0
  %v610 = vadd.f32 0.0, %v609
  %v611 = vpop.f32.mrb[0].mxu0
  %v612 = vadd.f32 0.0, %v611
  %613 = vmatprep.mubr.f32.mxu0 0.0
  %614 = vmatmul.mubr.f32.gmra.mrb[0].mxu0 %v317
  %v615 = vpop.f32.mrb[0].mxu0
  %v616 = vadd.f32 0.0, %v615
  %v617 = vpop.f32.mrb[0].mxu0
  %v618 = vadd.f32 0.0, %v617
  %619 = vmatprep.mubr.f32.mxu0 0.0
  %620 = vmatmul.mubr.f32.gmra.mrb[0].mxu0 %v320
  %v621 = vpop.f32.mrb[0].mxu0
  %v622 = vadd.f32 0.0, %v621
  %v623 = vpop.f32.mrb[0].mxu0
  %v624 = vadd.f32 0.0, %v623
  %625 = vmatprep.mubr.f32.mxu0 0.0
  %626 = vmatmul.mubr.f32.gmra.mrb[0].mxu0 %v323
  %v627 = vpop.f32.mrb[0].mxu0
  %v628 = vadd.f32 0.0, %v627
  %v629 = vpop.f32.mrb[0].mxu0
  %v630 = vadd.f32 0.0, %v629
  %631 = vmatprep.mubr.f32.mxu0 0.0
  %632 = vmatmul.mubr.f32.gmra.mrb[0].mxu0 %v326
  %v633 = vpop.f32.mrb[0].mxu0
  %v634 = vadd.f32 0.0, %v633
  %v635 = vpop.f32.mrb[0].mxu0
  %v636 = vadd.f32 0.0, %v635
  %637 = vmatprep.mubr.f32.mxu0 0.0
  %638 = vmatmul.mubr.f32.gmra.mrb[0].mxu0 %v329
  %v639 = vpop.f32.mrb[0].mxu0
  %v640 = vadd.f32 0.0, %v639
  %v641 = vpop.f32.mrb[0].mxu0
  %v642 = vadd.f32 0.0, %v641
  %643 = vmatprep.mubr.f32.mxu0 0.0
  %644 = vmatmul.mubr.f32.gmra.mrb[0].mxu0 %v332
  %v645 = vpop.f32.mrb[0].mxu0
  %v646 = vadd.f32 0.0, %v645
  %v647 = vpop.f32.mrb[0].mxu0
  %v648 = vadd.f32 0.0, %v647
  %649 = vmatprep.mubr.f32.mxu0 0.0
  %650 = vmatmul.mubr.f32.gmra.mrb[0].mxu0 %v335
  %v651 = vpop.f32.mrb[0].mxu0
  %v652 = vadd.f32 0.0, %v651
  %v653 = vpop.f32.mrb[0].mxu0
  %v654 = vadd.f32 0.0, %v653
  %655 = vmatprep.mubr.f32.mxu0 0.0
  %656 = vmatmul.mubr.f32.gmra.mrb[0].mxu0 %v338
  %v657 = vpop.f32.mrb[0].mxu0
  %v658 = vadd.f32 0.0, %v657
  %v659 = vpop.f32.mrb[0].mxu0
  %v660 = vadd.f32 0.0, %v659
  %661 = vdwg.mxu0
  %662 = vmatprep.subr.mxu0 %v41
  %663 = vmatpush1.msra.mxu0 %v40
  %664 = vmatprep.subr.mxu0 %v69
  %665 = vmatpush1.msra.mxu0 %v68
  %666 = vmatprep.subr.mxu0 %v97
  %667 = vmatpush1.msra.mxu0 %v96
  %668 = vmatprep.subr.mxu0 %v125
  %669 = vmatpush1.msra.mxu0 %v124
  %670 = vmatprep.subr.mxu0 %v153
  %671 = vmatpush1.msra.mxu0 %v152
  %672 = vmatprep.subr.mxu0 %v181
  %673 = vmatpush1.msra.mxu0 %v180
  %674 = vmatprep.subr.mxu0 %v209
  %675 = vmatpush1.msra.mxu0 %v208
  %676 = vmatprep.subr.mxu0 %v237
  %677 = vmatpush1.msra.mxu0 %v236
  %678 = vmatprep.subr.mxu0 0.0
  %679 = vmatpush1.msra.mxu0 0.0
  %680 = vmatprep.subr.mxu0 0.0
  %681 = vmatpush1.msra.mxu0 0.0
  %682 = vmatprep.subr.mxu0 0.0
  %683 = vmatpush1.msra.mxu0 0.0
  %684 = vmatprep.subr.mxu0 0.0
  %685 = vmatpush1.msra.mxu0 0.0
  %686 = vmatprep.subr.mxu0 0.0
  %687 = vmatpush1.msra.mxu0 0.0
  %688 = vmatprep.subr.mxu0 0.0
  %689 = vmatpush1.msra.mxu0 0.0
  %690 = vmatprep.subr.mxu0 0.0
  %691 = vmatpush1.msra.mxu0 0.0
  %692 = vmatprep.subr.mxu0 0.0
  %693 = vmatpush1.msra.mxu0 0.0
  %694 = vmatprep.subr.mxu0 0.0
  %695 = vmatpush1.msra.mxu0 0.0
  %696 = vmatprep.subr.mxu0 0.0
  %697 = vmatpush1.msra.mxu0 0.0
  %698 = vmatprep.subr.mxu0 0.0
  %699 = vmatpush1.msra.mxu0 0.0
  %700 = vmatprep.subr.mxu0 0.0
  %701 = vmatpush1.msra.mxu0 0.0
  %702 = vmatprep.subr.mxu0 0.0
  %703 = vmatpush1.msra.mxu0 0.0
  %704 = vmatprep.subr.mxu0 0.0
  %705 = vmatpush1.msra.mxu0 0.0
  %706 = vmatprep.subr.mxu0 0.0
  %707 = vmatpush1.msra.mxu0 0.0
  %708 = vmatprep.subr.mxu0 0.0
  %709 = vmatpush1.msra.mxu0 0.0
  %710 = vmatprep.subr.mxu0 0.0
  %711 = vmatpush1.msra.mxu0 0.0
  %712 = vmatprep.subr.mxu0 0.0
  %713 = vmatpush1.msra.mxu0 0.0
  %714 = vmatprep.subr.mxu0 0.0
  %715 = vmatpush1.msra.mxu0 0.0
  %716 = vmatprep.subr.mxu0 0.0
  %717 = vmatpush1.msra.mxu0 0.0
  %718 = vmatprep.subr.mxu0 0.0
  %719 = vmatpush1.msra.mxu0 0.0
  %720 = vmatprep.subr.mxu0 0.0
  %721 = vmatpush1.msra.mxu0 0.0
  %722 = vmatprep.subr.mxu0 0.0
  %723 = vmatpush1.msra.mxu0 0.0
  %724 = vmatprep.subr.mxu0 0.0
  %725 = vmatpush1.msra.mxu0 0.0
  %726 = vmatprep.mubr.f32.mxu0 0.0
  %727 = vmatmul.mubr.f32.gmra.mrb[0].mxu0 %v293
  %v728 = vpop.f32.mrb[0].mxu0
  %v729 = vadd.f32 0.0, %v728
  %v730 = vpop.f32.mrb[0].mxu0
  %v731 = vadd.f32 0.0, %v730
  %732 = vmatprep.mubr.f32.mxu0 0.0
  %733 = vmatmul.mubr.f32.gmra.mrb[0].mxu0 %v296
  %v734 = vpop.f32.mrb[0].mxu0
  %v735 = vadd.f32 0.0, %v734
  %v736 = vpop.f32.mrb[0].mxu0
  %v737 = vadd.f32 0.0, %v736
  %738 = vmatprep.mubr.f32.mxu0 0.0
  %739 = vmatmul.mubr.f32.gmra.mrb[0].mxu0 %v299
  %v740 = vpop.f32.mrb[0].mxu0
  %v741 = vadd.f32 0.0, %v740
  %v742 = vpop.f32.mrb[0].mxu0
  %v743 = vadd.f32 0.0, %v742
  %744 = vmatprep.mubr.f32.mxu0 0.0
  %745 = vmatmul.mubr.f32.gmra.mrb[0].mxu0 %v302
  %v746 = vpop.f32.mrb[0].mxu0
  %v747 = vadd.f32 0.0, %v746
  %v748 = vpop.f32.mrb[0].mxu0
  %v749 = vadd.f32 0.0, %v748
  %750 = vmatprep.mubr.f32.mxu0 0.0
  %751 = vmatmul.mubr.f32.gmra.mrb[0].mxu0 %v305
  %v752 = vpop.f32.mrb[0].mxu0
  %v753 = vadd.f32 0.0, %v752
  %v754 = vpop.f32.mrb[0].mxu0
  %v755 = vadd.f32 0.0, %v754
  %756 = vmatprep.mubr.f32.mxu0 0.0
  %757 = vmatmul.mubr.f32.gmra.mrb[0].mxu0 %v308
  %v758 = vpop.f32.mrb[0].mxu0
  %v759 = vadd.f32 0.0, %v758
  %v760 = vpop.f32.mrb[0].mxu0
  %v761 = vadd.f32 0.0, %v760
  %762 = vmatprep.mubr.f32.mxu0 0.0
  %763 = vmatmul.mubr.f32.gmra.mrb[0].mxu0 %v311
  %v764 = vpop.f32.mrb[0].mxu0
  %v765 = vadd.f32 0.0, %v764
  %v766 = vpop.f32.mrb[0].mxu0
  %v767 = vadd.f32 0.0, %v766
  %768 = vmatprep.mubr.f32.mxu0 0.0
  %769 = vmatmul.mubr.f32.gmra.mrb[0].mxu0 %v314
  %v770 = vpop.f32.mrb[0].mxu0
  %v771 = vadd.f32 0.0, %v770
  %v772 = vpop.f32.mrb[0].mxu0
  %v773 = vadd.f32 0.0, %v772
  %774 = vmatprep.mubr.f32.mxu0 0.0
  %775 = vmatmul.mubr.f32.gmra.mrb[0].mxu0 %v317
  %v776 = vpop.f32.mrb[0].mxu0
  %v777 = vadd.f32 0.0, %v776
  %v778 = vpop.f32.mrb[0].mxu0
  %v779 = vadd.f32 0.0, %v778
  %780 = vmatprep.mubr.f32.mxu0 0.0
  %781 = vmatmul.mubr.f32.gmra.mrb[0].mxu0 %v320
  %v782 = vpop.f32.mrb[0].mxu0
  %v783 = vadd.f32 0.0, %v782
  %v784 = vpop.f32.mrb[0].mxu0
  %v785 = vadd.f32 0.0, %v784
  %786 = vmatprep.mubr.f32.mxu0 0.0
  %787 = vmatmul.mubr.f32.gmra.mrb[0].mxu0 %v323
  %v788 = vpop.f32.mrb[0].mxu0
  %v789 = vadd.f32 0.0, %v788
  %v790 = vpop.f32.mrb[0].mxu0
  %v791 = vadd.f32 0.0, %v790
  %792 = vmatprep.mubr.f32.mxu0 0.0
  %793 = vmatmul.mubr.f32.gmra.mrb[0].mxu0 %v326
  %v794 = vpop.f32.mrb[0].mxu0
  %v795 = vadd.f32 0.0, %v794
  %v796 = vpop.f32.mrb[0].mxu0
  %v797 = vadd.f32 0.0, %v796
  %798 = vmatprep.mubr.f32.mxu0 0.0
  %799 = vmatmul.mubr.f32.gmra.mrb[0].mxu0 %v329
  %v800 = vpop.f32.mrb[0].mxu0
  %v801 = vadd.f32 0.0, %v800
  %v802 = vpop.f32.mrb[0].mxu0
  %v803 = vadd.f32 0.0, %v802
  %804 = vmatprep.mubr.f32.mxu0 0.0
  %805 = vmatmul.mubr.f32.gmra.mrb[0].mxu0 %v332
  %v806 = vpop.f32.mrb[0].mxu0
  %v807 = vadd.f32 0.0, %v806
  %v808 = vpop.f32.mrb[0].mxu0
  %v809 = vadd.f32 0.0, %v808
  %810 = vmatprep.mubr.f32.mxu0 0.0
  %811 = vmatmul.mubr.f32.gmra.mrb[0].mxu0 %v335
  %v812 = vpop.f32.mrb[0].mxu0
  %v813 = vadd.f32 0.0, %v812
  %v814 = vpop.f32.mrb[0].mxu0
  %v815 = vadd.f32 0.0, %v814
  %816 = vmatprep.mubr.f32.mxu0 0.0
  %817 = vmatmul.mubr.f32.gmra.mrb[0].mxu0 %v338
  %v818 = vpop.f32.mrb[0].mxu0
  %v819 = vadd.f32 0.0, %v818
  %v820 = vpop.f32.mrb[0].mxu0
  %v821 = vadd.f32 0.0, %v820
  %822 = vdwg.mxu0
  %823 = vmatprep.subr.mxu0 %v43
  %824 = vmatpush1.msra.mxu0 %v42
  %825 = vmatprep.subr.mxu0 %v71
  %826 = vmatpush1.msra.mxu0 %v70
  %827 = vmatprep.subr.mxu0 %v99
  %828 = vmatpush1.msra.mxu0 %v98
  %829 = vmatprep.subr.mxu0 %v127
  %830 = vmatpush1.msra.mxu0 %v126
  %831 = vmatprep.subr.mxu0 %v155
  %832 = vmatpush1.msra.mxu0 %v154
  %833 = vmatprep.subr.mxu0 %v183
  %834 = vmatpush1.msra.mxu0 %v182
  %835 = vmatprep.subr.mxu0 %v211
  %836 = vmatpush1.msra.mxu0 %v210
  %837 = vmatprep.subr.mxu0 %v239
  %838 = vmatpush1.msra.mxu0 %v238
  %839 = vmatprep.subr.mxu0 0.0
  %840 = vmatpush1.msra.mxu0 0.0
  %841 = vmatprep.subr.mxu0 0.0
  %842 = vmatpush1.msra.mxu0 0.0
  %843 = vmatprep.subr.mxu0 0.0
  %844 = vmatpush1.msra.mxu0 0.0
  %845 = vmatprep.subr.mxu0 0.0
  %846 = vmatpush1.msra.mxu0 0.0
  %847 = vmatprep.subr.mxu0 0.0
  %848 = vmatpush1.msra.mxu0 0.0
  %849 = vmatprep.subr.mxu0 0.0
  %850 = vmatpush1.msra.mxu0 0.0
  %851 = vmatprep.subr.mxu0 0.0
  %852 = vmatpush1.msra.mxu0 0.0
  %853 = vmatprep.subr.mxu0 0.0
  %854 = vmatpush1.msra.mxu0 0.0
  %855 = vmatprep.subr.mxu0 0.0
  %856 = vmatpush1.msra.mxu0 0.0
  %857 = vmatprep.subr.mxu0 0.0
  %858 = vmatpush1.msra.mxu0 0.0
  %859 = vmatprep.subr.mxu0 0.0
  %860 = vmatpush1.msra.mxu0 0.0
  %861 = vmatprep.subr.mxu0 0.0
  %862 = vmatpush1.msra.mxu0 0.0
  %863 = vmatprep.subr.mxu0 0.0
  %864 = vmatpush1.msra.mxu0 0.0
  %865 = vmatprep.subr.mxu0 0.0
  %866 = vmatpush1.msra.mxu0 0.0
  %867 = vmatprep.subr.mxu0 0.0
  %868 = vmatpush1.msra.mxu0 0.0
  %869 = vmatprep.subr.mxu0 0.0
  %870 = vmatpush1.msra.mxu0 0.0
  %871 = vmatprep.subr.mxu0 0.0
  %872 = vmatpush1.msra.mxu0 0.0
  %873 = vmatprep.subr.mxu0 0.0
  %874 = vmatpush1.msra.mxu0 0.0
  %875 = vmatprep.subr.mxu0 0.0
  %876 = vmatpush1.msra.mxu0 0.0
  %877 = vmatprep.subr.mxu0 0.0
  %878 = vmatpush1.msra.mxu0 0.0
  %879 = vmatprep.subr.mxu0 0.0
  %880 = vmatpush1.msra.mxu0 0.0
  %881 = vmatprep.subr.mxu0 0.0
  %882 = vmatpush1.msra.mxu0 0.0
  %883 = vmatprep.subr.mxu0 0.0
  %884 = vmatpush1.msra.mxu0 0.0
  %885 = vmatprep.subr.mxu0 0.0
  %886 = vmatpush1.msra.mxu0 0.0
  %887 = vmatprep.mubr.f32.mxu0 0.0
  %888 = vmatmul.mubr.f32.gmra.mrb[0].mxu0 %v293
  %v889 = vpop.f32.mrb[0].mxu0
  %v890 = vadd.f32 0.0, %v889
  %v891 = vpop.f32.mrb[0].mxu0
  %v892 = vadd.f32 0.0, %v891
  %893 = vmatprep.mubr.f32.mxu0 0.0
  %894 = vmatmul.mubr.f32.gmra.mrb[0].mxu0 %v296
  %v895 = vpop.f32.mrb[0].mxu0
  %v896 = vadd.f32 0.0, %v895
  %v897 = vpop.f32.mrb[0].mxu0
  %v898 = vadd.f32 0.0, %v897
  %899 = vmatprep.mubr.f32.mxu0 0.0
  %900 = vmatmul.mubr.f32.gmra.mrb[0].mxu0 %v299
  %v901 = vpop.f32.mrb[0].mxu0
  %v902 = vadd.f32 0.0, %v901
  %v903 = vpop.f32.mrb[0].mxu0
  %v904 = vadd.f32 0.0, %v903
  %905 = vmatprep.mubr.f32.mxu0 0.0
  %906 = vmatmul.mubr.f32.gmra.mrb[0].mxu0 %v302
  %v907 = vpop.f32.mrb[0].mxu0
  %v908 = vadd.f32 0.0, %v907
  %v909 = vpop.f32.mrb[0].mxu0
  %v910 = vadd.f32 0.0, %v909
  %911 = vmatprep.mubr.f32.mxu0 0.0
  %912 = vmatmul.mubr.f32.gmra.mrb[0].mxu0 %v305
  %v913 = vpop.f32.mrb[0].mxu0
  %v914 = vadd.f32 0.0, %v913
  %v915 = vpop.f32.mrb[0].mxu0
  %v916 = vadd.f32 0.0, %v915
  %917 = vmatprep.mubr.f32.mxu0 0.0
  %918 = vmatmul.mubr.f32.gmra.mrb[0].mxu0 %v308
  %v919 = vpop.f32.mrb[0].mxu0
  %v920 = vadd.f32 0.0, %v919
  %v921 = vpop.f32.mrb[0].mxu0
  %v922 = vadd.f32 0.0, %v921
  %923 = vmatprep.mubr.f32.mxu0 0.0
  %924 = vmatmul.mubr.f32.gmra.mrb[0].mxu0 %v311
  %v925 = vpop.f32.mrb[0].mxu0
  %v926 = vadd.f32 0.0, %v925
  %v927 = vpop.f32.mrb[0].mxu0
  %v928 = vadd.f32 0.0, %v927
  %929 = vmatprep.mubr.f32.mxu0 0.0
  %930 = vmatmul.mubr.f32.gmra.mrb[0].mxu0 %v314
  %v931 = vpop.f32.mrb[0].mxu0
  %v932 = vadd.f32 0.0, %v931
  %v933 = vpop.f32.mrb[0].mxu0
  %v934 = vadd.f32 0.0, %v933
  %935 = vmatprep.mubr.f32.mxu0 0.0
  %936 = vmatmul.mubr.f32.gmra.mrb[0].mxu0 %v317
  %v937 = vpop.f32.mrb[0].mxu0
  %v938 = vadd.f32 0.0, %v937
  %v939 = vpop.f32.mrb[0].mxu0
  %v940 = vadd.f32 0.0, %v939
  %941 = vmatprep.mubr.f32.mxu0 0.0
  %942 = vmatmul.mubr.f32.gmra.mrb[0].mxu0 %v320
  %v943 = vpop.f32.mrb[0].mxu0
  %v944 = vadd.f32 0.0, %v943
  %v945 = vpop.f32.mrb[0].mxu0
  %v946 = vadd.f32 0.0, %v945
  %947 = vmatprep.mubr.f32.mxu0 0.0
  %948 = vmatmul.mubr.f32.gmra.mrb[0].mxu0 %v323
  %v949 = vpop.f32.mrb[0].mxu0
  %v950 = vadd.f32 0.0, %v949
  %v951 = vpop.f32.mrb[0].mxu0
  %v952 = vadd.f32 0.0, %v951
  %953 = vmatprep.mubr.f32.mxu0 0.0
  %954 = vmatmul.mubr.f32.gmra.mrb[0].mxu0 %v326
  %v955 = vpop.f32.mrb[0].mxu0
  %v956 = vadd.f32 0.0, %v955
  %v957 = vpop.f32.mrb[0].mxu0
  %v958 = vadd.f32 0.0, %v957
  %959 = vmatprep.mubr.f32.mxu0 0.0
  %960 = vmatmul.mubr.f32.gmra.mrb[0].mxu0 %v329
  %v961 = vpop.f32.mrb[0].mxu0
  %v962 = vadd.f32 0.0, %v961
  %v963 = vpop.f32.mrb[0].mxu0
  %v964 = vadd.f32 0.0, %v963
  %965 = vmatprep.mubr.f32.mxu0 0.0
  %966 = vmatmul.mubr.f32.gmra.mrb[0].mxu0 %v332
  %v967 = vpop.f32.mrb[0].mxu0
  %v968 = vadd.f32 0.0, %v967
  %v969 = vpop.f32.mrb[0].mxu0
  %v970 = vadd.f32 0.0, %v969
  %971 = vmatprep.mubr.f32.mxu0 0.0
  %972 = vmatmul.mubr.f32.gmra.mrb[0].mxu0 %v335
  %v973 = vpop.f32.mrb[0].mxu0
  %v974 = vadd.f32 0.0, %v973
  %v975 = vpop.f32.mrb[0].mxu0
  %v976 = vadd.f32 0.0, %v975
  %977 = vmatprep.mubr.f32.mxu0 0.0
  %978 = vmatmul.mubr.f32.gmra.mrb[0].mxu0 %v338
  %v979 = vpop.f32.mrb[0].mxu0
  %v980 = vadd.f32 0.0, %v979
  %v981 = vpop.f32.mrb[0].mxu0
  %v982 = vadd.f32 0.0, %v981
  %983 = vdwg.mxu0
  %984 = vmatprep.subr.mxu0 %v45
  %985 = vmatpush1.msra.mxu0 %v44
  %986 = vmatprep.subr.mxu0 %v73
  %987 = vmatpush1.msra.mxu0 %v72
  %988 = vmatprep.subr.mxu0 %v101
  %989 = vmatpush1.msra.mxu0 %v100
  %990 = vmatprep.subr.mxu0 %v129
  %991 = vmatpush1.msra.mxu0 %v128
  %992 = vmatprep.subr.mxu0 %v157
  %993 = vmatpush1.msra.mxu0 %v156
  %994 = vmatprep.subr.mxu0 %v185
  %995 = vmatpush1.msra.mxu0 %v184
  %996 = vmatprep.subr.mxu0 %v213
  %997 = vmatpush1.msra.mxu0 %v212
  %998 = vmatprep.subr.mxu0 %v241
  %999 = vmatpush1.msra.mxu0 %v240
  %1000 = vmatprep.subr.mxu0 0.0
  %1001 = vmatpush1.msra.mxu0 0.0
  %1002 = vmatprep.subr.mxu0 0.0
  %1003 = vmatpush1.msra.mxu0 0.0
  %1004 = vmatprep.subr.mxu0 0.0
  %1005 = vmatpush1.msra.mxu0 0.0
  %1006 = vmatprep.subr.mxu0 0.0
  %1007 = vmatpush1.msra.mxu0 0.0
  %1008 = vmatprep.subr.mxu0 0.0
  %1009 = vmatpush1.msra.mxu0 0.0
  %1010 = vmatprep.subr.mxu0 0.0
  %1011 = vmatpush1.msra.mxu0 0.0
  %1012 = vmatprep.subr.mxu0 0.0
  %1013 = vmatpush1.msra.mxu0 0.0
  %1014 = vmatprep.subr.mxu0 0.0
  %1015 = vmatpush1.msra.mxu0 0.0
  %1016 = vmatprep.subr.mxu0 0.0
  %1017 = vmatpush1.msra.mxu0 0.0
  %1018 = vmatprep.subr.mxu0 0.0
  %1019 = vmatpush1.msra.mxu0 0.0
  %1020 = vmatprep.subr.mxu0 0.0
  %1021 = vmatpush1.msra.mxu0 0.0
  %1022 = vmatprep.subr.mxu0 0.0
  %1023 = vmatpush1.msra.mxu0 0.0
  %1024 = vmatprep.subr.mxu0 0.0
  %1025 = vmatpush1.msra.mxu0 0.0
  %1026 = vmatprep.subr.mxu0 0.0
  %1027 = vmatpush1.msra.mxu0 0.0
  %1028 = vmatprep.subr.mxu0 0.0
  %1029 = vmatpush1.msra.mxu0 0.0
  %1030 = vmatprep.subr.mxu0 0.0
  %1031 = vmatpush1.msra.mxu0 0.0
  %1032 = vmatprep.subr.mxu0 0.0
  %1033 = vmatpush1.msra.mxu0 0.0
  %1034 = vmatprep.subr.mxu0 0.0
  %1035 = vmatpush1.msra.mxu0 0.0
  %1036 = vmatprep.subr.mxu0 0.0
  %1037 = vmatpush1.msra.mxu0 0.0
  %1038 = vmatprep.subr.mxu0 0.0
  %1039 = vmatpush1.msra.mxu0 0.0
  %1040 = vmatprep.subr.mxu0 0.0
  %1041 = vmatpush1.msra.mxu0 0.0
  %1042 = vmatprep.subr.mxu0 0.0
  %1043 = vmatpush1.msra.mxu0 0.0
  %1044 = vmatprep.subr.mxu0 0.0
  %1045 = vmatpush1.msra.mxu0 0.0
  %1046 = vmatprep.subr.mxu0 0.0
  %1047 = vmatpush1.msra.mxu0 0.0
  %1048 = vmatprep.mubr.f32.mxu0 0.0
  %1049 = vmatmul.mubr.f32.gmra.mrb[0].mxu0 %v293
  %v1050 = vpop.f32.mrb[0].mxu0
  %v1051 = vadd.f32 0.0, %v1050
  %v1052 = vpop.f32.mrb[0].mxu0
  %v1053 = vadd.f32 0.0, %v1052
  %1054 = vmatprep.mubr.f32.mxu0 0.0
  %1055 = vmatmul.mubr.f32.gmra.mrb[0].mxu0 %v296
  %v1056 = vpop.f32.mrb[0].mxu0
  %v1057 = vadd.f32 0.0, %v1056
  %v1058 = vpop.f32.mrb[0].mxu0
  %v1059 = vadd.f32 0.0, %v1058
  %1060 = vmatprep.mubr.f32.mxu0 0.0
  %1061 = vmatmul.mubr.f32.gmra.mrb[0].mxu0 %v299
  %v1062 = vpop.f32.mrb[0].mxu0
  %v1063 = vadd.f32 0.0, %v1062
  %v1064 = vpop.f32.mrb[0].mxu0
  %v1065 = vadd.f32 0.0, %v1064
  %1066 = vmatprep.mubr.f32.mxu0 0.0
  %1067 = vmatmul.mubr.f32.gmra.mrb[0].mxu0 %v302
  %v1068 = vpop.f32.mrb[0].mxu0
  %v1069 = vadd.f32 0.0, %v1068
  %v1070 = vpop.f32.mrb[0].mxu0
  %v1071 = vadd.f32 0.0, %v1070
  %1072 = vmatprep.mubr.f32.mxu0 0.0
  %1073 = vmatmul.mubr.f32.gmra.mrb[0].mxu0 %v305
  %v1074 = vpop.f32.mrb[0].mxu0
  %v1075 = vadd.f32 0.0, %v1074
  %v1076 = vpop.f32.mrb[0].mxu0
  %v1077 = vadd.f32 0.0, %v1076
  %1078 = vmatprep.mubr.f32.mxu0 0.0
  %1079 = vmatmul.mubr.f32.gmra.mrb[0].mxu0 %v308
  %v1080 = vpop.f32.mrb[0].mxu0
  %v1081 = vadd.f32 0.0, %v1080
  %v1082 = vpop.f32.mrb[0].mxu0
  %v1083 = vadd.f32 0.0, %v1082
  %1084 = vmatprep.mubr.f32.mxu0 0.0
  %1085 = vmatmul.mubr.f32.gmra.mrb[0].mxu0 %v311
  %v1086 = vpop.f32.mrb[0].mxu0
  %v1087 = vadd.f32 0.0, %v1086
  %v1088 = vpop.f32.mrb[0].mxu0
  %v1089 = vadd.f32 0.0, %v1088
  %1090 = vmatprep.mubr.f32.mxu0 0.0
  %1091 = vmatmul.mubr.f32.gmra.mrb[0].mxu0 %v314
  %v1092 = vpop.f32.mrb[0].mxu0
  %v1093 = vadd.f32 0.0, %v1092
  %v1094 = vpop.f32.mrb[0].mxu0
  %v1095 = vadd.f32 0.0, %v1094
  %1096 = vmatprep.mubr.f32.mxu0 0.0
  %1097 = vmatmul.mubr.f32.gmra.mrb[0].mxu0 %v317
  %v1098 = vpop.f32.mrb[0].mxu0
  %v1099 = vadd.f32 0.0, %v1098
  %v1100 = vpop.f32.mrb[0].mxu0
  %v1101 = vadd.f32 0.0, %v1100
  %1102 = vmatprep.mubr.f32.mxu0 0.0
  %1103 = vmatmul.mubr.f32.gmra.mrb[0].mxu0 %v320
  %v1104 = vpop.f32.mrb[0].mxu0
  %v1105 = vadd.f32 0.0, %v1104
  %v1106 = vpop.f32.mrb[0].mxu0
  %v1107 = vadd.f32 0.0, %v1106
  %1108 = vmatprep.mubr.f32.mxu0 0.0
  %1109 = vmatmul.mubr.f32.gmra.mrb[0].mxu0 %v323
  %v1110 = vpop.f32.mrb[0].mxu0
  %v1111 = vadd.f32 0.0, %v1110
  %v1112 = vpop.f32.mrb[0].mxu0
  %v1113 = vadd.f32 0.0, %v1112
  %1114 = vmatprep.mubr.f32.mxu0 0.0
  %1115 = vmatmul.mubr.f32.gmra.mrb[0].mxu0 %v326
  %v1116 = vpop.f32.mrb[0].mxu0
  %v1117 = vadd.f32 0.0, %v1116
  %v1118 = vpop.f32.mrb[0].mxu0
  %v1119 = vadd.f32 0.0, %v1118
  %1120 = vmatprep.mubr.f32.mxu0 0.0
  %1121 = vmatmul.mubr.f32.gmra.mrb[0].mxu0 %v329
  %v1122 = vpop.f32.mrb[0].mxu0
  %v1123 = vadd.f32 0.0, %v1122
  %v1124 = vpop.f32.mrb[0].mxu0
  %v1125 = vadd.f32 0.0, %v1124
  %1126 = vmatprep.mubr.f32.mxu0 0.0
  %1127 = vmatmul.mubr.f32.gmra.mrb[0].mxu0 %v332
  %v1128 = vpop.f32.mrb[0].mxu0
  %v1129 = vadd.f32 0.0, %v1128
  %v1130 = vpop.f32.mrb[0].mxu0
  %v1131 = vadd.f32 0.0, %v1130
  %1132 = vmatprep.mubr.f32.mxu0 0.0
  %1133 = vmatmul.mubr.f32.gmra.mrb[0].mxu0 %v335
  %v1134 = vpop.f32.mrb[0].mxu0
  %v1135 = vadd.f32 0.0, %v1134
  %v1136 = vpop.f32.mrb[0].mxu0
  %v1137 = vadd.f32 0.0, %v1136
  %1138 = vmatprep.mubr.f32.mxu0 0.0
  %1139 = vmatmul.mubr.f32.gmra.mrb[0].mxu0 %v338
  %v1140 = vpop.f32.mrb[0].mxu0
  %v1141 = vadd.f32 0.0, %v1140
  %v1142 = vpop.f32.mrb[0].mxu0
  %v1143 = vadd.f32 0.0, %v1142
  %1144 = vdwg.mxu0
  %1145 = vmatprep.subr.mxu0 %v47
  %1146 = vmatpush1.msra.mxu0 %v46
  %1147 = vmatprep.subr.mxu0 %v75
  %1148 = vmatpush1.msra.mxu0 %v74
  %1149 = vmatprep.subr.mxu0 %v103
  %1150 = vmatpush1.msra.mxu0 %v102
  %1151 = vmatprep.subr.mxu0 %v131
  %1152 = vmatpush1.msra.mxu0 %v130
  %1153 = vmatprep.subr.mxu0 %v159
  %1154 = vmatpush1.msra.mxu0 %v158
  %1155 = vmatprep.subr.mxu0 %v187
  %1156 = vmatpush1.msra.mxu0 %v186
  %1157 = vmatprep.subr.mxu0 %v215
  %1158 = vmatpush1.msra.mxu0 %v214
  %1159 = vmatprep.subr.mxu0 %v243
  %1160 = vmatpush1.msra.mxu0 %v242
  %1161 = vmatprep.subr.mxu0 0.0
  %1162 = vmatpush1.msra.mxu0 0.0
  %1163 = vmatprep.subr.mxu0 0.0
  %1164 = vmatpush1.msra.mxu0 0.0
  %1165 = vmatprep.subr.mxu0 0.0
  %1166 = vmatpush1.msra.mxu0 0.0
  %1167 = vmatprep.subr.mxu0 0.0
  %1168 = vmatpush1.msra.mxu0 0.0
  %1169 = vmatprep.subr.mxu0 0.0
  %1170 = vmatpush1.msra.mxu0 0.0
  %1171 = vmatprep.subr.mxu0 0.0
  %1172 = vmatpush1.msra.mxu0 0.0
  %1173 = vmatprep.subr.mxu0 0.0
  %1174 = vmatpush1.msra.mxu0 0.0
  %1175 = vmatprep.subr.mxu0 0.0
  %1176 = vmatpush1.msra.mxu0 0.0
  %1177 = vmatprep.subr.mxu0 0.0
  %1178 = vmatpush1.msra.mxu0 0.0
  %1179 = vmatprep.subr.mxu0 0.0
  %1180 = vmatpush1.msra.mxu0 0.0
  %1181 = vmatprep.subr.mxu0 0.0
  %1182 = vmatpush1.msra.mxu0 0.0
  %1183 = vmatprep.subr.mxu0 0.0
  %1184 = vmatpush1.msra.mxu0 0.0
  %1185 = vmatprep.subr.mxu0 0.0
  %1186 = vmatpush1.msra.mxu0 0.0
  %1187 = vmatprep.subr.mxu0 0.0
  %1188 = vmatpush1.msra.mxu0 0.0
  %1189 = vmatprep.subr.mxu0 0.0
  %1190 = vmatpush1.msra.mxu0 0.0
  %1191 = vmatprep.subr.mxu0 0.0
  %1192 = vmatpush1.msra.mxu0 0.0
  %1193 = vmatprep.subr.mxu0 0.0
  %1194 = vmatpush1.msra.mxu0 0.0
  %1195 = vmatprep.subr.mxu0 0.0
  %1196 = vmatpush1.msra.mxu0 0.0
  %1197 = vmatprep.subr.mxu0 0.0
  %1198 = vmatpush1.msra.mxu0 0.0
  %1199 = vmatprep.subr.mxu0 0.0
  %1200 = vmatpush1.msra.mxu0 0.0
  %1201 = vmatprep.subr.mxu0 0.0
  %1202 = vmatpush1.msra.mxu0 0.0
  %1203 = vmatprep.subr.mxu0 0.0
  %1204 = vmatpush1.msra.mxu0 0.0
  %1205 = vmatprep.subr.mxu0 0.0
  %1206 = vmatpush1.msra.mxu0 0.0
  %1207 = vmatprep.subr.mxu0 0.0
  %1208 = vmatpush1.msra.mxu0 0.0
  %1209 = vmatprep.mubr.f32.mxu0 0.0
  %1210 = vmatmul.mubr.f32.gmra.mrb[0].mxu0 %v293
  %v1211 = vpop.f32.mrb[0].mxu0
  %v1212 = vadd.f32 0.0, %v1211
  %v1213 = vpop.f32.mrb[0].mxu0
  %v1214 = vadd.f32 0.0, %v1213
  %1215 = vmatprep.mubr.f32.mxu0 0.0
  %1216 = vmatmul.mubr.f32.gmra.mrb[0].mxu0 %v296
  %v1217 = vpop.f32.mrb[0].mxu0
  %v1218 = vadd.f32 0.0, %v1217
  %v1219 = vpop.f32.mrb[0].mxu0
  %v1220 = vadd.f32 0.0, %v1219
  %1221 = vmatprep.mubr.f32.mxu0 0.0
  %1222 = vmatmul.mubr.f32.gmra.mrb[0].mxu0 %v299
  %v1223 = vpop.f32.mrb[0].mxu0
  %v1224 = vadd.f32 0.0, %v1223
  %v1225 = vpop.f32.mrb[0].mxu0
  %v1226 = vadd.f32 0.0, %v1225
  %1227 = vmatprep.mubr.f32.mxu0 0.0
  %1228 = vmatmul.mubr.f32.gmra.mrb[0].mxu0 %v302
  %v1229 = vpop.f32.mrb[0].mxu0
  %v1230 = vadd.f32 0.0, %v1229
  %v1231 = vpop.f32.mrb[0].mxu0
  %v1232 = vadd.f32 0.0, %v1231
  %1233 = vmatprep.mubr.f32.mxu0 0.0
  %1234 = vmatmul.mubr.f32.gmra.mrb[0].mxu0 %v305
  %v1235 = vpop.f32.mrb[0].mxu0
  %v1236 = vadd.f32 0.0, %v1235
  %v1237 = vpop.f32.mrb[0].mxu0
  %v1238 = vadd.f32 0.0, %v1237
  %1239 = vmatprep.mubr.f32.mxu0 0.0
  %1240 = vmatmul.mubr.f32.gmra.mrb[0].mxu0 %v308
  %v1241 = vpop.f32.mrb[0].mxu0
  %v1242 = vadd.f32 0.0, %v1241
  %v1243 = vpop.f32.mrb[0].mxu0
  %v1244 = vadd.f32 0.0, %v1243
  %1245 = vmatprep.mubr.f32.mxu0 0.0
  %1246 = vmatmul.mubr.f32.gmra.mrb[0].mxu0 %v311
  %v1247 = vpop.f32.mrb[0].mxu0
  %v1248 = vadd.f32 0.0, %v1247
  %v1249 = vpop.f32.mrb[0].mxu0
  %v1250 = vadd.f32 0.0, %v1249
  %1251 = vmatprep.mubr.f32.mxu0 0.0
  %1252 = vmatmul.mubr.f32.gmra.mrb[0].mxu0 %v314
  %v1253 = vpop.f32.mrb[0].mxu0
  %v1254 = vadd.f32 0.0, %v1253
  %v1255 = vpop.f32.mrb[0].mxu0
  %v1256 = vadd.f32 0.0, %v1255
  %1257 = vmatprep.mubr.f32.mxu0 0.0
  %1258 = vmatmul.mubr.f32.gmra.mrb[0].mxu0 %v317
  %v1259 = vpop.f32.mrb[0].mxu0
  %v1260 = vadd.f32 0.0, %v1259
  %v1261 = vpop.f32.mrb[0].mxu0
  %v1262 = vadd.f32 0.0, %v1261
  %1263 = vmatprep.mubr.f32.mxu0 0.0
  %1264 = vmatmul.mubr.f32.gmra.mrb[0].mxu0 %v320
  %v1265 = vpop.f32.mrb[0].mxu0
  %v1266 = vadd.f32 0.0, %v1265
  %v1267 = vpop.f32.mrb[0].mxu0
  %v1268 = vadd.f32 0.0, %v1267
  %1269 = vmatprep.mubr.f32.mxu0 0.0
  %1270 = vmatmul.mubr.f32.gmra.mrb[0].mxu0 %v323
  %v1271 = vpop.f32.mrb[0].mxu0
  %v1272 = vadd.f32 0.0, %v1271
  %v1273 = vpop.f32.mrb[0].mxu0
  %v1274 = vadd.f32 0.0, %v1273
  %1275 = vmatprep.mubr.f32.mxu0 0.0
  %1276 = vmatmul.mubr.f32.gmra.mrb[0].mxu0 %v326
  %v1277 = vpop.f32.mrb[0].mxu0
  %v1278 = vadd.f32 0.0, %v1277
  %v1279 = vpop.f32.mrb[0].mxu0
  %v1280 = vadd.f32 0.0, %v1279
  %1281 = vmatprep.mubr.f32.mxu0 0.0
  %1282 = vmatmul.mubr.f32.gmra.mrb[0].mxu0 %v329
  %v1283 = vpop.f32.mrb[0].mxu0
  %v1284 = vadd.f32 0.0, %v1283
  %v1285 = vpop.f32.mrb[0].mxu0
  %v1286 = vadd.f32 0.0, %v1285
  %1287 = vmatprep.mubr.f32.mxu0 0.0
  %1288 = vmatmul.mubr.f32.gmra.mrb[0].mxu0 %v332
  %v1289 = vpop.f32.mrb[0].mxu0
  %v1290 = vadd.f32 0.0, %v1289
  %v1291 = vpop.f32.mrb[0].mxu0
  %v1292 = vadd.f32 0.0, %v1291
  %1293 = vmatprep.mubr.f32.mxu0 0.0
  %1294 = vmatmul.mubr.f32.gmra.mrb[0].mxu0 %v335
  %v1295 = vpop.f32.mrb[0].mxu0
  %v1296 = vadd.f32 0.0, %v1295
  %v1297 = vpop.f32.mrb[0].mxu0
  %v1298 = vadd.f32 0.0, %v1297
  %1299 = vmatprep.mubr.f32.mxu0 0.0
  %1300 = vmatmul.mubr.f32.gmra.mrb[0].mxu0 %v338
  %v1301 = vpop.f32.mrb[0].mxu0
  %v1302 = vadd.f32 0.0, %v1301
  %v1303 = vpop.f32.mrb[0].mxu0
  %v1304 = vadd.f32 0.0, %v1303
  %1305 = vdwg.mxu0
  %1306 = vmatprep.subr.mxu0 %v49
  %1307 = vmatpush1.msra.mxu0 %v48
  %1308 = vmatprep.subr.mxu0 %v77
  %1309 = vmatpush1.msra.mxu0 %v76
  %1310 = vmatprep.subr.mxu0 %v105
  %1311 = vmatpush1.msra.mxu0 %v104
  %1312 = vmatprep.subr.mxu0 %v133
  %1313 = vmatpush1.msra.mxu0 %v132
  %1314 = vmatprep.subr.mxu0 %v161
  %1315 = vmatpush1.msra.mxu0 %v160
  %1316 = vmatprep.subr.mxu0 %v189
  %1317 = vmatpush1.msra.mxu0 %v188
  %1318 = vmatprep.subr.mxu0 %v217
  %1319 = vmatpush1.msra.mxu0 %v216
  %1320 = vmatprep.subr.mxu0 %v245
  %1321 = vmatpush1.msra.mxu0 %v244
  %1322 = vmatprep.subr.mxu0 0.0
  %1323 = vmatpush1.msra.mxu0 0.0
  %1324 = vmatprep.subr.mxu0 0.0
  %1325 = vmatpush1.msra.mxu0 0.0
  %1326 = vmatprep.subr.mxu0 0.0
  %1327 = vmatpush1.msra.mxu0 0.0
  %1328 = vmatprep.subr.mxu0 0.0
  %1329 = vmatpush1.msra.mxu0 0.0
  %1330 = vmatprep.subr.mxu0 0.0
  %1331 = vmatpush1.msra.mxu0 0.0
  %1332 = vmatprep.subr.mxu0 0.0
  %1333 = vmatpush1.msra.mxu0 0.0
  %1334 = vmatprep.subr.mxu0 0.0
  %1335 = vmatpush1.msra.mxu0 0.0
  %1336 = vmatprep.subr.mxu0 0.0
  %1337 = vmatpush1.msra.mxu0 0.0
  %1338 = vmatprep.subr.mxu0 0.0
  %1339 = vmatpush1.msra.mxu0 0.0
  %1340 = vmatprep.subr.mxu0 0.0
  %1341 = vmatpush1.msra.mxu0 0.0
  %1342 = vmatprep.subr.mxu0 0.0
  %1343 = vmatpush1.msra.mxu0 0.0
  %1344 = vmatprep.subr.mxu0 0.0
  %1345 = vmatpush1.msra.mxu0 0.0
  %1346 = vmatprep.subr.mxu0 0.0
  %1347 = vmatpush1.msra.mxu0 0.0
  %1348 = vmatprep.subr.mxu0 0.0
  %1349 = vmatpush1.msra.mxu0 0.0
  %1350 = vmatprep.subr.mxu0 0.0
  %1351 = vmatpush1.msra.mxu0 0.0
  %1352 = vmatprep.subr.mxu0 0.0
  %1353 = vmatpush1.msra.mxu0 0.0
  %1354 = vmatprep.subr.mxu0 0.0
  %1355 = vmatpush1.msra.mxu0 0.0
  %1356 = vmatprep.subr.mxu0 0.0
  %1357 = vmatpush1.msra.mxu0 0.0
  %1358 = vmatprep.subr.mxu0 0.0
  %1359 = vmatpush1.msra.mxu0 0.0
  %1360 = vmatprep.subr.mxu0 0.0
  %1361 = vmatpush1.msra.mxu0 0.0
  %1362 = vmatprep.subr.mxu0 0.0
  %1363 = vmatpush1.msra.mxu0 0.0
  %1364 = vmatprep.subr.mxu0 0.0
  %1365 = vmatpush1.msra.mxu0 0.0
  %1366 = vmatprep.subr.mxu0 0.0
  %1367 = vmatpush1.msra.mxu0 0.0
  %1368 = vmatprep.subr.mxu0 0.0
  %1369 = vmatpush1.msra.mxu0 0.0
  %1370 = vmatprep.mubr.f32.mxu0 0.0
  %1371 = vmatmul.mubr.f32.gmra.mrb[0].mxu0 %v293
  %v1372 = vpop.f32.mrb[0].mxu0
  %v1373 = vadd.f32 0.0, %v1372
  %v1374 = vpop.f32.mrb[0].mxu0
  %v1375 = vadd.f32 0.0, %v1374
  %1376 = vmatprep.mubr.f32.mxu0 0.0
  %1377 = vmatmul.mubr.f32.gmra.mrb[0].mxu0 %v296
  %v1378 = vpop.f32.mrb[0].mxu0
  %v1379 = vadd.f32 0.0, %v1378
  %v1380 = vpop.f32.mrb[0].mxu0
  %v1381 = vadd.f32 0.0, %v1380
  %1382 = vmatprep.mubr.f32.mxu0 0.0
  %1383 = vmatmul.mubr.f32.gmra.mrb[0].mxu0 %v299
  %v1384 = vpop.f32.mrb[0].mxu0
  %v1385 = vadd.f32 0.0, %v1384
  %v1386 = vpop.f32.mrb[0].mxu0
  %v1387 = vadd.f32 0.0, %v1386
  %1388 = vmatprep.mubr.f32.mxu0 0.0
  %1389 = vmatmul.mubr.f32.gmra.mrb[0].mxu0 %v302
  %v1390 = vpop.f32.mrb[0].mxu0
  %v1391 = vadd.f32 0.0, %v1390
  %v1392 = vpop.f32.mrb[0].mxu0
  %v1393 = vadd.f32 0.0, %v1392
  %1394 = vmatprep.mubr.f32.mxu0 0.0
  %1395 = vmatmul.mubr.f32.gmra.mrb[0].mxu0 %v305
  %v1396 = vpop.f32.mrb[0].mxu0
  %v1397 = vadd.f32 0.0, %v1396
  %v1398 = vpop.f32.mrb[0].mxu0
  %v1399 = vadd.f32 0.0, %v1398
  %1400 = vmatprep.mubr.f32.mxu0 0.0
  %1401 = vmatmul.mubr.f32.gmra.mrb[0].mxu0 %v308
  %v1402 = vpop.f32.mrb[0].mxu0
  %v1403 = vadd.f32 0.0, %v1402
  %v1404 = vpop.f32.mrb[0].mxu0
  %v1405 = vadd.f32 0.0, %v1404
  %1406 = vmatprep.mubr.f32.mxu0 0.0
  %1407 = vmatmul.mubr.f32.gmra.mrb[0].mxu0 %v311
  %v1408 = vpop.f32.mrb[0].mxu0
  %v1409 = vadd.f32 0.0, %v1408
  %v1410 = vpop.f32.mrb[0].mxu0
  %v1411 = vadd.f32 0.0, %v1410
  %1412 = vmatprep.mubr.f32.mxu0 0.0
  %1413 = vmatmul.mubr.f32.gmra.mrb[0].mxu0 %v314
  %v1414 = vpop.f32.mrb[0].mxu0
  %v1415 = vadd.f32 0.0, %v1414
  %v1416 = vpop.f32.mrb[0].mxu0
  %v1417 = vadd.f32 0.0, %v1416
  %1418 = vmatprep.mubr.f32.mxu0 0.0
  %1419 = vmatmul.mubr.f32.gmra.mrb[0].mxu0 %v317
  %v1420 = vpop.f32.mrb[0].mxu0
  %v1421 = vadd.f32 0.0, %v1420
  %v1422 = vpop.f32.mrb[0].mxu0
  %v1423 = vadd.f32 0.0, %v1422
  %1424 = vmatprep.mubr.f32.mxu0 0.0
  %1425 = vmatmul.mubr.f32.gmra.mrb[0].mxu0 %v320
  %v1426 = vpop.f32.mrb[0].mxu0
  %v1427 = vadd.f32 0.0, %v1426
  %v1428 = vpop.f32.mrb[0].mxu0
  %v1429 = vadd.f32 0.0, %v1428
  %1430 = vmatprep.mubr.f32.mxu0 0.0
  %1431 = vmatmul.mubr.f32.gmra.mrb[0].mxu0 %v323
  %v1432 = vpop.f32.mrb[0].mxu0
  %v1433 = vadd.f32 0.0, %v1432
  %v1434 = vpop.f32.mrb[0].mxu0
  %v1435 = vadd.f32 0.0, %v1434
  %1436 = vmatprep.mubr.f32.mxu0 0.0
  %1437 = vmatmul.mubr.f32.gmra.mrb[0].mxu0 %v326
  %v1438 = vpop.f32.mrb[0].mxu0
  %v1439 = vadd.f32 0.0, %v1438
  %v1440 = vpop.f32.mrb[0].mxu0
  %v1441 = vadd.f32 0.0, %v1440
  %1442 = vmatprep.mubr.f32.mxu0 0.0
  %1443 = vmatmul.mubr.f32.gmra.mrb[0].mxu0 %v329
  %v1444 = vpop.f32.mrb[0].mxu0
  %v1445 = vadd.f32 0.0, %v1444
  %v1446 = vpop.f32.mrb[0].mxu0
  %v1447 = vadd.f32 0.0, %v1446
  %1448 = vmatprep.mubr.f32.mxu0 0.0
  %1449 = vmatmul.mubr.f32.gmra.mrb[0].mxu0 %v332
  %v1450 = vpop.f32.mrb[0].mxu0
  %v1451 = vadd.f32 0.0, %v1450
  %v1452 = vpop.f32.mrb[0].mxu0
  %v1453 = vadd.f32 0.0, %v1452
  %1454 = vmatprep.mubr.f32.mxu0 0.0
  %1455 = vmatmul.mubr.f32.gmra.mrb[0].mxu0 %v335
  %v1456 = vpop.f32.mrb[0].mxu0
  %v1457 = vadd.f32 0.0, %v1456
  %v1458 = vpop.f32.mrb[0].mxu0
  %v1459 = vadd.f32 0.0, %v1458
  %1460 = vmatprep.mubr.f32.mxu0 0.0
  %1461 = vmatmul.mubr.f32.gmra.mrb[0].mxu0 %v338
  %v1462 = vpop.f32.mrb[0].mxu0
  %v1463 = vadd.f32 0.0, %v1462
  %v1464 = vpop.f32.mrb[0].mxu0
  %v1465 = vadd.f32 0.0, %v1464
  %1466 = vdwg.mxu0
  %1467 = vmatprep.subr.mxu0 %v51
  %1468 = vmatpush1.msra.mxu0 %v50
  %1469 = vmatprep.subr.mxu0 %v79
  %1470 = vmatpush1.msra.mxu0 %v78
  %1471 = vmatprep.subr.mxu0 %v107
  %1472 = vmatpush1.msra.mxu0 %v106
  %1473 = vmatprep.subr.mxu0 %v135
  %1474 = vmatpush1.msra.mxu0 %v134
  %1475 = vmatprep.subr.mxu0 %v163
  %1476 = vmatpush1.msra.mxu0 %v162
  %1477 = vmatprep.subr.mxu0 %v191
  %1478 = vmatpush1.msra.mxu0 %v190
  %1479 = vmatprep.subr.mxu0 %v219
  %1480 = vmatpush1.msra.mxu0 %v218
  %1481 = vmatprep.subr.mxu0 %v247
  %1482 = vmatpush1.msra.mxu0 %v246
  %1483 = vmatprep.subr.mxu0 0.0
  %1484 = vmatpush1.msra.mxu0 0.0
  %1485 = vmatprep.subr.mxu0 0.0
  %1486 = vmatpush1.msra.mxu0 0.0
  %1487 = vmatprep.subr.mxu0 0.0
  %1488 = vmatpush1.msra.mxu0 0.0
  %1489 = vmatprep.subr.mxu0 0.0
  %1490 = vmatpush1.msra.mxu0 0.0
  %1491 = vmatprep.subr.mxu0 0.0
  %1492 = vmatpush1.msra.mxu0 0.0
  %1493 = vmatprep.subr.mxu0 0.0
  %1494 = vmatpush1.msra.mxu0 0.0
  %1495 = vmatprep.subr.mxu0 0.0
  %1496 = vmatpush1.msra.mxu0 0.0
  %1497 = vmatprep.subr.mxu0 0.0
  %1498 = vmatpush1.msra.mxu0 0.0
  %1499 = vmatprep.subr.mxu0 0.0
  %1500 = vmatpush1.msra.mxu0 0.0
  %1501 = vmatprep.subr.mxu0 0.0
  %1502 = vmatpush1.msra.mxu0 0.0
  %1503 = vmatprep.subr.mxu0 0.0
  %1504 = vmatpush1.msra.mxu0 0.0
  %1505 = vmatprep.subr.mxu0 0.0
  %1506 = vmatpush1.msra.mxu0 0.0
  %1507 = vmatprep.subr.mxu0 0.0
  %1508 = vmatpush1.msra.mxu0 0.0
  %1509 = vmatprep.subr.mxu0 0.0
  %1510 = vmatpush1.msra.mxu0 0.0
  %1511 = vmatprep.subr.mxu0 0.0
  %1512 = vmatpush1.msra.mxu0 0.0
  %1513 = vmatprep.subr.mxu0 0.0
  %1514 = vmatpush1.msra.mxu0 0.0
  %1515 = vmatprep.subr.mxu0 0.0
  %1516 = vmatpush1.msra.mxu0 0.0
  %1517 = vmatprep.subr.mxu0 0.0
  %1518 = vmatpush1.msra.mxu0 0.0
  %1519 = vmatprep.subr.mxu0 0.0
  %1520 = vmatpush1.msra.mxu0 0.0
  %1521 = vmatprep.subr.mxu0 0.0
  %1522 = vmatpush1.msra.mxu0 0.0
  %1523 = vmatprep.subr.mxu0 0.0
  %1524 = vmatpush1.msra.mxu0 0.0
  %1525 = vmatprep.subr.mxu0 0.0
  %1526 = vmatpush1.msra.mxu0 0.0
  %1527 = vmatprep.subr.mxu0 0.0
  %1528 = vmatpush1.msra.mxu0 0.0
  %1529 = vmatprep.subr.mxu0 0.0
  %1530 = vmatpush1.msra.mxu0 0.0
  %1531 = vmatprep.mubr.f32.mxu0 0.0
  %1532 = vmatmul.mubr.f32.gmra.mrb[0].mxu0 %v293
  %v1533 = vpop.f32.mrb[0].mxu0
  %v1534 = vadd.f32 0.0, %v1533
  %v1535 = vpop.f32.mrb[0].mxu0
  %v1536 = vadd.f32 0.0, %v1535
  %1537 = vmatprep.mubr.f32.mxu0 0.0
  %1538 = vmatmul.mubr.f32.gmra.mrb[0].mxu0 %v296
  %v1539 = vpop.f32.mrb[0].mxu0
  %v1540 = vadd.f32 0.0, %v1539
  %v1541 = vpop.f32.mrb[0].mxu0
  %v1542 = vadd.f32 0.0, %v1541
  %1543 = vmatprep.mubr.f32.mxu0 0.0
  %1544 = vmatmul.mubr.f32.gmra.mrb[0].mxu0 %v299
  %v1545 = vpop.f32.mrb[0].mxu0
  %v1546 = vadd.f32 0.0, %v1545
  %v1547 = vpop.f32.mrb[0].mxu0
  %v1548 = vadd.f32 0.0, %v1547
  %1549 = vmatprep.mubr.f32.mxu0 0.0
  %1550 = vmatmul.mubr.f32.gmra.mrb[0].mxu0 %v302
  %v1551 = vpop.f32.mrb[0].mxu0
  %v1552 = vadd.f32 0.0, %v1551
  %v1553 = vpop.f32.mrb[0].mxu0
  %v1554 = vadd.f32 0.0, %v1553
  %1555 = vmatprep.mubr.f32.mxu0 0.0
  %1556 = vmatmul.mubr.f32.gmra.mrb[0].mxu0 %v305
  %v1557 = vpop.f32.mrb[0].mxu0
  %v1558 = vadd.f32 0.0, %v1557
  %v1559 = vpop.f32.mrb[0].mxu0
  %v1560 = vadd.f32 0.0, %v1559
  %1561 = vmatprep.mubr.f32.mxu0 0.0
  %1562 = vmatmul.mubr.f32.gmra.mrb[0].mxu0 %v308
  %v1563 = vpop.f32.mrb[0].mxu0
  %v1564 = vadd.f32 0.0, %v1563
  %v1565 = vpop.f32.mrb[0].mxu0
  %v1566 = vadd.f32 0.0, %v1565
  %1567 = vmatprep.mubr.f32.mxu0 0.0
  %1568 = vmatmul.mubr.f32.gmra.mrb[0].mxu0 %v311
  %v1569 = vpop.f32.mrb[0].mxu0
  %v1570 = vadd.f32 0.0, %v1569
  %v1571 = vpop.f32.mrb[0].mxu0
  %v1572 = vadd.f32 0.0, %v1571
  %1573 = vmatprep.mubr.f32.mxu0 0.0
  %1574 = vmatmul.mubr.f32.gmra.mrb[0].mxu0 %v314
  %v1575 = vpop.f32.mrb[0].mxu0
  %v1576 = vadd.f32 0.0, %v1575
  %v1577 = vpop.f32.mrb[0].mxu0
  %v1578 = vadd.f32 0.0, %v1577
  %1579 = vmatprep.mubr.f32.mxu0 0.0
  %1580 = vmatmul.mubr.f32.gmra.mrb[0].mxu0 %v317
  %v1581 = vpop.f32.mrb[0].mxu0
  %v1582 = vadd.f32 0.0, %v1581
  %v1583 = vpop.f32.mrb[0].mxu0
  %v1584 = vadd.f32 0.0, %v1583
  %1585 = vmatprep.mubr.f32.mxu0 0.0
  %1586 = vmatmul.mubr.f32.gmra.mrb[0].mxu0 %v320
  %v1587 = vpop.f32.mrb[0].mxu0
  %v1588 = vadd.f32 0.0, %v1587
  %v1589 = vpop.f32.mrb[0].mxu0
  %v1590 = vadd.f32 0.0, %v1589
  %1591 = vmatprep.mubr.f32.mxu0 0.0
  %1592 = vmatmul.mubr.f32.gmra.mrb[0].mxu0 %v323
  %v1593 = vpop.f32.mrb[0].mxu0
  %v1594 = vadd.f32 0.0, %v1593
  %v1595 = vpop.f32.mrb[0].mxu0
  %v1596 = vadd.f32 0.0, %v1595
  %1597 = vmatprep.mubr.f32.mxu0 0.0
  %1598 = vmatmul.mubr.f32.gmra.mrb[0].mxu0 %v326
  %v1599 = vpop.f32.mrb[0].mxu0
  %v1600 = vadd.f32 0.0, %v1599
  %v1601 = vpop.f32.mrb[0].mxu0
  %v1602 = vadd.f32 0.0, %v1601
  %1603 = vmatprep.mubr.f32.mxu0 0.0
  %1604 = vmatmul.mubr.f32.gmra.mrb[0].mxu0 %v329
  %v1605 = vpop.f32.mrb[0].mxu0
  %v1606 = vadd.f32 0.0, %v1605
  %v1607 = vpop.f32.mrb[0].mxu0
  %v1608 = vadd.f32 0.0, %v1607
  %1609 = vmatprep.mubr.f32.mxu0 0.0
  %1610 = vmatmul.mubr.f32.gmra.mrb[0].mxu0 %v332
  %v1611 = vpop.f32.mrb[0].mxu0
  %v1612 = vadd.f32 0.0, %v1611
  %v1613 = vpop.f32.mrb[0].mxu0
  %v1614 = vadd.f32 0.0, %v1613
  %1615 = vmatprep.mubr.f32.mxu0 0.0
  %1616 = vmatmul.mubr.f32.gmra.mrb[0].mxu0 %v335
  %v1617 = vpop.f32.mrb[0].mxu0
  %v1618 = vadd.f32 0.0, %v1617
  %v1619 = vpop.f32.mrb[0].mxu0
  %v1620 = vadd.f32 0.0, %v1619
  %1621 = vmatprep.mubr.f32.mxu0 0.0
  %1622 = vmatmul.mubr.f32.gmra.mrb[0].mxu0 %v338
  %v1623 = vpop.f32.mrb[0].mxu0
  %v1624 = vadd.f32 0.0, %v1623
  %v1625 = vpop.f32.mrb[0].mxu0
  %v1626 = vadd.f32 0.0, %v1625
  %1627 = vdwg.mxu0
  %1628 = vmatprep.subr.mxu0 %v53
  %1629 = vmatpush1.msra.mxu0 %v52
  %1630 = vmatprep.subr.mxu0 %v81
  %1631 = vmatpush1.msra.mxu0 %v80
  %1632 = vmatprep.subr.mxu0 %v109
  %1633 = vmatpush1.msra.mxu0 %v108
  %1634 = vmatprep.subr.mxu0 %v137
  %1635 = vmatpush1.msra.mxu0 %v136
  %1636 = vmatprep.subr.mxu0 %v165
  %1637 = vmatpush1.msra.mxu0 %v164
  %1638 = vmatprep.subr.mxu0 %v193
  %1639 = vmatpush1.msra.mxu0 %v192
  %1640 = vmatprep.subr.mxu0 %v221
  %1641 = vmatpush1.msra.mxu0 %v220
  %1642 = vmatprep.subr.mxu0 %v249
  %1643 = vmatpush1.msra.mxu0 %v248
  %1644 = vmatprep.subr.mxu0 0.0
  %1645 = vmatpush1.msra.mxu0 0.0
  %1646 = vmatprep.subr.mxu0 0.0
  %1647 = vmatpush1.msra.mxu0 0.0
  %1648 = vmatprep.subr.mxu0 0.0
  %1649 = vmatpush1.msra.mxu0 0.0
  %1650 = vmatprep.subr.mxu0 0.0
  %1651 = vmatpush1.msra.mxu0 0.0
  %1652 = vmatprep.subr.mxu0 0.0
  %1653 = vmatpush1.msra.mxu0 0.0
  %1654 = vmatprep.subr.mxu0 0.0
  %1655 = vmatpush1.msra.mxu0 0.0
  %1656 = vmatprep.subr.mxu0 0.0
  %1657 = vmatpush1.msra.mxu0 0.0
  %1658 = vmatprep.subr.mxu0 0.0
  %1659 = vmatpush1.msra.mxu0 0.0
  %1660 = vmatprep.subr.mxu0 0.0
  %1661 = vmatpush1.msra.mxu0 0.0
  %1662 = vmatprep.subr.mxu0 0.0
  %1663 = vmatpush1.msra.mxu0 0.0
  %1664 = vmatprep.subr.mxu0 0.0
  %1665 = vmatpush1.msra.mxu0 0.0
  %1666 = vmatprep.subr.mxu0 0.0
  %1667 = vmatpush1.msra.mxu0 0.0
  %1668 = vmatprep.subr.mxu0 0.0
  %1669 = vmatpush1.msra.mxu0 0.0
  %1670 = vmatprep.subr.mxu0 0.0
  %1671 = vmatpush1.msra.mxu0 0.0
  %1672 = vmatprep.subr.mxu0 0.0
  %1673 = vmatpush1.msra.mxu0 0.0
  %1674 = vmatprep.subr.mxu0 0.0
  %1675 = vmatpush1.msra.mxu0 0.0
  %1676 = vmatprep.subr.mxu0 0.0
  %1677 = vmatpush1.msra.mxu0 0.0
  %1678 = vmatprep.subr.mxu0 0.0
  %1679 = vmatpush1.msra.mxu0 0.0
  %1680 = vmatprep.subr.mxu0 0.0
  %1681 = vmatpush1.msra.mxu0 0.0
  %1682 = vmatprep.subr.mxu0 0.0
  %1683 = vmatpush1.msra.mxu0 0.0
  %1684 = vmatprep.subr.mxu0 0.0
  %1685 = vmatpush1.msra.mxu0 0.0
  %1686 = vmatprep.subr.mxu0 0.0
  %1687 = vmatpush1.msra.mxu0 0.0
  %1688 = vmatprep.subr.mxu0 0.0
  %1689 = vmatpush1.msra.mxu0 0.0
  %1690 = vmatprep.subr.mxu0 0.0
  %1691 = vmatpush1.msra.mxu0 0.0
  %1692 = vmatprep.mubr.f32.mxu0 0.0
  %1693 = vmatmul.mubr.f32.gmra.mrb[0].mxu0 %v293
  %v1694 = vpop.f32.mrb[0].mxu0
  %v1695 = vadd.f32 0.0, %v1694
  %v1696 = vpop.f32.mrb[0].mxu0
  %v1697 = vadd.f32 0.0, %v1696
  %1698 = vmatprep.mubr.f32.mxu0 0.0
  %1699 = vmatmul.mubr.f32.gmra.mrb[0].mxu0 %v296
  %v1700 = vpop.f32.mrb[0].mxu0
  %v1701 = vadd.f32 0.0, %v1700
  %v1702 = vpop.f32.mrb[0].mxu0
  %v1703 = vadd.f32 0.0, %v1702
  %1704 = vmatprep.mubr.f32.mxu0 0.0
  %1705 = vmatmul.mubr.f32.gmra.mrb[0].mxu0 %v299
  %v1706 = vpop.f32.mrb[0].mxu0
  %v1707 = vadd.f32 0.0, %v1706
  %v1708 = vpop.f32.mrb[0].mxu0
  %v1709 = vadd.f32 0.0, %v1708
  %1710 = vmatprep.mubr.f32.mxu0 0.0
  %1711 = vmatmul.mubr.f32.gmra.mrb[0].mxu0 %v302
  %v1712 = vpop.f32.mrb[0].mxu0
  %v1713 = vadd.f32 0.0, %v1712
  %v1714 = vpop.f32.mrb[0].mxu0
  %v1715 = vadd.f32 0.0, %v1714
  %1716 = vmatprep.mubr.f32.mxu0 0.0
  %1717 = vmatmul.mubr.f32.gmra.mrb[0].mxu0 %v305
  %v1718 = vpop.f32.mrb[0].mxu0
  %v1719 = vadd.f32 0.0, %v1718
  %v1720 = vpop.f32.mrb[0].mxu0
  %v1721 = vadd.f32 0.0, %v1720
  %1722 = vmatprep.mubr.f32.mxu0 0.0
  %1723 = vmatmul.mubr.f32.gmra.mrb[0].mxu0 %v308
  %v1724 = vpop.f32.mrb[0].mxu0
  %v1725 = vadd.f32 0.0, %v1724
  %v1726 = vpop.f32.mrb[0].mxu0
  %v1727 = vadd.f32 0.0, %v1726
  %1728 = vmatprep.mubr.f32.mxu0 0.0
  %1729 = vmatmul.mubr.f32.gmra.mrb[0].mxu0 %v311
  %v1730 = vpop.f32.mrb[0].mxu0
  %v1731 = vadd.f32 0.0, %v1730
  %v1732 = vpop.f32.mrb[0].mxu0
  %v1733 = vadd.f32 0.0, %v1732
  %1734 = vmatprep.mubr.f32.mxu0 0.0
  %1735 = vmatmul.mubr.f32.gmra.mrb[0].mxu0 %v314
  %v1736 = vpop.f32.mrb[0].mxu0
  %v1737 = vadd.f32 0.0, %v1736
  %v1738 = vpop.f32.mrb[0].mxu0
  %v1739 = vadd.f32 0.0, %v1738
  %1740 = vmatprep.mubr.f32.mxu0 0.0
  %1741 = vmatmul.mubr.f32.gmra.mrb[0].mxu0 %v317
  %v1742 = vpop.f32.mrb[0].mxu0
  %v1743 = vadd.f32 0.0, %v1742
  %v1744 = vpop.f32.mrb[0].mxu0
  %v1745 = vadd.f32 0.0, %v1744
  %1746 = vmatprep.mubr.f32.mxu0 0.0
  %1747 = vmatmul.mubr.f32.gmra.mrb[0].mxu0 %v320
  %v1748 = vpop.f32.mrb[0].mxu0
  %v1749 = vadd.f32 0.0, %v1748
  %v1750 = vpop.f32.mrb[0].mxu0
  %v1751 = vadd.f32 0.0, %v1750
  %1752 = vmatprep.mubr.f32.mxu0 0.0
  %1753 = vmatmul.mubr.f32.gmra.mrb[0].mxu0 %v323
  %v1754 = vpop.f32.mrb[0].mxu0
  %v1755 = vadd.f32 0.0, %v1754
  %v1756 = vpop.f32.mrb[0].mxu0
  %v1757 = vadd.f32 0.0, %v1756
  %1758 = vmatprep.mubr.f32.mxu0 0.0
  %1759 = vmatmul.mubr.f32.gmra.mrb[0].mxu0 %v326
  %v1760 = vpop.f32.mrb[0].mxu0
  %v1761 = vadd.f32 0.0, %v1760
  %v1762 = vpop.f32.mrb[0].mxu0
  %v1763 = vadd.f32 0.0, %v1762
  %1764 = vmatprep.mubr.f32.mxu0 0.0
  %1765 = vmatmul.mubr.f32.gmra.mrb[0].mxu0 %v329
  %v1766 = vpop.f32.mrb[0].mxu0
  %v1767 = vadd.f32 0.0, %v1766
  %v1768 = vpop.f32.mrb[0].mxu0
  %v1769 = vadd.f32 0.0, %v1768
  %1770 = vmatprep.mubr.f32.mxu0 0.0
  %1771 = vmatmul.mubr.f32.gmra.mrb[0].mxu0 %v332
  %v1772 = vpop.f32.mrb[0].mxu0
  %v1773 = vadd.f32 0.0, %v1772
  %v1774 = vpop.f32.mrb[0].mxu0
  %v1775 = vadd.f32 0.0, %v1774
  %1776 = vmatprep.mubr.f32.mxu0 0.0
  %1777 = vmatmul.mubr.f32.gmra.mrb[0].mxu0 %v335
  %v1778 = vpop.f32.mrb[0].mxu0
  %v1779 = vadd.f32 0.0, %v1778
  %v1780 = vpop.f32.mrb[0].mxu0
  %v1781 = vadd.f32 0.0, %v1780
  %1782 = vmatprep.mubr.f32.mxu0 0.0
  %1783 = vmatmul.mubr.f32.gmra.mrb[0].mxu0 %v338
  %v1784 = vpop.f32.mrb[0].mxu0
  %v1785 = vadd.f32 0.0, %v1784
  %v1786 = vpop.f32.mrb[0].mxu0
  %v1787 = vadd.f32 0.0, %v1786
  %1788 = vdwg.mxu0
  %1789 = vmatprep.subr.mxu0 %v55
  %1790 = vmatpush1.msra.mxu0 %v54
  %1791 = vmatprep.subr.mxu0 %v83
  %1792 = vmatpush1.msra.mxu0 %v82
  %1793 = vmatprep.subr.mxu0 %v111
  %1794 = vmatpush1.msra.mxu0 %v110
  %1795 = vmatprep.subr.mxu0 %v139
  %1796 = vmatpush1.msra.mxu0 %v138
  %1797 = vmatprep.subr.mxu0 %v167
  %1798 = vmatpush1.msra.mxu0 %v166
  %1799 = vmatprep.subr.mxu0 %v195
  %1800 = vmatpush1.msra.mxu0 %v194
  %1801 = vmatprep.subr.mxu0 %v223
  %1802 = vmatpush1.msra.mxu0 %v222
  %1803 = vmatprep.subr.mxu0 %v251
  %1804 = vmatpush1.msra.mxu0 %v250
  %1805 = vmatprep.subr.mxu0 0.0
  %1806 = vmatpush1.msra.mxu0 0.0
  %1807 = vmatprep.subr.mxu0 0.0
  %1808 = vmatpush1.msra.mxu0 0.0
  %1809 = vmatprep.subr.mxu0 0.0
  %1810 = vmatpush1.msra.mxu0 0.0
  %1811 = vmatprep.subr.mxu0 0.0
  %1812 = vmatpush1.msra.mxu0 0.0
  %1813 = vmatprep.subr.mxu0 0.0
  %1814 = vmatpush1.msra.mxu0 0.0
  %1815 = vmatprep.subr.mxu0 0.0
  %1816 = vmatpush1.msra.mxu0 0.0
  %1817 = vmatprep.subr.mxu0 0.0
  %1818 = vmatpush1.msra.mxu0 0.0
  %1819 = vmatprep.subr.mxu0 0.0
  %1820 = vmatpush1.msra.mxu0 0.0
  %1821 = vmatprep.subr.mxu0 0.0
  %1822 = vmatpush1.msra.mxu0 0.0
  %1823 = vmatprep.subr.mxu0 0.0
  %1824 = vmatpush1.msra.mxu0 0.0
  %1825 = vmatprep.subr.mxu0 0.0
  %1826 = vmatpush1.msra.mxu0 0.0
  %1827 = vmatprep.subr.mxu0 0.0
  %1828 = vmatpush1.msra.mxu0 0.0
  %1829 = vmatprep.subr.mxu0 0.0
  %1830 = vmatpush1.msra.mxu0 0.0
  %1831 = vmatprep.subr.mxu0 0.0
  %1832 = vmatpush1.msra.mxu0 0.0
  %1833 = vmatprep.subr.mxu0 0.0
  %1834 = vmatpush1.msra.mxu0 0.0
  %1835 = vmatprep.subr.mxu0 0.0
  %1836 = vmatpush1.msra.mxu0 0.0
  %1837 = vmatprep.subr.mxu0 0.0
  %1838 = vmatpush1.msra.mxu0 0.0
  %1839 = vmatprep.subr.mxu0 0.0
  %1840 = vmatpush1.msra.mxu0 0.0
  %1841 = vmatprep.subr.mxu0 0.0
  %1842 = vmatpush1.msra.mxu0 0.0
  %1843 = vmatprep.subr.mxu0 0.0
  %1844 = vmatpush1.msra.mxu0 0.0
  %1845 = vmatprep.subr.mxu0 0.0
  %1846 = vmatpush1.msra.mxu0 0.0
  %1847 = vmatprep.subr.mxu0 0.0
  %1848 = vmatpush1.msra.mxu0 0.0
  %1849 = vmatprep.subr.mxu0 0.0
  %1850 = vmatpush1.msra.mxu0 0.0
  %1851 = vmatprep.subr.mxu0 0.0
  %1852 = vmatpush1.msra.mxu0 0.0
  %1853 = vmatprep.mubr.f32.mxu0 0.0
  %1854 = vmatmul.mubr.f32.gmra.mrb[0].mxu0 %v293
  %v1855 = vpop.f32.mrb[0].mxu0
  %v1856 = vadd.f32 0.0, %v1855
  %v1857 = vpop.f32.mrb[0].mxu0
  %v1858 = vadd.f32 0.0, %v1857
  %1859 = vmatprep.mubr.f32.mxu0 0.0
  %1860 = vmatmul.mubr.f32.gmra.mrb[0].mxu0 %v296
  %v1861 = vpop.f32.mrb[0].mxu0
  %v1862 = vadd.f32 0.0, %v1861
  %v1863 = vpop.f32.mrb[0].mxu0
  %v1864 = vadd.f32 0.0, %v1863
  %1865 = vmatprep.mubr.f32.mxu0 0.0
  %1866 = vmatmul.mubr.f32.gmra.mrb[0].mxu0 %v299
  %v1867 = vpop.f32.mrb[0].mxu0
  %v1868 = vadd.f32 0.0, %v1867
  %v1869 = vpop.f32.mrb[0].mxu0
  %v1870 = vadd.f32 0.0, %v1869
  %1871 = vmatprep.mubr.f32.mxu0 0.0
  %1872 = vmatmul.mubr.f32.gmra.mrb[0].mxu0 %v302
  %v1873 = vpop.f32.mrb[0].mxu0
  %v1874 = vadd.f32 0.0, %v1873
  %v1875 = vpop.f32.mrb[0].mxu0
  %v1876 = vadd.f32 0.0, %v1875
  %1877 = vmatprep.mubr.f32.mxu0 0.0
  %1878 = vmatmul.mubr.f32.gmra.mrb[0].mxu0 %v305
  %v1879 = vpop.f32.mrb[0].mxu0
  %v1880 = vadd.f32 0.0, %v1879
  %v1881 = vpop.f32.mrb[0].mxu0
  %v1882 = vadd.f32 0.0, %v1881
  %1883 = vmatprep.mubr.f32.mxu0 0.0
  %1884 = vmatmul.mubr.f32.gmra.mrb[0].mxu0 %v308
  %v1885 = vpop.f32.mrb[0].mxu0
  %v1886 = vadd.f32 0.0, %v1885
  %v1887 = vpop.f32.mrb[0].mxu0
  %v1888 = vadd.f32 0.0, %v1887
  %1889 = vmatprep.mubr.f32.mxu0 0.0
  %1890 = vmatmul.mubr.f32.gmra.mrb[0].mxu0 %v311
  %v1891 = vpop.f32.mrb[0].mxu0
  %v1892 = vadd.f32 0.0, %v1891
  %v1893 = vpop.f32.mrb[0].mxu0
  %v1894 = vadd.f32 0.0, %v1893
  %1895 = vmatprep.mubr.f32.mxu0 0.0
  %1896 = vmatmul.mubr.f32.gmra.mrb[0].mxu0 %v314
  %v1897 = vpop.f32.mrb[0].mxu0
  %v1898 = vadd.f32 0.0, %v1897
  %v1899 = vpop.f32.mrb[0].mxu0
  %v1900 = vadd.f32 0.0, %v1899
  %1901 = vmatprep.mubr.f32.mxu0 0.0
  %1902 = vmatmul.mubr.f32.gmra.mrb[0].mxu0 %v317
  %v1903 = vpop.f32.mrb[0].mxu0
  %v1904 = vadd.f32 0.0, %v1903
  %v1905 = vpop.f32.mrb[0].mxu0
  %v1906 = vadd.f32 0.0, %v1905
  %1907 = vmatprep.mubr.f32.mxu0 0.0
  %1908 = vmatmul.mubr.f32.gmra.mrb[0].mxu0 %v320
  %v1909 = vpop.f32.mrb[0].mxu0
  %v1910 = vadd.f32 0.0, %v1909
  %v1911 = vpop.f32.mrb[0].mxu0
  %v1912 = vadd.f32 0.0, %v1911
  %1913 = vmatprep.mubr.f32.mxu0 0.0
  %1914 = vmatmul.mubr.f32.gmra.mrb[0].mxu0 %v323
  %v1915 = vpop.f32.mrb[0].mxu0
  %v1916 = vadd.f32 0.0, %v1915
  %v1917 = vpop.f32.mrb[0].mxu0
  %v1918 = vadd.f32 0.0, %v1917
  %1919 = vmatprep.mubr.f32.mxu0 0.0
  %1920 = vmatmul.mubr.f32.gmra.mrb[0].mxu0 %v326
  %v1921 = vpop.f32.mrb[0].mxu0
  %v1922 = vadd.f32 0.0, %v1921
  %v1923 = vpop.f32.mrb[0].mxu0
  %v1924 = vadd.f32 0.0, %v1923
  %1925 = vmatprep.mubr.f32.mxu0 0.0
  %1926 = vmatmul.mubr.f32.gmra.mrb[0].mxu0 %v329
  %v1927 = vpop.f32.mrb[0].mxu0
  %v1928 = vadd.f32 0.0, %v1927
  %v1929 = vpop.f32.mrb[0].mxu0
  %v1930 = vadd.f32 0.0, %v1929
  %1931 = vmatprep.mubr.f32.mxu0 0.0
  %1932 = vmatmul.mubr.f32.gmra.mrb[0].mxu0 %v332
  %v1933 = vpop.f32.mrb[0].mxu0
  %v1934 = vadd.f32 0.0, %v1933
  %v1935 = vpop.f32.mrb[0].mxu0
  %v1936 = vadd.f32 0.0, %v1935
  %1937 = vmatprep.mubr.f32.mxu0 0.0
  %1938 = vmatmul.mubr.f32.gmra.mrb[0].mxu0 %v335
  %v1939 = vpop.f32.mrb[0].mxu0
  %v1940 = vadd.f32 0.0, %v1939
  %v1941 = vpop.f32.mrb[0].mxu0
  %v1942 = vadd.f32 0.0, %v1941
  %1943 = vmatprep.mubr.f32.mxu0 0.0
  %1944 = vmatmul.mubr.f32.gmra.mrb[0].mxu0 %v338
  %v1945 = vpop.f32.mrb[0].mxu0
  %v1946 = vadd.f32 0.0, %v1945
  %v1947 = vpop.f32.mrb[0].mxu0
  %v1948 = vadd.f32 0.0, %v1947
  %1949 = vdwg.mxu0
  %1950 = vmatprep.subr.mxu0 %v57
  %1951 = vmatpush1.msra.mxu0 %v56
  %1952 = vmatprep.subr.mxu0 %v85
  %1953 = vmatpush1.msra.mxu0 %v84
  %1954 = vmatprep.subr.mxu0 %v113
  %1955 = vmatpush1.msra.mxu0 %v112
  %1956 = vmatprep.subr.mxu0 %v141
  %1957 = vmatpush1.msra.mxu0 %v140
  %1958 = vmatprep.subr.mxu0 %v169
  %1959 = vmatpush1.msra.mxu0 %v168
  %1960 = vmatprep.subr.mxu0 %v197
  %1961 = vmatpush1.msra.mxu0 %v196
  %1962 = vmatprep.subr.mxu0 %v225
  %1963 = vmatpush1.msra.mxu0 %v224
  %1964 = vmatprep.subr.mxu0 %v253
  %1965 = vmatpush1.msra.mxu0 %v252
  %1966 = vmatprep.subr.mxu0 0.0
  %1967 = vmatpush1.msra.mxu0 0.0
  %1968 = vmatprep.subr.mxu0 0.0
  %1969 = vmatpush1.msra.mxu0 0.0
  %1970 = vmatprep.subr.mxu0 0.0
  %1971 = vmatpush1.msra.mxu0 0.0
  %1972 = vmatprep.subr.mxu0 0.0
  %1973 = vmatpush1.msra.mxu0 0.0
  %1974 = vmatprep.subr.mxu0 0.0
  %1975 = vmatpush1.msra.mxu0 0.0
  %1976 = vmatprep.subr.mxu0 0.0
  %1977 = vmatpush1.msra.mxu0 0.0
  %1978 = vmatprep.subr.mxu0 0.0
  %1979 = vmatpush1.msra.mxu0 0.0
  %1980 = vmatprep.subr.mxu0 0.0
  %1981 = vmatpush1.msra.mxu0 0.0
  %1982 = vmatprep.subr.mxu0 0.0
  %1983 = vmatpush1.msra.mxu0 0.0
  %1984 = vmatprep.subr.mxu0 0.0
  %1985 = vmatpush1.msra.mxu0 0.0
  %1986 = vmatprep.subr.mxu0 0.0
  %1987 = vmatpush1.msra.mxu0 0.0
  %1988 = vmatprep.subr.mxu0 0.0
  %1989 = vmatpush1.msra.mxu0 0.0
  %1990 = vmatprep.subr.mxu0 0.0
  %1991 = vmatpush1.msra.mxu0 0.0
  %1992 = vmatprep.subr.mxu0 0.0
  %1993 = vmatpush1.msra.mxu0 0.0
  %1994 = vmatprep.subr.mxu0 0.0
  %1995 = vmatpush1.msra.mxu0 0.0
  %1996 = vmatprep.subr.mxu0 0.0
  %1997 = vmatpush1.msra.mxu0 0.0
  %1998 = vmatprep.subr.mxu0 0.0
  %1999 = vmatpush1.msra.mxu0 0.0
  %2000 = vmatprep.subr.mxu0 0.0
  %2001 = vmatpush1.msra.mxu0 0.0
  %2002 = vmatprep.subr.mxu0 0.0
  %2003 = vmatpush1.msra.mxu0 0.0
  %2004 = vmatprep.subr.mxu0 0.0
  %2005 = vmatpush1.msra.mxu0 0.0
  %2006 = vmatprep.subr.mxu0 0.0
  %2007 = vmatpush1.msra.mxu0 0.0
  %2008 = vmatprep.subr.mxu0 0.0
  %2009 = vmatpush1.msra.mxu0 0.0
  %2010 = vmatprep.subr.mxu0 0.0
  %2011 = vmatpush1.msra.mxu0 0.0
  %2012 = vmatprep.subr.mxu0 0.0
  %2013 = vmatpush1.msra.mxu0 0.0
  %2014 = vmatprep.mubr.f32.mxu0 0.0
  %2015 = vmatmul.mubr.f32.gmra.mrb[0].mxu0 %v293
  %v2016 = vpop.f32.mrb[0].mxu0
  %v2017 = vadd.f32 0.0, %v2016
  %v2018 = vpop.f32.mrb[0].mxu0
  %v2019 = vadd.f32 0.0, %v2018
  %2020 = vmatprep.mubr.f32.mxu0 0.0
  %2021 = vmatmul.mubr.f32.gmra.mrb[0].mxu0 %v296
  %v2022 = vpop.f32.mrb[0].mxu0
  %v2023 = vadd.f32 0.0, %v2022
  %v2024 = vpop.f32.mrb[0].mxu0
  %v2025 = vadd.f32 0.0, %v2024
  %2026 = vmatprep.mubr.f32.mxu0 0.0
  %2027 = vmatmul.mubr.f32.gmra.mrb[0].mxu0 %v299
  %v2028 = vpop.f32.mrb[0].mxu0
  %v2029 = vadd.f32 0.0, %v2028
  %v2030 = vpop.f32.mrb[0].mxu0
  %v2031 = vadd.f32 0.0, %v2030
  %2032 = vmatprep.mubr.f32.mxu0 0.0
  %2033 = vmatmul.mubr.f32.gmra.mrb[0].mxu0 %v302
  %v2034 = vpop.f32.mrb[0].mxu0
  %v2035 = vadd.f32 0.0, %v2034
  %v2036 = vpop.f32.mrb[0].mxu0
  %v2037 = vadd.f32 0.0, %v2036
  %2038 = vmatprep.mubr.f32.mxu0 0.0
  %2039 = vmatmul.mubr.f32.gmra.mrb[0].mxu0 %v305
  %v2040 = vpop.f32.mrb[0].mxu0
  %v2041 = vadd.f32 0.0, %v2040
  %v2042 = vpop.f32.mrb[0].mxu0
  %v2043 = vadd.f32 0.0, %v2042
  %2044 = vmatprep.mubr.f32.mxu0 0.0
  %2045 = vmatmul.mubr.f32.gmra.mrb[0].mxu0 %v308
  %v2046 = vpop.f32.mrb[0].mxu0
  %v2047 = vadd.f32 0.0, %v2046
  %v2048 = vpop.f32.mrb[0].mxu0
  %v2049 = vadd.f32 0.0, %v2048
  %2050 = vmatprep.mubr.f32.mxu0 0.0
  %2051 = vmatmul.mubr.f32.gmra.mrb[0].mxu0 %v311
  %v2052 = vpop.f32.mrb[0].mxu0
  %v2053 = vadd.f32 0.0, %v2052
  %v2054 = vpop.f32.mrb[0].mxu0
  %v2055 = vadd.f32 0.0, %v2054
  %2056 = vmatprep.mubr.f32.mxu0 0.0
  %2057 = vmatmul.mubr.f32.gmra.mrb[0].mxu0 %v314
  %v2058 = vpop.f32.mrb[0].mxu0
  %v2059 = vadd.f32 0.0, %v2058
  %v2060 = vpop.f32.mrb[0].mxu0
  %v2061 = vadd.f32 0.0, %v2060
  %2062 = vmatprep.mubr.f32.mxu0 0.0
  %2063 = vmatmul.mubr.f32.gmra.mrb[0].mxu0 %v317
  %v2064 = vpop.f32.mrb[0].mxu0
  %v2065 = vadd.f32 0.0, %v2064
  %v2066 = vpop.f32.mrb[0].mxu0
  %v2067 = vadd.f32 0.0, %v2066
  %2068 = vmatprep.mubr.f32.mxu0 0.0
  %2069 = vmatmul.mubr.f32.gmra.mrb[0].mxu0 %v320
  %v2070 = vpop.f32.mrb[0].mxu0
  %v2071 = vadd.f32 0.0, %v2070
  %v2072 = vpop.f32.mrb[0].mxu0
  %v2073 = vadd.f32 0.0, %v2072
  %2074 = vmatprep.mubr.f32.mxu0 0.0
  %2075 = vmatmul.mubr.f32.gmra.mrb[0].mxu0 %v323
  %v2076 = vpop.f32.mrb[0].mxu0
  %v2077 = vadd.f32 0.0, %v2076
  %v2078 = vpop.f32.mrb[0].mxu0
  %v2079 = vadd.f32 0.0, %v2078
  %2080 = vmatprep.mubr.f32.mxu0 0.0
  %2081 = vmatmul.mubr.f32.gmra.mrb[0].mxu0 %v326
  %v2082 = vpop.f32.mrb[0].mxu0
  %v2083 = vadd.f32 0.0, %v2082
  %v2084 = vpop.f32.mrb[0].mxu0
  %v2085 = vadd.f32 0.0, %v2084
  %2086 = vmatprep.mubr.f32.mxu0 0.0
  %2087 = vmatmul.mubr.f32.gmra.mrb[0].mxu0 %v329
  %v2088 = vpop.f32.mrb[0].mxu0
  %v2089 = vadd.f32 0.0, %v2088
  %v2090 = vpop.f32.mrb[0].mxu0
  %v2091 = vadd.f32 0.0, %v2090
  %2092 = vmatprep.mubr.f32.mxu0 0.0
  %2093 = vmatmul.mubr.f32.gmra.mrb[0].mxu0 %v332
  %v2094 = vpop.f32.mrb[0].mxu0
  %v2095 = vadd.f32 0.0, %v2094
  %v2096 = vpop.f32.mrb[0].mxu0
  %v2097 = vadd.f32 0.0, %v2096
  %2098 = vmatprep.mubr.f32.mxu0 0.0
  %2099 = vmatmul.mubr.f32.gmra.mrb[0].mxu0 %v335
  %v2100 = vpop.f32.mrb[0].mxu0
  %v2101 = vadd.f32 0.0, %v2100
  %v2102 = vpop.f32.mrb[0].mxu0
  %v2103 = vadd.f32 0.0, %v2102
  %2104 = vmatprep.mubr.f32.mxu0 0.0
  %2105 = vmatmul.mubr.f32.gmra.mrb[0].mxu0 %v338
  %v2106 = vpop.f32.mrb[0].mxu0
  %v2107 = vadd.f32 0.0, %v2106
  %v2108 = vpop.f32.mrb[0].mxu0
  %v2109 = vadd.f32 0.0, %v2108
  %2110 = vdwg.mxu0
  %2111 = vmatprep.subr.mxu0 %v59
  %2112 = vmatpush1.msra.mxu0 %v58
  %2113 = vmatprep.subr.mxu0 %v87
  %2114 = vmatpush1.msra.mxu0 %v86
  %2115 = vmatprep.subr.mxu0 %v115
  %2116 = vmatpush1.msra.mxu0 %v114
  %2117 = vmatprep.subr.mxu0 %v143
  %2118 = vmatpush1.msra.mxu0 %v142
  %2119 = vmatprep.subr.mxu0 %v171
  %2120 = vmatpush1.msra.mxu0 %v170
  %2121 = vmatprep.subr.mxu0 %v199
  %2122 = vmatpush1.msra.mxu0 %v198
  %2123 = vmatprep.subr.mxu0 %v227
  %2124 = vmatpush1.msra.mxu0 %v226
  %2125 = vmatprep.subr.mxu0 %v255
  %2126 = vmatpush1.msra.mxu0 %v254
  %2127 = vmatprep.subr.mxu0 0.0
  %2128 = vmatpush1.msra.mxu0 0.0
  %2129 = vmatprep.subr.mxu0 0.0
  %2130 = vmatpush1.msra.mxu0 0.0
  %2131 = vmatprep.subr.mxu0 0.0
  %2132 = vmatpush1.msra.mxu0 0.0
  %2133 = vmatprep.subr.mxu0 0.0
  %2134 = vmatpush1.msra.mxu0 0.0
  %2135 = vmatprep.subr.mxu0 0.0
  %2136 = vmatpush1.msra.mxu0 0.0
  %2137 = vmatprep.subr.mxu0 0.0
  %2138 = vmatpush1.msra.mxu0 0.0
  %2139 = vmatprep.subr.mxu0 0.0
  %2140 = vmatpush1.msra.mxu0 0.0
  %2141 = vmatprep.subr.mxu0 0.0
  %2142 = vmatpush1.msra.mxu0 0.0
  %2143 = vmatprep.subr.mxu0 0.0
  %2144 = vmatpush1.msra.mxu0 0.0
  %2145 = vmatprep.subr.mxu0 0.0
  %2146 = vmatpush1.msra.mxu0 0.0
  %2147 = vmatprep.subr.mxu0 0.0
  %2148 = vmatpush1.msra.mxu0 0.0
  %2149 = vmatprep.subr.mxu0 0.0
  %2150 = vmatpush1.msra.mxu0 0.0
  %2151 = vmatprep.subr.mxu0 0.0
  %2152 = vmatpush1.msra.mxu0 0.0
  %2153 = vmatprep.subr.mxu0 0.0
  %2154 = vmatpush1.msra.mxu0 0.0
  %2155 = vmatprep.subr.mxu0 0.0
  %2156 = vmatpush1.msra.mxu0 0.0
  %2157 = vmatprep.subr.mxu0 0.0
  %2158 = vmatpush1.msra.mxu0 0.0
  %2159 = vmatprep.subr.mxu0 0.0
  %2160 = vmatpush1.msra.mxu0 0.0
  %2161 = vmatprep.subr.mxu0 0.0
  %2162 = vmatpush1.msra.mxu0 0.0
  %2163 = vmatprep.subr.mxu0 0.0
  %2164 = vmatpush1.msra.mxu0 0.0
  %2165 = vmatprep.subr.mxu0 0.0
  %2166 = vmatpush1.msra.mxu0 0.0
  %2167 = vmatprep.subr.mxu0 0.0
  %2168 = vmatpush1.msra.mxu0 0.0
  %2169 = vmatprep.subr.mxu0 0.0
  %2170 = vmatpush1.msra.mxu0 0.0
  %2171 = vmatprep.subr.mxu0 0.0
  %2172 = vmatpush1.msra.mxu0 0.0
  %2173 = vmatprep.subr.mxu0 0.0
  %2174 = vmatpush1.msra.mxu0 0.0
  %2175 = vmatprep.mubr.f32.mxu0 0.0
  %2176 = vmatmul.mubr.f32.gmra.mrb[0].mxu0 %v293
  %v2177 = vpop.f32.mrb[0].mxu0
  %v2178 = vadd.f32 0.0, %v2177
  %v2179 = vpop.f32.mrb[0].mxu0
  %v2180 = vadd.f32 0.0, %v2179
  %2181 = vmatprep.mubr.f32.mxu0 0.0
  %2182 = vmatmul.mubr.f32.gmra.mrb[0].mxu0 %v296
  %v2183 = vpop.f32.mrb[0].mxu0
  %v2184 = vadd.f32 0.0, %v2183
  %v2185 = vpop.f32.mrb[0].mxu0
  %v2186 = vadd.f32 0.0, %v2185
  %2187 = vmatprep.mubr.f32.mxu0 0.0
  %2188 = vmatmul.mubr.f32.gmra.mrb[0].mxu0 %v299
  %v2189 = vpop.f32.mrb[0].mxu0
  %v2190 = vadd.f32 0.0, %v2189
  %v2191 = vpop.f32.mrb[0].mxu0
  %v2192 = vadd.f32 0.0, %v2191
  %2193 = vmatprep.mubr.f32.mxu0 0.0
  %2194 = vmatmul.mubr.f32.gmra.mrb[0].mxu0 %v302
  %v2195 = vpop.f32.mrb[0].mxu0
  %v2196 = vadd.f32 0.0, %v2195
  %v2197 = vpop.f32.mrb[0].mxu0
  %v2198 = vadd.f32 0.0, %v2197
  %2199 = vmatprep.mubr.f32.mxu0 0.0
  %2200 = vmatmul.mubr.f32.gmra.mrb[0].mxu0 %v305
  %v2201 = vpop.f32.mrb[0].mxu0
  %v2202 = vadd.f32 0.0, %v2201
  %v2203 = vpop.f32.mrb[0].mxu0
  %v2204 = vadd.f32 0.0, %v2203
  %2205 = vmatprep.mubr.f32.mxu0 0.0
  %2206 = vmatmul.mubr.f32.gmra.mrb[0].mxu0 %v308
  %v2207 = vpop.f32.mrb[0].mxu0
  %v2208 = vadd.f32 0.0, %v2207
  %v2209 = vpop.f32.mrb[0].mxu0
  %v2210 = vadd.f32 0.0, %v2209
  %2211 = vmatprep.mubr.f32.mxu0 0.0
  %2212 = vmatmul.mubr.f32.gmra.mrb[0].mxu0 %v311
  %v2213 = vpop.f32.mrb[0].mxu0
  %v2214 = vadd.f32 0.0, %v2213
  %v2215 = vpop.f32.mrb[0].mxu0
  %v2216 = vadd.f32 0.0, %v2215
  %2217 = vmatprep.mubr.f32.mxu0 0.0
  %2218 = vmatmul.mubr.f32.gmra.mrb[0].mxu0 %v314
  %v2219 = vpop.f32.mrb[0].mxu0
  %v2220 = vadd.f32 0.0, %v2219
  %v2221 = vpop.f32.mrb[0].mxu0
  %v2222 = vadd.f32 0.0, %v2221
  %2223 = vmatprep.mubr.f32.mxu0 0.0
  %2224 = vmatmul.mubr.f32.gmra.mrb[0].mxu0 %v317
  %v2225 = vpop.f32.mrb[0].mxu0
  %v2226 = vadd.f32 0.0, %v2225
  %v2227 = vpop.f32.mrb[0].mxu0
  %v2228 = vadd.f32 0.0, %v2227
  %2229 = vmatprep.mubr.f32.mxu0 0.0
  %2230 = vmatmul.mubr.f32.gmra.mrb[0].mxu0 %v320
  %v2231 = vpop.f32.mrb[0].mxu0
  %v2232 = vadd.f32 0.0, %v2231
  %v2233 = vpop.f32.mrb[0].mxu0
  %v2234 = vadd.f32 0.0, %v2233
  %2235 = vmatprep.mubr.f32.mxu0 0.0
  %2236 = vmatmul.mubr.f32.gmra.mrb[0].mxu0 %v323
  %v2237 = vpop.f32.mrb[0].mxu0
  %v2238 = vadd.f32 0.0, %v2237
  %v2239 = vpop.f32.mrb[0].mxu0
  %v2240 = vadd.f32 0.0, %v2239
  %2241 = vmatprep.mubr.f32.mxu0 0.0
  %2242 = vmatmul.mubr.f32.gmra.mrb[0].mxu0 %v326
  %v2243 = vpop.f32.mrb[0].mxu0
  %v2244 = vadd.f32 0.0, %v2243
  %v2245 = vpop.f32.mrb[0].mxu0
  %v2246 = vadd.f32 0.0, %v2245
  %2247 = vmatprep.mubr.f32.mxu0 0.0
  %2248 = vmatmul.mubr.f32.gmra.mrb[0].mxu0 %v329
  %v2249 = vpop.f32.mrb[0].mxu0
  %v2250 = vadd.f32 0.0, %v2249
  %v2251 = vpop.f32.mrb[0].mxu0
  %v2252 = vadd.f32 0.0, %v2251
  %2253 = vmatprep.mubr.f32.mxu0 0.0
  %2254 = vmatmul.mubr.f32.gmra.mrb[0].mxu0 %v332
  %v2255 = vpop.f32.mrb[0].mxu0
  %v2256 = vadd.f32 0.0, %v2255
  %v2257 = vpop.f32.mrb[0].mxu0
  %v2258 = vadd.f32 0.0, %v2257
  %2259 = vmatprep.mubr.f32.mxu0 0.0
  %2260 = vmatmul.mubr.f32.gmra.mrb[0].mxu0 %v335
  %v2261 = vpop.f32.mrb[0].mxu0
  %v2262 = vadd.f32 0.0, %v2261
  %v2263 = vpop.f32.mrb[0].mxu0
  %v2264 = vadd.f32 0.0, %v2263
  %2265 = vmatprep.mubr.f32.mxu0 0.0
  %2266 = vmatmul.mubr.f32.gmra.mrb[0].mxu0 %v338
  %v2267 = vpop.f32.mrb[0].mxu0
  %v2268 = vadd.f32 0.0, %v2267
  %v2269 = vpop.f32.mrb[0].mxu0
  %v2270 = vadd.f32 0.0, %v2269
  %2271 = vdwg.mxu0
  %2272 = vmatprep.subr.mxu0 %v61
  %2273 = vmatpush1.msra.mxu0 %v60
  %2274 = vmatprep.subr.mxu0 %v89
  %2275 = vmatpush1.msra.mxu0 %v88
  %2276 = vmatprep.subr.mxu0 %v117
  %2277 = vmatpush1.msra.mxu0 %v116
  %2278 = vmatprep.subr.mxu0 %v145
  %2279 = vmatpush1.msra.mxu0 %v144
  %2280 = vmatprep.subr.mxu0 %v173
  %2281 = vmatpush1.msra.mxu0 %v172
  %2282 = vmatprep.subr.mxu0 %v201
  %2283 = vmatpush1.msra.mxu0 %v200
  %2284 = vmatprep.subr.mxu0 %v229
  %2285 = vmatpush1.msra.mxu0 %v228
  %2286 = vmatprep.subr.mxu0 %v257
  %2287 = vmatpush1.msra.mxu0 %v256
  %2288 = vmatprep.subr.mxu0 0.0
  %2289 = vmatpush1.msra.mxu0 0.0
  %2290 = vmatprep.subr.mxu0 0.0
  %2291 = vmatpush1.msra.mxu0 0.0
  %2292 = vmatprep.subr.mxu0 0.0
  %2293 = vmatpush1.msra.mxu0 0.0
  %2294 = vmatprep.subr.mxu0 0.0
  %2295 = vmatpush1.msra.mxu0 0.0
  %2296 = vmatprep.subr.mxu0 0.0
  %2297 = vmatpush1.msra.mxu0 0.0
  %2298 = vmatprep.subr.mxu0 0.0
  %2299 = vmatpush1.msra.mxu0 0.0
  %2300 = vmatprep.subr.mxu0 0.0
  %2301 = vmatpush1.msra.mxu0 0.0
  %2302 = vmatprep.subr.mxu0 0.0
  %2303 = vmatpush1.msra.mxu0 0.0
  %2304 = vmatprep.subr.mxu0 0.0
  %2305 = vmatpush1.msra.mxu0 0.0
  %2306 = vmatprep.subr.mxu0 0.0
  %2307 = vmatpush1.msra.mxu0 0.0
  %2308 = vmatprep.subr.mxu0 0.0
  %2309 = vmatpush1.msra.mxu0 0.0
  %2310 = vmatprep.subr.mxu0 0.0
  %2311 = vmatpush1.msra.mxu0 0.0
  %2312 = vmatprep.subr.mxu0 0.0
  %2313 = vmatpush1.msra.mxu0 0.0
  %2314 = vmatprep.subr.mxu0 0.0
  %2315 = vmatpush1.msra.mxu0 0.0
  %2316 = vmatprep.subr.mxu0 0.0
  %2317 = vmatpush1.msra.mxu0 0.0
  %2318 = vmatprep.subr.mxu0 0.0
  %2319 = vmatpush1.msra.mxu0 0.0
  %2320 = vmatprep.subr.mxu0 0.0
  %2321 = vmatpush1.msra.mxu0 0.0
  %2322 = vmatprep.subr.mxu0 0.0
  %2323 = vmatpush1.msra.mxu0 0.0
  %2324 = vmatprep.subr.mxu0 0.0
  %2325 = vmatpush1.msra.mxu0 0.0
  %2326 = vmatprep.subr.mxu0 0.0
  %2327 = vmatpush1.msra.mxu0 0.0
  %2328 = vmatprep.subr.mxu0 0.0
  %2329 = vmatpush1.msra.mxu0 0.0
  %2330 = vmatprep.subr.mxu0 0.0
  %2331 = vmatpush1.msra.mxu0 0.0
  %2332 = vmatprep.subr.mxu0 0.0
  %2333 = vmatpush1.msra.mxu0 0.0
  %2334 = vmatprep.subr.mxu0 0.0
  %2335 = vmatpush1.msra.mxu0 0.0
  %2336 = vmatprep.mubr.f32.mxu0 0.0
  %2337 = vmatmul.mubr.f32.gmra.mrb[0].mxu0 %v293
  %v2338 = vpop.f32.mrb[0].mxu0
  %v2339 = vadd.f32 0.0, %v2338
  %v2340 = vpop.f32.mrb[0].mxu0
  %v2341 = vadd.f32 0.0, %v2340
  %2342 = vmatprep.mubr.f32.mxu0 0.0
  %2343 = vmatmul.mubr.f32.gmra.mrb[0].mxu0 %v296
  %v2344 = vpop.f32.mrb[0].mxu0
  %v2345 = vadd.f32 0.0, %v2344
  %v2346 = vpop.f32.mrb[0].mxu0
  %v2347 = vadd.f32 0.0, %v2346
  %2348 = vmatprep.mubr.f32.mxu0 0.0
  %2349 = vmatmul.mubr.f32.gmra.mrb[0].mxu0 %v299
  %v2350 = vpop.f32.mrb[0].mxu0
  %v2351 = vadd.f32 0.0, %v2350
  %v2352 = vpop.f32.mrb[0].mxu0
  %v2353 = vadd.f32 0.0, %v2352
  %2354 = vmatprep.mubr.f32.mxu0 0.0
  %2355 = vmatmul.mubr.f32.gmra.mrb[0].mxu0 %v302
  %v2356 = vpop.f32.mrb[0].mxu0
  %v2357 = vadd.f32 0.0, %v2356
  %v2358 = vpop.f32.mrb[0].mxu0
  %v2359 = vadd.f32 0.0, %v2358
  %2360 = vmatprep.mubr.f32.mxu0 0.0
  %2361 = vmatmul.mubr.f32.gmra.mrb[0].mxu0 %v305
  %v2362 = vpop.f32.mrb[0].mxu0
  %v2363 = vadd.f32 0.0, %v2362
  %v2364 = vpop.f32.mrb[0].mxu0
  %v2365 = vadd.f32 0.0, %v2364
  %2366 = vmatprep.mubr.f32.mxu0 0.0
  %2367 = vmatmul.mubr.f32.gmra.mrb[0].mxu0 %v308
  %v2368 = vpop.f32.mrb[0].mxu0
  %v2369 = vadd.f32 0.0, %v2368
  %v2370 = vpop.f32.mrb[0].mxu0
  %v2371 = vadd.f32 0.0, %v2370
  %2372 = vmatprep.mubr.f32.mxu0 0.0
  %2373 = vmatmul.mubr.f32.gmra.mrb[0].mxu0 %v311
  %v2374 = vpop.f32.mrb[0].mxu0
  %v2375 = vadd.f32 0.0, %v2374
  %v2376 = vpop.f32.mrb[0].mxu0
  %v2377 = vadd.f32 0.0, %v2376
  %2378 = vmatprep.mubr.f32.mxu0 0.0
  %2379 = vmatmul.mubr.f32.gmra.mrb[0].mxu0 %v314
  %v2380 = vpop.f32.mrb[0].mxu0
  %v2381 = vadd.f32 0.0, %v2380
  %v2382 = vpop.f32.mrb[0].mxu0
  %v2383 = vadd.f32 0.0, %v2382
  %2384 = vmatprep.mubr.f32.mxu0 0.0
  %2385 = vmatmul.mubr.f32.gmra.mrb[0].mxu0 %v317
  %v2386 = vpop.f32.mrb[0].mxu0
  %v2387 = vadd.f32 0.0, %v2386
  %v2388 = vpop.f32.mrb[0].mxu0
  %v2389 = vadd.f32 0.0, %v2388
  %2390 = vmatprep.mubr.f32.mxu0 0.0
  %2391 = vmatmul.mubr.f32.gmra.mrb[0].mxu0 %v320
  %v2392 = vpop.f32.mrb[0].mxu0
  %v2393 = vadd.f32 0.0, %v2392
  %v2394 = vpop.f32.mrb[0].mxu0
  %v2395 = vadd.f32 0.0, %v2394
  %2396 = vmatprep.mubr.f32.mxu0 0.0
  %2397 = vmatmul.mubr.f32.gmra.mrb[0].mxu0 %v323
  %v2398 = vpop.f32.mrb[0].mxu0
  %v2399 = vadd.f32 0.0, %v2398
  %v2400 = vpop.f32.mrb[0].mxu0
  %v2401 = vadd.f32 0.0, %v2400
  %2402 = vmatprep.mubr.f32.mxu0 0.0
  %2403 = vmatmul.mubr.f32.gmra.mrb[0].mxu0 %v326
  %v2404 = vpop.f32.mrb[0].mxu0
  %v2405 = vadd.f32 0.0, %v2404
  %v2406 = vpop.f32.mrb[0].mxu0
  %v2407 = vadd.f32 0.0, %v2406
  %2408 = vmatprep.mubr.f32.mxu0 0.0
  %2409 = vmatmul.mubr.f32.gmra.mrb[0].mxu0 %v329
  %v2410 = vpop.f32.mrb[0].mxu0
  %v2411 = vadd.f32 0.0, %v2410
  %v2412 = vpop.f32.mrb[0].mxu0
  %v2413 = vadd.f32 0.0, %v2412
  %2414 = vmatprep.mubr.f32.mxu0 0.0
  %2415 = vmatmul.mubr.f32.gmra.mrb[0].mxu0 %v332
  %v2416 = vpop.f32.mrb[0].mxu0
  %v2417 = vadd.f32 0.0, %v2416
  %v2418 = vpop.f32.mrb[0].mxu0
  %v2419 = vadd.f32 0.0, %v2418
  %2420 = vmatprep.mubr.f32.mxu0 0.0
  %2421 = vmatmul.mubr.f32.gmra.mrb[0].mxu0 %v335
  %v2422 = vpop.f32.mrb[0].mxu0
  %v2423 = vadd.f32 0.0, %v2422
  %v2424 = vpop.f32.mrb[0].mxu0
  %v2425 = vadd.f32 0.0, %v2424
  %2426 = vmatprep.mubr.f32.mxu0 0.0
  %2427 = vmatmul.mubr.f32.gmra.mrb[0].mxu0 %v338
  %v2428 = vpop.f32.mrb[0].mxu0
  %v2429 = vadd.f32 0.0, %v2428
  %v2430 = vpop.f32.mrb[0].mxu0
  %v2431 = vadd.f32 0.0, %v2430
  %2432 = vdwg.mxu0
  %2433 = vmatprep.subr.mxu0 0.0
  %2434 = vmatpush1.msra.mxu0 %v62
  %2435 = vmatprep.subr.mxu0 0.0
  %2436 = vmatpush1.msra.mxu0 %v90
  %2437 = vmatprep.subr.mxu0 0.0
  %2438 = vmatpush1.msra.mxu0 %v118
  %2439 = vmatprep.subr.mxu0 0.0
  %2440 = vmatpush1.msra.mxu0 %v146
  %2441 = vmatprep.subr.mxu0 0.0
  %2442 = vmatpush1.msra.mxu0 %v174
  %2443 = vmatprep.subr.mxu0 0.0
  %2444 = vmatpush1.msra.mxu0 %v202
  %2445 = vmatprep.subr.mxu0 0.0
  %2446 = vmatpush1.msra.mxu0 %v230
  %2447 = vmatprep.subr.mxu0 0.0
  %2448 = vmatpush1.msra.mxu0 %v258
  %2449 = vmatprep.subr.mxu0 0.0
  %2450 = vmatpush1.msra.mxu0 0.0
  %2451 = vmatprep.subr.mxu0 0.0
  %2452 = vmatpush1.msra.mxu0 0.0
  %2453 = vmatprep.subr.mxu0 0.0
  %2454 = vmatpush1.msra.mxu0 0.0
  %2455 = vmatprep.subr.mxu0 0.0
  %2456 = vmatpush1.msra.mxu0 0.0
  %2457 = vmatprep.subr.mxu0 0.0
  %2458 = vmatpush1.msra.mxu0 0.0
  %2459 = vmatprep.subr.mxu0 0.0
  %2460 = vmatpush1.msra.mxu0 0.0
  %2461 = vmatprep.subr.mxu0 0.0
  %2462 = vmatpush1.msra.mxu0 0.0
  %2463 = vmatprep.subr.mxu0 0.0
  %2464 = vmatpush1.msra.mxu0 0.0
  %2465 = vmatprep.subr.mxu0 0.0
  %2466 = vmatpush1.msra.mxu0 0.0
  %2467 = vmatprep.subr.mxu0 0.0
  %2468 = vmatpush1.msra.mxu0 0.0
  %2469 = vmatprep.subr.mxu0 0.0
  %2470 = vmatpush1.msra.mxu0 0.0
  %2471 = vmatprep.subr.mxu0 0.0
  %2472 = vmatpush1.msra.mxu0 0.0
  %2473 = vmatprep.subr.mxu0 0.0
  %2474 = vmatpush1.msra.mxu0 0.0
  %2475 = vmatprep.subr.mxu0 0.0
  %2476 = vmatpush1.msra.mxu0 0.0
  %2477 = vmatprep.subr.mxu0 0.0
  %2478 = vmatpush1.msra.mxu0 0.0
  %2479 = vmatprep.subr.mxu0 0.0
  %2480 = vmatpush1.msra.mxu0 0.0
  %2481 = vmatprep.subr.mxu0 0.0
  %2482 = vmatpush1.msra.mxu0 0.0
  %2483 = vmatprep.subr.mxu0 0.0
  %2484 = vmatpush1.msra.mxu0 0.0
  %2485 = vmatprep.subr.mxu0 0.0
  %2486 = vmatpush1.msra.mxu0 0.0
  %2487 = vmatprep.subr.mxu0 0.0
  %2488 = vmatpush1.msra.mxu0 0.0
  %2489 = vmatprep.subr.mxu0 0.0
  %2490 = vmatpush1.msra.mxu0 0.0
  %2491 = vmatprep.subr.mxu0 0.0
  %2492 = vmatpush1.msra.mxu0 0.0
  %2493 = vmatprep.subr.mxu0 0.0
  %2494 = vmatpush1.msra.mxu0 0.0
  %2495 = vmatprep.subr.mxu0 0.0
  %2496 = vmatpush1.msra.mxu0 0.0
  %2497 = vmatprep.mubr.f32.mxu0 0.0
  %2498 = vmatmul.mubr.f32.gmra.mrb[0].mxu0 %v293
  %v2499 = vpop.f32.mrb[0].mxu0
  %v2500 = vadd.f32 0.0, %v2499
  %v2501 = vpop.f32.mrb[0].mxu0
  %2502 = vmatprep.mubr.f32.mxu0 0.0
  %2503 = vmatmul.mubr.f32.gmra.mrb[0].mxu0 %v296
  %v2504 = vpop.f32.mrb[0].mxu0
  %v2505 = vadd.f32 0.0, %v2504
  %v2506 = vpop.f32.mrb[0].mxu0
  %2507 = vmatprep.mubr.f32.mxu0 0.0
  %2508 = vmatmul.mubr.f32.gmra.mrb[0].mxu0 %v299
  %v2509 = vpop.f32.mrb[0].mxu0
  %v2510 = vadd.f32 0.0, %v2509
  %v2511 = vpop.f32.mrb[0].mxu0
  %2512 = vmatprep.mubr.f32.mxu0 0.0
  %2513 = vmatmul.mubr.f32.gmra.mrb[0].mxu0 %v302
  %v2514 = vpop.f32.mrb[0].mxu0
  %v2515 = vadd.f32 0.0, %v2514
  %v2516 = vpop.f32.mrb[0].mxu0
  %2517 = vmatprep.mubr.f32.mxu0 0.0
  %2518 = vmatmul.mubr.f32.gmra.mrb[0].mxu0 %v305
  %v2519 = vpop.f32.mrb[0].mxu0
  %v2520 = vadd.f32 0.0, %v2519
  %v2521 = vpop.f32.mrb[0].mxu0
  %2522 = vmatprep.mubr.f32.mxu0 0.0
  %2523 = vmatmul.mubr.f32.gmra.mrb[0].mxu0 %v308
  %v2524 = vpop.f32.mrb[0].mxu0
  %v2525 = vadd.f32 0.0, %v2524
  %v2526 = vpop.f32.mrb[0].mxu0
  %2527 = vmatprep.mubr.f32.mxu0 0.0
  %2528 = vmatmul.mubr.f32.gmra.mrb[0].mxu0 %v311
  %v2529 = vpop.f32.mrb[0].mxu0
  %v2530 = vadd.f32 0.0, %v2529
  %v2531 = vpop.f32.mrb[0].mxu0
  %2532 = vmatprep.mubr.f32.mxu0 0.0
  %2533 = vmatmul.mubr.f32.gmra.mrb[0].mxu0 %v314
  %v2534 = vpop.f32.mrb[0].mxu0
  %v2535 = vadd.f32 0.0, %v2534
  %v2536 = vpop.f32.mrb[0].mxu0
  %2537 = vmatprep.mubr.f32.mxu0 0.0
  %2538 = vmatmul.mubr.f32.gmra.mrb[0].mxu0 %v317
  %v2539 = vpop.f32.mrb[0].mxu0
  %v2540 = vadd.f32 0.0, %v2539
  %v2541 = vpop.f32.mrb[0].mxu0
  %2542 = vmatprep.mubr.f32.mxu0 0.0
  %2543 = vmatmul.mubr.f32.gmra.mrb[0].mxu0 %v320
  %v2544 = vpop.f32.mrb[0].mxu0
  %v2545 = vadd.f32 0.0, %v2544
  %v2546 = vpop.f32.mrb[0].mxu0
  %2547 = vmatprep.mubr.f32.mxu0 0.0
  %2548 = vmatmul.mubr.f32.gmra.mrb[0].mxu0 %v323
  %v2549 = vpop.f32.mrb[0].mxu0
  %v2550 = vadd.f32 0.0, %v2549
  %v2551 = vpop.f32.mrb[0].mxu0
  %2552 = vmatprep.mubr.f32.mxu0 0.0
  %2553 = vmatmul.mubr.f32.gmra.mrb[0].mxu0 %v326
  %v2554 = vpop.f32.mrb[0].mxu0
  %v2555 = vadd.f32 0.0, %v2554
  %v2556 = vpop.f32.mrb[0].mxu0
  %2557 = vmatprep.mubr.f32.mxu0 0.0
  %2558 = vmatmul.mubr.f32.gmra.mrb[0].mxu0 %v329
  %v2559 = vpop.f32.mrb[0].mxu0
  %v2560 = vadd.f32 0.0, %v2559
  %v2561 = vpop.f32.mrb[0].mxu0
  %2562 = vmatprep.mubr.f32.mxu0 0.0
  %2563 = vmatmul.mubr.f32.gmra.mrb[0].mxu0 %v332
  %v2564 = vpop.f32.mrb[0].mxu0
  %v2565 = vadd.f32 0.0, %v2564
  %v2566 = vpop.f32.mrb[0].mxu0
  %2567 = vmatprep.mubr.f32.mxu0 0.0
  %2568 = vmatmul.mubr.f32.gmra.mrb[0].mxu0 %v335
  %v2569 = vpop.f32.mrb[0].mxu0
  %v2570 = vadd.f32 0.0, %v2569
  %v2571 = vpop.f32.mrb[0].mxu0
  %2572 = vmatprep.mubr.f32.mxu0 0.0
  %2573 = vmatmul.mubr.f32.gmra.mrb[0].mxu0 %v338
  %v2574 = vpop.f32.mrb[0].mxu0
  %v2575 = vadd.f32 0.0, %v2574
  %v2576 = vpop.f32.mrb[0].mxu0
  %2577 = vdwg.mxu0
  %v2579 = vsel %vm291, %v259, 0
  %v2582 = vsel %vm291, %v260, 0
  %v2585 = vsel %vm291, %v261, 0
  %v2588 = vsel %vm291, %v262, 0
  %v2591 = vsel %vm291, %v263, 0
  %v2594 = vsel %vm291, %v264, 0
  %v2597 = vsel %vm291, %v265, 0
  %v2600 = vsel %vm291, %v266, 0
  %v2603 = vsel %vm291, %v267, 0
  %v2606 = vsel %vm291, %v268, 0
  %v2609 = vsel %vm291, %v269, 0
  %v2612 = vsel %vm291, %v270, 0
  %v2615 = vsel %vm291, %v271, 0
  %v2618 = vsel %vm291, %v272, 0
  %v2621 = vsel %vm291, %v273, 0
  %v2624 = vsel %vm291, %v274, 0
  %2626 = vmatprep.subr.mxu0 %v36
  %2627 = vmatpush1.msra.mxu0 %v35
  %2628 = vmatprep.subr.mxu0 %v64
  %2629 = vmatpush1.msra.mxu0 %v63
  %2630 = vmatprep.subr.mxu0 %v92
  %2631 = vmatpush1.msra.mxu0 %v91
  %2632 = vmatprep.subr.mxu0 %v120
  %2633 = vmatpush1.msra.mxu0 %v119
  %2634 = vmatprep.subr.mxu0 %v148
  %2635 = vmatpush1.msra.mxu0 %v147
  %2636 = vmatprep.subr.mxu0 %v176
  %2637 = vmatpush1.msra.mxu0 %v175
  %2638 = vmatprep.subr.mxu0 %v204
  %2639 = vmatpush1.msra.mxu0 %v203
  %2640 = vmatprep.subr.mxu0 %v232
  %2641 = vmatpush1.msra.mxu0 %v231
  %2642 = vmatprep.subr.mxu0 0.0
  %2643 = vmatpush1.msra.mxu0 0.0
  %2644 = vmatprep.subr.mxu0 0.0
  %2645 = vmatpush1.msra.mxu0 0.0
  %2646 = vmatprep.subr.mxu0 0.0
  %2647 = vmatpush1.msra.mxu0 0.0
  %2648 = vmatprep.subr.mxu0 0.0
  %2649 = vmatpush1.msra.mxu0 0.0
  %2650 = vmatprep.subr.mxu0 0.0
  %2651 = vmatpush1.msra.mxu0 0.0
  %2652 = vmatprep.subr.mxu0 0.0
  %2653 = vmatpush1.msra.mxu0 0.0
  %2654 = vmatprep.subr.mxu0 0.0
  %2655 = vmatpush1.msra.mxu0 0.0
  %2656 = vmatprep.subr.mxu0 0.0
  %2657 = vmatpush1.msra.mxu0 0.0
  %2658 = vmatprep.subr.mxu0 0.0
  %2659 = vmatpush1.msra.mxu0 0.0
  %2660 = vmatprep.subr.mxu0 0.0
  %2661 = vmatpush1.msra.mxu0 0.0
  %2662 = vmatprep.subr.mxu0 0.0
  %2663 = vmatpush1.msra.mxu0 0.0
  %2664 = vmatprep.subr.mxu0 0.0
  %2665 = vmatpush1.msra.mxu0 0.0
  %2666 = vmatprep.subr.mxu0 0.0
  %2667 = vmatpush1.msra.mxu0 0.0
  %2668 = vmatprep.subr.mxu0 0.0
  %2669 = vmatpush1.msra.mxu0 0.0
  %2670 = vmatprep.subr.mxu0 0.0
  %2671 = vmatpush1.msra.mxu0 0.0
  %2672 = vmatprep.subr.mxu0 0.0
  %2673 = vmatpush1.msra.mxu0 0.0
  %2674 = vmatprep.subr.mxu0 0.0
  %2675 = vmatpush1.msra.mxu0 0.0
  %2676 = vmatprep.subr.mxu0 0.0
  %2677 = vmatpush1.msra.mxu0 0.0
  %2678 = vmatprep.subr.mxu0 0.0
  %2679 = vmatpush1.msra.mxu0 0.0
  %2680 = vmatprep.subr.mxu0 0.0
  %2681 = vmatpush1.msra.mxu0 0.0
  %2682 = vmatprep.subr.mxu0 0.0
  %2683 = vmatpush1.msra.mxu0 0.0
  %2684 = vmatprep.subr.mxu0 0.0
  %2685 = vmatpush1.msra.mxu0 0.0
  %2686 = vmatprep.subr.mxu0 0.0
  %2687 = vmatpush1.msra.mxu0 0.0
  %2688 = vmatprep.subr.mxu0 0.0
  %2689 = vmatpush1.msra.mxu0 0.0
  %2690 = vmatprep.mubr.f32.mxu0 0.0
  %2691 = vmatmul.mubr.f32.gmra.mrb[0].mxu0 %v2579
  %v2692 = vpop.f32.mrb[0].mxu0
  %v2693 = vadd.f32 %v407, %v2692
  %v2694 = vpop.f32.mrb[0].mxu0
  %v2695 = vadd.f32 %v409, %v2694
  %2696 = vmatprep.mubr.f32.mxu0 0.0
  %2697 = vmatmul.mubr.f32.gmra.mrb[0].mxu0 %v2582
  %v2698 = vpop.f32.mrb[0].mxu0
  %v2699 = vadd.f32 %v413, %v2698
  %v2700 = vpop.f32.mrb[0].mxu0
  %v2701 = vadd.f32 %v415, %v2700
  %2702 = vmatprep.mubr.f32.mxu0 0.0
  %2703 = vmatmul.mubr.f32.gmra.mrb[0].mxu0 %v2585
  %v2704 = vpop.f32.mrb[0].mxu0
  %v2705 = vadd.f32 %v419, %v2704
  %v2706 = vpop.f32.mrb[0].mxu0
  %v2707 = vadd.f32 %v421, %v2706
  %2708 = vmatprep.mubr.f32.mxu0 0.0
  %2709 = vmatmul.mubr.f32.gmra.mrb[0].mxu0 %v2588
  %v2710 = vpop.f32.mrb[0].mxu0
  %v2711 = vadd.f32 %v425, %v2710
  %v2712 = vpop.f32.mrb[0].mxu0
  %v2713 = vadd.f32 %v427, %v2712
  %2714 = vmatprep.mubr.f32.mxu0 0.0
  %2715 = vmatmul.mubr.f32.gmra.mrb[0].mxu0 %v2591
  %v2716 = vpop.f32.mrb[0].mxu0
  %v2717 = vadd.f32 %v431, %v2716
  %v2718 = vpop.f32.mrb[0].mxu0
  %v2719 = vadd.f32 %v433, %v2718
  %2720 = vmatprep.mubr.f32.mxu0 0.0
  %2721 = vmatmul.mubr.f32.gmra.mrb[0].mxu0 %v2594
  %v2722 = vpop.f32.mrb[0].mxu0
  %v2723 = vadd.f32 %v437, %v2722
  %v2724 = vpop.f32.mrb[0].mxu0
  %v2725 = vadd.f32 %v439, %v2724
  %2726 = vmatprep.mubr.f32.mxu0 0.0
  %2727 = vmatmul.mubr.f32.gmra.mrb[0].mxu0 %v2597
  %v2728 = vpop.f32.mrb[0].mxu0
  %v2729 = vadd.f32 %v443, %v2728
  %v2730 = vpop.f32.mrb[0].mxu0
  %v2731 = vadd.f32 %v445, %v2730
  %2732 = vmatprep.mubr.f32.mxu0 0.0
  %2733 = vmatmul.mubr.f32.gmra.mrb[0].mxu0 %v2600
  %v2734 = vpop.f32.mrb[0].mxu0
  %v2735 = vadd.f32 %v449, %v2734
  %v2736 = vpop.f32.mrb[0].mxu0
  %v2737 = vadd.f32 %v451, %v2736
  %2738 = vmatprep.mubr.f32.mxu0 0.0
  %2739 = vmatmul.mubr.f32.gmra.mrb[0].mxu0 %v2603
  %v2740 = vpop.f32.mrb[0].mxu0
  %v2741 = vadd.f32 %v455, %v2740
  %v2742 = vpop.f32.mrb[0].mxu0
  %v2743 = vadd.f32 %v457, %v2742
  %2744 = vmatprep.mubr.f32.mxu0 0.0
  %2745 = vmatmul.mubr.f32.gmra.mrb[0].mxu0 %v2606
  %v2746 = vpop.f32.mrb[0].mxu0
  %v2747 = vadd.f32 %v461, %v2746
  %v2748 = vpop.f32.mrb[0].mxu0
  %v2749 = vadd.f32 %v463, %v2748
  %2750 = vmatprep.mubr.f32.mxu0 0.0
  %2751 = vmatmul.mubr.f32.gmra.mrb[0].mxu0 %v2609
  %v2752 = vpop.f32.mrb[0].mxu0
  %v2753 = vadd.f32 %v467, %v2752
  %v2754 = vpop.f32.mrb[0].mxu0
  %v2755 = vadd.f32 %v469, %v2754
  %2756 = vmatprep.mubr.f32.mxu0 0.0
  %2757 = vmatmul.mubr.f32.gmra.mrb[0].mxu0 %v2612
  %v2758 = vpop.f32.mrb[0].mxu0
  %v2759 = vadd.f32 %v473, %v2758
  %v2760 = vpop.f32.mrb[0].mxu0
  %v2761 = vadd.f32 %v475, %v2760
  %2762 = vmatprep.mubr.f32.mxu0 0.0
  %2763 = vmatmul.mubr.f32.gmra.mrb[0].mxu0 %v2615
  %v2764 = vpop.f32.mrb[0].mxu0
  %v2765 = vadd.f32 %v479, %v2764
  %v2766 = vpop.f32.mrb[0].mxu0
  %v2767 = vadd.f32 %v481, %v2766
  %2768 = vmatprep.mubr.f32.mxu0 0.0
  %2769 = vmatmul.mubr.f32.gmra.mrb[0].mxu0 %v2618
  %v2770 = vpop.f32.mrb[0].mxu0
  %v2771 = vadd.f32 %v485, %v2770
  %v2772 = vpop.f32.mrb[0].mxu0
  %v2773 = vadd.f32 %v487, %v2772
  %2774 = vmatprep.mubr.f32.mxu0 0.0
  %2775 = vmatmul.mubr.f32.gmra.mrb[0].mxu0 %v2621
  %v2776 = vpop.f32.mrb[0].mxu0
  %v2777 = vadd.f32 %v491, %v2776
  %v2778 = vpop.f32.mrb[0].mxu0
  %v2779 = vadd.f32 %v493, %v2778
  %2780 = vmatprep.mubr.f32.mxu0 0.0
  %2781 = vmatmul.mubr.f32.gmra.mrb[0].mxu0 %v2624
  %v2782 = vpop.f32.mrb[0].mxu0
  %v2783 = vadd.f32 %v497, %v2782
  %v2784 = vpop.f32.mrb[0].mxu0
  %v2785 = vadd.f32 %v499, %v2784
  %2786 = vdwg.mxu0
  %2787 = vmatprep.subr.mxu0 %v38
  %2788 = vmatpush1.msra.mxu0 %v37
  %2789 = vmatprep.subr.mxu0 %v66
  %2790 = vmatpush1.msra.mxu0 %v65
  %2791 = vmatprep.subr.mxu0 %v94
  %2792 = vmatpush1.msra.mxu0 %v93
  %2793 = vmatprep.subr.mxu0 %v122
  %2794 = vmatpush1.msra.mxu0 %v121
  %2795 = vmatprep.subr.mxu0 %v150
  %2796 = vmatpush1.msra.mxu0 %v149
  %2797 = vmatprep.subr.mxu0 %v178
  %2798 = vmatpush1.msra.mxu0 %v177
  %2799 = vmatprep.subr.mxu0 %v206
  %2800 = vmatpush1.msra.mxu0 %v205
  %2801 = vmatprep.subr.mxu0 %v234
  %2802 = vmatpush1.msra.mxu0 %v233
  %2803 = vmatprep.subr.mxu0 0.0
  %2804 = vmatpush1.msra.mxu0 0.0
  %2805 = vmatprep.subr.mxu0 0.0
  %2806 = vmatpush1.msra.mxu0 0.0
  %2807 = vmatprep.subr.mxu0 0.0
  %2808 = vmatpush1.msra.mxu0 0.0
  %2809 = vmatprep.subr.mxu0 0.0
  %2810 = vmatpush1.msra.mxu0 0.0
  %2811 = vmatprep.subr.mxu0 0.0
  %2812 = vmatpush1.msra.mxu0 0.0
  %2813 = vmatprep.subr.mxu0 0.0
  %2814 = vmatpush1.msra.mxu0 0.0
  %2815 = vmatprep.subr.mxu0 0.0
  %2816 = vmatpush1.msra.mxu0 0.0
  %2817 = vmatprep.subr.mxu0 0.0
  %2818 = vmatpush1.msra.mxu0 0.0
  %2819 = vmatprep.subr.mxu0 0.0
  %2820 = vmatpush1.msra.mxu0 0.0
  %2821 = vmatprep.subr.mxu0 0.0
  %2822 = vmatpush1.msra.mxu0 0.0
  %2823 = vmatprep.subr.mxu0 0.0
  %2824 = vmatpush1.msra.mxu0 0.0
  %2825 = vmatprep.subr.mxu0 0.0
  %2826 = vmatpush1.msra.mxu0 0.0
  %2827 = vmatprep.subr.mxu0 0.0
  %2828 = vmatpush1.msra.mxu0 0.0
  %2829 = vmatprep.subr.mxu0 0.0
  %2830 = vmatpush1.msra.mxu0 0.0
  %2831 = vmatprep.subr.mxu0 0.0
  %2832 = vmatpush1.msra.mxu0 0.0
  %2833 = vmatprep.subr.mxu0 0.0
  %2834 = vmatpush1.msra.mxu0 0.0
  %2835 = vmatprep.subr.mxu0 0.0
  %2836 = vmatpush1.msra.mxu0 0.0
  %2837 = vmatprep.subr.mxu0 0.0
  %2838 = vmatpush1.msra.mxu0 0.0
  %2839 = vmatprep.subr.mxu0 0.0
  %2840 = vmatpush1.msra.mxu0 0.0
  %2841 = vmatprep.subr.mxu0 0.0
  %2842 = vmatpush1.msra.mxu0 0.0
  %2843 = vmatprep.subr.mxu0 0.0
  %2844 = vmatpush1.msra.mxu0 0.0
  %2845 = vmatprep.subr.mxu0 0.0
  %2846 = vmatpush1.msra.mxu0 0.0
  %2847 = vmatprep.subr.mxu0 0.0
  %2848 = vmatpush1.msra.mxu0 0.0
  %2849 = vmatprep.subr.mxu0 0.0
  %2850 = vmatpush1.msra.mxu0 0.0
  %2851 = vmatprep.mubr.f32.mxu0 0.0
  %2852 = vmatmul.mubr.f32.gmra.mrb[0].mxu0 %v2579
  %v2853 = vpop.f32.mrb[0].mxu0
  %v2854 = vadd.f32 %v568, %v2853
  %v2855 = vpop.f32.mrb[0].mxu0
  %v2856 = vadd.f32 %v570, %v2855
  %2857 = vmatprep.mubr.f32.mxu0 0.0
  %2858 = vmatmul.mubr.f32.gmra.mrb[0].mxu0 %v2582
  %v2859 = vpop.f32.mrb[0].mxu0
  %v2860 = vadd.f32 %v574, %v2859
  %v2861 = vpop.f32.mrb[0].mxu0
  %v2862 = vadd.f32 %v576, %v2861
  %2863 = vmatprep.mubr.f32.mxu0 0.0
  %2864 = vmatmul.mubr.f32.gmra.mrb[0].mxu0 %v2585
  %v2865 = vpop.f32.mrb[0].mxu0
  %v2866 = vadd.f32 %v580, %v2865
  %v2867 = vpop.f32.mrb[0].mxu0
  %v2868 = vadd.f32 %v582, %v2867
  %2869 = vmatprep.mubr.f32.mxu0 0.0
  %2870 = vmatmul.mubr.f32.gmra.mrb[0].mxu0 %v2588
  %v2871 = vpop.f32.mrb[0].mxu0
  %v2872 = vadd.f32 %v586, %v2871
  %v2873 = vpop.f32.mrb[0].mxu0
  %v2874 = vadd.f32 %v588, %v2873
  %2875 = vmatprep.mubr.f32.mxu0 0.0
  %2876 = vmatmul.mubr.f32.gmra.mrb[0].mxu0 %v2591
  %v2877 = vpop.f32.mrb[0].mxu0
  %v2878 = vadd.f32 %v592, %v2877
  %v2879 = vpop.f32.mrb[0].mxu0
  %v2880 = vadd.f32 %v594, %v2879
  %2881 = vmatprep.mubr.f32.mxu0 0.0
  %2882 = vmatmul.mubr.f32.gmra.mrb[0].mxu0 %v2594
  %v2883 = vpop.f32.mrb[0].mxu0
  %v2884 = vadd.f32 %v598, %v2883
  %v2885 = vpop.f32.mrb[0].mxu0
  %v2886 = vadd.f32 %v600, %v2885
  %2887 = vmatprep.mubr.f32.mxu0 0.0
  %2888 = vmatmul.mubr.f32.gmra.mrb[0].mxu0 %v2597
  %v2889 = vpop.f32.mrb[0].mxu0
  %v2890 = vadd.f32 %v604, %v2889
  %v2891 = vpop.f32.mrb[0].mxu0
  %v2892 = vadd.f32 %v606, %v2891
  %2893 = vmatprep.mubr.f32.mxu0 0.0
  %2894 = vmatmul.mubr.f32.gmra.mrb[0].mxu0 %v2600
  %v2895 = vpop.f32.mrb[0].mxu0
  %v2896 = vadd.f32 %v610, %v2895
  %v2897 = vpop.f32.mrb[0].mxu0
  %v2898 = vadd.f32 %v612, %v2897
  %2899 = vmatprep.mubr.f32.mxu0 0.0
  %2900 = vmatmul.mubr.f32.gmra.mrb[0].mxu0 %v2603
  %v2901 = vpop.f32.mrb[0].mxu0
  %v2902 = vadd.f32 %v616, %v2901
  %v2903 = vpop.f32.mrb[0].mxu0
  %v2904 = vadd.f32 %v618, %v2903
  %2905 = vmatprep.mubr.f32.mxu0 0.0
  %2906 = vmatmul.mubr.f32.gmra.mrb[0].mxu0 %v2606
  %v2907 = vpop.f32.mrb[0].mxu0
  %v2908 = vadd.f32 %v622, %v2907
  %v2909 = vpop.f32.mrb[0].mxu0
  %v2910 = vadd.f32 %v624, %v2909
  %2911 = vmatprep.mubr.f32.mxu0 0.0
  %2912 = vmatmul.mubr.f32.gmra.mrb[0].mxu0 %v2609
  %v2913 = vpop.f32.mrb[0].mxu0
  %v2914 = vadd.f32 %v628, %v2913
  %v2915 = vpop.f32.mrb[0].mxu0
  %v2916 = vadd.f32 %v630, %v2915
  %2917 = vmatprep.mubr.f32.mxu0 0.0
  %2918 = vmatmul.mubr.f32.gmra.mrb[0].mxu0 %v2612
  %v2919 = vpop.f32.mrb[0].mxu0
  %v2920 = vadd.f32 %v634, %v2919
  %v2921 = vpop.f32.mrb[0].mxu0
  %v2922 = vadd.f32 %v636, %v2921
  %2923 = vmatprep.mubr.f32.mxu0 0.0
  %2924 = vmatmul.mubr.f32.gmra.mrb[0].mxu0 %v2615
  %v2925 = vpop.f32.mrb[0].mxu0
  %v2926 = vadd.f32 %v640, %v2925
  %v2927 = vpop.f32.mrb[0].mxu0
  %v2928 = vadd.f32 %v642, %v2927
  %2929 = vmatprep.mubr.f32.mxu0 0.0
  %2930 = vmatmul.mubr.f32.gmra.mrb[0].mxu0 %v2618
  %v2931 = vpop.f32.mrb[0].mxu0
  %v2932 = vadd.f32 %v646, %v2931
  %v2933 = vpop.f32.mrb[0].mxu0
  %v2934 = vadd.f32 %v648, %v2933
  %2935 = vmatprep.mubr.f32.mxu0 0.0
  %2936 = vmatmul.mubr.f32.gmra.mrb[0].mxu0 %v2621
  %v2937 = vpop.f32.mrb[0].mxu0
  %v2938 = vadd.f32 %v652, %v2937
  %v2939 = vpop.f32.mrb[0].mxu0
  %v2940 = vadd.f32 %v654, %v2939
  %2941 = vmatprep.mubr.f32.mxu0 0.0
  %2942 = vmatmul.mubr.f32.gmra.mrb[0].mxu0 %v2624
  %v2943 = vpop.f32.mrb[0].mxu0
  %v2944 = vadd.f32 %v658, %v2943
  %v2945 = vpop.f32.mrb[0].mxu0
  %v2946 = vadd.f32 %v660, %v2945
  %2947 = vdwg.mxu0
  %2948 = vmatprep.subr.mxu0 %v40
  %2949 = vmatpush1.msra.mxu0 %v39
  %2950 = vmatprep.subr.mxu0 %v68
  %2951 = vmatpush1.msra.mxu0 %v67
  %2952 = vmatprep.subr.mxu0 %v96
  %2953 = vmatpush1.msra.mxu0 %v95
  %2954 = vmatprep.subr.mxu0 %v124
  %2955 = vmatpush1.msra.mxu0 %v123
  %2956 = vmatprep.subr.mxu0 %v152
  %2957 = vmatpush1.msra.mxu0 %v151
  %2958 = vmatprep.subr.mxu0 %v180
  %2959 = vmatpush1.msra.mxu0 %v179
  %2960 = vmatprep.subr.mxu0 %v208
  %2961 = vmatpush1.msra.mxu0 %v207
  %2962 = vmatprep.subr.mxu0 %v236
  %2963 = vmatpush1.msra.mxu0 %v235
  %2964 = vmatprep.subr.mxu0 0.0
  %2965 = vmatpush1.msra.mxu0 0.0
  %2966 = vmatprep.subr.mxu0 0.0
  %2967 = vmatpush1.msra.mxu0 0.0
  %2968 = vmatprep.subr.mxu0 0.0
  %2969 = vmatpush1.msra.mxu0 0.0
  %2970 = vmatprep.subr.mxu0 0.0
  %2971 = vmatpush1.msra.mxu0 0.0
  %2972 = vmatprep.subr.mxu0 0.0
  %2973 = vmatpush1.msra.mxu0 0.0
  %2974 = vmatprep.subr.mxu0 0.0
  %2975 = vmatpush1.msra.mxu0 0.0
  %2976 = vmatprep.subr.mxu0 0.0
  %2977 = vmatpush1.msra.mxu0 0.0
  %2978 = vmatprep.subr.mxu0 0.0
  %2979 = vmatpush1.msra.mxu0 0.0
  %2980 = vmatprep.subr.mxu0 0.0
  %2981 = vmatpush1.msra.mxu0 0.0
  %2982 = vmatprep.subr.mxu0 0.0
  %2983 = vmatpush1.msra.mxu0 0.0
  %2984 = vmatprep.subr.mxu0 0.0
  %2985 = vmatpush1.msra.mxu0 0.0
  %2986 = vmatprep.subr.mxu0 0.0
  %2987 = vmatpush1.msra.mxu0 0.0
  %2988 = vmatprep.subr.mxu0 0.0
  %2989 = vmatpush1.msra.mxu0 0.0
  %2990 = vmatprep.subr.mxu0 0.0
  %2991 = vmatpush1.msra.mxu0 0.0
  %2992 = vmatprep.subr.mxu0 0.0
  %2993 = vmatpush1.msra.mxu0 0.0
  %2994 = vmatprep.subr.mxu0 0.0
  %2995 = vmatpush1.msra.mxu0 0.0
  %2996 = vmatprep.subr.mxu0 0.0
  %2997 = vmatpush1.msra.mxu0 0.0
  %2998 = vmatprep.subr.mxu0 0.0
  %2999 = vmatpush1.msra.mxu0 0.0
  %3000 = vmatprep.subr.mxu0 0.0
  %3001 = vmatpush1.msra.mxu0 0.0
  %3002 = vmatprep.subr.mxu0 0.0
  %3003 = vmatpush1.msra.mxu0 0.0
  %3004 = vmatprep.subr.mxu0 0.0
  %3005 = vmatpush1.msra.mxu0 0.0
  %3006 = vmatprep.subr.mxu0 0.0
  %3007 = vmatpush1.msra.mxu0 0.0
  %3008 = vmatprep.subr.mxu0 0.0
  %3009 = vmatpush1.msra.mxu0 0.0
  %3010 = vmatprep.subr.mxu0 0.0
  %3011 = vmatpush1.msra.mxu0 0.0
  %3012 = vmatprep.mubr.f32.mxu0 0.0
  %3013 = vmatmul.mubr.f32.gmra.mrb[0].mxu0 %v2579
  %v3014 = vpop.f32.mrb[0].mxu0
  %v3015 = vadd.f32 %v729, %v3014
  %v3016 = vpop.f32.mrb[0].mxu0
  %v3017 = vadd.f32 %v731, %v3016
  %3018 = vmatprep.mubr.f32.mxu0 0.0
  %3019 = vmatmul.mubr.f32.gmra.mrb[0].mxu0 %v2582
  %v3020 = vpop.f32.mrb[0].mxu0
  %v3021 = vadd.f32 %v735, %v3020
  %v3022 = vpop.f32.mrb[0].mxu0
  %v3023 = vadd.f32 %v737, %v3022
  %3024 = vmatprep.mubr.f32.mxu0 0.0
  %3025 = vmatmul.mubr.f32.gmra.mrb[0].mxu0 %v2585
  %v3026 = vpop.f32.mrb[0].mxu0
  %v3027 = vadd.f32 %v741, %v3026
  %v3028 = vpop.f32.mrb[0].mxu0
  %v3029 = vadd.f32 %v743, %v3028
  %3030 = vmatprep.mubr.f32.mxu0 0.0
  %3031 = vmatmul.mubr.f32.gmra.mrb[0].mxu0 %v2588
  %v3032 = vpop.f32.mrb[0].mxu0
  %v3033 = vadd.f32 %v747, %v3032
  %v3034 = vpop.f32.mrb[0].mxu0
  %v3035 = vadd.f32 %v749, %v3034
  %3036 = vmatprep.mubr.f32.mxu0 0.0
  %3037 = vmatmul.mubr.f32.gmra.mrb[0].mxu0 %v2591
  %v3038 = vpop.f32.mrb[0].mxu0
  %v3039 = vadd.f32 %v753, %v3038
  %v3040 = vpop.f32.mrb[0].mxu0
  %v3041 = vadd.f32 %v755, %v3040
  %3042 = vmatprep.mubr.f32.mxu0 0.0
  %3043 = vmatmul.mubr.f32.gmra.mrb[0].mxu0 %v2594
  %v3044 = vpop.f32.mrb[0].mxu0
  %v3045 = vadd.f32 %v759, %v3044
  %v3046 = vpop.f32.mrb[0].mxu0
  %v3047 = vadd.f32 %v761, %v3046
  %3048 = vmatprep.mubr.f32.mxu0 0.0
  %3049 = vmatmul.mubr.f32.gmra.mrb[0].mxu0 %v2597
  %v3050 = vpop.f32.mrb[0].mxu0
  %v3051 = vadd.f32 %v765, %v3050
  %v3052 = vpop.f32.mrb[0].mxu0
  %v3053 = vadd.f32 %v767, %v3052
  %3054 = vmatprep.mubr.f32.mxu0 0.0
  %3055 = vmatmul.mubr.f32.gmra.mrb[0].mxu0 %v2600
  %v3056 = vpop.f32.mrb[0].mxu0
  %v3057 = vadd.f32 %v771, %v3056
  %v3058 = vpop.f32.mrb[0].mxu0
  %v3059 = vadd.f32 %v773, %v3058
  %3060 = vmatprep.mubr.f32.mxu0 0.0
  %3061 = vmatmul.mubr.f32.gmra.mrb[0].mxu0 %v2603
  %v3062 = vpop.f32.mrb[0].mxu0
  %v3063 = vadd.f32 %v777, %v3062
  %v3064 = vpop.f32.mrb[0].mxu0
  %v3065 = vadd.f32 %v779, %v3064
  %3066 = vmatprep.mubr.f32.mxu0 0.0
  %3067 = vmatmul.mubr.f32.gmra.mrb[0].mxu0 %v2606
  %v3068 = vpop.f32.mrb[0].mxu0
  %v3069 = vadd.f32 %v783, %v3068
  %v3070 = vpop.f32.mrb[0].mxu0
  %v3071 = vadd.f32 %v785, %v3070
  %3072 = vmatprep.mubr.f32.mxu0 0.0
  %3073 = vmatmul.mubr.f32.gmra.mrb[0].mxu0 %v2609
  %v3074 = vpop.f32.mrb[0].mxu0
  %v3075 = vadd.f32 %v789, %v3074
  %v3076 = vpop.f32.mrb[0].mxu0
  %v3077 = vadd.f32 %v791, %v3076
  %3078 = vmatprep.mubr.f32.mxu0 0.0
  %3079 = vmatmul.mubr.f32.gmra.mrb[0].mxu0 %v2612
  %v3080 = vpop.f32.mrb[0].mxu0
  %v3081 = vadd.f32 %v795, %v3080
  %v3082 = vpop.f32.mrb[0].mxu0
  %v3083 = vadd.f32 %v797, %v3082
  %3084 = vmatprep.mubr.f32.mxu0 0.0
  %3085 = vmatmul.mubr.f32.gmra.mrb[0].mxu0 %v2615
  %v3086 = vpop.f32.mrb[0].mxu0
  %v3087 = vadd.f32 %v801, %v3086
  %v3088 = vpop.f32.mrb[0].mxu0
  %v3089 = vadd.f32 %v803, %v3088
  %3090 = vmatprep.mubr.f32.mxu0 0.0
  %3091 = vmatmul.mubr.f32.gmra.mrb[0].mxu0 %v2618
  %v3092 = vpop.f32.mrb[0].mxu0
  %v3093 = vadd.f32 %v807, %v3092
  %v3094 = vpop.f32.mrb[0].mxu0
  %v3095 = vadd.f32 %v809, %v3094
  %3096 = vmatprep.mubr.f32.mxu0 0.0
  %3097 = vmatmul.mubr.f32.gmra.mrb[0].mxu0 %v2621
  %v3098 = vpop.f32.mrb[0].mxu0
  %v3099 = vadd.f32 %v813, %v3098
  %v3100 = vpop.f32.mrb[0].mxu0
  %v3101 = vadd.f32 %v815, %v3100
  %3102 = vmatprep.mubr.f32.mxu0 0.0
  %3103 = vmatmul.mubr.f32.gmra.mrb[0].mxu0 %v2624
  %v3104 = vpop.f32.mrb[0].mxu0
  %v3105 = vadd.f32 %v819, %v3104
  %v3106 = vpop.f32.mrb[0].mxu0
  %v3107 = vadd.f32 %v821, %v3106
  %3108 = vdwg.mxu0
  %3109 = vmatprep.subr.mxu0 %v42
  %3110 = vmatpush1.msra.mxu0 %v41
  %3111 = vmatprep.subr.mxu0 %v70
  %3112 = vmatpush1.msra.mxu0 %v69
  %3113 = vmatprep.subr.mxu0 %v98
  %3114 = vmatpush1.msra.mxu0 %v97
  %3115 = vmatprep.subr.mxu0 %v126
  %3116 = vmatpush1.msra.mxu0 %v125
  %3117 = vmatprep.subr.mxu0 %v154
  %3118 = vmatpush1.msra.mxu0 %v153
  %3119 = vmatprep.subr.mxu0 %v182
  %3120 = vmatpush1.msra.mxu0 %v181
  %3121 = vmatprep.subr.mxu0 %v210
  %3122 = vmatpush1.msra.mxu0 %v209
  %3123 = vmatprep.subr.mxu0 %v238
  %3124 = vmatpush1.msra.mxu0 %v237
  %3125 = vmatprep.subr.mxu0 0.0
  %3126 = vmatpush1.msra.mxu0 0.0
  %3127 = vmatprep.subr.mxu0 0.0
  %3128 = vmatpush1.msra.mxu0 0.0
  %3129 = vmatprep.subr.mxu0 0.0
  %3130 = vmatpush1.msra.mxu0 0.0
  %3131 = vmatprep.subr.mxu0 0.0
  %3132 = vmatpush1.msra.mxu0 0.0
  %3133 = vmatprep.subr.mxu0 0.0
  %3134 = vmatpush1.msra.mxu0 0.0
  %3135 = vmatprep.subr.mxu0 0.0
  %3136 = vmatpush1.msra.mxu0 0.0
  %3137 = vmatprep.subr.mxu0 0.0
  %3138 = vmatpush1.msra.mxu0 0.0
  %3139 = vmatprep.subr.mxu0 0.0
  %3140 = vmatpush1.msra.mxu0 0.0
  %3141 = vmatprep.subr.mxu0 0.0
  %3142 = vmatpush1.msra.mxu0 0.0
  %3143 = vmatprep.subr.mxu0 0.0
  %3144 = vmatpush1.msra.mxu0 0.0
  %3145 = vmatprep.subr.mxu0 0.0
  %3146 = vmatpush1.msra.mxu0 0.0
  %3147 = vmatprep.subr.mxu0 0.0
  %3148 = vmatpush1.msra.mxu0 0.0
  %3149 = vmatprep.subr.mxu0 0.0
  %3150 = vmatpush1.msra.mxu0 0.0
  %3151 = vmatprep.subr.mxu0 0.0
  %3152 = vmatpush1.msra.mxu0 0.0
  %3153 = vmatprep.subr.mxu0 0.0
  %3154 = vmatpush1.msra.mxu0 0.0
  %3155 = vmatprep.subr.mxu0 0.0
  %3156 = vmatpush1.msra.mxu0 0.0
  %3157 = vmatprep.subr.mxu0 0.0
  %3158 = vmatpush1.msra.mxu0 0.0
  %3159 = vmatprep.subr.mxu0 0.0
  %3160 = vmatpush1.msra.mxu0 0.0
  %3161 = vmatprep.subr.mxu0 0.0
  %3162 = vmatpush1.msra.mxu0 0.0
  %3163 = vmatprep.subr.mxu0 0.0
  %3164 = vmatpush1.msra.mxu0 0.0
  %3165 = vmatprep.subr.mxu0 0.0
  %3166 = vmatpush1.msra.mxu0 0.0
  %3167 = vmatprep.subr.mxu0 0.0
  %3168 = vmatpush1.msra.mxu0 0.0
  %3169 = vmatprep.subr.mxu0 0.0
  %3170 = vmatpush1.msra.mxu0 0.0
  %3171 = vmatprep.subr.mxu0 0.0
  %3172 = vmatpush1.msra.mxu0 0.0
  %3173 = vmatprep.mubr.f32.mxu0 0.0
  %3174 = vmatmul.mubr.f32.gmra.mrb[0].mxu0 %v2579
  %v3175 = vpop.f32.mrb[0].mxu0
  %v3176 = vadd.f32 %v890, %v3175
  %v3177 = vpop.f32.mrb[0].mxu0
  %v3178 = vadd.f32 %v892, %v3177
  %3179 = vmatprep.mubr.f32.mxu0 0.0
  %3180 = vmatmul.mubr.f32.gmra.mrb[0].mxu0 %v2582
  %v3181 = vpop.f32.mrb[0].mxu0
  %v3182 = vadd.f32 %v896, %v3181
  %v3183 = vpop.f32.mrb[0].mxu0
  %v3184 = vadd.f32 %v898, %v3183
  %3185 = vmatprep.mubr.f32.mxu0 0.0
  %3186 = vmatmul.mubr.f32.gmra.mrb[0].mxu0 %v2585
  %v3187 = vpop.f32.mrb[0].mxu0
  %v3188 = vadd.f32 %v902, %v3187
  %v3189 = vpop.f32.mrb[0].mxu0
  %v3190 = vadd.f32 %v904, %v3189
  %3191 = vmatprep.mubr.f32.mxu0 0.0
  %3192 = vmatmul.mubr.f32.gmra.mrb[0].mxu0 %v2588
  %v3193 = vpop.f32.mrb[0].mxu0
  %v3194 = vadd.f32 %v908, %v3193
  %v3195 = vpop.f32.mrb[0].mxu0
  %v3196 = vadd.f32 %v910, %v3195
  %3197 = vmatprep.mubr.f32.mxu0 0.0
  %3198 = vmatmul.mubr.f32.gmra.mrb[0].mxu0 %v2591
  %v3199 = vpop.f32.mrb[0].mxu0
  %v3200 = vadd.f32 %v914, %v3199
  %v3201 = vpop.f32.mrb[0].mxu0
  %v3202 = vadd.f32 %v916, %v3201
  %3203 = vmatprep.mubr.f32.mxu0 0.0
  %3204 = vmatmul.mubr.f32.gmra.mrb[0].mxu0 %v2594
  %v3205 = vpop.f32.mrb[0].mxu0
  %v3206 = vadd.f32 %v920, %v3205
  %v3207 = vpop.f32.mrb[0].mxu0
  %v3208 = vadd.f32 %v922, %v3207
  %3209 = vmatprep.mubr.f32.mxu0 0.0
  %3210 = vmatmul.mubr.f32.gmra.mrb[0].mxu0 %v2597
  %v3211 = vpop.f32.mrb[0].mxu0
  %v3212 = vadd.f32 %v926, %v3211
  %v3213 = vpop.f32.mrb[0].mxu0
  %v3214 = vadd.f32 %v928, %v3213
  %3215 = vmatprep.mubr.f32.mxu0 0.0
  %3216 = vmatmul.mubr.f32.gmra.mrb[0].mxu0 %v2600
  %v3217 = vpop.f32.mrb[0].mxu0
  %v3218 = vadd.f32 %v932, %v3217
  %v3219 = vpop.f32.mrb[0].mxu0
  %v3220 = vadd.f32 %v934, %v3219
  %3221 = vmatprep.mubr.f32.mxu0 0.0
  %3222 = vmatmul.mubr.f32.gmra.mrb[0].mxu0 %v2603
  %v3223 = vpop.f32.mrb[0].mxu0
  %v3224 = vadd.f32 %v938, %v3223
  %v3225 = vpop.f32.mrb[0].mxu0
  %v3226 = vadd.f32 %v940, %v3225
  %3227 = vmatprep.mubr.f32.mxu0 0.0
  %3228 = vmatmul.mubr.f32.gmra.mrb[0].mxu0 %v2606
  %v3229 = vpop.f32.mrb[0].mxu0
  %v3230 = vadd.f32 %v944, %v3229
  %v3231 = vpop.f32.mrb[0].mxu0
  %v3232 = vadd.f32 %v946, %v3231
  %3233 = vmatprep.mubr.f32.mxu0 0.0
  %3234 = vmatmul.mubr.f32.gmra.mrb[0].mxu0 %v2609
  %v3235 = vpop.f32.mrb[0].mxu0
  %v3236 = vadd.f32 %v950, %v3235
  %v3237 = vpop.f32.mrb[0].mxu0
  %v3238 = vadd.f32 %v952, %v3237
  %3239 = vmatprep.mubr.f32.mxu0 0.0
  %3240 = vmatmul.mubr.f32.gmra.mrb[0].mxu0 %v2612
  %v3241 = vpop.f32.mrb[0].mxu0
  %v3242 = vadd.f32 %v956, %v3241
  %v3243 = vpop.f32.mrb[0].mxu0
  %v3244 = vadd.f32 %v958, %v3243
  %3245 = vmatprep.mubr.f32.mxu0 0.0
  %3246 = vmatmul.mubr.f32.gmra.mrb[0].mxu0 %v2615
  %v3247 = vpop.f32.mrb[0].mxu0
  %v3248 = vadd.f32 %v962, %v3247
  %v3249 = vpop.f32.mrb[0].mxu0
  %v3250 = vadd.f32 %v964, %v3249
  %3251 = vmatprep.mubr.f32.mxu0 0.0
  %3252 = vmatmul.mubr.f32.gmra.mrb[0].mxu0 %v2618
  %v3253 = vpop.f32.mrb[0].mxu0
  %v3254 = vadd.f32 %v968, %v3253
  %v3255 = vpop.f32.mrb[0].mxu0
  %v3256 = vadd.f32 %v970, %v3255
  %3257 = vmatprep.mubr.f32.mxu0 0.0
  %3258 = vmatmul.mubr.f32.gmra.mrb[0].mxu0 %v2621
  %v3259 = vpop.f32.mrb[0].mxu0
  %v3260 = vadd.f32 %v974, %v3259
  %v3261 = vpop.f32.mrb[0].mxu0
  %v3262 = vadd.f32 %v976, %v3261
  %3263 = vmatprep.mubr.f32.mxu0 0.0
  %3264 = vmatmul.mubr.f32.gmra.mrb[0].mxu0 %v2624
  %v3265 = vpop.f32.mrb[0].mxu0
  %v3266 = vadd.f32 %v980, %v3265
  %v3267 = vpop.f32.mrb[0].mxu0
  %v3268 = vadd.f32 %v982, %v3267
  %3269 = vdwg.mxu0
  %3270 = vmatprep.subr.mxu0 %v44
  %3271 = vmatpush1.msra.mxu0 %v43
  %3272 = vmatprep.subr.mxu0 %v72
  %3273 = vmatpush1.msra.mxu0 %v71
  %3274 = vmatprep.subr.mxu0 %v100
  %3275 = vmatpush1.msra.mxu0 %v99
  %3276 = vmatprep.subr.mxu0 %v128
  %3277 = vmatpush1.msra.mxu0 %v127
  %3278 = vmatprep.subr.mxu0 %v156
  %3279 = vmatpush1.msra.mxu0 %v155
  %3280 = vmatprep.subr.mxu0 %v184
  %3281 = vmatpush1.msra.mxu0 %v183
  %3282 = vmatprep.subr.mxu0 %v212
  %3283 = vmatpush1.msra.mxu0 %v211
  %3284 = vmatprep.subr.mxu0 %v240
  %3285 = vmatpush1.msra.mxu0 %v239
  %3286 = vmatprep.subr.mxu0 0.0
  %3287 = vmatpush1.msra.mxu0 0.0
  %3288 = vmatprep.subr.mxu0 0.0
  %3289 = vmatpush1.msra.mxu0 0.0
  %3290 = vmatprep.subr.mxu0 0.0
  %3291 = vmatpush1.msra.mxu0 0.0
  %3292 = vmatprep.subr.mxu0 0.0
  %3293 = vmatpush1.msra.mxu0 0.0
  %3294 = vmatprep.subr.mxu0 0.0
  %3295 = vmatpush1.msra.mxu0 0.0
  %3296 = vmatprep.subr.mxu0 0.0
  %3297 = vmatpush1.msra.mxu0 0.0
  %3298 = vmatprep.subr.mxu0 0.0
  %3299 = vmatpush1.msra.mxu0 0.0
  %3300 = vmatprep.subr.mxu0 0.0
  %3301 = vmatpush1.msra.mxu0 0.0
  %3302 = vmatprep.subr.mxu0 0.0
  %3303 = vmatpush1.msra.mxu0 0.0
  %3304 = vmatprep.subr.mxu0 0.0
  %3305 = vmatpush1.msra.mxu0 0.0
  %3306 = vmatprep.subr.mxu0 0.0
  %3307 = vmatpush1.msra.mxu0 0.0
  %3308 = vmatprep.subr.mxu0 0.0
  %3309 = vmatpush1.msra.mxu0 0.0
  %3310 = vmatprep.subr.mxu0 0.0
  %3311 = vmatpush1.msra.mxu0 0.0
  %3312 = vmatprep.subr.mxu0 0.0
  %3313 = vmatpush1.msra.mxu0 0.0
  %3314 = vmatprep.subr.mxu0 0.0
  %3315 = vmatpush1.msra.mxu0 0.0
  %3316 = vmatprep.subr.mxu0 0.0
  %3317 = vmatpush1.msra.mxu0 0.0
  %3318 = vmatprep.subr.mxu0 0.0
  %3319 = vmatpush1.msra.mxu0 0.0
  %3320 = vmatprep.subr.mxu0 0.0
  %3321 = vmatpush1.msra.mxu0 0.0
  %3322 = vmatprep.subr.mxu0 0.0
  %3323 = vmatpush1.msra.mxu0 0.0
  %3324 = vmatprep.subr.mxu0 0.0
  %3325 = vmatpush1.msra.mxu0 0.0
  %3326 = vmatprep.subr.mxu0 0.0
  %3327 = vmatpush1.msra.mxu0 0.0
  %3328 = vmatprep.subr.mxu0 0.0
  %3329 = vmatpush1.msra.mxu0 0.0
  %3330 = vmatprep.subr.mxu0 0.0
  %3331 = vmatpush1.msra.mxu0 0.0
  %3332 = vmatprep.subr.mxu0 0.0
  %3333 = vmatpush1.msra.mxu0 0.0
  %3334 = vmatprep.mubr.f32.mxu0 0.0
  %3335 = vmatmul.mubr.f32.gmra.mrb[0].mxu0 %v2579
  %v3336 = vpop.f32.mrb[0].mxu0
  %v3337 = vadd.f32 %v1051, %v3336
  %v3338 = vpop.f32.mrb[0].mxu0
  %v3339 = vadd.f32 %v1053, %v3338
  %3340 = vmatprep.mubr.f32.mxu0 0.0
  %3341 = vmatmul.mubr.f32.gmra.mrb[0].mxu0 %v2582
  %v3342 = vpop.f32.mrb[0].mxu0
  %v3343 = vadd.f32 %v1057, %v3342
  %v3344 = vpop.f32.mrb[0].mxu0
  %v3345 = vadd.f32 %v1059, %v3344
  %3346 = vmatprep.mubr.f32.mxu0 0.0
  %3347 = vmatmul.mubr.f32.gmra.mrb[0].mxu0 %v2585
  %v3348 = vpop.f32.mrb[0].mxu0
  %v3349 = vadd.f32 %v1063, %v3348
  %v3350 = vpop.f32.mrb[0].mxu0
  %v3351 = vadd.f32 %v1065, %v3350
  %3352 = vmatprep.mubr.f32.mxu0 0.0
  %3353 = vmatmul.mubr.f32.gmra.mrb[0].mxu0 %v2588
  %v3354 = vpop.f32.mrb[0].mxu0
  %v3355 = vadd.f32 %v1069, %v3354
  %v3356 = vpop.f32.mrb[0].mxu0
  %v3357 = vadd.f32 %v1071, %v3356
  %3358 = vmatprep.mubr.f32.mxu0 0.0
  %3359 = vmatmul.mubr.f32.gmra.mrb[0].mxu0 %v2591
  %v3360 = vpop.f32.mrb[0].mxu0
  %v3361 = vadd.f32 %v1075, %v3360
  %v3362 = vpop.f32.mrb[0].mxu0
  %v3363 = vadd.f32 %v1077, %v3362
  %3364 = vmatprep.mubr.f32.mxu0 0.0
  %3365 = vmatmul.mubr.f32.gmra.mrb[0].mxu0 %v2594
  %v3366 = vpop.f32.mrb[0].mxu0
  %v3367 = vadd.f32 %v1081, %v3366
  %v3368 = vpop.f32.mrb[0].mxu0
  %v3369 = vadd.f32 %v1083, %v3368
  %3370 = vmatprep.mubr.f32.mxu0 0.0
  %3371 = vmatmul.mubr.f32.gmra.mrb[0].mxu0 %v2597
  %v3372 = vpop.f32.mrb[0].mxu0
  %v3373 = vadd.f32 %v1087, %v3372
  %v3374 = vpop.f32.mrb[0].mxu0
  %v3375 = vadd.f32 %v1089, %v3374
  %3376 = vmatprep.mubr.f32.mxu0 0.0
  %3377 = vmatmul.mubr.f32.gmra.mrb[0].mxu0 %v2600
  %v3378 = vpop.f32.mrb[0].mxu0
  %v3379 = vadd.f32 %v1093, %v3378
  %v3380 = vpop.f32.mrb[0].mxu0
  %v3381 = vadd.f32 %v1095, %v3380
  %3382 = vmatprep.mubr.f32.mxu0 0.0
  %3383 = vmatmul.mubr.f32.gmra.mrb[0].mxu0 %v2603
  %v3384 = vpop.f32.mrb[0].mxu0
  %v3385 = vadd.f32 %v1099, %v3384
  %v3386 = vpop.f32.mrb[0].mxu0
  %v3387 = vadd.f32 %v1101, %v3386
  %3388 = vmatprep.mubr.f32.mxu0 0.0
  %3389 = vmatmul.mubr.f32.gmra.mrb[0].mxu0 %v2606
  %v3390 = vpop.f32.mrb[0].mxu0
  %v3391 = vadd.f32 %v1105, %v3390
  %v3392 = vpop.f32.mrb[0].mxu0
  %v3393 = vadd.f32 %v1107, %v3392
  %3394 = vmatprep.mubr.f32.mxu0 0.0
  %3395 = vmatmul.mubr.f32.gmra.mrb[0].mxu0 %v2609
  %v3396 = vpop.f32.mrb[0].mxu0
  %v3397 = vadd.f32 %v1111, %v3396
  %v3398 = vpop.f32.mrb[0].mxu0
  %v3399 = vadd.f32 %v1113, %v3398
  %3400 = vmatprep.mubr.f32.mxu0 0.0
  %3401 = vmatmul.mubr.f32.gmra.mrb[0].mxu0 %v2612
  %v3402 = vpop.f32.mrb[0].mxu0
  %v3403 = vadd.f32 %v1117, %v3402
  %v3404 = vpop.f32.mrb[0].mxu0
  %v3405 = vadd.f32 %v1119, %v3404
  %3406 = vmatprep.mubr.f32.mxu0 0.0
  %3407 = vmatmul.mubr.f32.gmra.mrb[0].mxu0 %v2615
  %v3408 = vpop.f32.mrb[0].mxu0
  %v3409 = vadd.f32 %v1123, %v3408
  %v3410 = vpop.f32.mrb[0].mxu0
  %v3411 = vadd.f32 %v1125, %v3410
  %3412 = vmatprep.mubr.f32.mxu0 0.0
  %3413 = vmatmul.mubr.f32.gmra.mrb[0].mxu0 %v2618
  %v3414 = vpop.f32.mrb[0].mxu0
  %v3415 = vadd.f32 %v1129, %v3414
  %v3416 = vpop.f32.mrb[0].mxu0
  %v3417 = vadd.f32 %v1131, %v3416
  %3418 = vmatprep.mubr.f32.mxu0 0.0
  %3419 = vmatmul.mubr.f32.gmra.mrb[0].mxu0 %v2621
  %v3420 = vpop.f32.mrb[0].mxu0
  %v3421 = vadd.f32 %v1135, %v3420
  %v3422 = vpop.f32.mrb[0].mxu0
  %v3423 = vadd.f32 %v1137, %v3422
  %3424 = vmatprep.mubr.f32.mxu0 0.0
  %3425 = vmatmul.mubr.f32.gmra.mrb[0].mxu0 %v2624
  %v3426 = vpop.f32.mrb[0].mxu0
  %v3427 = vadd.f32 %v1141, %v3426
  %v3428 = vpop.f32.mrb[0].mxu0
  %v3429 = vadd.f32 %v1143, %v3428
  %3430 = vdwg.mxu0
  %3431 = vmatprep.subr.mxu0 %v46
  %3432 = vmatpush1.msra.mxu0 %v45
  %3433 = vmatprep.subr.mxu0 %v74
  %3434 = vmatpush1.msra.mxu0 %v73
  %3435 = vmatprep.subr.mxu0 %v102
  %3436 = vmatpush1.msra.mxu0 %v101
  %3437 = vmatprep.subr.mxu0 %v130
  %3438 = vmatpush1.msra.mxu0 %v129
  %3439 = vmatprep.subr.mxu0 %v158
  %3440 = vmatpush1.msra.mxu0 %v157
  %3441 = vmatprep.subr.mxu0 %v186
  %3442 = vmatpush1.msra.mxu0 %v185
  %3443 = vmatprep.subr.mxu0 %v214
  %3444 = vmatpush1.msra.mxu0 %v213
  %3445 = vmatprep.subr.mxu0 %v242
  %3446 = vmatpush1.msra.mxu0 %v241
  %3447 = vmatprep.subr.mxu0 0.0
  %3448 = vmatpush1.msra.mxu0 0.0
  %3449 = vmatprep.subr.mxu0 0.0
  %3450 = vmatpush1.msra.mxu0 0.0
  %3451 = vmatprep.subr.mxu0 0.0
  %3452 = vmatpush1.msra.mxu0 0.0
  %3453 = vmatprep.subr.mxu0 0.0
  %3454 = vmatpush1.msra.mxu0 0.0
  %3455 = vmatprep.subr.mxu0 0.0
  %3456 = vmatpush1.msra.mxu0 0.0
  %3457 = vmatprep.subr.mxu0 0.0
  %3458 = vmatpush1.msra.mxu0 0.0
  %3459 = vmatprep.subr.mxu0 0.0
  %3460 = vmatpush1.msra.mxu0 0.0
  %3461 = vmatprep.subr.mxu0 0.0
  %3462 = vmatpush1.msra.mxu0 0.0
  %3463 = vmatprep.subr.mxu0 0.0
  %3464 = vmatpush1.msra.mxu0 0.0
  %3465 = vmatprep.subr.mxu0 0.0
  %3466 = vmatpush1.msra.mxu0 0.0
  %3467 = vmatprep.subr.mxu0 0.0
  %3468 = vmatpush1.msra.mxu0 0.0
  %3469 = vmatprep.subr.mxu0 0.0
  %3470 = vmatpush1.msra.mxu0 0.0
  %3471 = vmatprep.subr.mxu0 0.0
  %3472 = vmatpush1.msra.mxu0 0.0
  %3473 = vmatprep.subr.mxu0 0.0
  %3474 = vmatpush1.msra.mxu0 0.0
  %3475 = vmatprep.subr.mxu0 0.0
  %3476 = vmatpush1.msra.mxu0 0.0
  %3477 = vmatprep.subr.mxu0 0.0
  %3478 = vmatpush1.msra.mxu0 0.0
  %3479 = vmatprep.subr.mxu0 0.0
  %3480 = vmatpush1.msra.mxu0 0.0
  %3481 = vmatprep.subr.mxu0 0.0
  %3482 = vmatpush1.msra.mxu0 0.0
  %3483 = vmatprep.subr.mxu0 0.0
  %3484 = vmatpush1.msra.mxu0 0.0
  %3485 = vmatprep.subr.mxu0 0.0
  %3486 = vmatpush1.msra.mxu0 0.0
  %3487 = vmatprep.subr.mxu0 0.0
  %3488 = vmatpush1.msra.mxu0 0.0
  %3489 = vmatprep.subr.mxu0 0.0
  %3490 = vmatpush1.msra.mxu0 0.0
  %3491 = vmatprep.subr.mxu0 0.0
  %3492 = vmatpush1.msra.mxu0 0.0
  %3493 = vmatprep.subr.mxu0 0.0
  %3494 = vmatpush1.msra.mxu0 0.0
  %3495 = vmatprep.mubr.f32.mxu0 0.0
  %3496 = vmatmul.mubr.f32.gmra.mrb[0].mxu0 %v2579
  %v3497 = vpop.f32.mrb[0].mxu0
  %v3498 = vadd.f32 %v1212, %v3497
  %v3499 = vpop.f32.mrb[0].mxu0
  %v3500 = vadd.f32 %v1214, %v3499
  %3501 = vmatprep.mubr.f32.mxu0 0.0
  %3502 = vmatmul.mubr.f32.gmra.mrb[0].mxu0 %v2582
  %v3503 = vpop.f32.mrb[0].mxu0
  %v3504 = vadd.f32 %v1218, %v3503
  %v3505 = vpop.f32.mrb[0].mxu0
  %v3506 = vadd.f32 %v1220, %v3505
  %3507 = vmatprep.mubr.f32.mxu0 0.0
  %3508 = vmatmul.mubr.f32.gmra.mrb[0].mxu0 %v2585
  %v3509 = vpop.f32.mrb[0].mxu0
  %v3510 = vadd.f32 %v1224, %v3509
  %v3511 = vpop.f32.mrb[0].mxu0
  %v3512 = vadd.f32 %v1226, %v3511
  %3513 = vmatprep.mubr.f32.mxu0 0.0
  %3514 = vmatmul.mubr.f32.gmra.mrb[0].mxu0 %v2588
  %v3515 = vpop.f32.mrb[0].mxu0
  %v3516 = vadd.f32 %v1230, %v3515
  %v3517 = vpop.f32.mrb[0].mxu0
  %v3518 = vadd.f32 %v1232, %v3517
  %3519 = vmatprep.mubr.f32.mxu0 0.0
  %3520 = vmatmul.mubr.f32.gmra.mrb[0].mxu0 %v2591
  %v3521 = vpop.f32.mrb[0].mxu0
  %v3522 = vadd.f32 %v1236, %v3521
  %v3523 = vpop.f32.mrb[0].mxu0
  %v3524 = vadd.f32 %v1238, %v3523
  %3525 = vmatprep.mubr.f32.mxu0 0.0
  %3526 = vmatmul.mubr.f32.gmra.mrb[0].mxu0 %v2594
  %v3527 = vpop.f32.mrb[0].mxu0
  %v3528 = vadd.f32 %v1242, %v3527
  %v3529 = vpop.f32.mrb[0].mxu0
  %v3530 = vadd.f32 %v1244, %v3529
  %3531 = vmatprep.mubr.f32.mxu0 0.0
  %3532 = vmatmul.mubr.f32.gmra.mrb[0].mxu0 %v2597
  %v3533 = vpop.f32.mrb[0].mxu0
  %v3534 = vadd.f32 %v1248, %v3533
  %v3535 = vpop.f32.mrb[0].mxu0
  %v3536 = vadd.f32 %v1250, %v3535
  %3537 = vmatprep.mubr.f32.mxu0 0.0
  %3538 = vmatmul.mubr.f32.gmra.mrb[0].mxu0 %v2600
  %v3539 = vpop.f32.mrb[0].mxu0
  %v3540 = vadd.f32 %v1254, %v3539
  %v3541 = vpop.f32.mrb[0].mxu0
  %v3542 = vadd.f32 %v1256, %v3541
  %3543 = vmatprep.mubr.f32.mxu0 0.0
  %3544 = vmatmul.mubr.f32.gmra.mrb[0].mxu0 %v2603
  %v3545 = vpop.f32.mrb[0].mxu0
  %v3546 = vadd.f32 %v1260, %v3545
  %v3547 = vpop.f32.mrb[0].mxu0
  %v3548 = vadd.f32 %v1262, %v3547
  %3549 = vmatprep.mubr.f32.mxu0 0.0
  %3550 = vmatmul.mubr.f32.gmra.mrb[0].mxu0 %v2606
  %v3551 = vpop.f32.mrb[0].mxu0
  %v3552 = vadd.f32 %v1266, %v3551
  %v3553 = vpop.f32.mrb[0].mxu0
  %v3554 = vadd.f32 %v1268, %v3553
  %3555 = vmatprep.mubr.f32.mxu0 0.0
  %3556 = vmatmul.mubr.f32.gmra.mrb[0].mxu0 %v2609
  %v3557 = vpop.f32.mrb[0].mxu0
  %v3558 = vadd.f32 %v1272, %v3557
  %v3559 = vpop.f32.mrb[0].mxu0
  %v3560 = vadd.f32 %v1274, %v3559
  %3561 = vmatprep.mubr.f32.mxu0 0.0
  %3562 = vmatmul.mubr.f32.gmra.mrb[0].mxu0 %v2612
  %v3563 = vpop.f32.mrb[0].mxu0
  %v3564 = vadd.f32 %v1278, %v3563
  %v3565 = vpop.f32.mrb[0].mxu0
  %v3566 = vadd.f32 %v1280, %v3565
  %3567 = vmatprep.mubr.f32.mxu0 0.0
  %3568 = vmatmul.mubr.f32.gmra.mrb[0].mxu0 %v2615
  %v3569 = vpop.f32.mrb[0].mxu0
  %v3570 = vadd.f32 %v1284, %v3569
  %v3571 = vpop.f32.mrb[0].mxu0
  %v3572 = vadd.f32 %v1286, %v3571
  %3573 = vmatprep.mubr.f32.mxu0 0.0
  %3574 = vmatmul.mubr.f32.gmra.mrb[0].mxu0 %v2618
  %v3575 = vpop.f32.mrb[0].mxu0
  %v3576 = vadd.f32 %v1290, %v3575
  %v3577 = vpop.f32.mrb[0].mxu0
  %v3578 = vadd.f32 %v1292, %v3577
  %3579 = vmatprep.mubr.f32.mxu0 0.0
  %3580 = vmatmul.mubr.f32.gmra.mrb[0].mxu0 %v2621
  %v3581 = vpop.f32.mrb[0].mxu0
  %v3582 = vadd.f32 %v1296, %v3581
  %v3583 = vpop.f32.mrb[0].mxu0
  %v3584 = vadd.f32 %v1298, %v3583
  %3585 = vmatprep.mubr.f32.mxu0 0.0
  %3586 = vmatmul.mubr.f32.gmra.mrb[0].mxu0 %v2624
  %v3587 = vpop.f32.mrb[0].mxu0
  %v3588 = vadd.f32 %v1302, %v3587
  %v3589 = vpop.f32.mrb[0].mxu0
  %v3590 = vadd.f32 %v1304, %v3589
  %3591 = vdwg.mxu0
  %3592 = vmatprep.subr.mxu0 %v48
  %3593 = vmatpush1.msra.mxu0 %v47
  %3594 = vmatprep.subr.mxu0 %v76
  %3595 = vmatpush1.msra.mxu0 %v75
  %3596 = vmatprep.subr.mxu0 %v104
  %3597 = vmatpush1.msra.mxu0 %v103
  %3598 = vmatprep.subr.mxu0 %v132
  %3599 = vmatpush1.msra.mxu0 %v131
  %3600 = vmatprep.subr.mxu0 %v160
  %3601 = vmatpush1.msra.mxu0 %v159
  %3602 = vmatprep.subr.mxu0 %v188
  %3603 = vmatpush1.msra.mxu0 %v187
  %3604 = vmatprep.subr.mxu0 %v216
  %3605 = vmatpush1.msra.mxu0 %v215
  %3606 = vmatprep.subr.mxu0 %v244
  %3607 = vmatpush1.msra.mxu0 %v243
  %3608 = vmatprep.subr.mxu0 0.0
  %3609 = vmatpush1.msra.mxu0 0.0
  %3610 = vmatprep.subr.mxu0 0.0
  %3611 = vmatpush1.msra.mxu0 0.0
  %3612 = vmatprep.subr.mxu0 0.0
  %3613 = vmatpush1.msra.mxu0 0.0
  %3614 = vmatprep.subr.mxu0 0.0
  %3615 = vmatpush1.msra.mxu0 0.0
  %3616 = vmatprep.subr.mxu0 0.0
  %3617 = vmatpush1.msra.mxu0 0.0
  %3618 = vmatprep.subr.mxu0 0.0
  %3619 = vmatpush1.msra.mxu0 0.0
  %3620 = vmatprep.subr.mxu0 0.0
  %3621 = vmatpush1.msra.mxu0 0.0
  %3622 = vmatprep.subr.mxu0 0.0
  %3623 = vmatpush1.msra.mxu0 0.0
  %3624 = vmatprep.subr.mxu0 0.0
  %3625 = vmatpush1.msra.mxu0 0.0
  %3626 = vmatprep.subr.mxu0 0.0
  %3627 = vmatpush1.msra.mxu0 0.0
  %3628 = vmatprep.subr.mxu0 0.0
  %3629 = vmatpush1.msra.mxu0 0.0
  %3630 = vmatprep.subr.mxu0 0.0
  %3631 = vmatpush1.msra.mxu0 0.0
  %3632 = vmatprep.subr.mxu0 0.0
  %3633 = vmatpush1.msra.mxu0 0.0
  %3634 = vmatprep.subr.mxu0 0.0
  %3635 = vmatpush1.msra.mxu0 0.0
  %3636 = vmatprep.subr.mxu0 0.0
  %3637 = vmatpush1.msra.mxu0 0.0
  %3638 = vmatprep.subr.mxu0 0.0
  %3639 = vmatpush1.msra.mxu0 0.0
  %3640 = vmatprep.subr.mxu0 0.0
  %3641 = vmatpush1.msra.mxu0 0.0
  %3642 = vmatprep.subr.mxu0 0.0
  %3643 = vmatpush1.msra.mxu0 0.0
  %3644 = vmatprep.subr.mxu0 0.0
  %3645 = vmatpush1.msra.mxu0 0.0
  %3646 = vmatprep.subr.mxu0 0.0
  %3647 = vmatpush1.msra.mxu0 0.0
  %3648 = vmatprep.subr.mxu0 0.0
  %3649 = vmatpush1.msra.mxu0 0.0
  %3650 = vmatprep.subr.mxu0 0.0
  %3651 = vmatpush1.msra.mxu0 0.0
  %3652 = vmatprep.subr.mxu0 0.0
  %3653 = vmatpush1.msra.mxu0 0.0
  %3654 = vmatprep.subr.mxu0 0.0
  %3655 = vmatpush1.msra.mxu0 0.0
  %3656 = vmatprep.mubr.f32.mxu0 0.0
  %3657 = vmatmul.mubr.f32.gmra.mrb[0].mxu0 %v2579
  %v3658 = vpop.f32.mrb[0].mxu0
  %v3659 = vadd.f32 %v1373, %v3658
  %v3660 = vpop.f32.mrb[0].mxu0
  %v3661 = vadd.f32 %v1375, %v3660
  %3662 = vmatprep.mubr.f32.mxu0 0.0
  %3663 = vmatmul.mubr.f32.gmra.mrb[0].mxu0 %v2582
  %v3664 = vpop.f32.mrb[0].mxu0
  %v3665 = vadd.f32 %v1379, %v3664
  %v3666 = vpop.f32.mrb[0].mxu0
  %v3667 = vadd.f32 %v1381, %v3666
  %3668 = vmatprep.mubr.f32.mxu0 0.0
  %3669 = vmatmul.mubr.f32.gmra.mrb[0].mxu0 %v2585
  %v3670 = vpop.f32.mrb[0].mxu0
  %v3671 = vadd.f32 %v1385, %v3670
  %v3672 = vpop.f32.mrb[0].mxu0
  %v3673 = vadd.f32 %v1387, %v3672
  %3674 = vmatprep.mubr.f32.mxu0 0.0
  %3675 = vmatmul.mubr.f32.gmra.mrb[0].mxu0 %v2588
  %v3676 = vpop.f32.mrb[0].mxu0
  %v3677 = vadd.f32 %v1391, %v3676
  %v3678 = vpop.f32.mrb[0].mxu0
  %v3679 = vadd.f32 %v1393, %v3678
  %3680 = vmatprep.mubr.f32.mxu0 0.0
  %3681 = vmatmul.mubr.f32.gmra.mrb[0].mxu0 %v2591
  %v3682 = vpop.f32.mrb[0].mxu0
  %v3683 = vadd.f32 %v1397, %v3682
  %v3684 = vpop.f32.mrb[0].mxu0
  %v3685 = vadd.f32 %v1399, %v3684
  %3686 = vmatprep.mubr.f32.mxu0 0.0
  %3687 = vmatmul.mubr.f32.gmra.mrb[0].mxu0 %v2594
  %v3688 = vpop.f32.mrb[0].mxu0
  %v3689 = vadd.f32 %v1403, %v3688
  %v3690 = vpop.f32.mrb[0].mxu0
  %v3691 = vadd.f32 %v1405, %v3690
  %3692 = vmatprep.mubr.f32.mxu0 0.0
  %3693 = vmatmul.mubr.f32.gmra.mrb[0].mxu0 %v2597
  %v3694 = vpop.f32.mrb[0].mxu0
  %v3695 = vadd.f32 %v1409, %v3694
  %v3696 = vpop.f32.mrb[0].mxu0
  %v3697 = vadd.f32 %v1411, %v3696
  %3698 = vmatprep.mubr.f32.mxu0 0.0
  %3699 = vmatmul.mubr.f32.gmra.mrb[0].mxu0 %v2600
  %v3700 = vpop.f32.mrb[0].mxu0
  %v3701 = vadd.f32 %v1415, %v3700
  %v3702 = vpop.f32.mrb[0].mxu0
  %v3703 = vadd.f32 %v1417, %v3702
  %3704 = vmatprep.mubr.f32.mxu0 0.0
  %3705 = vmatmul.mubr.f32.gmra.mrb[0].mxu0 %v2603
  %v3706 = vpop.f32.mrb[0].mxu0
  %v3707 = vadd.f32 %v1421, %v3706
  %v3708 = vpop.f32.mrb[0].mxu0
  %v3709 = vadd.f32 %v1423, %v3708
  %3710 = vmatprep.mubr.f32.mxu0 0.0
  %3711 = vmatmul.mubr.f32.gmra.mrb[0].mxu0 %v2606
  %v3712 = vpop.f32.mrb[0].mxu0
  %v3713 = vadd.f32 %v1427, %v3712
  %v3714 = vpop.f32.mrb[0].mxu0
  %v3715 = vadd.f32 %v1429, %v3714
  %3716 = vmatprep.mubr.f32.mxu0 0.0
  %3717 = vmatmul.mubr.f32.gmra.mrb[0].mxu0 %v2609
  %v3718 = vpop.f32.mrb[0].mxu0
  %v3719 = vadd.f32 %v1433, %v3718
  %v3720 = vpop.f32.mrb[0].mxu0
  %v3721 = vadd.f32 %v1435, %v3720
  %3722 = vmatprep.mubr.f32.mxu0 0.0
  %3723 = vmatmul.mubr.f32.gmra.mrb[0].mxu0 %v2612
  %v3724 = vpop.f32.mrb[0].mxu0
  %v3725 = vadd.f32 %v1439, %v3724
  %v3726 = vpop.f32.mrb[0].mxu0
  %v3727 = vadd.f32 %v1441, %v3726
  %3728 = vmatprep.mubr.f32.mxu0 0.0
  %3729 = vmatmul.mubr.f32.gmra.mrb[0].mxu0 %v2615
  %v3730 = vpop.f32.mrb[0].mxu0
  %v3731 = vadd.f32 %v1445, %v3730
  %v3732 = vpop.f32.mrb[0].mxu0
  %v3733 = vadd.f32 %v1447, %v3732
  %3734 = vmatprep.mubr.f32.mxu0 0.0
  %3735 = vmatmul.mubr.f32.gmra.mrb[0].mxu0 %v2618
  %v3736 = vpop.f32.mrb[0].mxu0
  %v3737 = vadd.f32 %v1451, %v3736
  %v3738 = vpop.f32.mrb[0].mxu0
  %v3739 = vadd.f32 %v1453, %v3738
  %3740 = vmatprep.mubr.f32.mxu0 0.0
  %3741 = vmatmul.mubr.f32.gmra.mrb[0].mxu0 %v2621
  %v3742 = vpop.f32.mrb[0].mxu0
  %v3743 = vadd.f32 %v1457, %v3742
  %v3744 = vpop.f32.mrb[0].mxu0
  %v3745 = vadd.f32 %v1459, %v3744
  %3746 = vmatprep.mubr.f32.mxu0 0.0
  %3747 = vmatmul.mubr.f32.gmra.mrb[0].mxu0 %v2624
  %v3748 = vpop.f32.mrb[0].mxu0
  %v3749 = vadd.f32 %v1463, %v3748
  %v3750 = vpop.f32.mrb[0].mxu0
  %v3751 = vadd.f32 %v1465, %v3750
  %3752 = vdwg.mxu0
  %3753 = vmatprep.subr.mxu0 %v50
  %3754 = vmatpush1.msra.mxu0 %v49
  %3755 = vmatprep.subr.mxu0 %v78
  %3756 = vmatpush1.msra.mxu0 %v77
  %3757 = vmatprep.subr.mxu0 %v106
  %3758 = vmatpush1.msra.mxu0 %v105
  %3759 = vmatprep.subr.mxu0 %v134
  %3760 = vmatpush1.msra.mxu0 %v133
  %3761 = vmatprep.subr.mxu0 %v162
  %3762 = vmatpush1.msra.mxu0 %v161
  %3763 = vmatprep.subr.mxu0 %v190
  %3764 = vmatpush1.msra.mxu0 %v189
  %3765 = vmatprep.subr.mxu0 %v218
  %3766 = vmatpush1.msra.mxu0 %v217
  %3767 = vmatprep.subr.mxu0 %v246
  %3768 = vmatpush1.msra.mxu0 %v245
  %3769 = vmatprep.subr.mxu0 0.0
  %3770 = vmatpush1.msra.mxu0 0.0
  %3771 = vmatprep.subr.mxu0 0.0
  %3772 = vmatpush1.msra.mxu0 0.0
  %3773 = vmatprep.subr.mxu0 0.0
  %3774 = vmatpush1.msra.mxu0 0.0
  %3775 = vmatprep.subr.mxu0 0.0
  %3776 = vmatpush1.msra.mxu0 0.0
  %3777 = vmatprep.subr.mxu0 0.0
  %3778 = vmatpush1.msra.mxu0 0.0
  %3779 = vmatprep.subr.mxu0 0.0
  %3780 = vmatpush1.msra.mxu0 0.0
  %3781 = vmatprep.subr.mxu0 0.0
  %3782 = vmatpush1.msra.mxu0 0.0
  %3783 = vmatprep.subr.mxu0 0.0
  %3784 = vmatpush1.msra.mxu0 0.0
  %3785 = vmatprep.subr.mxu0 0.0
  %3786 = vmatpush1.msra.mxu0 0.0
  %3787 = vmatprep.subr.mxu0 0.0
  %3788 = vmatpush1.msra.mxu0 0.0
  %3789 = vmatprep.subr.mxu0 0.0
  %3790 = vmatpush1.msra.mxu0 0.0
  %3791 = vmatprep.subr.mxu0 0.0
  %3792 = vmatpush1.msra.mxu0 0.0
  %3793 = vmatprep.subr.mxu0 0.0
  %3794 = vmatpush1.msra.mxu0 0.0
  %3795 = vmatprep.subr.mxu0 0.0
  %3796 = vmatpush1.msra.mxu0 0.0
  %3797 = vmatprep.subr.mxu0 0.0
  %3798 = vmatpush1.msra.mxu0 0.0
  %3799 = vmatprep.subr.mxu0 0.0
  %3800 = vmatpush1.msra.mxu0 0.0
  %3801 = vmatprep.subr.mxu0 0.0
  %3802 = vmatpush1.msra.mxu0 0.0
  %3803 = vmatprep.subr.mxu0 0.0
  %3804 = vmatpush1.msra.mxu0 0.0
  %3805 = vmatprep.subr.mxu0 0.0
  %3806 = vmatpush1.msra.mxu0 0.0
  %3807 = vmatprep.subr.mxu0 0.0
  %3808 = vmatpush1.msra.mxu0 0.0
  %3809 = vmatprep.subr.mxu0 0.0
  %3810 = vmatpush1.msra.mxu0 0.0
  %3811 = vmatprep.subr.mxu0 0.0
  %3812 = vmatpush1.msra.mxu0 0.0
  %3813 = vmatprep.subr.mxu0 0.0
  %3814 = vmatpush1.msra.mxu0 0.0
  %3815 = vmatprep.subr.mxu0 0.0
  %3816 = vmatpush1.msra.mxu0 0.0
  %3817 = vmatprep.mubr.f32.mxu0 0.0
  %3818 = vmatmul.mubr.f32.gmra.mrb[0].mxu0 %v2579
  %v3819 = vpop.f32.mrb[0].mxu0
  %v3820 = vadd.f32 %v1534, %v3819
  %v3821 = vpop.f32.mrb[0].mxu0
  %v3822 = vadd.f32 %v1536, %v3821
  %3823 = vmatprep.mubr.f32.mxu0 0.0
  %3824 = vmatmul.mubr.f32.gmra.mrb[0].mxu0 %v2582
  %v3825 = vpop.f32.mrb[0].mxu0
  %v3826 = vadd.f32 %v1540, %v3825
  %v3827 = vpop.f32.mrb[0].mxu0
  %v3828 = vadd.f32 %v1542, %v3827
  %3829 = vmatprep.mubr.f32.mxu0 0.0
  %3830 = vmatmul.mubr.f32.gmra.mrb[0].mxu0 %v2585
  %v3831 = vpop.f32.mrb[0].mxu0
  %v3832 = vadd.f32 %v1546, %v3831
  %v3833 = vpop.f32.mrb[0].mxu0
  %v3834 = vadd.f32 %v1548, %v3833
  %3835 = vmatprep.mubr.f32.mxu0 0.0
  %3836 = vmatmul.mubr.f32.gmra.mrb[0].mxu0 %v2588
  %v3837 = vpop.f32.mrb[0].mxu0
  %v3838 = vadd.f32 %v1552, %v3837
  %v3839 = vpop.f32.mrb[0].mxu0
  %v3840 = vadd.f32 %v1554, %v3839
  %3841 = vmatprep.mubr.f32.mxu0 0.0
  %3842 = vmatmul.mubr.f32.gmra.mrb[0].mxu0 %v2591
  %v3843 = vpop.f32.mrb[0].mxu0
  %v3844 = vadd.f32 %v1558, %v3843
  %v3845 = vpop.f32.mrb[0].mxu0
  %v3846 = vadd.f32 %v1560, %v3845
  %3847 = vmatprep.mubr.f32.mxu0 0.0
  %3848 = vmatmul.mubr.f32.gmra.mrb[0].mxu0 %v2594
  %v3849 = vpop.f32.mrb[0].mxu0
  %v3850 = vadd.f32 %v1564, %v3849
  %v3851 = vpop.f32.mrb[0].mxu0
  %v3852 = vadd.f32 %v1566, %v3851
  %3853 = vmatprep.mubr.f32.mxu0 0.0
  %3854 = vmatmul.mubr.f32.gmra.mrb[0].mxu0 %v2597
  %v3855 = vpop.f32.mrb[0].mxu0
  %v3856 = vadd.f32 %v1570, %v3855
  %v3857 = vpop.f32.mrb[0].mxu0
  %v3858 = vadd.f32 %v1572, %v3857
  %3859 = vmatprep.mubr.f32.mxu0 0.0
  %3860 = vmatmul.mubr.f32.gmra.mrb[0].mxu0 %v2600
  %v3861 = vpop.f32.mrb[0].mxu0
  %v3862 = vadd.f32 %v1576, %v3861
  %v3863 = vpop.f32.mrb[0].mxu0
  %v3864 = vadd.f32 %v1578, %v3863
  %3865 = vmatprep.mubr.f32.mxu0 0.0
  %3866 = vmatmul.mubr.f32.gmra.mrb[0].mxu0 %v2603
  %v3867 = vpop.f32.mrb[0].mxu0
  %v3868 = vadd.f32 %v1582, %v3867
  %v3869 = vpop.f32.mrb[0].mxu0
  %v3870 = vadd.f32 %v1584, %v3869
  %3871 = vmatprep.mubr.f32.mxu0 0.0
  %3872 = vmatmul.mubr.f32.gmra.mrb[0].mxu0 %v2606
  %v3873 = vpop.f32.mrb[0].mxu0
  %v3874 = vadd.f32 %v1588, %v3873
  %v3875 = vpop.f32.mrb[0].mxu0
  %v3876 = vadd.f32 %v1590, %v3875
  %3877 = vmatprep.mubr.f32.mxu0 0.0
  %3878 = vmatmul.mubr.f32.gmra.mrb[0].mxu0 %v2609
  %v3879 = vpop.f32.mrb[0].mxu0
  %v3880 = vadd.f32 %v1594, %v3879
  %v3881 = vpop.f32.mrb[0].mxu0
  %v3882 = vadd.f32 %v1596, %v3881
  %3883 = vmatprep.mubr.f32.mxu0 0.0
  %3884 = vmatmul.mubr.f32.gmra.mrb[0].mxu0 %v2612
  %v3885 = vpop.f32.mrb[0].mxu0
  %v3886 = vadd.f32 %v1600, %v3885
  %v3887 = vpop.f32.mrb[0].mxu0
  %v3888 = vadd.f32 %v1602, %v3887
  %3889 = vmatprep.mubr.f32.mxu0 0.0
  %3890 = vmatmul.mubr.f32.gmra.mrb[0].mxu0 %v2615
  %v3891 = vpop.f32.mrb[0].mxu0
  %v3892 = vadd.f32 %v1606, %v3891
  %v3893 = vpop.f32.mrb[0].mxu0
  %v3894 = vadd.f32 %v1608, %v3893
  %3895 = vmatprep.mubr.f32.mxu0 0.0
  %3896 = vmatmul.mubr.f32.gmra.mrb[0].mxu0 %v2618
  %v3897 = vpop.f32.mrb[0].mxu0
  %v3898 = vadd.f32 %v1612, %v3897
  %v3899 = vpop.f32.mrb[0].mxu0
  %v3900 = vadd.f32 %v1614, %v3899
  %3901 = vmatprep.mubr.f32.mxu0 0.0
  %3902 = vmatmul.mubr.f32.gmra.mrb[0].mxu0 %v2621
  %v3903 = vpop.f32.mrb[0].mxu0
  %v3904 = vadd.f32 %v1618, %v3903
  %v3905 = vpop.f32.mrb[0].mxu0
  %v3906 = vadd.f32 %v1620, %v3905
  %3907 = vmatprep.mubr.f32.mxu0 0.0
  %3908 = vmatmul.mubr.f32.gmra.mrb[0].mxu0 %v2624
  %v3909 = vpop.f32.mrb[0].mxu0
  %v3910 = vadd.f32 %v1624, %v3909
  %v3911 = vpop.f32.mrb[0].mxu0
  %v3912 = vadd.f32 %v1626, %v3911
  %3913 = vdwg.mxu0
  %3914 = vmatprep.subr.mxu0 %v52
  %3915 = vmatpush1.msra.mxu0 %v51
  %3916 = vmatprep.subr.mxu0 %v80
  %3917 = vmatpush1.msra.mxu0 %v79
  %3918 = vmatprep.subr.mxu0 %v108
  %3919 = vmatpush1.msra.mxu0 %v107
  %3920 = vmatprep.subr.mxu0 %v136
  %3921 = vmatpush1.msra.mxu0 %v135
  %3922 = vmatprep.subr.mxu0 %v164
  %3923 = vmatpush1.msra.mxu0 %v163
  %3924 = vmatprep.subr.mxu0 %v192
  %3925 = vmatpush1.msra.mxu0 %v191
  %3926 = vmatprep.subr.mxu0 %v220
  %3927 = vmatpush1.msra.mxu0 %v219
  %3928 = vmatprep.subr.mxu0 %v248
  %3929 = vmatpush1.msra.mxu0 %v247
  %3930 = vmatprep.subr.mxu0 0.0
  %3931 = vmatpush1.msra.mxu0 0.0
  %3932 = vmatprep.subr.mxu0 0.0
  %3933 = vmatpush1.msra.mxu0 0.0
  %3934 = vmatprep.subr.mxu0 0.0
  %3935 = vmatpush1.msra.mxu0 0.0
  %3936 = vmatprep.subr.mxu0 0.0
  %3937 = vmatpush1.msra.mxu0 0.0
  %3938 = vmatprep.subr.mxu0 0.0
  %3939 = vmatpush1.msra.mxu0 0.0
  %3940 = vmatprep.subr.mxu0 0.0
  %3941 = vmatpush1.msra.mxu0 0.0
  %3942 = vmatprep.subr.mxu0 0.0
  %3943 = vmatpush1.msra.mxu0 0.0
  %3944 = vmatprep.subr.mxu0 0.0
  %3945 = vmatpush1.msra.mxu0 0.0
  %3946 = vmatprep.subr.mxu0 0.0
  %3947 = vmatpush1.msra.mxu0 0.0
  %3948 = vmatprep.subr.mxu0 0.0
  %3949 = vmatpush1.msra.mxu0 0.0
  %3950 = vmatprep.subr.mxu0 0.0
  %3951 = vmatpush1.msra.mxu0 0.0
  %3952 = vmatprep.subr.mxu0 0.0
  %3953 = vmatpush1.msra.mxu0 0.0
  %3954 = vmatprep.subr.mxu0 0.0
  %3955 = vmatpush1.msra.mxu0 0.0
  %3956 = vmatprep.subr.mxu0 0.0
  %3957 = vmatpush1.msra.mxu0 0.0
  %3958 = vmatprep.subr.mxu0 0.0
  %3959 = vmatpush1.msra.mxu0 0.0
  %3960 = vmatprep.subr.mxu0 0.0
  %3961 = vmatpush1.msra.mxu0 0.0
  %3962 = vmatprep.subr.mxu0 0.0
  %3963 = vmatpush1.msra.mxu0 0.0
  %3964 = vmatprep.subr.mxu0 0.0
  %3965 = vmatpush1.msra.mxu0 0.0
  %3966 = vmatprep.subr.mxu0 0.0
  %3967 = vmatpush1.msra.mxu0 0.0
  %3968 = vmatprep.subr.mxu0 0.0
  %3969 = vmatpush1.msra.mxu0 0.0
  %3970 = vmatprep.subr.mxu0 0.0
  %3971 = vmatpush1.msra.mxu0 0.0
  %3972 = vmatprep.subr.mxu0 0.0
  %3973 = vmatpush1.msra.mxu0 0.0
  %3974 = vmatprep.subr.mxu0 0.0
  %3975 = vmatpush1.msra.mxu0 0.0
  %3976 = vmatprep.subr.mxu0 0.0
  %3977 = vmatpush1.msra.mxu0 0.0
  %3978 = vmatprep.mubr.f32.mxu0 0.0
  %3979 = vmatmul.mubr.f32.gmra.mrb[0].mxu0 %v2579
  %v3980 = vpop.f32.mrb[0].mxu0
  %v3981 = vadd.f32 %v1695, %v3980
  %v3982 = vpop.f32.mrb[0].mxu0
  %v3983 = vadd.f32 %v1697, %v3982
  %3984 = vmatprep.mubr.f32.mxu0 0.0
  %3985 = vmatmul.mubr.f32.gmra.mrb[0].mxu0 %v2582
  %v3986 = vpop.f32.mrb[0].mxu0
  %v3987 = vadd.f32 %v1701, %v3986
  %v3988 = vpop.f32.mrb[0].mxu0
  %v3989 = vadd.f32 %v1703, %v3988
  %3990 = vmatprep.mubr.f32.mxu0 0.0
  %3991 = vmatmul.mubr.f32.gmra.mrb[0].mxu0 %v2585
  %v3992 = vpop.f32.mrb[0].mxu0
  %v3993 = vadd.f32 %v1707, %v3992
  %v3994 = vpop.f32.mrb[0].mxu0
  %v3995 = vadd.f32 %v1709, %v3994
  %3996 = vmatprep.mubr.f32.mxu0 0.0
  %3997 = vmatmul.mubr.f32.gmra.mrb[0].mxu0 %v2588
  %v3998 = vpop.f32.mrb[0].mxu0
  %v3999 = vadd.f32 %v1713, %v3998
  %v4000 = vpop.f32.mrb[0].mxu0
  %v4001 = vadd.f32 %v1715, %v4000
  %4002 = vmatprep.mubr.f32.mxu0 0.0
  %4003 = vmatmul.mubr.f32.gmra.mrb[0].mxu0 %v2591
  %v4004 = vpop.f32.mrb[0].mxu0
  %v4005 = vadd.f32 %v1719, %v4004
  %v4006 = vpop.f32.mrb[0].mxu0
  %v4007 = vadd.f32 %v1721, %v4006
  %4008 = vmatprep.mubr.f32.mxu0 0.0
  %4009 = vmatmul.mubr.f32.gmra.mrb[0].mxu0 %v2594
  %v4010 = vpop.f32.mrb[0].mxu0
  %v4011 = vadd.f32 %v1725, %v4010
  %v4012 = vpop.f32.mrb[0].mxu0
  %v4013 = vadd.f32 %v1727, %v4012
  %4014 = vmatprep.mubr.f32.mxu0 0.0
  %4015 = vmatmul.mubr.f32.gmra.mrb[0].mxu0 %v2597
  %v4016 = vpop.f32.mrb[0].mxu0
  %v4017 = vadd.f32 %v1731, %v4016
  %v4018 = vpop.f32.mrb[0].mxu0
  %v4019 = vadd.f32 %v1733, %v4018
  %4020 = vmatprep.mubr.f32.mxu0 0.0
  %4021 = vmatmul.mubr.f32.gmra.mrb[0].mxu0 %v2600
  %v4022 = vpop.f32.mrb[0].mxu0
  %v4023 = vadd.f32 %v1737, %v4022
  %v4024 = vpop.f32.mrb[0].mxu0
  %v4025 = vadd.f32 %v1739, %v4024
  %4026 = vmatprep.mubr.f32.mxu0 0.0
  %4027 = vmatmul.mubr.f32.gmra.mrb[0].mxu0 %v2603
  %v4028 = vpop.f32.mrb[0].mxu0
  %v4029 = vadd.f32 %v1743, %v4028
  %v4030 = vpop.f32.mrb[0].mxu0
  %v4031 = vadd.f32 %v1745, %v4030
  %4032 = vmatprep.mubr.f32.mxu0 0.0
  %4033 = vmatmul.mubr.f32.gmra.mrb[0].mxu0 %v2606
  %v4034 = vpop.f32.mrb[0].mxu0
  %v4035 = vadd.f32 %v1749, %v4034
  %v4036 = vpop.f32.mrb[0].mxu0
  %v4037 = vadd.f32 %v1751, %v4036
  %4038 = vmatprep.mubr.f32.mxu0 0.0
  %4039 = vmatmul.mubr.f32.gmra.mrb[0].mxu0 %v2609
  %v4040 = vpop.f32.mrb[0].mxu0
  %v4041 = vadd.f32 %v1755, %v4040
  %v4042 = vpop.f32.mrb[0].mxu0
  %v4043 = vadd.f32 %v1757, %v4042
  %4044 = vmatprep.mubr.f32.mxu0 0.0
  %4045 = vmatmul.mubr.f32.gmra.mrb[0].mxu0 %v2612
  %v4046 = vpop.f32.mrb[0].mxu0
  %v4047 = vadd.f32 %v1761, %v4046
  %v4048 = vpop.f32.mrb[0].mxu0
  %v4049 = vadd.f32 %v1763, %v4048
  %4050 = vmatprep.mubr.f32.mxu0 0.0
  %4051 = vmatmul.mubr.f32.gmra.mrb[0].mxu0 %v2615
  %v4052 = vpop.f32.mrb[0].mxu0
  %v4053 = vadd.f32 %v1767, %v4052
  %v4054 = vpop.f32.mrb[0].mxu0
  %v4055 = vadd.f32 %v1769, %v4054
  %4056 = vmatprep.mubr.f32.mxu0 0.0
  %4057 = vmatmul.mubr.f32.gmra.mrb[0].mxu0 %v2618
  %v4058 = vpop.f32.mrb[0].mxu0
  %v4059 = vadd.f32 %v1773, %v4058
  %v4060 = vpop.f32.mrb[0].mxu0
  %v4061 = vadd.f32 %v1775, %v4060
  %4062 = vmatprep.mubr.f32.mxu0 0.0
  %4063 = vmatmul.mubr.f32.gmra.mrb[0].mxu0 %v2621
  %v4064 = vpop.f32.mrb[0].mxu0
  %v4065 = vadd.f32 %v1779, %v4064
  %v4066 = vpop.f32.mrb[0].mxu0
  %v4067 = vadd.f32 %v1781, %v4066
  %4068 = vmatprep.mubr.f32.mxu0 0.0
  %4069 = vmatmul.mubr.f32.gmra.mrb[0].mxu0 %v2624
  %v4070 = vpop.f32.mrb[0].mxu0
  %v4071 = vadd.f32 %v1785, %v4070
  %v4072 = vpop.f32.mrb[0].mxu0
  %v4073 = vadd.f32 %v1787, %v4072
  %4074 = vdwg.mxu0
  %4075 = vmatprep.subr.mxu0 %v54
  %4076 = vmatpush1.msra.mxu0 %v53
  %4077 = vmatprep.subr.mxu0 %v82
  %4078 = vmatpush1.msra.mxu0 %v81
  %4079 = vmatprep.subr.mxu0 %v110
  %4080 = vmatpush1.msra.mxu0 %v109
  %4081 = vmatprep.subr.mxu0 %v138
  %4082 = vmatpush1.msra.mxu0 %v137
  %4083 = vmatprep.subr.mxu0 %v166
  %4084 = vmatpush1.msra.mxu0 %v165
  %4085 = vmatprep.subr.mxu0 %v194
  %4086 = vmatpush1.msra.mxu0 %v193
  %4087 = vmatprep.subr.mxu0 %v222
  %4088 = vmatpush1.msra.mxu0 %v221
  %4089 = vmatprep.subr.mxu0 %v250
  %4090 = vmatpush1.msra.mxu0 %v249
  %4091 = vmatprep.subr.mxu0 0.0
  %4092 = vmatpush1.msra.mxu0 0.0
  %4093 = vmatprep.subr.mxu0 0.0
  %4094 = vmatpush1.msra.mxu0 0.0
  %4095 = vmatprep.subr.mxu0 0.0
  %4096 = vmatpush1.msra.mxu0 0.0
  %4097 = vmatprep.subr.mxu0 0.0
  %4098 = vmatpush1.msra.mxu0 0.0
  %4099 = vmatprep.subr.mxu0 0.0
  %4100 = vmatpush1.msra.mxu0 0.0
  %4101 = vmatprep.subr.mxu0 0.0
  %4102 = vmatpush1.msra.mxu0 0.0
  %4103 = vmatprep.subr.mxu0 0.0
  %4104 = vmatpush1.msra.mxu0 0.0
  %4105 = vmatprep.subr.mxu0 0.0
  %4106 = vmatpush1.msra.mxu0 0.0
  %4107 = vmatprep.subr.mxu0 0.0
  %4108 = vmatpush1.msra.mxu0 0.0
  %4109 = vmatprep.subr.mxu0 0.0
  %4110 = vmatpush1.msra.mxu0 0.0
  %4111 = vmatprep.subr.mxu0 0.0
  %4112 = vmatpush1.msra.mxu0 0.0
  %4113 = vmatprep.subr.mxu0 0.0
  %4114 = vmatpush1.msra.mxu0 0.0
  %4115 = vmatprep.subr.mxu0 0.0
  %4116 = vmatpush1.msra.mxu0 0.0
  %4117 = vmatprep.subr.mxu0 0.0
  %4118 = vmatpush1.msra.mxu0 0.0
  %4119 = vmatprep.subr.mxu0 0.0
  %4120 = vmatpush1.msra.mxu0 0.0
  %4121 = vmatprep.subr.mxu0 0.0
  %4122 = vmatpush1.msra.mxu0 0.0
  %4123 = vmatprep.subr.mxu0 0.0
  %4124 = vmatpush1.msra.mxu0 0.0
  %4125 = vmatprep.subr.mxu0 0.0
  %4126 = vmatpush1.msra.mxu0 0.0
  %4127 = vmatprep.subr.mxu0 0.0
  %4128 = vmatpush1.msra.mxu0 0.0
  %4129 = vmatprep.subr.mxu0 0.0
  %4130 = vmatpush1.msra.mxu0 0.0
  %4131 = vmatprep.subr.mxu0 0.0
  %4132 = vmatpush1.msra.mxu0 0.0
  %4133 = vmatprep.subr.mxu0 0.0
  %4134 = vmatpush1.msra.mxu0 0.0
  %4135 = vmatprep.subr.mxu0 0.0
  %4136 = vmatpush1.msra.mxu0 0.0
  %4137 = vmatprep.subr.mxu0 0.0
  %4138 = vmatpush1.msra.mxu0 0.0
  %4139 = vmatprep.mubr.f32.mxu0 0.0
  %4140 = vmatmul.mubr.f32.gmra.mrb[0].mxu0 %v2579
  %v4141 = vpop.f32.mrb[0].mxu0
  %v4142 = vadd.f32 %v1856, %v4141
  %v4143 = vpop.f32.mrb[0].mxu0
  %v4144 = vadd.f32 %v1858, %v4143
  %4145 = vmatprep.mubr.f32.mxu0 0.0
  %4146 = vmatmul.mubr.f32.gmra.mrb[0].mxu0 %v2582
  %v4147 = vpop.f32.mrb[0].mxu0
  %v4148 = vadd.f32 %v1862, %v4147
  %v4149 = vpop.f32.mrb[0].mxu0
  %v4150 = vadd.f32 %v1864, %v4149
  %4151 = vmatprep.mubr.f32.mxu0 0.0
  %4152 = vmatmul.mubr.f32.gmra.mrb[0].mxu0 %v2585
  %v4153 = vpop.f32.mrb[0].mxu0
  %v4154 = vadd.f32 %v1868, %v4153
  %v4155 = vpop.f32.mrb[0].mxu0
  %v4156 = vadd.f32 %v1870, %v4155
  %4157 = vmatprep.mubr.f32.mxu0 0.0
  %4158 = vmatmul.mubr.f32.gmra.mrb[0].mxu0 %v2588
  %v4159 = vpop.f32.mrb[0].mxu0
  %v4160 = vadd.f32 %v1874, %v4159
  %v4161 = vpop.f32.mrb[0].mxu0
  %v4162 = vadd.f32 %v1876, %v4161
  %4163 = vmatprep.mubr.f32.mxu0 0.0
  %4164 = vmatmul.mubr.f32.gmra.mrb[0].mxu0 %v2591
  %v4165 = vpop.f32.mrb[0].mxu0
  %v4166 = vadd.f32 %v1880, %v4165
  %v4167 = vpop.f32.mrb[0].mxu0
  %v4168 = vadd.f32 %v1882, %v4167
  %4169 = vmatprep.mubr.f32.mxu0 0.0
  %4170 = vmatmul.mubr.f32.gmra.mrb[0].mxu0 %v2594
  %v4171 = vpop.f32.mrb[0].mxu0
  %v4172 = vadd.f32 %v1886, %v4171
  %v4173 = vpop.f32.mrb[0].mxu0
  %v4174 = vadd.f32 %v1888, %v4173
  %4175 = vmatprep.mubr.f32.mxu0 0.0
  %4176 = vmatmul.mubr.f32.gmra.mrb[0].mxu0 %v2597
  %v4177 = vpop.f32.mrb[0].mxu0
  %v4178 = vadd.f32 %v1892, %v4177
  %v4179 = vpop.f32.mrb[0].mxu0
  %v4180 = vadd.f32 %v1894, %v4179
  %4181 = vmatprep.mubr.f32.mxu0 0.0
  %4182 = vmatmul.mubr.f32.gmra.mrb[0].mxu0 %v2600
  %v4183 = vpop.f32.mrb[0].mxu0
  %v4184 = vadd.f32 %v1898, %v4183
  %v4185 = vpop.f32.mrb[0].mxu0
  %v4186 = vadd.f32 %v1900, %v4185
  %4187 = vmatprep.mubr.f32.mxu0 0.0
  %4188 = vmatmul.mubr.f32.gmra.mrb[0].mxu0 %v2603
  %v4189 = vpop.f32.mrb[0].mxu0
  %v4190 = vadd.f32 %v1904, %v4189
  %v4191 = vpop.f32.mrb[0].mxu0
  %v4192 = vadd.f32 %v1906, %v4191
  %4193 = vmatprep.mubr.f32.mxu0 0.0
  %4194 = vmatmul.mubr.f32.gmra.mrb[0].mxu0 %v2606
  %v4195 = vpop.f32.mrb[0].mxu0
  %v4196 = vadd.f32 %v1910, %v4195
  %v4197 = vpop.f32.mrb[0].mxu0
  %v4198 = vadd.f32 %v1912, %v4197
  %4199 = vmatprep.mubr.f32.mxu0 0.0
  %4200 = vmatmul.mubr.f32.gmra.mrb[0].mxu0 %v2609
  %v4201 = vpop.f32.mrb[0].mxu0
  %v4202 = vadd.f32 %v1916, %v4201
  %v4203 = vpop.f32.mrb[0].mxu0
  %v4204 = vadd.f32 %v1918, %v4203
  %4205 = vmatprep.mubr.f32.mxu0 0.0
  %4206 = vmatmul.mubr.f32.gmra.mrb[0].mxu0 %v2612
  %v4207 = vpop.f32.mrb[0].mxu0
  %v4208 = vadd.f32 %v1922, %v4207
  %v4209 = vpop.f32.mrb[0].mxu0
  %v4210 = vadd.f32 %v1924, %v4209
  %4211 = vmatprep.mubr.f32.mxu0 0.0
  %4212 = vmatmul.mubr.f32.gmra.mrb[0].mxu0 %v2615
  %v4213 = vpop.f32.mrb[0].mxu0
  %v4214 = vadd.f32 %v1928, %v4213
  %v4215 = vpop.f32.mrb[0].mxu0
  %v4216 = vadd.f32 %v1930, %v4215
  %4217 = vmatprep.mubr.f32.mxu0 0.0
  %4218 = vmatmul.mubr.f32.gmra.mrb[0].mxu0 %v2618
  %v4219 = vpop.f32.mrb[0].mxu0
  %v4220 = vadd.f32 %v1934, %v4219
  %v4221 = vpop.f32.mrb[0].mxu0
  %v4222 = vadd.f32 %v1936, %v4221
  %4223 = vmatprep.mubr.f32.mxu0 0.0
  %4224 = vmatmul.mubr.f32.gmra.mrb[0].mxu0 %v2621
  %v4225 = vpop.f32.mrb[0].mxu0
  %v4226 = vadd.f32 %v1940, %v4225
  %v4227 = vpop.f32.mrb[0].mxu0
  %v4228 = vadd.f32 %v1942, %v4227
  %4229 = vmatprep.mubr.f32.mxu0 0.0
  %4230 = vmatmul.mubr.f32.gmra.mrb[0].mxu0 %v2624
  %v4231 = vpop.f32.mrb[0].mxu0
  %v4232 = vadd.f32 %v1946, %v4231
  %v4233 = vpop.f32.mrb[0].mxu0
  %v4234 = vadd.f32 %v1948, %v4233
  %4235 = vdwg.mxu0
  %4236 = vmatprep.subr.mxu0 %v56
  %4237 = vmatpush1.msra.mxu0 %v55
  %4238 = vmatprep.subr.mxu0 %v84
  %4239 = vmatpush1.msra.mxu0 %v83
  %4240 = vmatprep.subr.mxu0 %v112
  %4241 = vmatpush1.msra.mxu0 %v111
  %4242 = vmatprep.subr.mxu0 %v140
  %4243 = vmatpush1.msra.mxu0 %v139
  %4244 = vmatprep.subr.mxu0 %v168
  %4245 = vmatpush1.msra.mxu0 %v167
  %4246 = vmatprep.subr.mxu0 %v196
  %4247 = vmatpush1.msra.mxu0 %v195
  %4248 = vmatprep.subr.mxu0 %v224
  %4249 = vmatpush1.msra.mxu0 %v223
  %4250 = vmatprep.subr.mxu0 %v252
  %4251 = vmatpush1.msra.mxu0 %v251
  %4252 = vmatprep.subr.mxu0 0.0
  %4253 = vmatpush1.msra.mxu0 0.0
  %4254 = vmatprep.subr.mxu0 0.0
  %4255 = vmatpush1.msra.mxu0 0.0
  %4256 = vmatprep.subr.mxu0 0.0
  %4257 = vmatpush1.msra.mxu0 0.0
  %4258 = vmatprep.subr.mxu0 0.0
  %4259 = vmatpush1.msra.mxu0 0.0
  %4260 = vmatprep.subr.mxu0 0.0
  %4261 = vmatpush1.msra.mxu0 0.0
  %4262 = vmatprep.subr.mxu0 0.0
  %4263 = vmatpush1.msra.mxu0 0.0
  %4264 = vmatprep.subr.mxu0 0.0
  %4265 = vmatpush1.msra.mxu0 0.0
  %4266 = vmatprep.subr.mxu0 0.0
  %4267 = vmatpush1.msra.mxu0 0.0
  %4268 = vmatprep.subr.mxu0 0.0
  %4269 = vmatpush1.msra.mxu0 0.0
  %4270 = vmatprep.subr.mxu0 0.0
  %4271 = vmatpush1.msra.mxu0 0.0
  %4272 = vmatprep.subr.mxu0 0.0
  %4273 = vmatpush1.msra.mxu0 0.0
  %4274 = vmatprep.subr.mxu0 0.0
  %4275 = vmatpush1.msra.mxu0 0.0
  %4276 = vmatprep.subr.mxu0 0.0
  %4277 = vmatpush1.msra.mxu0 0.0
  %4278 = vmatprep.subr.mxu0 0.0
  %4279 = vmatpush1.msra.mxu0 0.0
  %4280 = vmatprep.subr.mxu0 0.0
  %4281 = vmatpush1.msra.mxu0 0.0
  %4282 = vmatprep.subr.mxu0 0.0
  %4283 = vmatpush1.msra.mxu0 0.0
  %4284 = vmatprep.subr.mxu0 0.0
  %4285 = vmatpush1.msra.mxu0 0.0
  %4286 = vmatprep.subr.mxu0 0.0
  %4287 = vmatpush1.msra.mxu0 0.0
  %4288 = vmatprep.subr.mxu0 0.0
  %4289 = vmatpush1.msra.mxu0 0.0
  %4290 = vmatprep.subr.mxu0 0.0
  %4291 = vmatpush1.msra.mxu0 0.0
  %4292 = vmatprep.subr.mxu0 0.0
  %4293 = vmatpush1.msra.mxu0 0.0
  %4294 = vmatprep.subr.mxu0 0.0
  %4295 = vmatpush1.msra.mxu0 0.0
  %4296 = vmatprep.subr.mxu0 0.0
  %4297 = vmatpush1.msra.mxu0 0.0
  %4298 = vmatprep.subr.mxu0 0.0
  %4299 = vmatpush1.msra.mxu0 0.0
  %4300 = vmatprep.mubr.f32.mxu0 0.0
  %4301 = vmatmul.mubr.f32.gmra.mrb[0].mxu0 %v2579
  %v4302 = vpop.f32.mrb[0].mxu0
  %v4303 = vadd.f32 %v2017, %v4302
  %v4304 = vpop.f32.mrb[0].mxu0
  %v4305 = vadd.f32 %v2019, %v4304
  %4306 = vmatprep.mubr.f32.mxu0 0.0
  %4307 = vmatmul.mubr.f32.gmra.mrb[0].mxu0 %v2582
  %v4308 = vpop.f32.mrb[0].mxu0
  %v4309 = vadd.f32 %v2023, %v4308
  %v4310 = vpop.f32.mrb[0].mxu0
  %v4311 = vadd.f32 %v2025, %v4310
  %4312 = vmatprep.mubr.f32.mxu0 0.0
  %4313 = vmatmul.mubr.f32.gmra.mrb[0].mxu0 %v2585
  %v4314 = vpop.f32.mrb[0].mxu0
  %v4315 = vadd.f32 %v2029, %v4314
  %v4316 = vpop.f32.mrb[0].mxu0
  %v4317 = vadd.f32 %v2031, %v4316
  %4318 = vmatprep.mubr.f32.mxu0 0.0
  %4319 = vmatmul.mubr.f32.gmra.mrb[0].mxu0 %v2588
  %v4320 = vpop.f32.mrb[0].mxu0
  %v4321 = vadd.f32 %v2035, %v4320
  %v4322 = vpop.f32.mrb[0].mxu0
  %v4323 = vadd.f32 %v2037, %v4322
  %4324 = vmatprep.mubr.f32.mxu0 0.0
  %4325 = vmatmul.mubr.f32.gmra.mrb[0].mxu0 %v2591
  %v4326 = vpop.f32.mrb[0].mxu0
  %v4327 = vadd.f32 %v2041, %v4326
  %v4328 = vpop.f32.mrb[0].mxu0
  %v4329 = vadd.f32 %v2043, %v4328
  %4330 = vmatprep.mubr.f32.mxu0 0.0
  %4331 = vmatmul.mubr.f32.gmra.mrb[0].mxu0 %v2594
  %v4332 = vpop.f32.mrb[0].mxu0
  %v4333 = vadd.f32 %v2047, %v4332
  %v4334 = vpop.f32.mrb[0].mxu0
  %v4335 = vadd.f32 %v2049, %v4334
  %4336 = vmatprep.mubr.f32.mxu0 0.0
  %4337 = vmatmul.mubr.f32.gmra.mrb[0].mxu0 %v2597
  %v4338 = vpop.f32.mrb[0].mxu0
  %v4339 = vadd.f32 %v2053, %v4338
  %v4340 = vpop.f32.mrb[0].mxu0
  %v4341 = vadd.f32 %v2055, %v4340
  %4342 = vmatprep.mubr.f32.mxu0 0.0
  %4343 = vmatmul.mubr.f32.gmra.mrb[0].mxu0 %v2600
  %v4344 = vpop.f32.mrb[0].mxu0
  %v4345 = vadd.f32 %v2059, %v4344
  %v4346 = vpop.f32.mrb[0].mxu0
  %v4347 = vadd.f32 %v2061, %v4346
  %4348 = vmatprep.mubr.f32.mxu0 0.0
  %4349 = vmatmul.mubr.f32.gmra.mrb[0].mxu0 %v2603
  %v4350 = vpop.f32.mrb[0].mxu0
  %v4351 = vadd.f32 %v2065, %v4350
  %v4352 = vpop.f32.mrb[0].mxu0
  %v4353 = vadd.f32 %v2067, %v4352
  %4354 = vmatprep.mubr.f32.mxu0 0.0
  %4355 = vmatmul.mubr.f32.gmra.mrb[0].mxu0 %v2606
  %v4356 = vpop.f32.mrb[0].mxu0
  %v4357 = vadd.f32 %v2071, %v4356
  %v4358 = vpop.f32.mrb[0].mxu0
  %v4359 = vadd.f32 %v2073, %v4358
  %4360 = vmatprep.mubr.f32.mxu0 0.0
  %4361 = vmatmul.mubr.f32.gmra.mrb[0].mxu0 %v2609
  %v4362 = vpop.f32.mrb[0].mxu0
  %v4363 = vadd.f32 %v2077, %v4362
  %v4364 = vpop.f32.mrb[0].mxu0
  %v4365 = vadd.f32 %v2079, %v4364
  %4366 = vmatprep.mubr.f32.mxu0 0.0
  %4367 = vmatmul.mubr.f32.gmra.mrb[0].mxu0 %v2612
  %v4368 = vpop.f32.mrb[0].mxu0
  %v4369 = vadd.f32 %v2083, %v4368
  %v4370 = vpop.f32.mrb[0].mxu0
  %v4371 = vadd.f32 %v2085, %v4370
  %4372 = vmatprep.mubr.f32.mxu0 0.0
  %4373 = vmatmul.mubr.f32.gmra.mrb[0].mxu0 %v2615
  %v4374 = vpop.f32.mrb[0].mxu0
  %v4375 = vadd.f32 %v2089, %v4374
  %v4376 = vpop.f32.mrb[0].mxu0
  %v4377 = vadd.f32 %v2091, %v4376
  %4378 = vmatprep.mubr.f32.mxu0 0.0
  %4379 = vmatmul.mubr.f32.gmra.mrb[0].mxu0 %v2618
  %v4380 = vpop.f32.mrb[0].mxu0
  %v4381 = vadd.f32 %v2095, %v4380
  %v4382 = vpop.f32.mrb[0].mxu0
  %v4383 = vadd.f32 %v2097, %v4382
  %4384 = vmatprep.mubr.f32.mxu0 0.0
  %4385 = vmatmul.mubr.f32.gmra.mrb[0].mxu0 %v2621
  %v4386 = vpop.f32.mrb[0].mxu0
  %v4387 = vadd.f32 %v2101, %v4386
  %v4388 = vpop.f32.mrb[0].mxu0
  %v4389 = vadd.f32 %v2103, %v4388
  %4390 = vmatprep.mubr.f32.mxu0 0.0
  %4391 = vmatmul.mubr.f32.gmra.mrb[0].mxu0 %v2624
  %v4392 = vpop.f32.mrb[0].mxu0
  %v4393 = vadd.f32 %v2107, %v4392
  %v4394 = vpop.f32.mrb[0].mxu0
  %v4395 = vadd.f32 %v2109, %v4394
  %4396 = vdwg.mxu0
  %4397 = vmatprep.subr.mxu0 %v58
  %4398 = vmatpush1.msra.mxu0 %v57
  %4399 = vmatprep.subr.mxu0 %v86
  %4400 = vmatpush1.msra.mxu0 %v85
  %4401 = vmatprep.subr.mxu0 %v114
  %4402 = vmatpush1.msra.mxu0 %v113
  %4403 = vmatprep.subr.mxu0 %v142
  %4404 = vmatpush1.msra.mxu0 %v141
  %4405 = vmatprep.subr.mxu0 %v170
  %4406 = vmatpush1.msra.mxu0 %v169
  %4407 = vmatprep.subr.mxu0 %v198
  %4408 = vmatpush1.msra.mxu0 %v197
  %4409 = vmatprep.subr.mxu0 %v226
  %4410 = vmatpush1.msra.mxu0 %v225
  %4411 = vmatprep.subr.mxu0 %v254
  %4412 = vmatpush1.msra.mxu0 %v253
  %4413 = vmatprep.subr.mxu0 0.0
  %4414 = vmatpush1.msra.mxu0 0.0
  %4415 = vmatprep.subr.mxu0 0.0
  %4416 = vmatpush1.msra.mxu0 0.0
  %4417 = vmatprep.subr.mxu0 0.0
  %4418 = vmatpush1.msra.mxu0 0.0
  %4419 = vmatprep.subr.mxu0 0.0
  %4420 = vmatpush1.msra.mxu0 0.0
  %4421 = vmatprep.subr.mxu0 0.0
  %4422 = vmatpush1.msra.mxu0 0.0
  %4423 = vmatprep.subr.mxu0 0.0
  %4424 = vmatpush1.msra.mxu0 0.0
  %4425 = vmatprep.subr.mxu0 0.0
  %4426 = vmatpush1.msra.mxu0 0.0
  %4427 = vmatprep.subr.mxu0 0.0
  %4428 = vmatpush1.msra.mxu0 0.0
  %4429 = vmatprep.subr.mxu0 0.0
  %4430 = vmatpush1.msra.mxu0 0.0
  %4431 = vmatprep.subr.mxu0 0.0
  %4432 = vmatpush1.msra.mxu0 0.0
  %4433 = vmatprep.subr.mxu0 0.0
  %4434 = vmatpush1.msra.mxu0 0.0
  %4435 = vmatprep.subr.mxu0 0.0
  %4436 = vmatpush1.msra.mxu0 0.0
  %4437 = vmatprep.subr.mxu0 0.0
  %4438 = vmatpush1.msra.mxu0 0.0
  %4439 = vmatprep.subr.mxu0 0.0
  %4440 = vmatpush1.msra.mxu0 0.0
  %4441 = vmatprep.subr.mxu0 0.0
  %4442 = vmatpush1.msra.mxu0 0.0
  %4443 = vmatprep.subr.mxu0 0.0
  %4444 = vmatpush1.msra.mxu0 0.0
  %4445 = vmatprep.subr.mxu0 0.0
  %4446 = vmatpush1.msra.mxu0 0.0
  %4447 = vmatprep.subr.mxu0 0.0
  %4448 = vmatpush1.msra.mxu0 0.0
  %4449 = vmatprep.subr.mxu0 0.0
  %4450 = vmatpush1.msra.mxu0 0.0
  %4451 = vmatprep.subr.mxu0 0.0
  %4452 = vmatpush1.msra.mxu0 0.0
  %4453 = vmatprep.subr.mxu0 0.0
  %4454 = vmatpush1.msra.mxu0 0.0
  %4455 = vmatprep.subr.mxu0 0.0
  %4456 = vmatpush1.msra.mxu0 0.0
  %4457 = vmatprep.subr.mxu0 0.0
  %4458 = vmatpush1.msra.mxu0 0.0
  %4459 = vmatprep.subr.mxu0 0.0
  %4460 = vmatpush1.msra.mxu0 0.0
  %4461 = vmatprep.mubr.f32.mxu0 0.0
  %4462 = vmatmul.mubr.f32.gmra.mrb[0].mxu0 %v2579
  %v4463 = vpop.f32.mrb[0].mxu0
  %v4464 = vadd.f32 %v2178, %v4463
  %v4465 = vpop.f32.mrb[0].mxu0
  %v4466 = vadd.f32 %v2180, %v4465
  %4467 = vmatprep.mubr.f32.mxu0 0.0
  %4468 = vmatmul.mubr.f32.gmra.mrb[0].mxu0 %v2582
  %v4469 = vpop.f32.mrb[0].mxu0
  %v4470 = vadd.f32 %v2184, %v4469
  %v4471 = vpop.f32.mrb[0].mxu0
  %v4472 = vadd.f32 %v2186, %v4471
  %4473 = vmatprep.mubr.f32.mxu0 0.0
  %4474 = vmatmul.mubr.f32.gmra.mrb[0].mxu0 %v2585
  %v4475 = vpop.f32.mrb[0].mxu0
  %v4476 = vadd.f32 %v2190, %v4475
  %v4477 = vpop.f32.mrb[0].mxu0
  %v4478 = vadd.f32 %v2192, %v4477
  %4479 = vmatprep.mubr.f32.mxu0 0.0
  %4480 = vmatmul.mubr.f32.gmra.mrb[0].mxu0 %v2588
  %v4481 = vpop.f32.mrb[0].mxu0
  %v4482 = vadd.f32 %v2196, %v4481
  %v4483 = vpop.f32.mrb[0].mxu0
  %v4484 = vadd.f32 %v2198, %v4483
  %4485 = vmatprep.mubr.f32.mxu0 0.0
  %4486 = vmatmul.mubr.f32.gmra.mrb[0].mxu0 %v2591
  %v4487 = vpop.f32.mrb[0].mxu0
  %v4488 = vadd.f32 %v2202, %v4487
  %v4489 = vpop.f32.mrb[0].mxu0
  %v4490 = vadd.f32 %v2204, %v4489
  %4491 = vmatprep.mubr.f32.mxu0 0.0
  %4492 = vmatmul.mubr.f32.gmra.mrb[0].mxu0 %v2594
  %v4493 = vpop.f32.mrb[0].mxu0
  %v4494 = vadd.f32 %v2208, %v4493
  %v4495 = vpop.f32.mrb[0].mxu0
  %v4496 = vadd.f32 %v2210, %v4495
  %4497 = vmatprep.mubr.f32.mxu0 0.0
  %4498 = vmatmul.mubr.f32.gmra.mrb[0].mxu0 %v2597
  %v4499 = vpop.f32.mrb[0].mxu0
  %v4500 = vadd.f32 %v2214, %v4499
  %v4501 = vpop.f32.mrb[0].mxu0
  %v4502 = vadd.f32 %v2216, %v4501
  %4503 = vmatprep.mubr.f32.mxu0 0.0
  %4504 = vmatmul.mubr.f32.gmra.mrb[0].mxu0 %v2600
  %v4505 = vpop.f32.mrb[0].mxu0
  %v4506 = vadd.f32 %v2220, %v4505
  %v4507 = vpop.f32.mrb[0].mxu0
  %v4508 = vadd.f32 %v2222, %v4507
  %4509 = vmatprep.mubr.f32.mxu0 0.0
  %4510 = vmatmul.mubr.f32.gmra.mrb[0].mxu0 %v2603
  %v4511 = vpop.f32.mrb[0].mxu0
  %v4512 = vadd.f32 %v2226, %v4511
  %v4513 = vpop.f32.mrb[0].mxu0
  %v4514 = vadd.f32 %v2228, %v4513
  %4515 = vmatprep.mubr.f32.mxu0 0.0
  %4516 = vmatmul.mubr.f32.gmra.mrb[0].mxu0 %v2606
  %v4517 = vpop.f32.mrb[0].mxu0
  %v4518 = vadd.f32 %v2232, %v4517
  %v4519 = vpop.f32.mrb[0].mxu0
  %v4520 = vadd.f32 %v2234, %v4519
  %4521 = vmatprep.mubr.f32.mxu0 0.0
  %4522 = vmatmul.mubr.f32.gmra.mrb[0].mxu0 %v2609
  %v4523 = vpop.f32.mrb[0].mxu0
  %v4524 = vadd.f32 %v2238, %v4523
  %v4525 = vpop.f32.mrb[0].mxu0
  %v4526 = vadd.f32 %v2240, %v4525
  %4527 = vmatprep.mubr.f32.mxu0 0.0
  %4528 = vmatmul.mubr.f32.gmra.mrb[0].mxu0 %v2612
  %v4529 = vpop.f32.mrb[0].mxu0
  %v4530 = vadd.f32 %v2244, %v4529
  %v4531 = vpop.f32.mrb[0].mxu0
  %v4532 = vadd.f32 %v2246, %v4531
  %4533 = vmatprep.mubr.f32.mxu0 0.0
  %4534 = vmatmul.mubr.f32.gmra.mrb[0].mxu0 %v2615
  %v4535 = vpop.f32.mrb[0].mxu0
  %v4536 = vadd.f32 %v2250, %v4535
  %v4537 = vpop.f32.mrb[0].mxu0
  %v4538 = vadd.f32 %v2252, %v4537
  %4539 = vmatprep.mubr.f32.mxu0 0.0
  %4540 = vmatmul.mubr.f32.gmra.mrb[0].mxu0 %v2618
  %v4541 = vpop.f32.mrb[0].mxu0
  %v4542 = vadd.f32 %v2256, %v4541
  %v4543 = vpop.f32.mrb[0].mxu0
  %v4544 = vadd.f32 %v2258, %v4543
  %4545 = vmatprep.mubr.f32.mxu0 0.0
  %4546 = vmatmul.mubr.f32.gmra.mrb[0].mxu0 %v2621
  %v4547 = vpop.f32.mrb[0].mxu0
  %v4548 = vadd.f32 %v2262, %v4547
  %v4549 = vpop.f32.mrb[0].mxu0
  %v4550 = vadd.f32 %v2264, %v4549
  %4551 = vmatprep.mubr.f32.mxu0 0.0
  %4552 = vmatmul.mubr.f32.gmra.mrb[0].mxu0 %v2624
  %v4553 = vpop.f32.mrb[0].mxu0
  %v4554 = vadd.f32 %v2268, %v4553
  %v4555 = vpop.f32.mrb[0].mxu0
  %v4556 = vadd.f32 %v2270, %v4555
  %4557 = vdwg.mxu0
  %4558 = vmatprep.subr.mxu0 %v60
  %4559 = vmatpush1.msra.mxu0 %v59
  %4560 = vmatprep.subr.mxu0 %v88
  %4561 = vmatpush1.msra.mxu0 %v87
  %4562 = vmatprep.subr.mxu0 %v116
  %4563 = vmatpush1.msra.mxu0 %v115
  %4564 = vmatprep.subr.mxu0 %v144
  %4565 = vmatpush1.msra.mxu0 %v143
  %4566 = vmatprep.subr.mxu0 %v172
  %4567 = vmatpush1.msra.mxu0 %v171
  %4568 = vmatprep.subr.mxu0 %v200
  %4569 = vmatpush1.msra.mxu0 %v199
  %4570 = vmatprep.subr.mxu0 %v228
  %4571 = vmatpush1.msra.mxu0 %v227
  %4572 = vmatprep.subr.mxu0 %v256
  %4573 = vmatpush1.msra.mxu0 %v255
  %4574 = vmatprep.subr.mxu0 0.0
  %4575 = vmatpush1.msra.mxu0 0.0
  %4576 = vmatprep.subr.mxu0 0.0
  %4577 = vmatpush1.msra.mxu0 0.0
  %4578 = vmatprep.subr.mxu0 0.0
  %4579 = vmatpush1.msra.mxu0 0.0
  %4580 = vmatprep.subr.mxu0 0.0
  %4581 = vmatpush1.msra.mxu0 0.0
  %4582 = vmatprep.subr.mxu0 0.0
  %4583 = vmatpush1.msra.mxu0 0.0
  %4584 = vmatprep.subr.mxu0 0.0
  %4585 = vmatpush1.msra.mxu0 0.0
  %4586 = vmatprep.subr.mxu0 0.0
  %4587 = vmatpush1.msra.mxu0 0.0
  %4588 = vmatprep.subr.mxu0 0.0
  %4589 = vmatpush1.msra.mxu0 0.0
  %4590 = vmatprep.subr.mxu0 0.0
  %4591 = vmatpush1.msra.mxu0 0.0
  %4592 = vmatprep.subr.mxu0 0.0
  %4593 = vmatpush1.msra.mxu0 0.0
  %4594 = vmatprep.subr.mxu0 0.0
  %4595 = vmatpush1.msra.mxu0 0.0
  %4596 = vmatprep.subr.mxu0 0.0
  %4597 = vmatpush1.msra.mxu0 0.0
  %4598 = vmatprep.subr.mxu0 0.0
  %4599 = vmatpush1.msra.mxu0 0.0
  %4600 = vmatprep.subr.mxu0 0.0
  %4601 = vmatpush1.msra.mxu0 0.0
  %4602 = vmatprep.subr.mxu0 0.0
  %4603 = vmatpush1.msra.mxu0 0.0
  %4604 = vmatprep.subr.mxu0 0.0
  %4605 = vmatpush1.msra.mxu0 0.0
  %4606 = vmatprep.subr.mxu0 0.0
  %4607 = vmatpush1.msra.mxu0 0.0
  %4608 = vmatprep.subr.mxu0 0.0
  %4609 = vmatpush1.msra.mxu0 0.0
  %4610 = vmatprep.subr.mxu0 0.0
  %4611 = vmatpush1.msra.mxu0 0.0
  %4612 = vmatprep.subr.mxu0 0.0
  %4613 = vmatpush1.msra.mxu0 0.0
  %4614 = vmatprep.subr.mxu0 0.0
  %4615 = vmatpush1.msra.mxu0 0.0
  %4616 = vmatprep.subr.mxu0 0.0
  %4617 = vmatpush1.msra.mxu0 0.0
  %4618 = vmatprep.subr.mxu0 0.0
  %4619 = vmatpush1.msra.mxu0 0.0
  %4620 = vmatprep.subr.mxu0 0.0
  %4621 = vmatpush1.msra.mxu0 0.0
  %4622 = vmatprep.mubr.f32.mxu0 0.0
  %4623 = vmatmul.mubr.f32.gmra.mrb[0].mxu0 %v2579
  %v4624 = vpop.f32.mrb[0].mxu0
  %v4625 = vadd.f32 %v2339, %v4624
  %v4626 = vpop.f32.mrb[0].mxu0
  %v4627 = vadd.f32 %v2341, %v4626
  %4628 = vmatprep.mubr.f32.mxu0 0.0
  %4629 = vmatmul.mubr.f32.gmra.mrb[0].mxu0 %v2582
  %v4630 = vpop.f32.mrb[0].mxu0
  %v4631 = vadd.f32 %v2345, %v4630
  %v4632 = vpop.f32.mrb[0].mxu0
  %v4633 = vadd.f32 %v2347, %v4632
  %4634 = vmatprep.mubr.f32.mxu0 0.0
  %4635 = vmatmul.mubr.f32.gmra.mrb[0].mxu0 %v2585
  %v4636 = vpop.f32.mrb[0].mxu0
  %v4637 = vadd.f32 %v2351, %v4636
  %v4638 = vpop.f32.mrb[0].mxu0
  %v4639 = vadd.f32 %v2353, %v4638
  %4640 = vmatprep.mubr.f32.mxu0 0.0
  %4641 = vmatmul.mubr.f32.gmra.mrb[0].mxu0 %v2588
  %v4642 = vpop.f32.mrb[0].mxu0
  %v4643 = vadd.f32 %v2357, %v4642
  %v4644 = vpop.f32.mrb[0].mxu0
  %v4645 = vadd.f32 %v2359, %v4644
  %4646 = vmatprep.mubr.f32.mxu0 0.0
  %4647 = vmatmul.mubr.f32.gmra.mrb[0].mxu0 %v2591
  %v4648 = vpop.f32.mrb[0].mxu0
  %v4649 = vadd.f32 %v2363, %v4648
  %v4650 = vpop.f32.mrb[0].mxu0
  %v4651 = vadd.f32 %v2365, %v4650
  %4652 = vmatprep.mubr.f32.mxu0 0.0
  %4653 = vmatmul.mubr.f32.gmra.mrb[0].mxu0 %v2594
  %v4654 = vpop.f32.mrb[0].mxu0
  %v4655 = vadd.f32 %v2369, %v4654
  %v4656 = vpop.f32.mrb[0].mxu0
  %v4657 = vadd.f32 %v2371, %v4656
  %4658 = vmatprep.mubr.f32.mxu0 0.0
  %4659 = vmatmul.mubr.f32.gmra.mrb[0].mxu0 %v2597
  %v4660 = vpop.f32.mrb[0].mxu0
  %v4661 = vadd.f32 %v2375, %v4660
  %v4662 = vpop.f32.mrb[0].mxu0
  %v4663 = vadd.f32 %v2377, %v4662
  %4664 = vmatprep.mubr.f32.mxu0 0.0
  %4665 = vmatmul.mubr.f32.gmra.mrb[0].mxu0 %v2600
  %v4666 = vpop.f32.mrb[0].mxu0
  %v4667 = vadd.f32 %v2381, %v4666
  %v4668 = vpop.f32.mrb[0].mxu0
  %v4669 = vadd.f32 %v2383, %v4668
  %4670 = vmatprep.mubr.f32.mxu0 0.0
  %4671 = vmatmul.mubr.f32.gmra.mrb[0].mxu0 %v2603
  %v4672 = vpop.f32.mrb[0].mxu0
  %v4673 = vadd.f32 %v2387, %v4672
  %v4674 = vpop.f32.mrb[0].mxu0
  %v4675 = vadd.f32 %v2389, %v4674
  %4676 = vmatprep.mubr.f32.mxu0 0.0
  %4677 = vmatmul.mubr.f32.gmra.mrb[0].mxu0 %v2606
  %v4678 = vpop.f32.mrb[0].mxu0
  %v4679 = vadd.f32 %v2393, %v4678
  %v4680 = vpop.f32.mrb[0].mxu0
  %v4681 = vadd.f32 %v2395, %v4680
  %4682 = vmatprep.mubr.f32.mxu0 0.0
  %4683 = vmatmul.mubr.f32.gmra.mrb[0].mxu0 %v2609
  %v4684 = vpop.f32.mrb[0].mxu0
  %v4685 = vadd.f32 %v2399, %v4684
  %v4686 = vpop.f32.mrb[0].mxu0
  %v4687 = vadd.f32 %v2401, %v4686
  %4688 = vmatprep.mubr.f32.mxu0 0.0
  %4689 = vmatmul.mubr.f32.gmra.mrb[0].mxu0 %v2612
  %v4690 = vpop.f32.mrb[0].mxu0
  %v4691 = vadd.f32 %v2405, %v4690
  %v4692 = vpop.f32.mrb[0].mxu0
  %v4693 = vadd.f32 %v2407, %v4692
  %4694 = vmatprep.mubr.f32.mxu0 0.0
  %4695 = vmatmul.mubr.f32.gmra.mrb[0].mxu0 %v2615
  %v4696 = vpop.f32.mrb[0].mxu0
  %v4697 = vadd.f32 %v2411, %v4696
  %v4698 = vpop.f32.mrb[0].mxu0
  %v4699 = vadd.f32 %v2413, %v4698
  %4700 = vmatprep.mubr.f32.mxu0 0.0
  %4701 = vmatmul.mubr.f32.gmra.mrb[0].mxu0 %v2618
  %v4702 = vpop.f32.mrb[0].mxu0
  %v4703 = vadd.f32 %v2417, %v4702
  %v4704 = vpop.f32.mrb[0].mxu0
  %v4705 = vadd.f32 %v2419, %v4704
  %4706 = vmatprep.mubr.f32.mxu0 0.0
  %4707 = vmatmul.mubr.f32.gmra.mrb[0].mxu0 %v2621
  %v4708 = vpop.f32.mrb[0].mxu0
  %v4709 = vadd.f32 %v2423, %v4708
  %v4710 = vpop.f32.mrb[0].mxu0
  %v4711 = vadd.f32 %v2425, %v4710
  %4712 = vmatprep.mubr.f32.mxu0 0.0
  %4713 = vmatmul.mubr.f32.gmra.mrb[0].mxu0 %v2624
  %v4714 = vpop.f32.mrb[0].mxu0
  %v4715 = vadd.f32 %v2429, %v4714
  %v4716 = vpop.f32.mrb[0].mxu0
  %v4717 = vadd.f32 %v2431, %v4716
  %4718 = vdwg.mxu0
  %4719 = vmatprep.subr.mxu0 0.0
  %4720 = vmatpush1.msra.mxu0 %v61
  %4721 = vmatprep.subr.mxu0 0.0
  %4722 = vmatpush1.msra.mxu0 %v89
  %4723 = vmatprep.subr.mxu0 0.0
  %4724 = vmatpush1.msra.mxu0 %v117
  %4725 = vmatprep.subr.mxu0 0.0
  %4726 = vmatpush1.msra.mxu0 %v145
  %4727 = vmatprep.subr.mxu0 0.0
  %4728 = vmatpush1.msra.mxu0 %v173
  %4729 = vmatprep.subr.mxu0 0.0
  %4730 = vmatpush1.msra.mxu0 %v201
  %4731 = vmatprep.subr.mxu0 0.0
  %4732 = vmatpush1.msra.mxu0 %v229
  %4733 = vmatprep.subr.mxu0 0.0
  %4734 = vmatpush1.msra.mxu0 %v257
  %4735 = vmatprep.subr.mxu0 0.0
  %4736 = vmatpush1.msra.mxu0 0.0
  %4737 = vmatprep.subr.mxu0 0.0
  %4738 = vmatpush1.msra.mxu0 0.0
  %4739 = vmatprep.subr.mxu0 0.0
  %4740 = vmatpush1.msra.mxu0 0.0
  %4741 = vmatprep.subr.mxu0 0.0
  %4742 = vmatpush1.msra.mxu0 0.0
  %4743 = vmatprep.subr.mxu0 0.0
  %4744 = vmatpush1.msra.mxu0 0.0
  %4745 = vmatprep.subr.mxu0 0.0
  %4746 = vmatpush1.msra.mxu0 0.0
  %4747 = vmatprep.subr.mxu0 0.0
  %4748 = vmatpush1.msra.mxu0 0.0
  %4749 = vmatprep.subr.mxu0 0.0
  %4750 = vmatpush1.msra.mxu0 0.0
  %4751 = vmatprep.subr.mxu0 0.0
  %4752 = vmatpush1.msra.mxu0 0.0
  %4753 = vmatprep.subr.mxu0 0.0
  %4754 = vmatpush1.msra.mxu0 0.0
  %4755 = vmatprep.subr.mxu0 0.0
  %4756 = vmatpush1.msra.mxu0 0.0
  %4757 = vmatprep.subr.mxu0 0.0
  %4758 = vmatpush1.msra.mxu0 0.0
  %4759 = vmatprep.subr.mxu0 0.0
  %4760 = vmatpush1.msra.mxu0 0.0
  %4761 = vmatprep.subr.mxu0 0.0
  %4762 = vmatpush1.msra.mxu0 0.0
  %4763 = vmatprep.subr.mxu0 0.0
  %4764 = vmatpush1.msra.mxu0 0.0
  %4765 = vmatprep.subr.mxu0 0.0
  %4766 = vmatpush1.msra.mxu0 0.0
  %4767 = vmatprep.subr.mxu0 0.0
  %4768 = vmatpush1.msra.mxu0 0.0
  %4769 = vmatprep.subr.mxu0 0.0
  %4770 = vmatpush1.msra.mxu0 0.0
  %4771 = vmatprep.subr.mxu0 0.0
  %4772 = vmatpush1.msra.mxu0 0.0
  %4773 = vmatprep.subr.mxu0 0.0
  %4774 = vmatpush1.msra.mxu0 0.0
  %4775 = vmatprep.subr.mxu0 0.0
  %4776 = vmatpush1.msra.mxu0 0.0
  %4777 = vmatprep.subr.mxu0 0.0
  %4778 = vmatpush1.msra.mxu0 0.0
  %4779 = vmatprep.subr.mxu0 0.0
  %4780 = vmatpush1.msra.mxu0 0.0
  %4781 = vmatprep.subr.mxu0 0.0
  %4782 = vmatpush1.msra.mxu0 0.0
  %4783 = vmatprep.mubr.f32.mxu0 0.0
  %4784 = vmatmul.mubr.f32.gmra.mrb[0].mxu0 %v2579
  %v4785 = vpop.f32.mrb[0].mxu0
  %v4786 = vadd.f32 %v2500, %v4785
  %v4787 = vpop.f32.mrb[0].mxu0
  %4788 = vmatprep.mubr.f32.mxu0 0.0
  %4789 = vmatmul.mubr.f32.gmra.mrb[0].mxu0 %v2582
  %v4790 = vpop.f32.mrb[0].mxu0
  %v4791 = vadd.f32 %v2505, %v4790
  %v4792 = vpop.f32.mrb[0].mxu0
  %4793 = vmatprep.mubr.f32.mxu0 0.0
  %4794 = vmatmul.mubr.f32.gmra.mrb[0].mxu0 %v2585
  %v4795 = vpop.f32.mrb[0].mxu0
  %v4796 = vadd.f32 %v2510, %v4795
  %v4797 = vpop.f32.mrb[0].mxu0
  %4798 = vmatprep.mubr.f32.mxu0 0.0
  %4799 = vmatmul.mubr.f32.gmra.mrb[0].mxu0 %v2588
  %v4800 = vpop.f32.mrb[0].mxu0
  %v4801 = vadd.f32 %v2515, %v4800
  %v4802 = vpop.f32.mrb[0].mxu0
  %4803 = vmatprep.mubr.f32.mxu0 0.0
  %4804 = vmatmul.mubr.f32.gmra.mrb[0].mxu0 %v2591
  %v4805 = vpop.f32.mrb[0].mxu0
  %v4806 = vadd.f32 %v2520, %v4805
  %v4807 = vpop.f32.mrb[0].mxu0
  %4808 = vmatprep.mubr.f32.mxu0 0.0
  %4809 = vmatmul.mubr.f32.gmra.mrb[0].mxu0 %v2594
  %v4810 = vpop.f32.mrb[0].mxu0
  %v4811 = vadd.f32 %v2525, %v4810
  %v4812 = vpop.f32.mrb[0].mxu0
  %4813 = vmatprep.mubr.f32.mxu0 0.0
  %4814 = vmatmul.mubr.f32.gmra.mrb[0].mxu0 %v2597
  %v4815 = vpop.f32.mrb[0].mxu0
  %v4816 = vadd.f32 %v2530, %v4815
  %v4817 = vpop.f32.mrb[0].mxu0
  %4818 = vmatprep.mubr.f32.mxu0 0.0
  %4819 = vmatmul.mubr.f32.gmra.mrb[0].mxu0 %v2600
  %v4820 = vpop.f32.mrb[0].mxu0
  %v4821 = vadd.f32 %v2535, %v4820
  %v4822 = vpop.f32.mrb[0].mxu0
  %4823 = vmatprep.mubr.f32.mxu0 0.0
  %4824 = vmatmul.mubr.f32.gmra.mrb[0].mxu0 %v2603
  %v4825 = vpop.f32.mrb[0].mxu0
  %v4826 = vadd.f32 %v2540, %v4825
  %v4827 = vpop.f32.mrb[0].mxu0
  %4828 = vmatprep.mubr.f32.mxu0 0.0
  %4829 = vmatmul.mubr.f32.gmra.mrb[0].mxu0 %v2606
  %v4830 = vpop.f32.mrb[0].mxu0
  %v4831 = vadd.f32 %v2545, %v4830
  %v4832 = vpop.f32.mrb[0].mxu0
  %4833 = vmatprep.mubr.f32.mxu0 0.0
  %4834 = vmatmul.mubr.f32.gmra.mrb[0].mxu0 %v2609
  %v4835 = vpop.f32.mrb[0].mxu0
  %v4836 = vadd.f32 %v2550, %v4835
  %v4837 = vpop.f32.mrb[0].mxu0
  %4838 = vmatprep.mubr.f32.mxu0 0.0
  %4839 = vmatmul.mubr.f32.gmra.mrb[0].mxu0 %v2612
  %v4840 = vpop.f32.mrb[0].mxu0
  %v4841 = vadd.f32 %v2555, %v4840
  %v4842 = vpop.f32.mrb[0].mxu0
  %4843 = vmatprep.mubr.f32.mxu0 0.0
  %4844 = vmatmul.mubr.f32.gmra.mrb[0].mxu0 %v2615
  %v4845 = vpop.f32.mrb[0].mxu0
  %v4846 = vadd.f32 %v2560, %v4845
  %v4847 = vpop.f32.mrb[0].mxu0
  %4848 = vmatprep.mubr.f32.mxu0 0.0
  %4849 = vmatmul.mubr.f32.gmra.mrb[0].mxu0 %v2618
  %v4850 = vpop.f32.mrb[0].mxu0
  %v4851 = vadd.f32 %v2565, %v4850
  %v4852 = vpop.f32.mrb[0].mxu0
  %4853 = vmatprep.mubr.f32.mxu0 0.0
  %4854 = vmatmul.mubr.f32.gmra.mrb[0].mxu0 %v2621
  %v4855 = vpop.f32.mrb[0].mxu0
  %v4856 = vadd.f32 %v2570, %v4855
  %v4857 = vpop.f32.mrb[0].mxu0
  %4858 = vmatprep.mubr.f32.mxu0 0.0
  %4859 = vmatmul.mubr.f32.gmra.mrb[0].mxu0 %v2624
  %v4860 = vpop.f32.mrb[0].mxu0
  %v4861 = vadd.f32 %v2575, %v4860
  %v4862 = vpop.f32.mrb[0].mxu0
  %4863 = vdwg.mxu0
  %v4864 = vld [vmem:[%s3] sm:$0xff]
  %v4865 = vld [vmem:[%s3 + $0x8] sm:$0xff]
  %v4866 = vld [vmem:[%s3 + $0x10] sm:$0xff]
  %v4867 = vld [vmem:[%s3 + $0x18] sm:$0xff]
  %v4868 = vld [vmem:[%s3 + $0x20] sm:$0xff]
  %v4869 = vld [vmem:[%s3 + $0x28] sm:$0xff]
  %v4870 = vld [vmem:[%s3 + $0x30] sm:$0xff]
  %v4871 = vld [vmem:[%s3 + $0x38] sm:$0xff]
  %v4872 = vld [vmem:[%s3 + $0x40] sm:$0xff]
  %v4873 = vld [vmem:[%s3 + $0x48] sm:$0xff]
  %v4874 = vld [vmem:[%s3 + $0x50] sm:$0xff]
  %v4875 = vld [vmem:[%s3 + $0x58] sm:$0xff]
  %v4876 = vld [vmem:[%s3 + $0x60] sm:$0xff]
  %v4877 = vld [vmem:[%s3 + $0x68] sm:$0xff]
  %v4878 = vld [vmem:[%s3 + $0x70] sm:$0xff]
  %v4879 = vld [vmem:[%s3 + $0x78] sm:$0xff]
  %4881 = vset.pattern.permute.xlu0 0
  %4882 = vperm.xlu0 %4881, %v4864
  %v4883 = vpop.permute.xlu0 %4882
  %4886 = vset.pattern.permute.xlu0 0
  %4887 = vperm.xlu0 %4886, %v4865
  %v4888 = vpop.permute.xlu0 %4887
  %4891 = vset.pattern.permute.xlu0 0
  %4892 = vperm.xlu0 %4891, %v4866
  %v4893 = vpop.permute.xlu0 %4892
  %4896 = vset.pattern.permute.xlu0 0
  %4897 = vperm.xlu0 %4896, %v4867
  %v4898 = vpop.permute.xlu0 %4897
  %4901 = vset.pattern.permute.xlu0 0
  %4902 = vperm.xlu0 %4901, %v4868
  %v4903 = vpop.permute.xlu0 %4902
  %4906 = vset.pattern.permute.xlu0 0
  %4907 = vperm.xlu0 %4906, %v4869
  %v4908 = vpop.permute.xlu0 %4907
  %4911 = vset.pattern.permute.xlu0 0
  %4912 = vperm.xlu0 %4911, %v4870
  %v4913 = vpop.permute.xlu0 %4912
  %4916 = vset.pattern.permute.xlu0 0
  %4917 = vperm.xlu0 %4916, %v4871
  %v4918 = vpop.permute.xlu0 %4917
  %4921 = vset.pattern.permute.xlu0 0
  %4922 = vperm.xlu0 %4921, %v4872
  %v4923 = vpop.permute.xlu0 %4922
  %4926 = vset.pattern.permute.xlu0 0
  %4927 = vperm.xlu0 %4926, %v4873
  %v4928 = vpop.permute.xlu0 %4927
  %4931 = vset.pattern.permute.xlu0 0
  %4932 = vperm.xlu0 %4931, %v4874
  %v4933 = vpop.permute.xlu0 %4932
  %4936 = vset.pattern.permute.xlu0 0
  %4937 = vperm.xlu0 %4936, %v4875
  %v4938 = vpop.permute.xlu0 %4937
  %4941 = vset.pattern.permute.xlu0 0
  %4942 = vperm.xlu0 %4941, %v4876
  %v4943 = vpop.permute.xlu0 %4942
  %4946 = vset.pattern.permute.xlu0 0
  %4947 = vperm.xlu0 %4946, %v4877
  %v4948 = vpop.permute.xlu0 %4947
  %4951 = vset.pattern.permute.xlu0 0
  %4952 = vperm.xlu0 %4951, %v4878
  %v4953 = vpop.permute.xlu0 %4952
  %4956 = vset.pattern.permute.xlu0 0
  %4957 = vperm.xlu0 %4956, %v4879
  %v4958 = vpop.permute.xlu0 %4957
  %v4960 = vadd.f32 %v2693, %v4883
  %v4961 = vadd.f32 %v2695, %v4883
  %v4962 = vadd.f32 %v2854, %v4883
  %v4963 = vadd.f32 %v2856, %v4883
  %v4964 = vadd.f32 %v3015, %v4883
  %v4965 = vadd.f32 %v3017, %v4883
  %v4966 = vadd.f32 %v3176, %v4883
  %v4967 = vadd.f32 %v3178, %v4883
  %v4968 = vadd.f32 %v3337, %v4883
  %v4969 = vadd.f32 %v3339, %v4883
  %v4970 = vadd.f32 %v3498, %v4883
  %v4971 = vadd.f32 %v3500, %v4883
  %v4972 = vadd.f32 %v3659, %v4883
  %v4973 = vadd.f32 %v3661, %v4883
  %v4974 = vadd.f32 %v3820, %v4883
  %v4975 = vadd.f32 %v3822, %v4883
  %v4976 = vadd.f32 %v3981, %v4883
  %v4977 = vadd.f32 %v3983, %v4883
  %v4978 = vadd.f32 %v4142, %v4883
  %v4979 = vadd.f32 %v4144, %v4883
  %v4980 = vadd.f32 %v4303, %v4883
  %v4981 = vadd.f32 %v4305, %v4883
  %v4982 = vadd.f32 %v4464, %v4883
  %v4983 = vadd.f32 %v4466, %v4883
  %v4984 = vadd.f32 %v4625, %v4883
  %v4985 = vadd.f32 %v4627, %v4883
  %v4986 = vadd.f32 %v4786, %v4883
  %v4987 = vadd.f32 %v2699, %v4888
  %v4988 = vadd.f32 %v2701, %v4888
  %v4989 = vadd.f32 %v2860, %v4888
  %v4990 = vadd.f32 %v2862, %v4888
  %v4991 = vadd.f32 %v3021, %v4888
  %v4992 = vadd.f32 %v3023, %v4888
  %v4993 = vadd.f32 %v3182, %v4888
  %v4994 = vadd.f32 %v3184, %v4888
  %v4995 = vadd.f32 %v3343, %v4888
  %v4996 = vadd.f32 %v3345, %v4888
  %v4997 = vadd.f32 %v3504, %v4888
  %v4998 = vadd.f32 %v3506, %v4888
  %v4999 = vadd.f32 %v3665, %v4888
  %v5000 = vadd.f32 %v3667, %v4888
  %v5001 = vadd.f32 %v3826, %v4888
  %v5002 = vadd.f32 %v3828, %v4888
  %v5003 = vadd.f32 %v3987, %v4888
  %v5004 = vadd.f32 %v3989, %v4888
  %v5005 = vadd.f32 %v4148, %v4888
  %v5006 = vadd.f32 %v4150, %v4888
  %v5007 = vadd.f32 %v4309, %v4888
  %v5008 = vadd.f32 %v4311, %v4888
  %v5009 = vadd.f32 %v4470, %v4888
  %v5010 = vadd.f32 %v4472, %v4888
  %v5011 = vadd.f32 %v4631, %v4888
  %v5012 = vadd.f32 %v4633, %v4888
  %v5013 = vadd.f32 %v4791, %v4888
  %v5014 = vadd.f32 %v2705, %v4893
  %v5015 = vadd.f32 %v2707, %v4893
  %v5016 = vadd.f32 %v2866, %v4893
  %v5017 = vadd.f32 %v2868, %v4893
  %v5018 = vadd.f32 %v3027, %v4893
  %v5019 = vadd.f32 %v3029, %v4893
  %v5020 = vadd.f32 %v3188, %v4893
  %v5021 = vadd.f32 %v3190, %v4893
  %v5022 = vadd.f32 %v3349, %v4893
  %v5023 = vadd.f32 %v3351, %v4893
  %v5024 = vadd.f32 %v3510, %v4893
  %v5025 = vadd.f32 %v3512, %v4893
  %v5026 = vadd.f32 %v3671, %v4893
  %v5027 = vadd.f32 %v3673, %v4893
  %v5028 = vadd.f32 %v3832, %v4893
  %v5029 = vadd.f32 %v3834, %v4893
  %v5030 = vadd.f32 %v3993, %v4893
  %v5031 = vadd.f32 %v3995, %v4893
  %v5032 = vadd.f32 %v4154, %v4893
  %v5033 = vadd.f32 %v4156, %v4893
  %v5034 = vadd.f32 %v4315, %v4893
  %v5035 = vadd.f32 %v4317, %v4893
  %v5036 = vadd.f32 %v4476, %v4893
  %v5037 = vadd.f32 %v4478, %v4893
  %v5038 = vadd.f32 %v4637, %v4893
  %v5039 = vadd.f32 %v4639, %v4893
  %v5040 = vadd.f32 %v4796, %v4893
  %v5041 = vadd.f32 %v2711, %v4898
  %v5042 = vadd.f32 %v2713, %v4898
  %v5043 = vadd.f32 %v2872, %v4898
  %v5044 = vadd.f32 %v2874, %v4898
  %v5045 = vadd.f32 %v3033, %v4898
  %v5046 = vadd.f32 %v3035, %v4898
  %v5047 = vadd.f32 %v3194, %v4898
  %v5048 = vadd.f32 %v3196, %v4898
  %v5049 = vadd.f32 %v3355, %v4898
  %v5050 = vadd.f32 %v3357, %v4898
  %v5051 = vadd.f32 %v3516, %v4898
  %v5052 = vadd.f32 %v3518, %v4898
  %v5053 = vadd.f32 %v3677, %v4898
  %v5054 = vadd.f32 %v3679, %v4898
  %v5055 = vadd.f32 %v3838, %v4898
  %v5056 = vadd.f32 %v3840, %v4898
  %v5057 = vadd.f32 %v3999, %v4898
  %v5058 = vadd.f32 %v4001, %v4898
  %v5059 = vadd.f32 %v4160, %v4898
  %v5060 = vadd.f32 %v4162, %v4898
  %v5061 = vadd.f32 %v4321, %v4898
  %v5062 = vadd.f32 %v4323, %v4898
  %v5063 = vadd.f32 %v4482, %v4898
  %v5064 = vadd.f32 %v4484, %v4898
  %v5065 = vadd.f32 %v4643, %v4898
  %v5066 = vadd.f32 %v4645, %v4898
  %v5067 = vadd.f32 %v4801, %v4898
  %v5068 = vadd.f32 %v2717, %v4903
  %v5069 = vadd.f32 %v2719, %v4903
  %v5070 = vadd.f32 %v2878, %v4903
  %v5071 = vadd.f32 %v2880, %v4903
  %v5072 = vadd.f32 %v3039, %v4903
  %v5073 = vadd.f32 %v3041, %v4903
  %v5074 = vadd.f32 %v3200, %v4903
  %v5075 = vadd.f32 %v3202, %v4903
  %v5076 = vadd.f32 %v3361, %v4903
  %v5077 = vadd.f32 %v3363, %v4903
  %v5078 = vadd.f32 %v3522, %v4903
  %v5079 = vadd.f32 %v3524, %v4903
  %v5080 = vadd.f32 %v3683, %v4903
  %v5081 = vadd.f32 %v3685, %v4903
  %v5082 = vadd.f32 %v3844, %v4903
  %v5083 = vadd.f32 %v3846, %v4903
  %v5084 = vadd.f32 %v4005, %v4903
  %v5085 = vadd.f32 %v4007, %v4903
  %v5086 = vadd.f32 %v4166, %v4903
  %v5087 = vadd.f32 %v4168, %v4903
  %v5088 = vadd.f32 %v4327, %v4903
  %v5089 = vadd.f32 %v4329, %v4903
  %v5090 = vadd.f32 %v4488, %v4903
  %v5091 = vadd.f32 %v4490, %v4903
  %v5092 = vadd.f32 %v4649, %v4903
  %v5093 = vadd.f32 %v4651, %v4903
  %v5094 = vadd.f32 %v4806, %v4903
  %v5095 = vadd.f32 %v2723, %v4908
  %v5096 = vadd.f32 %v2725, %v4908
  %v5097 = vadd.f32 %v2884, %v4908
  %v5098 = vadd.f32 %v2886, %v4908
  %v5099 = vadd.f32 %v3045, %v4908
  %v5100 = vadd.f32 %v3047, %v4908
  %v5101 = vadd.f32 %v3206, %v4908
  %v5102 = vadd.f32 %v3208, %v4908
  %v5103 = vadd.f32 %v3367, %v4908
  %v5104 = vadd.f32 %v3369, %v4908
  %v5105 = vadd.f32 %v3528, %v4908
  %v5106 = vadd.f32 %v3530, %v4908
  %v5107 = vadd.f32 %v3689, %v4908
  %v5108 = vadd.f32 %v3691, %v4908
  %v5109 = vadd.f32 %v3850, %v4908
  %v5110 = vadd.f32 %v3852, %v4908
  %v5111 = vadd.f32 %v4011, %v4908
  %v5112 = vadd.f32 %v4013, %v4908
  %v5113 = vadd.f32 %v4172, %v4908
  %v5114 = vadd.f32 %v4174, %v4908
  %v5115 = vadd.f32 %v4333, %v4908
  %v5116 = vadd.f32 %v4335, %v4908
  %v5117 = vadd.f32 %v4494, %v4908
  %v5118 = vadd.f32 %v4496, %v4908
  %v5119 = vadd.f32 %v4655, %v4908
  %v5120 = vadd.f32 %v4657, %v4908
  %v5121 = vadd.f32 %v4811, %v4908
  %v5122 = vadd.f32 %v2729, %v4913
  %v5123 = vadd.f32 %v2731, %v4913
  %v5124 = vadd.f32 %v2890, %v4913
  %v5125 = vadd.f32 %v2892, %v4913
  %v5126 = vadd.f32 %v3051, %v4913
  %v5127 = vadd.f32 %v3053, %v4913
  %v5128 = vadd.f32 %v3212, %v4913
  %v5129 = vadd.f32 %v3214, %v4913
  %v5130 = vadd.f32 %v3373, %v4913
  %v5131 = vadd.f32 %v3375, %v4913
  %v5132 = vadd.f32 %v3534, %v4913
  %v5133 = vadd.f32 %v3536, %v4913
  %v5134 = vadd.f32 %v3695, %v4913
  %v5135 = vadd.f32 %v3697, %v4913
  %v5136 = vadd.f32 %v3856, %v4913
  %v5137 = vadd.f32 %v3858, %v4913
  %v5138 = vadd.f32 %v4017, %v4913
  %v5139 = vadd.f32 %v4019, %v4913
  %v5140 = vadd.f32 %v4178, %v4913
  %v5141 = vadd.f32 %v4180, %v4913
  %v5142 = vadd.f32 %v4339, %v4913
  %v5143 = vadd.f32 %v4341, %v4913
  %v5144 = vadd.f32 %v4500, %v4913
  %v5145 = vadd.f32 %v4502, %v4913
  %v5146 = vadd.f32 %v4661, %v4913
  %v5147 = vadd.f32 %v4663, %v4913
  %v5148 = vadd.f32 %v4816, %v4913
  %v5149 = vadd.f32 %v2735, %v4918
  %v5150 = vadd.f32 %v2737, %v4918
  %v5151 = vadd.f32 %v2896, %v4918
  %v5152 = vadd.f32 %v2898, %v4918
  %v5153 = vadd.f32 %v3057, %v4918
  %v5154 = vadd.f32 %v3059, %v4918
  %v5155 = vadd.f32 %v3218, %v4918
  %v5156 = vadd.f32 %v3220, %v4918
  %v5157 = vadd.f32 %v3379, %v4918
  %v5158 = vadd.f32 %v3381, %v4918
  %v5159 = vadd.f32 %v3540, %v4918
  %v5160 = vadd.f32 %v3542, %v4918
  %v5161 = vadd.f32 %v3701, %v4918
  %v5162 = vadd.f32 %v3703, %v4918
  %v5163 = vadd.f32 %v3862, %v4918
  %v5164 = vadd.f32 %v3864, %v4918
  %v5165 = vadd.f32 %v4023, %v4918
  %v5166 = vadd.f32 %v4025, %v4918
  %v5167 = vadd.f32 %v4184, %v4918
  %v5168 = vadd.f32 %v4186, %v4918
  %v5169 = vadd.f32 %v4345, %v4918
  %v5170 = vadd.f32 %v4347, %v4918
  %v5171 = vadd.f32 %v4506, %v4918
  %v5172 = vadd.f32 %v4508, %v4918
  %v5173 = vadd.f32 %v4667, %v4918
  %v5174 = vadd.f32 %v4669, %v4918
  %v5175 = vadd.f32 %v4821, %v4918
  %v5176 = vadd.f32 %v2741, %v4923
  %v5177 = vadd.f32 %v2743, %v4923
  %v5178 = vadd.f32 %v2902, %v4923
  %v5179 = vadd.f32 %v2904, %v4923
  %v5180 = vadd.f32 %v3063, %v4923
  %v5181 = vadd.f32 %v3065, %v4923
  %v5182 = vadd.f32 %v3224, %v4923
  %v5183 = vadd.f32 %v3226, %v4923
  %v5184 = vadd.f32 %v3385, %v4923
  %v5185 = vadd.f32 %v3387, %v4923
  %v5186 = vadd.f32 %v3546, %v4923
  %v5187 = vadd.f32 %v3548, %v4923
  %v5188 = vadd.f32 %v3707, %v4923
  %v5189 = vadd.f32 %v3709, %v4923
  %v5190 = vadd.f32 %v3868, %v4923
  %v5191 = vadd.f32 %v3870, %v4923
  %v5192 = vadd.f32 %v4029, %v4923
  %v5193 = vadd.f32 %v4031, %v4923
  %v5194 = vadd.f32 %v4190, %v4923
  %v5195 = vadd.f32 %v4192, %v4923
  %v5196 = vadd.f32 %v4351, %v4923
  %v5197 = vadd.f32 %v4353, %v4923
  %v5198 = vadd.f32 %v4512, %v4923
  %v5199 = vadd.f32 %v4514, %v4923
  %v5200 = vadd.f32 %v4673, %v4923
  %v5201 = vadd.f32 %v4675, %v4923
  %v5202 = vadd.f32 %v4826, %v4923
  %v5203 = vadd.f32 %v2747, %v4928
  %v5204 = vadd.f32 %v2749, %v4928
  %v5205 = vadd.f32 %v2908, %v4928
  %v5206 = vadd.f32 %v2910, %v4928
  %v5207 = vadd.f32 %v3069, %v4928
  %v5208 = vadd.f32 %v3071, %v4928
  %v5209 = vadd.f32 %v3230, %v4928
  %v5210 = vadd.f32 %v3232, %v4928
  %v5211 = vadd.f32 %v3391, %v4928
  %v5212 = vadd.f32 %v3393, %v4928
  %v5213 = vadd.f32 %v3552, %v4928
  %v5214 = vadd.f32 %v3554, %v4928
  %v5215 = vadd.f32 %v3713, %v4928
  %v5216 = vadd.f32 %v3715, %v4928
  %v5217 = vadd.f32 %v3874, %v4928
  %v5218 = vadd.f32 %v3876, %v4928
  %v5219 = vadd.f32 %v4035, %v4928
  %v5220 = vadd.f32 %v4037, %v4928
  %v5221 = vadd.f32 %v4196, %v4928
  %v5222 = vadd.f32 %v4198, %v4928
  %v5223 = vadd.f32 %v4357, %v4928
  %v5224 = vadd.f32 %v4359, %v4928
  %v5225 = vadd.f32 %v4518, %v4928
  %v5226 = vadd.f32 %v4520, %v4928
  %v5227 = vadd.f32 %v4679, %v4928
  %v5228 = vadd.f32 %v4681, %v4928
  %v5229 = vadd.f32 %v4831, %v4928
  %v5230 = vadd.f32 %v2753, %v4933
  %v5231 = vadd.f32 %v2755, %v4933
  %v5232 = vadd.f32 %v2914, %v4933
  %v5233 = vadd.f32 %v2916, %v4933
  %v5234 = vadd.f32 %v3075, %v4933
  %v5235 = vadd.f32 %v3077, %v4933
  %v5236 = vadd.f32 %v3236, %v4933
  %v5237 = vadd.f32 %v3238, %v4933
  %v5238 = vadd.f32 %v3397, %v4933
  %v5239 = vadd.f32 %v3399, %v4933
  %v5240 = vadd.f32 %v3558, %v4933
  %v5241 = vadd.f32 %v3560, %v4933
  %v5242 = vadd.f32 %v3719, %v4933
  %v5243 = vadd.f32 %v3721, %v4933
  %v5244 = vadd.f32 %v3880, %v4933
  %v5245 = vadd.f32 %v3882, %v4933
  %v5246 = vadd.f32 %v4041, %v4933
  %v5247 = vadd.f32 %v4043, %v4933
  %v5248 = vadd.f32 %v4202, %v4933
  %v5249 = vadd.f32 %v4204, %v4933
  %v5250 = vadd.f32 %v4363, %v4933
  %v5251 = vadd.f32 %v4365, %v4933
  %v5252 = vadd.f32 %v4524, %v4933
  %v5253 = vadd.f32 %v4526, %v4933
  %v5254 = vadd.f32 %v4685, %v4933
  %v5255 = vadd.f32 %v4687, %v4933
  %v5256 = vadd.f32 %v4836, %v4933
  %v5257 = vadd.f32 %v2759, %v4938
  %v5258 = vadd.f32 %v2761, %v4938
  %v5259 = vadd.f32 %v2920, %v4938
  %v5260 = vadd.f32 %v2922, %v4938
  %v5261 = vadd.f32 %v3081, %v4938
  %v5262 = vadd.f32 %v3083, %v4938
  %v5263 = vadd.f32 %v3242, %v4938
  %v5264 = vadd.f32 %v3244, %v4938
  %v5265 = vadd.f32 %v3403, %v4938
  %v5266 = vadd.f32 %v3405, %v4938
  %v5267 = vadd.f32 %v3564, %v4938
  %v5268 = vadd.f32 %v3566, %v4938
  %v5269 = vadd.f32 %v3725, %v4938
  %v5270 = vadd.f32 %v3727, %v4938
  %v5271 = vadd.f32 %v3886, %v4938
  %v5272 = vadd.f32 %v3888, %v4938
  %v5273 = vadd.f32 %v4047, %v4938
  %v5274 = vadd.f32 %v4049, %v4938
  %v5275 = vadd.f32 %v4208, %v4938
  %v5276 = vadd.f32 %v4210, %v4938
  %v5277 = vadd.f32 %v4369, %v4938
  %v5278 = vadd.f32 %v4371, %v4938
  %v5279 = vadd.f32 %v4530, %v4938
  %v5280 = vadd.f32 %v4532, %v4938
  %v5281 = vadd.f32 %v4691, %v4938
  %v5282 = vadd.f32 %v4693, %v4938
  %v5283 = vadd.f32 %v4841, %v4938
  %v5284 = vadd.f32 %v2765, %v4943
  %v5285 = vadd.f32 %v2767, %v4943
  %v5286 = vadd.f32 %v2926, %v4943
  %v5287 = vadd.f32 %v2928, %v4943
  %v5288 = vadd.f32 %v3087, %v4943
  %v5289 = vadd.f32 %v3089, %v4943
  %v5290 = vadd.f32 %v3248, %v4943
  %v5291 = vadd.f32 %v3250, %v4943
  %v5292 = vadd.f32 %v3409, %v4943
  %v5293 = vadd.f32 %v3411, %v4943
  %v5294 = vadd.f32 %v3570, %v4943
  %v5295 = vadd.f32 %v3572, %v4943
  %v5296 = vadd.f32 %v3731, %v4943
  %v5297 = vadd.f32 %v3733, %v4943
  %v5298 = vadd.f32 %v3892, %v4943
  %v5299 = vadd.f32 %v3894, %v4943
  %v5300 = vadd.f32 %v4053, %v4943
  %v5301 = vadd.f32 %v4055, %v4943
  %v5302 = vadd.f32 %v4214, %v4943
  %v5303 = vadd.f32 %v4216, %v4943
  %v5304 = vadd.f32 %v4375, %v4943
  %v5305 = vadd.f32 %v4377, %v4943
  %v5306 = vadd.f32 %v4536, %v4943
  %v5307 = vadd.f32 %v4538, %v4943
  %v5308 = vadd.f32 %v4697, %v4943
  %v5309 = vadd.f32 %v4699, %v4943
  %v5310 = vadd.f32 %v4846, %v4943
  %v5311 = vadd.f32 %v2771, %v4948
  %v5312 = vadd.f32 %v2773, %v4948
  %v5313 = vadd.f32 %v2932, %v4948
  %v5314 = vadd.f32 %v2934, %v4948
  %v5315 = vadd.f32 %v3093, %v4948
  %v5316 = vadd.f32 %v3095, %v4948
  %v5317 = vadd.f32 %v3254, %v4948
  %v5318 = vadd.f32 %v3256, %v4948
  %v5319 = vadd.f32 %v3415, %v4948
  %v5320 = vadd.f32 %v3417, %v4948
  %v5321 = vadd.f32 %v3576, %v4948
  %v5322 = vadd.f32 %v3578, %v4948
  %v5323 = vadd.f32 %v3737, %v4948
  %v5324 = vadd.f32 %v3739, %v4948
  %v5325 = vadd.f32 %v3898, %v4948
  %v5326 = vadd.f32 %v3900, %v4948
  %v5327 = vadd.f32 %v4059, %v4948
  %v5328 = vadd.f32 %v4061, %v4948
  %v5329 = vadd.f32 %v4220, %v4948
  %v5330 = vadd.f32 %v4222, %v4948
  %v5331 = vadd.f32 %v4381, %v4948
  %v5332 = vadd.f32 %v4383, %v4948
  %v5333 = vadd.f32 %v4542, %v4948
  %v5334 = vadd.f32 %v4544, %v4948
  %v5335 = vadd.f32 %v4703, %v4948
  %v5336 = vadd.f32 %v4705, %v4948
  %v5337 = vadd.f32 %v4851, %v4948
  %v5338 = vadd.f32 %v2777, %v4953
  %v5339 = vadd.f32 %v2779, %v4953
  %v5340 = vadd.f32 %v2938, %v4953
  %v5341 = vadd.f32 %v2940, %v4953
  %v5342 = vadd.f32 %v3099, %v4953
  %v5343 = vadd.f32 %v3101, %v4953
  %v5344 = vadd.f32 %v3260, %v4953
  %v5345 = vadd.f32 %v3262, %v4953
  %v5346 = vadd.f32 %v3421, %v4953
  %v5347 = vadd.f32 %v3423, %v4953
  %v5348 = vadd.f32 %v3582, %v4953
  %v5349 = vadd.f32 %v3584, %v4953
  %v5350 = vadd.f32 %v3743, %v4953
  %v5351 = vadd.f32 %v3745, %v4953
  %v5352 = vadd.f32 %v3904, %v4953
  %v5353 = vadd.f32 %v3906, %v4953
  %v5354 = vadd.f32 %v4065, %v4953
  %v5355 = vadd.f32 %v4067, %v4953
  %v5356 = vadd.f32 %v4226, %v4953
  %v5357 = vadd.f32 %v4228, %v4953
  %v5358 = vadd.f32 %v4387, %v4953
  %v5359 = vadd.f32 %v4389, %v4953
  %v5360 = vadd.f32 %v4548, %v4953
  %v5361 = vadd.f32 %v4550, %v4953
  %v5362 = vadd.f32 %v4709, %v4953
  %v5363 = vadd.f32 %v4711, %v4953
  %v5364 = vadd.f32 %v4856, %v4953
  %v5365 = vadd.f32 %v2783, %v4958
  %v5366 = vadd.f32 %v2785, %v4958
  %v5367 = vadd.f32 %v2944, %v4958
  %v5368 = vadd.f32 %v2946, %v4958
  %v5369 = vadd.f32 %v3105, %v4958
  %v5370 = vadd.f32 %v3107, %v4958
  %v5371 = vadd.f32 %v3266, %v4958
  %v5372 = vadd.f32 %v3268, %v4958
  %v5373 = vadd.f32 %v3427, %v4958
  %v5374 = vadd.f32 %v3429, %v4958
  %v5375 = vadd.f32 %v3588, %v4958
  %v5376 = vadd.f32 %v3590, %v4958
  %v5377 = vadd.f32 %v3749, %v4958
  %v5378 = vadd.f32 %v3751, %v4958
  %v5379 = vadd.f32 %v3910, %v4958
  %v5380 = vadd.f32 %v3912, %v4958
  %v5381 = vadd.f32 %v4071, %v4958
  %v5382 = vadd.f32 %v4073, %v4958
  %v5383 = vadd.f32 %v4232, %v4958
  %v5384 = vadd.f32 %v4234, %v4958
  %v5385 = vadd.f32 %v4393, %v4958
  %v5386 = vadd.f32 %v4395, %v4958
  %v5387 = vadd.f32 %v4554, %v4958
  %v5388 = vadd.f32 %v4556, %v4958
  %v5389 = vadd.f32 %v4715, %v4958
  %v5390 = vadd.f32 %v4717, %v4958
  %v5391 = vadd.f32 %v4861, %v4958
  %v5392 = vmax.f32 %v4960, 0.0
  %v5393 = vmax.f32 %v4961, 0.0
  %v5394 = vmax.f32 %v4962, 0.0
  %v5395 = vmax.f32 %v4963, 0.0
  %v5396 = vmax.f32 %v4964, 0.0
  %v5397 = vmax.f32 %v4965, 0.0
  %v5398 = vmax.f32 %v4966, 0.0
  %v5399 = vmax.f32 %v4967, 0.0
  %v5400 = vmax.f32 %v4968, 0.0
  %v5401 = vmax.f32 %v4969, 0.0
  %v5402 = vmax.f32 %v4970, 0.0
  %v5403 = vmax.f32 %v4971, 0.0
  %v5404 = vmax.f32 %v4972, 0.0
  %v5405 = vmax.f32 %v4973, 0.0
  %v5406 = vmax.f32 %v4974, 0.0
  %v5407 = vmax.f32 %v4975, 0.0
  %v5408 = vmax.f32 %v4976, 0.0
  %v5409 = vmax.f32 %v4977, 0.0
  %v5410 = vmax.f32 %v4978, 0.0
  %v5411 = vmax.f32 %v4979, 0.0
  %v5412 = vmax.f32 %v4980, 0.0
  %v5413 = vmax.f32 %v4981, 0.0
  %v5414 = vmax.f32 %v4982, 0.0
  %v5415 = vmax.f32 %v4983, 0.0
  %v5416 = vmax.f32 %v4984, 0.0
  %v5417 = vmax.f32 %v4985, 0.0
  %v5418 = vmax.f32 %v4986, 0.0
  %v5419 = vmax.f32 %v4987, 0.0
  %v5420 = vmax.f32 %v4988, 0.0
  %v5421 = vmax.f32 %v4989, 0.0
  %v5422 = vmax.f32 %v4990, 0.0
  %v5423 = vmax.f32 %v4991, 0.0
  %v5424 = vmax.f32 %v4992, 0.0
  %v5425 = vmax.f32 %v4993, 0.0
  %v5426 = vmax.f32 %v4994, 0.0
  %v5427 = vmax.f32 %v4995, 0.0
  %v5428 = vmax.f32 %v4996, 0.0
  %v5429 = vmax.f32 %v4997, 0.0
  %v5430 = vmax.f32 %v4998, 0.0
  %v5431 = vmax.f32 %v4999, 0.0
  %v5432 = vmax.f32 %v5000, 0.0
  %v5433 = vmax.f32 %v5001, 0.0
  %v5434 = vmax.f32 %v5002, 0.0
  %v5435 = vmax.f32 %v5003, 0.0
  %v5436 = vmax.f32 %v5004, 0.0
  %v5437 = vmax.f32 %v5005, 0.0
  %v5438 = vmax.f32 %v5006, 0.0
  %v5439 = vmax.f32 %v5007, 0.0
  %v5440 = vmax.f32 %v5008, 0.0
  %v5441 = vmax.f32 %v5009, 0.0
  %v5442 = vmax.f32 %v5010, 0.0
  %v5443 = vmax.f32 %v5011, 0.0
  %v5444 = vmax.f32 %v5012, 0.0
  %v5445 = vmax.f32 %v5013, 0.0
  %v5446 = vmax.f32 %v5014, 0.0
  %v5447 = vmax.f32 %v5015, 0.0
  %v5448 = vmax.f32 %v5016, 0.0
  %v5449 = vmax.f32 %v5017, 0.0
  %v5450 = vmax.f32 %v5018, 0.0
  %v5451 = vmax.f32 %v5019, 0.0
  %v5452 = vmax.f32 %v5020, 0.0
  %v5453 = vmax.f32 %v5021, 0.0
  %v5454 = vmax.f32 %v5022, 0.0
  %v5455 = vmax.f32 %v5023, 0.0
  %v5456 = vmax.f32 %v5024, 0.0
  %v5457 = vmax.f32 %v5025, 0.0
  %v5458 = vmax.f32 %v5026, 0.0
  %v5459 = vmax.f32 %v5027, 0.0
  %v5460 = vmax.f32 %v5028, 0.0
  %v5461 = vmax.f32 %v5029, 0.0
  %v5462 = vmax.f32 %v5030, 0.0
  %v5463 = vmax.f32 %v5031, 0.0
  %v5464 = vmax.f32 %v5032, 0.0
  %v5465 = vmax.f32 %v5033, 0.0
  %v5466 = vmax.f32 %v5034, 0.0
  %v5467 = vmax.f32 %v5035, 0.0
  %v5468 = vmax.f32 %v5036, 0.0
  %v5469 = vmax.f32 %v5037, 0.0
  %v5470 = vmax.f32 %v5038, 0.0
  %v5471 = vmax.f32 %v5039, 0.0
  %v5472 = vmax.f32 %v5040, 0.0
  %v5473 = vmax.f32 %v5041, 0.0
  %v5474 = vmax.f32 %v5042, 0.0
  %v5475 = vmax.f32 %v5043, 0.0
  %v5476 = vmax.f32 %v5044, 0.0
  %v5477 = vmax.f32 %v5045, 0.0
  %v5478 = vmax.f32 %v5046, 0.0
  %v5479 = vmax.f32 %v5047, 0.0
  %v5480 = vmax.f32 %v5048, 0.0
  %v5481 = vmax.f32 %v5049, 0.0
  %v5482 = vmax.f32 %v5050, 0.0
  %v5483 = vmax.f32 %v5051, 0.0
  %v5484 = vmax.f32 %v5052, 0.0
  %v5485 = vmax.f32 %v5053, 0.0
  %v5486 = vmax.f32 %v5054, 0.0
  %v5487 = vmax.f32 %v5055, 0.0
  %v5488 = vmax.f32 %v5056, 0.0
  %v5489 = vmax.f32 %v5057, 0.0
  %v5490 = vmax.f32 %v5058, 0.0
  %v5491 = vmax.f32 %v5059, 0.0
  %v5492 = vmax.f32 %v5060, 0.0
  %v5493 = vmax.f32 %v5061, 0.0
  %v5494 = vmax.f32 %v5062, 0.0
  %v5495 = vmax.f32 %v5063, 0.0
  %v5496 = vmax.f32 %v5064, 0.0
  %v5497 = vmax.f32 %v5065, 0.0
  %v5498 = vmax.f32 %v5066, 0.0
  %v5499 = vmax.f32 %v5067, 0.0
  %v5500 = vmax.f32 %v5068, 0.0
  %v5501 = vmax.f32 %v5069, 0.0
  %v5502 = vmax.f32 %v5070, 0.0
  %v5503 = vmax.f32 %v5071, 0.0
  %v5504 = vmax.f32 %v5072, 0.0
  %v5505 = vmax.f32 %v5073, 0.0
  %v5506 = vmax.f32 %v5074, 0.0
  %v5507 = vmax.f32 %v5075, 0.0
  %v5508 = vmax.f32 %v5076, 0.0
  %v5509 = vmax.f32 %v5077, 0.0
  %v5510 = vmax.f32 %v5078, 0.0
  %v5511 = vmax.f32 %v5079, 0.0
  %v5512 = vmax.f32 %v5080, 0.0
  %v5513 = vmax.f32 %v5081, 0.0
  %v5514 = vmax.f32 %v5082, 0.0
  %v5515 = vmax.f32 %v5083, 0.0
  %v5516 = vmax.f32 %v5084, 0.0
  %v5517 = vmax.f32 %v5085, 0.0
  %v5518 = vmax.f32 %v5086, 0.0
  %v5519 = vmax.f32 %v5087, 0.0
  %v5520 = vmax.f32 %v5088, 0.0
  %v5521 = vmax.f32 %v5089, 0.0
  %v5522 = vmax.f32 %v5090, 0.0
  %v5523 = vmax.f32 %v5091, 0.0
  %v5524 = vmax.f32 %v5092, 0.0
  %v5525 = vmax.f32 %v5093, 0.0
  %v5526 = vmax.f32 %v5094, 0.0
  %v5527 = vmax.f32 %v5095, 0.0
  %v5528 = vmax.f32 %v5096, 0.0
  %v5529 = vmax.f32 %v5097, 0.0
  %v5530 = vmax.f32 %v5098, 0.0
  %v5531 = vmax.f32 %v5099, 0.0
  %v5532 = vmax.f32 %v5100, 0.0
  %v5533 = vmax.f32 %v5101, 0.0
  %v5534 = vmax.f32 %v5102, 0.0
  %v5535 = vmax.f32 %v5103, 0.0
  %v5536 = vmax.f32 %v5104, 0.0
  %v5537 = vmax.f32 %v5105, 0.0
  %v5538 = vmax.f32 %v5106, 0.0
  %v5539 = vmax.f32 %v5107, 0.0
  %v5540 = vmax.f32 %v5108, 0.0
  %v5541 = vmax.f32 %v5109, 0.0
  %v5542 = vmax.f32 %v5110, 0.0
  %v5543 = vmax.f32 %v5111, 0.0
  %v5544 = vmax.f32 %v5112, 0.0
  %v5545 = vmax.f32 %v5113, 0.0
  %v5546 = vmax.f32 %v5114, 0.0
  %v5547 = vmax.f32 %v5115, 0.0
  %v5548 = vmax.f32 %v5116, 0.0
  %v5549 = vmax.f32 %v5117, 0.0
  %v5550 = vmax.f32 %v5118, 0.0
  %v5551 = vmax.f32 %v5119, 0.0
  %v5552 = vmax.f32 %v5120, 0.0
  %v5553 = vmax.f32 %v5121, 0.0
  %v5554 = vmax.f32 %v5122, 0.0
  %v5555 = vmax.f32 %v5123, 0.0
  %v5556 = vmax.f32 %v5124, 0.0
  %v5557 = vmax.f32 %v5125, 0.0
  %v5558 = vmax.f32 %v5126, 0.0
  %v5559 = vmax.f32 %v5127, 0.0
  %v5560 = vmax.f32 %v5128, 0.0
  %v5561 = vmax.f32 %v5129, 0.0
  %v5562 = vmax.f32 %v5130, 0.0
  %v5563 = vmax.f32 %v5131, 0.0
  %v5564 = vmax.f32 %v5132, 0.0
  %v5565 = vmax.f32 %v5133, 0.0
  %v5566 = vmax.f32 %v5134, 0.0
  %v5567 = vmax.f32 %v5135, 0.0
  %v5568 = vmax.f32 %v5136, 0.0
  %v5569 = vmax.f32 %v5137, 0.0
  %v5570 = vmax.f32 %v5138, 0.0
  %v5571 = vmax.f32 %v5139, 0.0
  %v5572 = vmax.f32 %v5140, 0.0
  %v5573 = vmax.f32 %v5141, 0.0
  %v5574 = vmax.f32 %v5142, 0.0
  %v5575 = vmax.f32 %v5143, 0.0
  %v5576 = vmax.f32 %v5144, 0.0
  %v5577 = vmax.f32 %v5145, 0.0
  %v5578 = vmax.f32 %v5146, 0.0
  %v5579 = vmax.f32 %v5147, 0.0
  %v5580 = vmax.f32 %v5148, 0.0
  %v5581 = vmax.f32 %v5149, 0.0
  %v5582 = vmax.f32 %v5150, 0.0
  %v5583 = vmax.f32 %v5151, 0.0
  %v5584 = vmax.f32 %v5152, 0.0
  %v5585 = vmax.f32 %v5153, 0.0
  %v5586 = vmax.f32 %v5154, 0.0
  %v5587 = vmax.f32 %v5155, 0.0
  %v5588 = vmax.f32 %v5156, 0.0
  %v5589 = vmax.f32 %v5157, 0.0
  %v5590 = vmax.f32 %v5158, 0.0
  %v5591 = vmax.f32 %v5159, 0.0
  %v5592 = vmax.f32 %v5160, 0.0
  %v5593 = vmax.f32 %v5161, 0.0
  %v5594 = vmax.f32 %v5162, 0.0
  %v5595 = vmax.f32 %v5163, 0.0
  %v5596 = vmax.f32 %v5164, 0.0
  %v5597 = vmax.f32 %v5165, 0.0
  %v5598 = vmax.f32 %v5166, 0.0
  %v5599 = vmax.f32 %v5167, 0.0
  %v5600 = vmax.f32 %v5168, 0.0
  %v5601 = vmax.f32 %v5169, 0.0
  %v5602 = vmax.f32 %v5170, 0.0
  %v5603 = vmax.f32 %v5171, 0.0
  %v5604 = vmax.f32 %v5172, 0.0
  %v5605 = vmax.f32 %v5173, 0.0
  %v5606 = vmax.f32 %v5174, 0.0
  %v5607 = vmax.f32 %v5175, 0.0
  %v5608 = vmax.f32 %v5176, 0.0
  %v5609 = vmax.f32 %v5177, 0.0
  %v5610 = vmax.f32 %v5178, 0.0
  %v5611 = vmax.f32 %v5179, 0.0
  %v5612 = vmax.f32 %v5180, 0.0
  %v5613 = vmax.f32 %v5181, 0.0
  %v5614 = vmax.f32 %v5182, 0.0
  %v5615 = vmax.f32 %v5183, 0.0
  %v5616 = vmax.f32 %v5184, 0.0
  %v5617 = vmax.f32 %v5185, 0.0
  %v5618 = vmax.f32 %v5186, 0.0
  %v5619 = vmax.f32 %v5187, 0.0
  %v5620 = vmax.f32 %v5188, 0.0
  %v5621 = vmax.f32 %v5189, 0.0
  %v5622 = vmax.f32 %v5190, 0.0
  %v5623 = vmax.f32 %v5191, 0.0
  %v5624 = vmax.f32 %v5192, 0.0
  %v5625 = vmax.f32 %v5193, 0.0
  %v5626 = vmax.f32 %v5194, 0.0
  %v5627 = vmax.f32 %v5195, 0.0
  %v5628 = vmax.f32 %v5196, 0.0
  %v5629 = vmax.f32 %v5197, 0.0
  %v5630 = vmax.f32 %v5198, 0.0
  %v5631 = vmax.f32 %v5199, 0.0
  %v5632 = vmax.f32 %v5200, 0.0
  %v5633 = vmax.f32 %v5201, 0.0
  %v5634 = vmax.f32 %v5202, 0.0
  %v5635 = vmax.f32 %v5203, 0.0
  %v5636 = vmax.f32 %v5204, 0.0
  %v5637 = vmax.f32 %v5205, 0.0
  %v5638 = vmax.f32 %v5206, 0.0
  %v5639 = vmax.f32 %v5207, 0.0
  %v5640 = vmax.f32 %v5208, 0.0
  %v5641 = vmax.f32 %v5209, 0.0
  %v5642 = vmax.f32 %v5210, 0.0
  %v5643 = vmax.f32 %v5211, 0.0
  %v5644 = vmax.f32 %v5212, 0.0
  %v5645 = vmax.f32 %v5213, 0.0
  %v5646 = vmax.f32 %v5214, 0.0
  %v5647 = vmax.f32 %v5215, 0.0
  %v5648 = vmax.f32 %v5216, 0.0
  %v5649 = vmax.f32 %v5217, 0.0
  %v5650 = vmax.f32 %v5218, 0.0
  %v5651 = vmax.f32 %v5219, 0.0
  %v5652 = vmax.f32 %v5220, 0.0
  %v5653 = vmax.f32 %v5221, 0.0
  %v5654 = vmax.f32 %v5222, 0.0
  %v5655 = vmax.f32 %v5223, 0.0
  %v5656 = vmax.f32 %v5224, 0.0
  %v5657 = vmax.f32 %v5225, 0.0
  %v5658 = vmax.f32 %v5226, 0.0
  %v5659 = vmax.f32 %v5227, 0.0
  %v5660 = vmax.f32 %v5228, 0.0
  %v5661 = vmax.f32 %v5229, 0.0
  %v5662 = vmax.f32 %v5230, 0.0
  %v5663 = vmax.f32 %v5231, 0.0
  %v5664 = vmax.f32 %v5232, 0.0
  %v5665 = vmax.f32 %v5233, 0.0
  %v5666 = vmax.f32 %v5234, 0.0
  %v5667 = vmax.f32 %v5235, 0.0
  %v5668 = vmax.f32 %v5236, 0.0
  %v5669 = vmax.f32 %v5237, 0.0
  %v5670 = vmax.f32 %v5238, 0.0
  %v5671 = vmax.f32 %v5239, 0.0
  %v5672 = vmax.f32 %v5240, 0.0
  %v5673 = vmax.f32 %v5241, 0.0
  %v5674 = vmax.f32 %v5242, 0.0
  %v5675 = vmax.f32 %v5243, 0.0
  %v5676 = vmax.f32 %v5244, 0.0
  %v5677 = vmax.f32 %v5245, 0.0
  %v5678 = vmax.f32 %v5246, 0.0
  %v5679 = vmax.f32 %v5247, 0.0
  %v5680 = vmax.f32 %v5248, 0.0
  %v5681 = vmax.f32 %v5249, 0.0
  %v5682 = vmax.f32 %v5250, 0.0
  %v5683 = vmax.f32 %v5251, 0.0
  %v5684 = vmax.f32 %v5252, 0.0
  %v5685 = vmax.f32 %v5253, 0.0
  %v5686 = vmax.f32 %v5254, 0.0
  %v5687 = vmax.f32 %v5255, 0.0
  %v5688 = vmax.f32 %v5256, 0.0
  %v5689 = vmax.f32 %v5257, 0.0
  %v5690 = vmax.f32 %v5258, 0.0
  %v5691 = vmax.f32 %v5259, 0.0
  %v5692 = vmax.f32 %v5260, 0.0
  %v5693 = vmax.f32 %v5261, 0.0
  %v5694 = vmax.f32 %v5262, 0.0
  %v5695 = vmax.f32 %v5263, 0.0
  %v5696 = vmax.f32 %v5264, 0.0
  %v5697 = vmax.f32 %v5265, 0.0
  %v5698 = vmax.f32 %v5266, 0.0
  %v5699 = vmax.f32 %v5267, 0.0
  %v5700 = vmax.f32 %v5268, 0.0
  %v5701 = vmax.f32 %v5269, 0.0
  %v5702 = vmax.f32 %v5270, 0.0
  %v5703 = vmax.f32 %v5271, 0.0
  %v5704 = vmax.f32 %v5272, 0.0
  %v5705 = vmax.f32 %v5273, 0.0
  %v5706 = vmax.f32 %v5274, 0.0
  %v5707 = vmax.f32 %v5275, 0.0
  %v5708 = vmax.f32 %v5276, 0.0
  %v5709 = vmax.f32 %v5277, 0.0
  %v5710 = vmax.f32 %v5278, 0.0
  %v5711 = vmax.f32 %v5279, 0.0
  %v5712 = vmax.f32 %v5280, 0.0
  %v5713 = vmax.f32 %v5281, 0.0
  %v5714 = vmax.f32 %v5282, 0.0
  %v5715 = vmax.f32 %v5283, 0.0
  %v5716 = vmax.f32 %v5284, 0.0
  %v5717 = vmax.f32 %v5285, 0.0
  %v5718 = vmax.f32 %v5286, 0.0
  %v5719 = vmax.f32 %v5287, 0.0
  %v5720 = vmax.f32 %v5288, 0.0
  %v5721 = vmax.f32 %v5289, 0.0
  %v5722 = vmax.f32 %v5290, 0.0
  %v5723 = vmax.f32 %v5291, 0.0
  %v5724 = vmax.f32 %v5292, 0.0
  %v5725 = vmax.f32 %v5293, 0.0
  %v5726 = vmax.f32 %v5294, 0.0
  %v5727 = vmax.f32 %v5295, 0.0
  %v5728 = vmax.f32 %v5296, 0.0
  %v5729 = vmax.f32 %v5297, 0.0
  %v5730 = vmax.f32 %v5298, 0.0
  %v5731 = vmax.f32 %v5299, 0.0
  %v5732 = vmax.f32 %v5300, 0.0
  %v5733 = vmax.f32 %v5301, 0.0
  %v5734 = vmax.f32 %v5302, 0.0
  %v5735 = vmax.f32 %v5303, 0.0
  %v5736 = vmax.f32 %v5304, 0.0
  %v5737 = vmax.f32 %v5305, 0.0
  %v5738 = vmax.f32 %v5306, 0.0
  %v5739 = vmax.f32 %v5307, 0.0
  %v5740 = vmax.f32 %v5308, 0.0
  %v5741 = vmax.f32 %v5309, 0.0
  %v5742 = vmax.f32 %v5310, 0.0
  %v5743 = vmax.f32 %v5311, 0.0
  %v5744 = vmax.f32 %v5312, 0.0
  %v5745 = vmax.f32 %v5313, 0.0
  %v5746 = vmax.f32 %v5314, 0.0
  %v5747 = vmax.f32 %v5315, 0.0
  %v5748 = vmax.f32 %v5316, 0.0
  %v5749 = vmax.f32 %v5317, 0.0
  %v5750 = vmax.f32 %v5318, 0.0
  %v5751 = vmax.f32 %v5319, 0.0
  %v5752 = vmax.f32 %v5320, 0.0
  %v5753 = vmax.f32 %v5321, 0.0
  %v5754 = vmax.f32 %v5322, 0.0
  %v5755 = vmax.f32 %v5323, 0.0
  %v5756 = vmax.f32 %v5324, 0.0
  %v5757 = vmax.f32 %v5325, 0.0
  %v5758 = vmax.f32 %v5326, 0.0
  %v5759 = vmax.f32 %v5327, 0.0
  %v5760 = vmax.f32 %v5328, 0.0
  %v5761 = vmax.f32 %v5329, 0.0
  %v5762 = vmax.f32 %v5330, 0.0
  %v5763 = vmax.f32 %v5331, 0.0
  %v5764 = vmax.f32 %v5332, 0.0
  %v5765 = vmax.f32 %v5333, 0.0
  %v5766 = vmax.f32 %v5334, 0.0
  %v5767 = vmax.f32 %v5335, 0.0
  %v5768 = vmax.f32 %v5336, 0.0
  %v5769 = vmax.f32 %v5337, 0.0
  %v5770 = vmax.f32 %v5338, 0.0
  %v5771 = vmax.f32 %v5339, 0.0
  %v5772 = vmax.f32 %v5340, 0.0
  %v5773 = vmax.f32 %v5341, 0.0
  %v5774 = vmax.f32 %v5342, 0.0
  %v5775 = vmax.f32 %v5343, 0.0
  %v5776 = vmax.f32 %v5344, 0.0
  %v5777 = vmax.f32 %v5345, 0.0
  %v5778 = vmax.f32 %v5346, 0.0
  %v5779 = vmax.f32 %v5347, 0.0
  %v5780 = vmax.f32 %v5348, 0.0
  %v5781 = vmax.f32 %v5349, 0.0
  %v5782 = vmax.f32 %v5350, 0.0
  %v5783 = vmax.f32 %v5351, 0.0
  %v5784 = vmax.f32 %v5352, 0.0
  %v5785 = vmax.f32 %v5353, 0.0
  %v5786 = vmax.f32 %v5354, 0.0
  %v5787 = vmax.f32 %v5355, 0.0
  %v5788 = vmax.f32 %v5356, 0.0
  %v5789 = vmax.f32 %v5357, 0.0
  %v5790 = vmax.f32 %v5358, 0.0
  %v5791 = vmax.f32 %v5359, 0.0
  %v5792 = vmax.f32 %v5360, 0.0
  %v5793 = vmax.f32 %v5361, 0.0
  %v5794 = vmax.f32 %v5362, 0.0
  %v5795 = vmax.f32 %v5363, 0.0
  %v5796 = vmax.f32 %v5364, 0.0
  %v5797 = vmax.f32 %v5365, 0.0
  %v5798 = vmax.f32 %v5366, 0.0
  %v5799 = vmax.f32 %v5367, 0.0
  %v5800 = vmax.f32 %v5368, 0.0
  %v5801 = vmax.f32 %v5369, 0.0
  %v5802 = vmax.f32 %v5370, 0.0
  %v5803 = vmax.f32 %v5371, 0.0
  %v5804 = vmax.f32 %v5372, 0.0
  %v5805 = vmax.f32 %v5373, 0.0
  %v5806 = vmax.f32 %v5374, 0.0
  %v5807 = vmax.f32 %v5375, 0.0
  %v5808 = vmax.f32 %v5376, 0.0
  %v5809 = vmax.f32 %v5377, 0.0
  %v5810 = vmax.f32 %v5378, 0.0
  %v5811 = vmax.f32 %v5379, 0.0
  %v5812 = vmax.f32 %v5380, 0.0
  %v5813 = vmax.f32 %v5381, 0.0
  %v5814 = vmax.f32 %v5382, 0.0
  %v5815 = vmax.f32 %v5383, 0.0
  %v5816 = vmax.f32 %v5384, 0.0
  %v5817 = vmax.f32 %v5385, 0.0
  %v5818 = vmax.f32 %v5386, 0.0
  %v5819 = vmax.f32 %v5387, 0.0
  %v5820 = vmax.f32 %v5388, 0.0
  %v5821 = vmax.f32 %v5389, 0.0
  %v5822 = vmax.f32 %v5390, 0.0
  %v5823 = vmax.f32 %v5391, 0.0
  %v5824 = vld [vmem:[%s4] sm:$0xff]
  %v5825 = vld [vmem:[%s4 + $0x8] sm:$0xff]
  %v5826 = vld [vmem:[%s4 + $0x10] sm:$0xff]
  %v5827 = vld [vmem:[%s4 + $0x18] sm:$0xff]
  %v5828 = vld [vmem:[%s4 + $0x20] sm:$0xff]
  %v5829 = vld [vmem:[%s4 + $0x28] sm:$0xff]
  %v5830 = vld [vmem:[%s4 + $0x30] sm:$0xff]
  %v5831 = vld [vmem:[%s5] sm:$0xff]
  %v5832 = vld [vmem:[%s5 + $0x8] sm:$0xff]
  %v5833 = vld [vmem:[%s5 + $0x10] sm:$0xff]
  %v5834 = vld [vmem:[%s5 + $0x18] sm:$0xff]
  %v5835 = vld [vmem:[%s5 + $0x20] sm:$0xff]
  %v5836 = vld [vmem:[%s5 + $0x28] sm:$0xff]
  %v5837 = vld [vmem:[%s5 + $0x30] sm:$0xff]
  %5839 = vset.pattern.permute.xlu0 0
  %5840 = vperm.xlu0 %5839, %v5831
  %v5841 = vpop.permute.xlu0 %5840
  %5844 = vset.pattern.permute.xlu0 0
  %5845 = vperm.xlu0 %5844, %v5832
  %v5846 = vpop.permute.xlu0 %5845
  %5849 = vset.pattern.permute.xlu0 0
  %5850 = vperm.xlu0 %5849, %v5833
  %v5851 = vpop.permute.xlu0 %5850
  %5854 = vset.pattern.permute.xlu0 0
  %5855 = vperm.xlu0 %5854, %v5834
  %v5856 = vpop.permute.xlu0 %5855
  %5859 = vset.pattern.permute.xlu0 0
  %5860 = vperm.xlu0 %5859, %v5835
  %v5861 = vpop.permute.xlu0 %5860
  %5864 = vset.pattern.permute.xlu0 0
  %5865 = vperm.xlu0 %5864, %v5836
  %v5866 = vpop.permute.xlu0 %5865
  %5869 = vset.pattern.permute.xlu0 0
  %5870 = vperm.xlu0 %5869, %v5837
  %v5871 = vpop.permute.xlu0 %5870
  %5873 = vmatprep.subr.mxu0 %v5393
  %5874 = vmatpush1.msra.mxu0 %v5392
  %5875 = vmatprep.subr.mxu0 %v5420
  %5876 = vmatpush1.msra.mxu0 %v5419
  %5877 = vmatprep.subr.mxu0 %v5447
  %5878 = vmatpush1.msra.mxu0 %v5446
  %5879 = vmatprep.subr.mxu0 %v5474
  %5880 = vmatpush1.msra.mxu0 %v5473
  %5881 = vmatprep.subr.mxu0 %v5501
  %5882 = vmatpush1.msra.mxu0 %v5500
  %5883 = vmatprep.subr.mxu0 %v5528
  %5884 = vmatpush1.msra.mxu0 %v5527
  %5885 = vmatprep.subr.mxu0 %v5555
  %5886 = vmatpush1.msra.mxu0 %v5554
  %5887 = vmatprep.subr.mxu0 %v5582
  %5888 = vmatpush1.msra.mxu0 %v5581
  %5889 = vmatprep.subr.mxu0 %v5609
  %5890 = vmatpush1.msra.mxu0 %v5608
  %5891 = vmatprep.subr.mxu0 %v5636
  %5892 = vmatpush1.msra.mxu0 %v5635
  %5893 = vmatprep.subr.mxu0 %v5663
  %5894 = vmatpush1.msra.mxu0 %v5662
  %5895 = vmatprep.subr.mxu0 %v5690
  %5896 = vmatpush1.msra.mxu0 %v5689
  %5897 = vmatprep.subr.mxu0 %v5717
  %5898 = vmatpush1.msra.mxu0 %v5716
  %5899 = vmatprep.subr.mxu0 %v5744
  %5900 = vmatpush1.msra.mxu0 %v5743
  %5901 = vmatprep.subr.mxu0 %v5771
  %5902 = vmatpush1.msra.mxu0 %v5770
  %5903 = vmatprep.subr.mxu0 %v5798
  %5904 = vmatpush1.msra.mxu0 %v5797
  %5905 = vmatprep.subr.mxu0 0.0
  %5906 = vmatpush1.msra.mxu0 0.0
  %5907 = vmatprep.subr.mxu0 0.0
  %5908 = vmatpush1.msra.mxu0 0.0
  %5909 = vmatprep.subr.mxu0 0.0
  %5910 = vmatpush1.msra.mxu0 0.0
  %5911 = vmatprep.subr.mxu0 0.0
  %5912 = vmatpush1.msra.mxu0 0.0
  %5913 = vmatprep.subr.mxu0 0.0
  %5914 = vmatpush1.msra.mxu0 0.0
  %5915 = vmatprep.subr.mxu0 0.0
  %5916 = vmatpush1.msra.mxu0 0.0
  %5917 = vmatprep.subr.mxu0 0.0
  %5918 = vmatpush1.msra.mxu0 0.0
  %5919 = vmatprep.subr.mxu0 0.0
  %5920 = vmatpush1.msra.mxu0 0.0
  %5921 = vmatprep.subr.mxu0 0.0
  %5922 = vmatpush1.msra.mxu0 0.0
  %5923 = vmatprep.subr.mxu0 0.0
  %5924 = vmatpush1.msra.mxu0 0.0
  %5925 = vmatprep.subr.mxu0 0.0
  %5926 = vmatpush1.msra.mxu0 0.0
  %5927 = vmatprep.subr.mxu0 0.0
  %5928 = vmatpush1.msra.mxu0 0.0
  %5929 = vmatprep.subr.mxu0 0.0
  %5930 = vmatpush1.msra.mxu0 0.0
  %5931 = vmatprep.subr.mxu0 0.0
  %5932 = vmatpush1.msra.mxu0 0.0
  %5933 = vmatprep.subr.mxu0 0.0
  %5934 = vmatpush1.msra.mxu0 0.0
  %5935 = vmatprep.subr.mxu0 0.0
  %5936 = vmatpush1.msra.mxu0 0.0
  %5937 = vmatprep.mubr.f32.mxu0 0.0
  %5938 = vmatmul.mubr.f32.gmra.mrb[0].mxu0 %v5824
  %v5939 = vpop.f32.mrb[0].mxu0
  %v5940 = vadd.f32 %v5841, %v5939
  %v5941 = vpop.f32.mrb[0].mxu0
  %v5942 = vadd.f32 %v5841, %v5941
  %5943 = vmatprep.mubr.f32.mxu0 0.0
  %5944 = vmatmul.mubr.f32.gmra.mrb[0].mxu0 %v5825
  %v5945 = vpop.f32.mrb[0].mxu0
  %v5946 = vadd.f32 %v5846, %v5945
  %v5947 = vpop.f32.mrb[0].mxu0
  %v5948 = vadd.f32 %v5846, %v5947
  %5949 = vmatprep.mubr.f32.mxu0 0.0
  %5950 = vmatmul.mubr.f32.gmra.mrb[0].mxu0 %v5826
  %v5951 = vpop.f32.mrb[0].mxu0
  %v5952 = vadd.f32 %v5851, %v5951
  %v5953 = vpop.f32.mrb[0].mxu0
  %v5954 = vadd.f32 %v5851, %v5953
  %5955 = vmatprep.mubr.f32.mxu0 0.0
  %5956 = vmatmul.mubr.f32.gmra.mrb[0].mxu0 %v5827
  %v5957 = vpop.f32.mrb[0].mxu0
  %v5958 = vadd.f32 %v5856, %v5957
  %v5959 = vpop.f32.mrb[0].mxu0
  %v5960 = vadd.f32 %v5856, %v5959
  %5961 = vmatprep.mubr.f32.mxu0 0.0
  %5962 = vmatmul.mubr.f32.gmra.mrb[0].mxu0 %v5828
  %v5963 = vpop.f32.mrb[0].mxu0
  %v5964 = vadd.f32 %v5861, %v5963
  %v5965 = vpop.f32.mrb[0].mxu0
  %v5966 = vadd.f32 %v5861, %v5965
  %5967 = vmatprep.mubr.f32.mxu0 0.0
  %5968 = vmatmul.mubr.f32.gmra.mrb[0].mxu0 %v5829
  %v5969 = vpop.f32.mrb[0].mxu0
  %v5970 = vadd.f32 %v5866, %v5969
  %v5971 = vpop.f32.mrb[0].mxu0
  %v5972 = vadd.f32 %v5866, %v5971
  %5973 = vmatprep.mubr.f32.mxu0 0.0
  %5974 = vmatmul.mubr.f32.gmra.mrb[0].mxu0 %v5830
  %v5975 = vpop.f32.mrb[0].mxu0
  %v5976 = vadd.f32 %v5871, %v5975
  %v5977 = vpop.f32.mrb[0].mxu0
  %v5978 = vadd.f32 %v5871, %v5977
  %5979 = vdwg.mxu0
  %5980 = vmatprep.subr.mxu0 %v5395
  %5981 = vmatpush1.msra.mxu0 %v5394
  %5982 = vmatprep.subr.mxu0 %v5422
  %5983 = vmatpush1.msra.mxu0 %v5421
  %5984 = vmatprep.subr.mxu0 %v5449
  %5985 = vmatpush1.msra.mxu0 %v5448
  %5986 = vmatprep.subr.mxu0 %v5476
  %5987 = vmatpush1.msra.mxu0 %v5475
  %5988 = vmatprep.subr.mxu0 %v5503
  %5989 = vmatpush1.msra.mxu0 %v5502
  %5990 = vmatprep.subr.mxu0 %v5530
  %5991 = vmatpush1.msra.mxu0 %v5529
  %5992 = vmatprep.subr.mxu0 %v5557
  %5993 = vmatpush1.msra.mxu0 %v5556
  %5994 = vmatprep.subr.mxu0 %v5584
  %5995 = vmatpush1.msra.mxu0 %v5583
  %5996 = vmatprep.subr.mxu0 %v5611
  %5997 = vmatpush1.msra.mxu0 %v5610
  %5998 = vmatprep.subr.mxu0 %v5638
  %5999 = vmatpush1.msra.mxu0 %v5637
  %6000 = vmatprep.subr.mxu0 %v5665
  %6001 = vmatpush1.msra.mxu0 %v5664
  %6002 = vmatprep.subr.mxu0 %v5692
  %6003 = vmatpush1.msra.mxu0 %v5691
  %6004 = vmatprep.subr.mxu0 %v5719
  %6005 = vmatpush1.msra.mxu0 %v5718
  %6006 = vmatprep.subr.mxu0 %v5746
  %6007 = vmatpush1.msra.mxu0 %v5745
  %6008 = vmatprep.subr.mxu0 %v5773
  %6009 = vmatpush1.msra.mxu0 %v5772
  %6010 = vmatprep.subr.mxu0 %v5800
  %6011 = vmatpush1.msra.mxu0 %v5799
  %6012 = vmatprep.subr.mxu0 0.0
  %6013 = vmatpush1.msra.mxu0 0.0
  %6014 = vmatprep.subr.mxu0 0.0
  %6015 = vmatpush1.msra.mxu0 0.0
  %6016 = vmatprep.subr.mxu0 0.0
  %6017 = vmatpush1.msra.mxu0 0.0
  %6018 = vmatprep.subr.mxu0 0.0
  %6019 = vmatpush1.msra.mxu0 0.0
  %6020 = vmatprep.subr.mxu0 0.0
  %6021 = vmatpush1.msra.mxu0 0.0
  %6022 = vmatprep.subr.mxu0 0.0
  %6023 = vmatpush1.msra.mxu0 0.0
  %6024 = vmatprep.subr.mxu0 0.0
  %6025 = vmatpush1.msra.mxu0 0.0
  %6026 = vmatprep.subr.mxu0 0.0
  %6027 = vmatpush1.msra.mxu0 0.0
  %6028 = vmatprep.subr.mxu0 0.0
  %6029 = vmatpush1.msra.mxu0 0.0
  %6030 = vmatprep.subr.mxu0 0.0
  %6031 = vmatpush1.msra.mxu0 0.0
  %6032 = vmatprep.subr.mxu0 0.0
  %6033 = vmatpush1.msra.mxu0 0.0
  %6034 = vmatprep.subr.mxu0 0.0
  %6035 = vmatpush1.msra.mxu0 0.0
  %6036 = vmatprep.subr.mxu0 0.0
  %6037 = vmatpush1.msra.mxu0 0.0
  %6038 = vmatprep.subr.mxu0 0.0
  %6039 = vmatpush1.msra.mxu0 0.0
  %6040 = vmatprep.subr.mxu0 0.0
  %6041 = vmatpush1.msra.mxu0 0.0
  %6042 = vmatprep.subr.mxu0 0.0
  %6043 = vmatpush1.msra.mxu0 0.0
  %6044 = vmatprep.mubr.f32.mxu0 0.0
  %6045 = vmatmul.mubr.f32.gmra.mrb[0].mxu0 %v5824
  %v6046 = vpop.f32.mrb[0].mxu0
  %v6047 = vadd.f32 %v5841, %v6046
  %v6048 = vpop.f32.mrb[0].mxu0
  %v6049 = vadd.f32 %v5841, %v6048
  %6050 = vmatprep.mubr.f32.mxu0 0.0
  %6051 = vmatmul.mubr.f32.gmra.mrb[0].mxu0 %v5825
  %v6052 = vpop.f32.mrb[0].mxu0
  %v6053 = vadd.f32 %v5846, %v6052
  %v6054 = vpop.f32.mrb[0].mxu0
  %v6055 = vadd.f32 %v5846, %v6054
  %6056 = vmatprep.mubr.f32.mxu0 0.0
  %6057 = vmatmul.mubr.f32.gmra.mrb[0].mxu0 %v5826
  %v6058 = vpop.f32.mrb[0].mxu0
  %v6059 = vadd.f32 %v5851, %v6058
  %v6060 = vpop.f32.mrb[0].mxu0
  %v6061 = vadd.f32 %v5851, %v6060
  %6062 = vmatprep.mubr.f32.mxu0 0.0
  %6063 = vmatmul.mubr.f32.gmra.mrb[0].mxu0 %v5827
  %v6064 = vpop.f32.mrb[0].mxu0
  %v6065 = vadd.f32 %v5856, %v6064
  %v6066 = vpop.f32.mrb[0].mxu0
  %v6067 = vadd.f32 %v5856, %v6066
  %6068 = vmatprep.mubr.f32.mxu0 0.0
  %6069 = vmatmul.mubr.f32.gmra.mrb[0].mxu0 %v5828
  %v6070 = vpop.f32.mrb[0].mxu0
  %v6071 = vadd.f32 %v5861, %v6070
  %v6072 = vpop.f32.mrb[0].mxu0
  %v6073 = vadd.f32 %v5861, %v6072
  %6074 = vmatprep.mubr.f32.mxu0 0.0
  %6075 = vmatmul.mubr.f32.gmra.mrb[0].mxu0 %v5829
  %v6076 = vpop.f32.mrb[0].mxu0
  %v6077 = vadd.f32 %v5866, %v6076
  %v6078 = vpop.f32.mrb[0].mxu0
  %v6079 = vadd.f32 %v5866, %v6078
  %6080 = vmatprep.mubr.f32.mxu0 0.0
  %6081 = vmatmul.mubr.f32.gmra.mrb[0].mxu0 %v5830
  %v6082 = vpop.f32.mrb[0].mxu0
  %v6083 = vadd.f32 %v5871, %v6082
  %v6084 = vpop.f32.mrb[0].mxu0
  %v6085 = vadd.f32 %v5871, %v6084
  %6086 = vdwg.mxu0
  %6087 = vmatprep.subr.mxu0 %v5397
  %6088 = vmatpush1.msra.mxu0 %v5396
  %6089 = vmatprep.subr.mxu0 %v5424
  %6090 = vmatpush1.msra.mxu0 %v5423
  %6091 = vmatprep.subr.mxu0 %v5451
  %6092 = vmatpush1.msra.mxu0 %v5450
  %6093 = vmatprep.subr.mxu0 %v5478
  %6094 = vmatpush1.msra.mxu0 %v5477
  %6095 = vmatprep.subr.mxu0 %v5505
  %6096 = vmatpush1.msra.mxu0 %v5504
  %6097 = vmatprep.subr.mxu0 %v5532
  %6098 = vmatpush1.msra.mxu0 %v5531
  %6099 = vmatprep.subr.mxu0 %v5559
  %6100 = vmatpush1.msra.mxu0 %v5558
  %6101 = vmatprep.subr.mxu0 %v5586
  %6102 = vmatpush1.msra.mxu0 %v5585
  %6103 = vmatprep.subr.mxu0 %v5613
  %6104 = vmatpush1.msra.mxu0 %v5612
  %6105 = vmatprep.subr.mxu0 %v5640
  %6106 = vmatpush1.msra.mxu0 %v5639
  %6107 = vmatprep.subr.mxu0 %v5667
  %6108 = vmatpush1.msra.mxu0 %v5666
  %6109 = vmatprep.subr.mxu0 %v5694
  %6110 = vmatpush1.msra.mxu0 %v5693
  %6111 = vmatprep.subr.mxu0 %v5721
  %6112 = vmatpush1.msra.mxu0 %v5720
  %6113 = vmatprep.subr.mxu0 %v5748
  %6114 = vmatpush1.msra.mxu0 %v5747
  %6115 = vmatprep.subr.mxu0 %v5775
  %6116 = vmatpush1.msra.mxu0 %v5774
  %6117 = vmatprep.subr.mxu0 %v5802
  %6118 = vmatpush1.msra.mxu0 %v5801
  %6119 = vmatprep.subr.mxu0 0.0
  %6120 = vmatpush1.msra.mxu0 0.0
  %6121 = vmatprep.subr.mxu0 0.0
  %6122 = vmatpush1.msra.mxu0 0.0
  %6123 = vmatprep.subr.mxu0 0.0
  %6124 = vmatpush1.msra.mxu0 0.0
  %6125 = vmatprep.subr.mxu0 0.0
  %6126 = vmatpush1.msra.mxu0 0.0
  %6127 = vmatprep.subr.mxu0 0.0
  %6128 = vmatpush1.msra.mxu0 0.0
  %6129 = vmatprep.subr.mxu0 0.0
  %6130 = vmatpush1.msra.mxu0 0.0
  %6131 = vmatprep.subr.mxu0 0.0
  %6132 = vmatpush1.msra.mxu0 0.0
  %6133 = vmatprep.subr.mxu0 0.0
  %6134 = vmatpush1.msra.mxu0 0.0
  %6135 = vmatprep.subr.mxu0 0.0
  %6136 = vmatpush1.msra.mxu0 0.0
  %6137 = vmatprep.subr.mxu0 0.0
  %6138 = vmatpush1.msra.mxu0 0.0
  %6139 = vmatprep.subr.mxu0 0.0
  %6140 = vmatpush1.msra.mxu0 0.0
  %6141 = vmatprep.subr.mxu0 0.0
  %6142 = vmatpush1.msra.mxu0 0.0
  %6143 = vmatprep.subr.mxu0 0.0
  %6144 = vmatpush1.msra.mxu0 0.0
  %6145 = vmatprep.subr.mxu0 0.0
  %6146 = vmatpush1.msra.mxu0 0.0
  %6147 = vmatprep.subr.mxu0 0.0
  %6148 = vmatpush1.msra.mxu0 0.0
  %6149 = vmatprep.subr.mxu0 0.0
  %6150 = vmatpush1.msra.mxu0 0.0
  %6151 = vmatprep.mubr.f32.mxu0 0.0
  %6152 = vmatmul.mubr.f32.gmra.mrb[0].mxu0 %v5824
  %v6153 = vpop.f32.mrb[0].mxu0
  %v6154 = vadd.f32 %v5841, %v6153
  %v6155 = vpop.f32.mrb[0].mxu0
  %v6156 = vadd.f32 %v5841, %v6155
  %6157 = vmatprep.mubr.f32.mxu0 0.0
  %6158 = vmatmul.mubr.f32.gmra.mrb[0].mxu0 %v5825
  %v6159 = vpop.f32.mrb[0].mxu0
  %v6160 = vadd.f32 %v5846, %v6159
  %v6161 = vpop.f32.mrb[0].mxu0
  %v6162 = vadd.f32 %v5846, %v6161
  %6163 = vmatprep.mubr.f32.mxu0 0.0
  %6164 = vmatmul.mubr.f32.gmra.mrb[0].mxu0 %v5826
  %v6165 = vpop.f32.mrb[0].mxu0
  %v6166 = vadd.f32 %v5851, %v6165
  %v6167 = vpop.f32.mrb[0].mxu0
  %v6168 = vadd.f32 %v5851, %v6167
  %6169 = vmatprep.mubr.f32.mxu0 0.0
  %6170 = vmatmul.mubr.f32.gmra.mrb[0].mxu0 %v5827
  %v6171 = vpop.f32.mrb[0].mxu0
  %v6172 = vadd.f32 %v5856, %v6171
  %v6173 = vpop.f32.mrb[0].mxu0
  %v6174 = vadd.f32 %v5856, %v6173
  %6175 = vmatprep.mubr.f32.mxu0 0.0
  %6176 = vmatmul.mubr.f32.gmra.mrb[0].mxu0 %v5828
  %v6177 = vpop.f32.mrb[0].mxu0
  %v6178 = vadd.f32 %v5861, %v6177
  %v6179 = vpop.f32.mrb[0].mxu0
  %v6180 = vadd.f32 %v5861, %v6179
  %6181 = vmatprep.mubr.f32.mxu0 0.0
  %6182 = vmatmul.mubr.f32.gmra.mrb[0].mxu0 %v5829
  %v6183 = vpop.f32.mrb[0].mxu0
  %v6184 = vadd.f32 %v5866, %v6183
  %v6185 = vpop.f32.mrb[0].mxu0
  %v6186 = vadd.f32 %v5866, %v6185
  %6187 = vmatprep.mubr.f32.mxu0 0.0
  %6188 = vmatmul.mubr.f32.gmra.mrb[0].mxu0 %v5830
  %v6189 = vpop.f32.mrb[0].mxu0
  %v6190 = vadd.f32 %v5871, %v6189
  %v6191 = vpop.f32.mrb[0].mxu0
  %v6192 = vadd.f32 %v5871, %v6191
  %6193 = vdwg.mxu0
  %6194 = vmatprep.subr.mxu0 %v5399
  %6195 = vmatpush1.msra.mxu0 %v5398
  %6196 = vmatprep.subr.mxu0 %v5426
  %6197 = vmatpush1.msra.mxu0 %v5425
  %6198 = vmatprep.subr.mxu0 %v5453
  %6199 = vmatpush1.msra.mxu0 %v5452
  %6200 = vmatprep.subr.mxu0 %v5480
  %6201 = vmatpush1.msra.mxu0 %v5479
  %6202 = vmatprep.subr.mxu0 %v5507
  %6203 = vmatpush1.msra.mxu0 %v5506
  %6204 = vmatprep.subr.mxu0 %v5534
  %6205 = vmatpush1.msra.mxu0 %v5533
  %6206 = vmatprep.subr.mxu0 %v5561
  %6207 = vmatpush1.msra.mxu0 %v5560
  %6208 = vmatprep.subr.mxu0 %v5588
  %6209 = vmatpush1.msra.mxu0 %v5587
  %6210 = vmatprep.subr.mxu0 %v5615
  %6211 = vmatpush1.msra.mxu0 %v5614
  %6212 = vmatprep.subr.mxu0 %v5642
  %6213 = vmatpush1.msra.mxu0 %v5641
  %6214 = vmatprep.subr.mxu0 %v5669
  %6215 = vmatpush1.msra.mxu0 %v5668
  %6216 = vmatprep.subr.mxu0 %v5696
  %6217 = vmatpush1.msra.mxu0 %v5695
  %6218 = vmatprep.subr.mxu0 %v5723
  %6219 = vmatpush1.msra.mxu0 %v5722
  %6220 = vmatprep.subr.mxu0 %v5750
  %6221 = vmatpush1.msra.mxu0 %v5749
  %6222 = vmatprep.subr.mxu0 %v5777
  %6223 = vmatpush1.msra.mxu0 %v5776
  %6224 = vmatprep.subr.mxu0 %v5804
  %6225 = vmatpush1.msra.mxu0 %v5803
  %6226 = vmatprep.subr.mxu0 0.0
  %6227 = vmatpush1.msra.mxu0 0.0
  %6228 = vmatprep.subr.mxu0 0.0
  %6229 = vmatpush1.msra.mxu0 0.0
  %6230 = vmatprep.subr.mxu0 0.0
  %6231 = vmatpush1.msra.mxu0 0.0
  %6232 = vmatprep.subr.mxu0 0.0
  %6233 = vmatpush1.msra.mxu0 0.0
  %6234 = vmatprep.subr.mxu0 0.0
  %6235 = vmatpush1.msra.mxu0 0.0
  %6236 = vmatprep.subr.mxu0 0.0
  %6237 = vmatpush1.msra.mxu0 0.0
  %6238 = vmatprep.subr.mxu0 0.0
  %6239 = vmatpush1.msra.mxu0 0.0
  %6240 = vmatprep.subr.mxu0 0.0
  %6241 = vmatpush1.msra.mxu0 0.0
  %6242 = vmatprep.subr.mxu0 0.0
  %6243 = vmatpush1.msra.mxu0 0.0
  %6244 = vmatprep.subr.mxu0 0.0
  %6245 = vmatpush1.msra.mxu0 0.0
  %6246 = vmatprep.subr.mxu0 0.0
  %6247 = vmatpush1.msra.mxu0 0.0
  %6248 = vmatprep.subr.mxu0 0.0
  %6249 = vmatpush1.msra.mxu0 0.0
  %6250 = vmatprep.subr.mxu0 0.0
  %6251 = vmatpush1.msra.mxu0 0.0
  %6252 = vmatprep.subr.mxu0 0.0
  %6253 = vmatpush1.msra.mxu0 0.0
  %6254 = vmatprep.subr.mxu0 0.0
  %6255 = vmatpush1.msra.mxu0 0.0
  %6256 = vmatprep.subr.mxu0 0.0
  %6257 = vmatpush1.msra.mxu0 0.0
  %6258 = vmatprep.mubr.f32.mxu0 0.0
  %6259 = vmatmul.mubr.f32.gmra.mrb[0].mxu0 %v5824
  %v6260 = vpop.f32.mrb[0].mxu0
  %v6261 = vadd.f32 %v5841, %v6260
  %v6262 = vpop.f32.mrb[0].mxu0
  %v6263 = vadd.f32 %v5841, %v6262
  %6264 = vmatprep.mubr.f32.mxu0 0.0
  %6265 = vmatmul.mubr.f32.gmra.mrb[0].mxu0 %v5825
  %v6266 = vpop.f32.mrb[0].mxu0
  %v6267 = vadd.f32 %v5846, %v6266
  %v6268 = vpop.f32.mrb[0].mxu0
  %v6269 = vadd.f32 %v5846, %v6268
  %6270 = vmatprep.mubr.f32.mxu0 0.0
  %6271 = vmatmul.mubr.f32.gmra.mrb[0].mxu0 %v5826
  %v6272 = vpop.f32.mrb[0].mxu0
  %v6273 = vadd.f32 %v5851, %v6272
  %v6274 = vpop.f32.mrb[0].mxu0
  %v6275 = vadd.f32 %v5851, %v6274
  %6276 = vmatprep.mubr.f32.mxu0 0.0
  %6277 = vmatmul.mubr.f32.gmra.mrb[0].mxu0 %v5827
  %v6278 = vpop.f32.mrb[0].mxu0
  %v6279 = vadd.f32 %v5856, %v6278
  %v6280 = vpop.f32.mrb[0].mxu0
  %v6281 = vadd.f32 %v5856, %v6280
  %6282 = vmatprep.mubr.f32.mxu0 0.0
  %6283 = vmatmul.mubr.f32.gmra.mrb[0].mxu0 %v5828
  %v6284 = vpop.f32.mrb[0].mxu0
  %v6285 = vadd.f32 %v5861, %v6284
  %v6286 = vpop.f32.mrb[0].mxu0
  %v6287 = vadd.f32 %v5861, %v6286
  %6288 = vmatprep.mubr.f32.mxu0 0.0
  %6289 = vmatmul.mubr.f32.gmra.mrb[0].mxu0 %v5829
  %v6290 = vpop.f32.mrb[0].mxu0
  %v6291 = vadd.f32 %v5866, %v6290
  %v6292 = vpop.f32.mrb[0].mxu0
  %v6293 = vadd.f32 %v5866, %v6292
  %6294 = vmatprep.mubr.f32.mxu0 0.0
  %6295 = vmatmul.mubr.f32.gmra.mrb[0].mxu0 %v5830
  %v6296 = vpop.f32.mrb[0].mxu0
  %v6297 = vadd.f32 %v5871, %v6296
  %v6298 = vpop.f32.mrb[0].mxu0
  %v6299 = vadd.f32 %v5871, %v6298
  %6300 = vdwg.mxu0
  %6301 = vmatprep.subr.mxu0 %v5401
  %6302 = vmatpush1.msra.mxu0 %v5400
  %6303 = vmatprep.subr.mxu0 %v5428
  %6304 = vmatpush1.msra.mxu0 %v5427
  %6305 = vmatprep.subr.mxu0 %v5455
  %6306 = vmatpush1.msra.mxu0 %v5454
  %6307 = vmatprep.subr.mxu0 %v5482
  %6308 = vmatpush1.msra.mxu0 %v5481
  %6309 = vmatprep.subr.mxu0 %v5509
  %6310 = vmatpush1.msra.mxu0 %v5508
  %6311 = vmatprep.subr.mxu0 %v5536
  %6312 = vmatpush1.msra.mxu0 %v5535
  %6313 = vmatprep.subr.mxu0 %v5563
  %6314 = vmatpush1.msra.mxu0 %v5562
  %6315 = vmatprep.subr.mxu0 %v5590
  %6316 = vmatpush1.msra.mxu0 %v5589
  %6317 = vmatprep.subr.mxu0 %v5617
  %6318 = vmatpush1.msra.mxu0 %v5616
  %6319 = vmatprep.subr.mxu0 %v5644
  %6320 = vmatpush1.msra.mxu0 %v5643
  %6321 = vmatprep.subr.mxu0 %v5671
  %6322 = vmatpush1.msra.mxu0 %v5670
  %6323 = vmatprep.subr.mxu0 %v5698
  %6324 = vmatpush1.msra.mxu0 %v5697
  %6325 = vmatprep.subr.mxu0 %v5725
  %6326 = vmatpush1.msra.mxu0 %v5724
  %6327 = vmatprep.subr.mxu0 %v5752
  %6328 = vmatpush1.msra.mxu0 %v5751
  %6329 = vmatprep.subr.mxu0 %v5779
  %6330 = vmatpush1.msra.mxu0 %v5778
  %6331 = vmatprep.subr.mxu0 %v5806
  %6332 = vmatpush1.msra.mxu0 %v5805
  %6333 = vmatprep.subr.mxu0 0.0
  %6334 = vmatpush1.msra.mxu0 0.0
  %6335 = vmatprep.subr.mxu0 0.0
  %6336 = vmatpush1.msra.mxu0 0.0
  %6337 = vmatprep.subr.mxu0 0.0
  %6338 = vmatpush1.msra.mxu0 0.0
  %6339 = vmatprep.subr.mxu0 0.0
  %6340 = vmatpush1.msra.mxu0 0.0
  %6341 = vmatprep.subr.mxu0 0.0
  %6342 = vmatpush1.msra.mxu0 0.0
  %6343 = vmatprep.subr.mxu0 0.0
  %6344 = vmatpush1.msra.mxu0 0.0
  %6345 = vmatprep.subr.mxu0 0.0
  %6346 = vmatpush1.msra.mxu0 0.0
  %6347 = vmatprep.subr.mxu0 0.0
  %6348 = vmatpush1.msra.mxu0 0.0
  %6349 = vmatprep.subr.mxu0 0.0
  %6350 = vmatpush1.msra.mxu0 0.0
  %6351 = vmatprep.subr.mxu0 0.0
  %6352 = vmatpush1.msra.mxu0 0.0
  %6353 = vmatprep.subr.mxu0 0.0
  %6354 = vmatpush1.msra.mxu0 0.0
  %6355 = vmatprep.subr.mxu0 0.0
  %6356 = vmatpush1.msra.mxu0 0.0
  %6357 = vmatprep.subr.mxu0 0.0
  %6358 = vmatpush1.msra.mxu0 0.0
  %6359 = vmatprep.subr.mxu0 0.0
  %6360 = vmatpush1.msra.mxu0 0.0
  %6361 = vmatprep.subr.mxu0 0.0
  %6362 = vmatpush1.msra.mxu0 0.0
  %6363 = vmatprep.subr.mxu0 0.0
  %6364 = vmatpush1.msra.mxu0 0.0
  %6365 = vmatprep.mubr.f32.mxu0 0.0
  %6366 = vmatmul.mubr.f32.gmra.mrb[0].mxu0 %v5824
  %v6367 = vpop.f32.mrb[0].mxu0
  %v6368 = vadd.f32 %v5841, %v6367
  %v6369 = vpop.f32.mrb[0].mxu0
  %v6370 = vadd.f32 %v5841, %v6369
  %6371 = vmatprep.mubr.f32.mxu0 0.0
  %6372 = vmatmul.mubr.f32.gmra.mrb[0].mxu0 %v5825
  %v6373 = vpop.f32.mrb[0].mxu0
  %v6374 = vadd.f32 %v5846, %v6373
  %v6375 = vpop.f32.mrb[0].mxu0
  %v6376 = vadd.f32 %v5846, %v6375
  %6377 = vmatprep.mubr.f32.mxu0 0.0
  %6378 = vmatmul.mubr.f32.gmra.mrb[0].mxu0 %v5826
  %v6379 = vpop.f32.mrb[0].mxu0
  %v6380 = vadd.f32 %v5851, %v6379
  %v6381 = vpop.f32.mrb[0].mxu0
  %v6382 = vadd.f32 %v5851, %v6381
  %6383 = vmatprep.mubr.f32.mxu0 0.0
  %6384 = vmatmul.mubr.f32.gmra.mrb[0].mxu0 %v5827
  %v6385 = vpop.f32.mrb[0].mxu0
  %v6386 = vadd.f32 %v5856, %v6385
  %v6387 = vpop.f32.mrb[0].mxu0
  %v6388 = vadd.f32 %v5856, %v6387
  %6389 = vmatprep.mubr.f32.mxu0 0.0
  %6390 = vmatmul.mubr.f32.gmra.mrb[0].mxu0 %v5828
  %v6391 = vpop.f32.mrb[0].mxu0
  %v6392 = vadd.f32 %v5861, %v6391
  %v6393 = vpop.f32.mrb[0].mxu0
  %v6394 = vadd.f32 %v5861, %v6393
  %6395 = vmatprep.mubr.f32.mxu0 0.0
  %6396 = vmatmul.mubr.f32.gmra.mrb[0].mxu0 %v5829
  %v6397 = vpop.f32.mrb[0].mxu0
  %v6398 = vadd.f32 %v5866, %v6397
  %v6399 = vpop.f32.mrb[0].mxu0
  %v6400 = vadd.f32 %v5866, %v6399
  %6401 = vmatprep.mubr.f32.mxu0 0.0
  %6402 = vmatmul.mubr.f32.gmra.mrb[0].mxu0 %v5830
  %v6403 = vpop.f32.mrb[0].mxu0
  %v6404 = vadd.f32 %v5871, %v6403
  %v6405 = vpop.f32.mrb[0].mxu0
  %v6406 = vadd.f32 %v5871, %v6405
  %6407 = vdwg.mxu0
  %6408 = vmatprep.subr.mxu0 %v5403
  %6409 = vmatpush1.msra.mxu0 %v5402
  %6410 = vmatprep.subr.mxu0 %v5430
  %6411 = vmatpush1.msra.mxu0 %v5429
  %6412 = vmatprep.subr.mxu0 %v5457
  %6413 = vmatpush1.msra.mxu0 %v5456
  %6414 = vmatprep.subr.mxu0 %v5484
  %6415 = vmatpush1.msra.mxu0 %v5483
  %6416 = vmatprep.subr.mxu0 %v5511
  %6417 = vmatpush1.msra.mxu0 %v5510
  %6418 = vmatprep.subr.mxu0 %v5538
  %6419 = vmatpush1.msra.mxu0 %v5537
  %6420 = vmatprep.subr.mxu0 %v5565
  %6421 = vmatpush1.msra.mxu0 %v5564
  %6422 = vmatprep.subr.mxu0 %v5592
  %6423 = vmatpush1.msra.mxu0 %v5591
  %6424 = vmatprep.subr.mxu0 %v5619
  %6425 = vmatpush1.msra.mxu0 %v5618
  %6426 = vmatprep.subr.mxu0 %v5646
  %6427 = vmatpush1.msra.mxu0 %v5645
  %6428 = vmatprep.subr.mxu0 %v5673
  %6429 = vmatpush1.msra.mxu0 %v5672
  %6430 = vmatprep.subr.mxu0 %v5700
  %6431 = vmatpush1.msra.mxu0 %v5699
  %6432 = vmatprep.subr.mxu0 %v5727
  %6433 = vmatpush1.msra.mxu0 %v5726
  %6434 = vmatprep.subr.mxu0 %v5754
  %6435 = vmatpush1.msra.mxu0 %v5753
  %6436 = vmatprep.subr.mxu0 %v5781
  %6437 = vmatpush1.msra.mxu0 %v5780
  %6438 = vmatprep.subr.mxu0 %v5808
  %6439 = vmatpush1.msra.mxu0 %v5807
  %6440 = vmatprep.subr.mxu0 0.0
  %6441 = vmatpush1.msra.mxu0 0.0
  %6442 = vmatprep.subr.mxu0 0.0
  %6443 = vmatpush1.msra.mxu0 0.0
  %6444 = vmatprep.subr.mxu0 0.0
  %6445 = vmatpush1.msra.mxu0 0.0
  %6446 = vmatprep.subr.mxu0 0.0
  %6447 = vmatpush1.msra.mxu0 0.0
  %6448 = vmatprep.subr.mxu0 0.0
  %6449 = vmatpush1.msra.mxu0 0.0
  %6450 = vmatprep.subr.mxu0 0.0
  %6451 = vmatpush1.msra.mxu0 0.0
  %6452 = vmatprep.subr.mxu0 0.0
  %6453 = vmatpush1.msra.mxu0 0.0
  %6454 = vmatprep.subr.mxu0 0.0
  %6455 = vmatpush1.msra.mxu0 0.0
  %6456 = vmatprep.subr.mxu0 0.0
  %6457 = vmatpush1.msra.mxu0 0.0
  %6458 = vmatprep.subr.mxu0 0.0
  %6459 = vmatpush1.msra.mxu0 0.0
  %6460 = vmatprep.subr.mxu0 0.0
  %6461 = vmatpush1.msra.mxu0 0.0
  %6462 = vmatprep.subr.mxu0 0.0
  %6463 = vmatpush1.msra.mxu0 0.0
  %6464 = vmatprep.subr.mxu0 0.0
  %6465 = vmatpush1.msra.mxu0 0.0
  %6466 = vmatprep.subr.mxu0 0.0
  %6467 = vmatpush1.msra.mxu0 0.0
  %6468 = vmatprep.subr.mxu0 0.0
  %6469 = vmatpush1.msra.mxu0 0.0
  %6470 = vmatprep.subr.mxu0 0.0
  %6471 = vmatpush1.msra.mxu0 0.0
  %6472 = vmatprep.mubr.f32.mxu0 0.0
  %6473 = vmatmul.mubr.f32.gmra.mrb[0].mxu0 %v5824
  %v6474 = vpop.f32.mrb[0].mxu0
  %v6475 = vadd.f32 %v5841, %v6474
  %v6476 = vpop.f32.mrb[0].mxu0
  %v6477 = vadd.f32 %v5841, %v6476
  %6478 = vmatprep.mubr.f32.mxu0 0.0
  %6479 = vmatmul.mubr.f32.gmra.mrb[0].mxu0 %v5825
  %v6480 = vpop.f32.mrb[0].mxu0
  %v6481 = vadd.f32 %v5846, %v6480
  %v6482 = vpop.f32.mrb[0].mxu0
  %v6483 = vadd.f32 %v5846, %v6482
  %6484 = vmatprep.mubr.f32.mxu0 0.0
  %6485 = vmatmul.mubr.f32.gmra.mrb[0].mxu0 %v5826
  %v6486 = vpop.f32.mrb[0].mxu0
  %v6487 = vadd.f32 %v5851, %v6486
  %v6488 = vpop.f32.mrb[0].mxu0
  %v6489 = vadd.f32 %v5851, %v6488
  %6490 = vmatprep.mubr.f32.mxu0 0.0
  %6491 = vmatmul.mubr.f32.gmra.mrb[0].mxu0 %v5827
  %v6492 = vpop.f32.mrb[0].mxu0
  %v6493 = vadd.f32 %v5856, %v6492
  %v6494 = vpop.f32.mrb[0].mxu0
  %v6495 = vadd.f32 %v5856, %v6494
  %6496 = vmatprep.mubr.f32.mxu0 0.0
  %6497 = vmatmul.mubr.f32.gmra.mrb[0].mxu0 %v5828
  %v6498 = vpop.f32.mrb[0].mxu0
  %v6499 = vadd.f32 %v5861, %v6498
  %v6500 = vpop.f32.mrb[0].mxu0
  %v6501 = vadd.f32 %v5861, %v6500
  %6502 = vmatprep.mubr.f32.mxu0 0.0
  %6503 = vmatmul.mubr.f32.gmra.mrb[0].mxu0 %v5829
  %v6504 = vpop.f32.mrb[0].mxu0
  %v6505 = vadd.f32 %v5866, %v6504
  %v6506 = vpop.f32.mrb[0].mxu0
  %v6507 = vadd.f32 %v5866, %v6506
  %6508 = vmatprep.mubr.f32.mxu0 0.0
  %6509 = vmatmul.mubr.f32.gmra.mrb[0].mxu0 %v5830
  %v6510 = vpop.f32.mrb[0].mxu0
  %v6511 = vadd.f32 %v5871, %v6510
  %v6512 = vpop.f32.mrb[0].mxu0
  %v6513 = vadd.f32 %v5871, %v6512
  %6514 = vdwg.mxu0
  %6515 = vmatprep.subr.mxu0 %v5405
  %6516 = vmatpush1.msra.mxu0 %v5404
  %6517 = vmatprep.subr.mxu0 %v5432
  %6518 = vmatpush1.msra.mxu0 %v5431
  %6519 = vmatprep.subr.mxu0 %v5459
  %6520 = vmatpush1.msra.mxu0 %v5458
  %6521 = vmatprep.subr.mxu0 %v5486
  %6522 = vmatpush1.msra.mxu0 %v5485
  %6523 = vmatprep.subr.mxu0 %v5513
  %6524 = vmatpush1.msra.mxu0 %v5512
  %6525 = vmatprep.subr.mxu0 %v5540
  %6526 = vmatpush1.msra.mxu0 %v5539
  %6527 = vmatprep.subr.mxu0 %v5567
  %6528 = vmatpush1.msra.mxu0 %v5566
  %6529 = vmatprep.subr.mxu0 %v5594
  %6530 = vmatpush1.msra.mxu0 %v5593
  %6531 = vmatprep.subr.mxu0 %v5621
  %6532 = vmatpush1.msra.mxu0 %v5620
  %6533 = vmatprep.subr.mxu0 %v5648
  %6534 = vmatpush1.msra.mxu0 %v5647
  %6535 = vmatprep.subr.mxu0 %v5675
  %6536 = vmatpush1.msra.mxu0 %v5674
  %6537 = vmatprep.subr.mxu0 %v5702
  %6538 = vmatpush1.msra.mxu0 %v5701
  %6539 = vmatprep.subr.mxu0 %v5729
  %6540 = vmatpush1.msra.mxu0 %v5728
  %6541 = vmatprep.subr.mxu0 %v5756
  %6542 = vmatpush1.msra.mxu0 %v5755
  %6543 = vmatprep.subr.mxu0 %v5783
  %6544 = vmatpush1.msra.mxu0 %v5782
  %6545 = vmatprep.subr.mxu0 %v5810
  %6546 = vmatpush1.msra.mxu0 %v5809
  %6547 = vmatprep.subr.mxu0 0.0
  %6548 = vmatpush1.msra.mxu0 0.0
  %6549 = vmatprep.subr.mxu0 0.0
  %6550 = vmatpush1.msra.mxu0 0.0
  %6551 = vmatprep.subr.mxu0 0.0
  %6552 = vmatpush1.msra.mxu0 0.0
  %6553 = vmatprep.subr.mxu0 0.0
  %6554 = vmatpush1.msra.mxu0 0.0
  %6555 = vmatprep.subr.mxu0 0.0
  %6556 = vmatpush1.msra.mxu0 0.0
  %6557 = vmatprep.subr.mxu0 0.0
  %6558 = vmatpush1.msra.mxu0 0.0
  %6559 = vmatprep.subr.mxu0 0.0
  %6560 = vmatpush1.msra.mxu0 0.0
  %6561 = vmatprep.subr.mxu0 0.0
  %6562 = vmatpush1.msra.mxu0 0.0
  %6563 = vmatprep.subr.mxu0 0.0
  %6564 = vmatpush1.msra.mxu0 0.0
  %6565 = vmatprep.subr.mxu0 0.0
  %6566 = vmatpush1.msra.mxu0 0.0
  %6567 = vmatprep.subr.mxu0 0.0
  %6568 = vmatpush1.msra.mxu0 0.0
  %6569 = vmatprep.subr.mxu0 0.0
  %6570 = vmatpush1.msra.mxu0 0.0
  %6571 = vmatprep.subr.mxu0 0.0
  %6572 = vmatpush1.msra.mxu0 0.0
  %6573 = vmatprep.subr.mxu0 0.0
  %6574 = vmatpush1.msra.mxu0 0.0
  %6575 = vmatprep.subr.mxu0 0.0
  %6576 = vmatpush1.msra.mxu0 0.0
  %6577 = vmatprep.subr.mxu0 0.0
  %6578 = vmatpush1.msra.mxu0 0.0
  %6579 = vmatprep.mubr.f32.mxu0 0.0
  %6580 = vmatmul.mubr.f32.gmra.mrb[0].mxu0 %v5824
  %v6581 = vpop.f32.mrb[0].mxu0
  %v6582 = vadd.f32 %v5841, %v6581
  %v6583 = vpop.f32.mrb[0].mxu0
  %v6584 = vadd.f32 %v5841, %v6583
  %6585 = vmatprep.mubr.f32.mxu0 0.0
  %6586 = vmatmul.mubr.f32.gmra.mrb[0].mxu0 %v5825
  %v6587 = vpop.f32.mrb[0].mxu0
  %v6588 = vadd.f32 %v5846, %v6587
  %v6589 = vpop.f32.mrb[0].mxu0
  %v6590 = vadd.f32 %v5846, %v6589
  %6591 = vmatprep.mubr.f32.mxu0 0.0
  %6592 = vmatmul.mubr.f32.gmra.mrb[0].mxu0 %v5826
  %v6593 = vpop.f32.mrb[0].mxu0
  %v6594 = vadd.f32 %v5851, %v6593
  %v6595 = vpop.f32.mrb[0].mxu0
  %v6596 = vadd.f32 %v5851, %v6595
  %6597 = vmatprep.mubr.f32.mxu0 0.0
  %6598 = vmatmul.mubr.f32.gmra.mrb[0].mxu0 %v5827
  %v6599 = vpop.f32.mrb[0].mxu0
  %v6600 = vadd.f32 %v5856, %v6599
  %v6601 = vpop.f32.mrb[0].mxu0
  %v6602 = vadd.f32 %v5856, %v6601
  %6603 = vmatprep.mubr.f32.mxu0 0.0
  %6604 = vmatmul.mubr.f32.gmra.mrb[0].mxu0 %v5828
  %v6605 = vpop.f32.mrb[0].mxu0
  %v6606 = vadd.f32 %v5861, %v6605
  %v6607 = vpop.f32.mrb[0].mxu0
  %v6608 = vadd.f32 %v5861, %v6607
  %6609 = vmatprep.mubr.f32.mxu0 0.0
  %6610 = vmatmul.mubr.f32.gmra.mrb[0].mxu0 %v5829
  %v6611 = vpop.f32.mrb[0].mxu0
  %v6612 = vadd.f32 %v5866, %v6611
  %v6613 = vpop.f32.mrb[0].mxu0
  %v6614 = vadd.f32 %v5866, %v6613
  %6615 = vmatprep.mubr.f32.mxu0 0.0
  %6616 = vmatmul.mubr.f32.gmra.mrb[0].mxu0 %v5830
  %v6617 = vpop.f32.mrb[0].mxu0
  %v6618 = vadd.f32 %v5871, %v6617
  %v6619 = vpop.f32.mrb[0].mxu0
  %v6620 = vadd.f32 %v5871, %v6619
  %6621 = vdwg.mxu0
  %6622 = vmatprep.subr.mxu0 %v5407
  %6623 = vmatpush1.msra.mxu0 %v5406
  %6624 = vmatprep.subr.mxu0 %v5434
  %6625 = vmatpush1.msra.mxu0 %v5433
  %6626 = vmatprep.subr.mxu0 %v5461
  %6627 = vmatpush1.msra.mxu0 %v5460
  %6628 = vmatprep.subr.mxu0 %v5488
  %6629 = vmatpush1.msra.mxu0 %v5487
  %6630 = vmatprep.subr.mxu0 %v5515
  %6631 = vmatpush1.msra.mxu0 %v5514
  %6632 = vmatprep.subr.mxu0 %v5542
  %6633 = vmatpush1.msra.mxu0 %v5541
  %6634 = vmatprep.subr.mxu0 %v5569
  %6635 = vmatpush1.msra.mxu0 %v5568
  %6636 = vmatprep.subr.mxu0 %v5596
  %6637 = vmatpush1.msra.mxu0 %v5595
  %6638 = vmatprep.subr.mxu0 %v5623
  %6639 = vmatpush1.msra.mxu0 %v5622
  %6640 = vmatprep.subr.mxu0 %v5650
  %6641 = vmatpush1.msra.mxu0 %v5649
  %6642 = vmatprep.subr.mxu0 %v5677
  %6643 = vmatpush1.msra.mxu0 %v5676
  %6644 = vmatprep.subr.mxu0 %v5704
  %6645 = vmatpush1.msra.mxu0 %v5703
  %6646 = vmatprep.subr.mxu0 %v5731
  %6647 = vmatpush1.msra.mxu0 %v5730
  %6648 = vmatprep.subr.mxu0 %v5758
  %6649 = vmatpush1.msra.mxu0 %v5757
  %6650 = vmatprep.subr.mxu0 %v5785
  %6651 = vmatpush1.msra.mxu0 %v5784
  %6652 = vmatprep.subr.mxu0 %v5812
  %6653 = vmatpush1.msra.mxu0 %v5811
  %6654 = vmatprep.subr.mxu0 0.0
  %6655 = vmatpush1.msra.mxu0 0.0
  %6656 = vmatprep.subr.mxu0 0.0
  %6657 = vmatpush1.msra.mxu0 0.0
  %6658 = vmatprep.subr.mxu0 0.0
  %6659 = vmatpush1.msra.mxu0 0.0
  %6660 = vmatprep.subr.mxu0 0.0
  %6661 = vmatpush1.msra.mxu0 0.0
  %6662 = vmatprep.subr.mxu0 0.0
  %6663 = vmatpush1.msra.mxu0 0.0
  %6664 = vmatprep.subr.mxu0 0.0
  %6665 = vmatpush1.msra.mxu0 0.0
  %6666 = vmatprep.subr.mxu0 0.0
  %6667 = vmatpush1.msra.mxu0 0.0
  %6668 = vmatprep.subr.mxu0 0.0
  %6669 = vmatpush1.msra.mxu0 0.0
  %6670 = vmatprep.subr.mxu0 0.0
  %6671 = vmatpush1.msra.mxu0 0.0
  %6672 = vmatprep.subr.mxu0 0.0
  %6673 = vmatpush1.msra.mxu0 0.0
  %6674 = vmatprep.subr.mxu0 0.0
  %6675 = vmatpush1.msra.mxu0 0.0
  %6676 = vmatprep.subr.mxu0 0.0
  %6677 = vmatpush1.msra.mxu0 0.0
  %6678 = vmatprep.subr.mxu0 0.0
  %6679 = vmatpush1.msra.mxu0 0.0
  %6680 = vmatprep.subr.mxu0 0.0
  %6681 = vmatpush1.msra.mxu0 0.0
  %6682 = vmatprep.subr.mxu0 0.0
  %6683 = vmatpush1.msra.mxu0 0.0
  %6684 = vmatprep.subr.mxu0 0.0
  %6685 = vmatpush1.msra.mxu0 0.0
  %6686 = vmatprep.mubr.f32.mxu0 0.0
  %6687 = vmatmul.mubr.f32.gmra.mrb[0].mxu0 %v5824
  %v6688 = vpop.f32.mrb[0].mxu0
  %v6689 = vadd.f32 %v5841, %v6688
  %v6690 = vpop.f32.mrb[0].mxu0
  %v6691 = vadd.f32 %v5841, %v6690
  %6692 = vmatprep.mubr.f32.mxu0 0.0
  %6693 = vmatmul.mubr.f32.gmra.mrb[0].mxu0 %v5825
  %v6694 = vpop.f32.mrb[0].mxu0
  %v6695 = vadd.f32 %v5846, %v6694
  %v6696 = vpop.f32.mrb[0].mxu0
  %v6697 = vadd.f32 %v5846, %v6696
  %6698 = vmatprep.mubr.f32.mxu0 0.0
  %6699 = vmatmul.mubr.f32.gmra.mrb[0].mxu0 %v5826
  %v6700 = vpop.f32.mrb[0].mxu0
  %v6701 = vadd.f32 %v5851, %v6700
  %v6702 = vpop.f32.mrb[0].mxu0
  %v6703 = vadd.f32 %v5851, %v6702
  %6704 = vmatprep.mubr.f32.mxu0 0.0
  %6705 = vmatmul.mubr.f32.gmra.mrb[0].mxu0 %v5827
  %v6706 = vpop.f32.mrb[0].mxu0
  %v6707 = vadd.f32 %v5856, %v6706
  %v6708 = vpop.f32.mrb[0].mxu0
  %v6709 = vadd.f32 %v5856, %v6708
  %6710 = vmatprep.mubr.f32.mxu0 0.0
  %6711 = vmatmul.mubr.f32.gmra.mrb[0].mxu0 %v5828
  %v6712 = vpop.f32.mrb[0].mxu0
  %v6713 = vadd.f32 %v5861, %v6712
  %v6714 = vpop.f32.mrb[0].mxu0
  %v6715 = vadd.f32 %v5861, %v6714
  %6716 = vmatprep.mubr.f32.mxu0 0.0
  %6717 = vmatmul.mubr.f32.gmra.mrb[0].mxu0 %v5829
  %v6718 = vpop.f32.mrb[0].mxu0
  %v6719 = vadd.f32 %v5866, %v6718
  %v6720 = vpop.f32.mrb[0].mxu0
  %v6721 = vadd.f32 %v5866, %v6720
  %6722 = vmatprep.mubr.f32.mxu0 0.0
  %6723 = vmatmul.mubr.f32.gmra.mrb[0].mxu0 %v5830
  %v6724 = vpop.f32.mrb[0].mxu0
  %v6725 = vadd.f32 %v5871, %v6724
  %v6726 = vpop.f32.mrb[0].mxu0
  %v6727 = vadd.f32 %v5871, %v6726
  %6728 = vdwg.mxu0
  %6729 = vmatprep.subr.mxu0 %v5409
  %6730 = vmatpush1.msra.mxu0 %v5408
  %6731 = vmatprep.subr.mxu0 %v5436
  %6732 = vmatpush1.msra.mxu0 %v5435
  %6733 = vmatprep.subr.mxu0 %v5463
  %6734 = vmatpush1.msra.mxu0 %v5462
  %6735 = vmatprep.subr.mxu0 %v5490
  %6736 = vmatpush1.msra.mxu0 %v5489
  %6737 = vmatprep.subr.mxu0 %v5517
  %6738 = vmatpush1.msra.mxu0 %v5516
  %6739 = vmatprep.subr.mxu0 %v5544
  %6740 = vmatpush1.msra.mxu0 %v5543
  %6741 = vmatprep.subr.mxu0 %v5571
  %6742 = vmatpush1.msra.mxu0 %v5570
  %6743 = vmatprep.subr.mxu0 %v5598
  %6744 = vmatpush1.msra.mxu0 %v5597
  %6745 = vmatprep.subr.mxu0 %v5625
  %6746 = vmatpush1.msra.mxu0 %v5624
  %6747 = vmatprep.subr.mxu0 %v5652
  %6748 = vmatpush1.msra.mxu0 %v5651
  %6749 = vmatprep.subr.mxu0 %v5679
  %6750 = vmatpush1.msra.mxu0 %v5678
  %6751 = vmatprep.subr.mxu0 %v5706
  %6752 = vmatpush1.msra.mxu0 %v5705
  %6753 = vmatprep.subr.mxu0 %v5733
  %6754 = vmatpush1.msra.mxu0 %v5732
  %6755 = vmatprep.subr.mxu0 %v5760
  %6756 = vmatpush1.msra.mxu0 %v5759
  %6757 = vmatprep.subr.mxu0 %v5787
  %6758 = vmatpush1.msra.mxu0 %v5786
  %6759 = vmatprep.subr.mxu0 %v5814
  %6760 = vmatpush1.msra.mxu0 %v5813
  %6761 = vmatprep.subr.mxu0 0.0
  %6762 = vmatpush1.msra.mxu0 0.0
  %6763 = vmatprep.subr.mxu0 0.0
  %6764 = vmatpush1.msra.mxu0 0.0
  %6765 = vmatprep.subr.mxu0 0.0
  %6766 = vmatpush1.msra.mxu0 0.0
  %6767 = vmatprep.subr.mxu0 0.0
  %6768 = vmatpush1.msra.mxu0 0.0
  %6769 = vmatprep.subr.mxu0 0.0
  %6770 = vmatpush1.msra.mxu0 0.0
  %6771 = vmatprep.subr.mxu0 0.0
  %6772 = vmatpush1.msra.mxu0 0.0
  %6773 = vmatprep.subr.mxu0 0.0
  %6774 = vmatpush1.msra.mxu0 0.0
  %6775 = vmatprep.subr.mxu0 0.0
  %6776 = vmatpush1.msra.mxu0 0.0
  %6777 = vmatprep.subr.mxu0 0.0
  %6778 = vmatpush1.msra.mxu0 0.0
  %6779 = vmatprep.subr.mxu0 0.0
  %6780 = vmatpush1.msra.mxu0 0.0
  %6781 = vmatprep.subr.mxu0 0.0
  %6782 = vmatpush1.msra.mxu0 0.0
  %6783 = vmatprep.subr.mxu0 0.0
  %6784 = vmatpush1.msra.mxu0 0.0
  %6785 = vmatprep.subr.mxu0 0.0
  %6786 = vmatpush1.msra.mxu0 0.0
  %6787 = vmatprep.subr.mxu0 0.0
  %6788 = vmatpush1.msra.mxu0 0.0
  %6789 = vmatprep.subr.mxu0 0.0
  %6790 = vmatpush1.msra.mxu0 0.0
  %6791 = vmatprep.subr.mxu0 0.0
  %6792 = vmatpush1.msra.mxu0 0.0
  %6793 = vmatprep.mubr.f32.mxu0 0.0
  %6794 = vmatmul.mubr.f32.gmra.mrb[0].mxu0 %v5824
  %v6795 = vpop.f32.mrb[0].mxu0
  %v6796 = vadd.f32 %v5841, %v6795
  %v6797 = vpop.f32.mrb[0].mxu0
  %v6798 = vadd.f32 %v5841, %v6797
  %6799 = vmatprep.mubr.f32.mxu0 0.0
  %6800 = vmatmul.mubr.f32.gmra.mrb[0].mxu0 %v5825
  %v6801 = vpop.f32.mrb[0].mxu0
  %v6802 = vadd.f32 %v5846, %v6801
  %v6803 = vpop.f32.mrb[0].mxu0
  %v6804 = vadd.f32 %v5846, %v6803
  %6805 = vmatprep.mubr.f32.mxu0 0.0
  %6806 = vmatmul.mubr.f32.gmra.mrb[0].mxu0 %v5826
  %v6807 = vpop.f32.mrb[0].mxu0
  %v6808 = vadd.f32 %v5851, %v6807
  %v6809 = vpop.f32.mrb[0].mxu0
  %v6810 = vadd.f32 %v5851, %v6809
  %6811 = vmatprep.mubr.f32.mxu0 0.0
  %6812 = vmatmul.mubr.f32.gmra.mrb[0].mxu0 %v5827
  %v6813 = vpop.f32.mrb[0].mxu0
  %v6814 = vadd.f32 %v5856, %v6813
  %v6815 = vpop.f32.mrb[0].mxu0
  %v6816 = vadd.f32 %v5856, %v6815
  %6817 = vmatprep.mubr.f32.mxu0 0.0
  %6818 = vmatmul.mubr.f32.gmra.mrb[0].mxu0 %v5828
  %v6819 = vpop.f32.mrb[0].mxu0
  %v6820 = vadd.f32 %v5861, %v6819
  %v6821 = vpop.f32.mrb[0].mxu0
  %v6822 = vadd.f32 %v5861, %v6821
  %6823 = vmatprep.mubr.f32.mxu0 0.0
  %6824 = vmatmul.mubr.f32.gmra.mrb[0].mxu0 %v5829
  %v6825 = vpop.f32.mrb[0].mxu0
  %v6826 = vadd.f32 %v5866, %v6825
  %v6827 = vpop.f32.mrb[0].mxu0
  %v6828 = vadd.f32 %v5866, %v6827
  %6829 = vmatprep.mubr.f32.mxu0 0.0
  %6830 = vmatmul.mubr.f32.gmra.mrb[0].mxu0 %v5830
  %v6831 = vpop.f32.mrb[0].mxu0
  %v6832 = vadd.f32 %v5871, %v6831
  %v6833 = vpop.f32.mrb[0].mxu0
  %v6834 = vadd.f32 %v5871, %v6833
  %6835 = vdwg.mxu0
  %6836 = vmatprep.subr.mxu0 %v5411
  %6837 = vmatpush1.msra.mxu0 %v5410
  %6838 = vmatprep.subr.mxu0 %v5438
  %6839 = vmatpush1.msra.mxu0 %v5437
  %6840 = vmatprep.subr.mxu0 %v5465
  %6841 = vmatpush1.msra.mxu0 %v5464
  %6842 = vmatprep.subr.mxu0 %v5492
  %6843 = vmatpush1.msra.mxu0 %v5491
  %6844 = vmatprep.subr.mxu0 %v5519
  %6845 = vmatpush1.msra.mxu0 %v5518
  %6846 = vmatprep.subr.mxu0 %v5546
  %6847 = vmatpush1.msra.mxu0 %v5545
  %6848 = vmatprep.subr.mxu0 %v5573
  %6849 = vmatpush1.msra.mxu0 %v5572
  %6850 = vmatprep.subr.mxu0 %v5600
  %6851 = vmatpush1.msra.mxu0 %v5599
  %6852 = vmatprep.subr.mxu0 %v5627
  %6853 = vmatpush1.msra.mxu0 %v5626
  %6854 = vmatprep.subr.mxu0 %v5654
  %6855 = vmatpush1.msra.mxu0 %v5653
  %6856 = vmatprep.subr.mxu0 %v5681
  %6857 = vmatpush1.msra.mxu0 %v5680
  %6858 = vmatprep.subr.mxu0 %v5708
  %6859 = vmatpush1.msra.mxu0 %v5707
  %6860 = vmatprep.subr.mxu0 %v5735
  %6861 = vmatpush1.msra.mxu0 %v5734
  %6862 = vmatprep.subr.mxu0 %v5762
  %6863 = vmatpush1.msra.mxu0 %v5761
  %6864 = vmatprep.subr.mxu0 %v5789
  %6865 = vmatpush1.msra.mxu0 %v5788
  %6866 = vmatprep.subr.mxu0 %v5816
  %6867 = vmatpush1.msra.mxu0 %v5815
  %6868 = vmatprep.subr.mxu0 0.0
  %6869 = vmatpush1.msra.mxu0 0.0
  %6870 = vmatprep.subr.mxu0 0.0
  %6871 = vmatpush1.msra.mxu0 0.0
  %6872 = vmatprep.subr.mxu0 0.0
  %6873 = vmatpush1.msra.mxu0 0.0
  %6874 = vmatprep.subr.mxu0 0.0
  %6875 = vmatpush1.msra.mxu0 0.0
  %6876 = vmatprep.subr.mxu0 0.0
  %6877 = vmatpush1.msra.mxu0 0.0
  %6878 = vmatprep.subr.mxu0 0.0
  %6879 = vmatpush1.msra.mxu0 0.0
  %6880 = vmatprep.subr.mxu0 0.0
  %6881 = vmatpush1.msra.mxu0 0.0
  %6882 = vmatprep.subr.mxu0 0.0
  %6883 = vmatpush1.msra.mxu0 0.0
  %6884 = vmatprep.subr.mxu0 0.0
  %6885 = vmatpush1.msra.mxu0 0.0
  %6886 = vmatprep.subr.mxu0 0.0
  %6887 = vmatpush1.msra.mxu0 0.0
  %6888 = vmatprep.subr.mxu0 0.0
  %6889 = vmatpush1.msra.mxu0 0.0
  %6890 = vmatprep.subr.mxu0 0.0
  %6891 = vmatpush1.msra.mxu0 0.0
  %6892 = vmatprep.subr.mxu0 0.0
  %6893 = vmatpush1.msra.mxu0 0.0
  %6894 = vmatprep.subr.mxu0 0.0
  %6895 = vmatpush1.msra.mxu0 0.0
  %6896 = vmatprep.subr.mxu0 0.0
  %6897 = vmatpush1.msra.mxu0 0.0
  %6898 = vmatprep.subr.mxu0 0.0
  %6899 = vmatpush1.msra.mxu0 0.0
  %6900 = vmatprep.mubr.f32.mxu0 0.0
  %6901 = vmatmul.mubr.f32.gmra.mrb[0].mxu0 %v5824
  %v6902 = vpop.f32.mrb[0].mxu0
  %v6903 = vadd.f32 %v5841, %v6902
  %v6904 = vpop.f32.mrb[0].mxu0
  %v6905 = vadd.f32 %v5841, %v6904
  %6906 = vmatprep.mubr.f32.mxu0 0.0
  %6907 = vmatmul.mubr.f32.gmra.mrb[0].mxu0 %v5825
  %v6908 = vpop.f32.mrb[0].mxu0
  %v6909 = vadd.f32 %v5846, %v6908
  %v6910 = vpop.f32.mrb[0].mxu0
  %v6911 = vadd.f32 %v5846, %v6910
  %6912 = vmatprep.mubr.f32.mxu0 0.0
  %6913 = vmatmul.mubr.f32.gmra.mrb[0].mxu0 %v5826
  %v6914 = vpop.f32.mrb[0].mxu0
  %v6915 = vadd.f32 %v5851, %v6914
  %v6916 = vpop.f32.mrb[0].mxu0
  %v6917 = vadd.f32 %v5851, %v6916
  %6918 = vmatprep.mubr.f32.mxu0 0.0
  %6919 = vmatmul.mubr.f32.gmra.mrb[0].mxu0 %v5827
  %v6920 = vpop.f32.mrb[0].mxu0
  %v6921 = vadd.f32 %v5856, %v6920
  %v6922 = vpop.f32.mrb[0].mxu0
  %v6923 = vadd.f32 %v5856, %v6922
  %6924 = vmatprep.mubr.f32.mxu0 0.0
  %6925 = vmatmul.mubr.f32.gmra.mrb[0].mxu0 %v5828
  %v6926 = vpop.f32.mrb[0].mxu0
  %v6927 = vadd.f32 %v5861, %v6926
  %v6928 = vpop.f32.mrb[0].mxu0
  %v6929 = vadd.f32 %v5861, %v6928
  %6930 = vmatprep.mubr.f32.mxu0 0.0
  %6931 = vmatmul.mubr.f32.gmra.mrb[0].mxu0 %v5829
  %v6932 = vpop.f32.mrb[0].mxu0
  %v6933 = vadd.f32 %v5866, %v6932
  %v6934 = vpop.f32.mrb[0].mxu0
  %v6935 = vadd.f32 %v5866, %v6934
  %6936 = vmatprep.mubr.f32.mxu0 0.0
  %6937 = vmatmul.mubr.f32.gmra.mrb[0].mxu0 %v5830
  %v6938 = vpop.f32.mrb[0].mxu0
  %v6939 = vadd.f32 %v5871, %v6938
  %v6940 = vpop.f32.mrb[0].mxu0
  %v6941 = vadd.f32 %v5871, %v6940
  %6942 = vdwg.mxu0
  %6943 = vmatprep.subr.mxu0 %v5413
  %6944 = vmatpush1.msra.mxu0 %v5412
  %6945 = vmatprep.subr.mxu0 %v5440
  %6946 = vmatpush1.msra.mxu0 %v5439
  %6947 = vmatprep.subr.mxu0 %v5467
  %6948 = vmatpush1.msra.mxu0 %v5466
  %6949 = vmatprep.subr.mxu0 %v5494
  %6950 = vmatpush1.msra.mxu0 %v5493
  %6951 = vmatprep.subr.mxu0 %v5521
  %6952 = vmatpush1.msra.mxu0 %v5520
  %6953 = vmatprep.subr.mxu0 %v5548
  %6954 = vmatpush1.msra.mxu0 %v5547
  %6955 = vmatprep.subr.mxu0 %v5575
  %6956 = vmatpush1.msra.mxu0 %v5574
  %6957 = vmatprep.subr.mxu0 %v5602
  %6958 = vmatpush1.msra.mxu0 %v5601
  %6959 = vmatprep.subr.mxu0 %v5629
  %6960 = vmatpush1.msra.mxu0 %v5628
  %6961 = vmatprep.subr.mxu0 %v5656
  %6962 = vmatpush1.msra.mxu0 %v5655
  %6963 = vmatprep.subr.mxu0 %v5683
  %6964 = vmatpush1.msra.mxu0 %v5682
  %6965 = vmatprep.subr.mxu0 %v5710
  %6966 = vmatpush1.msra.mxu0 %v5709
  %6967 = vmatprep.subr.mxu0 %v5737
  %6968 = vmatpush1.msra.mxu0 %v5736
  %6969 = vmatprep.subr.mxu0 %v5764
  %6970 = vmatpush1.msra.mxu0 %v5763
  %6971 = vmatprep.subr.mxu0 %v5791
  %6972 = vmatpush1.msra.mxu0 %v5790
  %6973 = vmatprep.subr.mxu0 %v5818
  %6974 = vmatpush1.msra.mxu0 %v5817
  %6975 = vmatprep.subr.mxu0 0.0
  %6976 = vmatpush1.msra.mxu0 0.0
  %6977 = vmatprep.subr.mxu0 0.0
  %6978 = vmatpush1.msra.mxu0 0.0
  %6979 = vmatprep.subr.mxu0 0.0
  %6980 = vmatpush1.msra.mxu0 0.0
  %6981 = vmatprep.subr.mxu0 0.0
  %6982 = vmatpush1.msra.mxu0 0.0
  %6983 = vmatprep.subr.mxu0 0.0
  %6984 = vmatpush1.msra.mxu0 0.0
  %6985 = vmatprep.subr.mxu0 0.0
  %6986 = vmatpush1.msra.mxu0 0.0
  %6987 = vmatprep.subr.mxu0 0.0
  %6988 = vmatpush1.msra.mxu0 0.0
  %6989 = vmatprep.subr.mxu0 0.0
  %6990 = vmatpush1.msra.mxu0 0.0
  %6991 = vmatprep.subr.mxu0 0.0
  %6992 = vmatpush1.msra.mxu0 0.0
  %6993 = vmatprep.subr.mxu0 0.0
  %6994 = vmatpush1.msra.mxu0 0.0
  %6995 = vmatprep.subr.mxu0 0.0
  %6996 = vmatpush1.msra.mxu0 0.0
  %6997 = vmatprep.subr.mxu0 0.0
  %6998 = vmatpush1.msra.mxu0 0.0
  %6999 = vmatprep.subr.mxu0 0.0
  %7000 = vmatpush1.msra.mxu0 0.0
  %7001 = vmatprep.subr.mxu0 0.0
  %7002 = vmatpush1.msra.mxu0 0.0
  %7003 = vmatprep.subr.mxu0 0.0
  %7004 = vmatpush1.msra.mxu0 0.0
  %7005 = vmatprep.subr.mxu0 0.0
  %7006 = vmatpush1.msra.mxu0 0.0
  %7007 = vmatprep.mubr.f32.mxu0 0.0
  %7008 = vmatmul.mubr.f32.gmra.mrb[0].mxu0 %v5824
  %v7009 = vpop.f32.mrb[0].mxu0
  %v7010 = vadd.f32 %v5841, %v7009
  %v7011 = vpop.f32.mrb[0].mxu0
  %v7012 = vadd.f32 %v5841, %v7011
  %7013 = vmatprep.mubr.f32.mxu0 0.0
  %7014 = vmatmul.mubr.f32.gmra.mrb[0].mxu0 %v5825
  %v7015 = vpop.f32.mrb[0].mxu0
  %v7016 = vadd.f32 %v5846, %v7015
  %v7017 = vpop.f32.mrb[0].mxu0
  %v7018 = vadd.f32 %v5846, %v7017
  %7019 = vmatprep.mubr.f32.mxu0 0.0
  %7020 = vmatmul.mubr.f32.gmra.mrb[0].mxu0 %v5826
  %v7021 = vpop.f32.mrb[0].mxu0
  %v7022 = vadd.f32 %v5851, %v7021
  %v7023 = vpop.f32.mrb[0].mxu0
  %v7024 = vadd.f32 %v5851, %v7023
  %7025 = vmatprep.mubr.f32.mxu0 0.0
  %7026 = vmatmul.mubr.f32.gmra.mrb[0].mxu0 %v5827
  %v7027 = vpop.f32.mrb[0].mxu0
  %v7028 = vadd.f32 %v5856, %v7027
  %v7029 = vpop.f32.mrb[0].mxu0
  %v7030 = vadd.f32 %v5856, %v7029
  %7031 = vmatprep.mubr.f32.mxu0 0.0
  %7032 = vmatmul.mubr.f32.gmra.mrb[0].mxu0 %v5828
  %v7033 = vpop.f32.mrb[0].mxu0
  %v7034 = vadd.f32 %v5861, %v7033
  %v7035 = vpop.f32.mrb[0].mxu0
  %v7036 = vadd.f32 %v5861, %v7035
  %7037 = vmatprep.mubr.f32.mxu0 0.0
  %7038 = vmatmul.mubr.f32.gmra.mrb[0].mxu0 %v5829
  %v7039 = vpop.f32.mrb[0].mxu0
  %v7040 = vadd.f32 %v5866, %v7039
  %v7041 = vpop.f32.mrb[0].mxu0
  %v7042 = vadd.f32 %v5866, %v7041
  %7043 = vmatprep.mubr.f32.mxu0 0.0
  %7044 = vmatmul.mubr.f32.gmra.mrb[0].mxu0 %v5830
  %v7045 = vpop.f32.mrb[0].mxu0
  %v7046 = vadd.f32 %v5871, %v7045
  %v7047 = vpop.f32.mrb[0].mxu0
  %v7048 = vadd.f32 %v5871, %v7047
  %7049 = vdwg.mxu0
  %7050 = vmatprep.subr.mxu0 %v5415
  %7051 = vmatpush1.msra.mxu0 %v5414
  %7052 = vmatprep.subr.mxu0 %v5442
  %7053 = vmatpush1.msra.mxu0 %v5441
  %7054 = vmatprep.subr.mxu0 %v5469
  %7055 = vmatpush1.msra.mxu0 %v5468
  %7056 = vmatprep.subr.mxu0 %v5496
  %7057 = vmatpush1.msra.mxu0 %v5495
  %7058 = vmatprep.subr.mxu0 %v5523
  %7059 = vmatpush1.msra.mxu0 %v5522
  %7060 = vmatprep.subr.mxu0 %v5550
  %7061 = vmatpush1.msra.mxu0 %v5549
  %7062 = vmatprep.subr.mxu0 %v5577
  %7063 = vmatpush1.msra.mxu0 %v5576
  %7064 = vmatprep.subr.mxu0 %v5604
  %7065 = vmatpush1.msra.mxu0 %v5603
  %7066 = vmatprep.subr.mxu0 %v5631
  %7067 = vmatpush1.msra.mxu0 %v5630
  %7068 = vmatprep.subr.mxu0 %v5658
  %7069 = vmatpush1.msra.mxu0 %v5657
  %7070 = vmatprep.subr.mxu0 %v5685
  %7071 = vmatpush1.msra.mxu0 %v5684
  %7072 = vmatprep.subr.mxu0 %v5712
  %7073 = vmatpush1.msra.mxu0 %v5711
  %7074 = vmatprep.subr.mxu0 %v5739
  %7075 = vmatpush1.msra.mxu0 %v5738
  %7076 = vmatprep.subr.mxu0 %v5766
  %7077 = vmatpush1.msra.mxu0 %v5765
  %7078 = vmatprep.subr.mxu0 %v5793
  %7079 = vmatpush1.msra.mxu0 %v5792
  %7080 = vmatprep.subr.mxu0 %v5820
  %7081 = vmatpush1.msra.mxu0 %v5819
  %7082 = vmatprep.subr.mxu0 0.0
  %7083 = vmatpush1.msra.mxu0 0.0
  %7084 = vmatprep.subr.mxu0 0.0
  %7085 = vmatpush1.msra.mxu0 0.0
  %7086 = vmatprep.subr.mxu0 0.0
  %7087 = vmatpush1.msra.mxu0 0.0
  %7088 = vmatprep.subr.mxu0 0.0
  %7089 = vmatpush1.msra.mxu0 0.0
  %7090 = vmatprep.subr.mxu0 0.0
  %7091 = vmatpush1.msra.mxu0 0.0
  %7092 = vmatprep.subr.mxu0 0.0
  %7093 = vmatpush1.msra.mxu0 0.0
  %7094 = vmatprep.subr.mxu0 0.0
  %7095 = vmatpush1.msra.mxu0 0.0
  %7096 = vmatprep.subr.mxu0 0.0
  %7097 = vmatpush1.msra.mxu0 0.0
  %7098 = vmatprep.subr.mxu0 0.0
  %7099 = vmatpush1.msra.mxu0 0.0
  %7100 = vmatprep.subr.mxu0 0.0
  %7101 = vmatpush1.msra.mxu0 0.0
  %7102 = vmatprep.subr.mxu0 0.0
  %7103 = vmatpush1.msra.mxu0 0.0
  %7104 = vmatprep.subr.mxu0 0.0
  %7105 = vmatpush1.msra.mxu0 0.0
  %7106 = vmatprep.subr.mxu0 0.0
  %7107 = vmatpush1.msra.mxu0 0.0
  %7108 = vmatprep.subr.mxu0 0.0
  %7109 = vmatpush1.msra.mxu0 0.0
  %7110 = vmatprep.subr.mxu0 0.0
  %7111 = vmatpush1.msra.mxu0 0.0
  %7112 = vmatprep.subr.mxu0 0.0
  %7113 = vmatpush1.msra.mxu0 0.0
  %7114 = vmatprep.mubr.f32.mxu0 0.0
  %7115 = vmatmul.mubr.f32.gmra.mrb[0].mxu0 %v5824
  %v7116 = vpop.f32.mrb[0].mxu0
  %v7117 = vadd.f32 %v5841, %v7116
  %v7118 = vpop.f32.mrb[0].mxu0
  %v7119 = vadd.f32 %v5841, %v7118
  %7120 = vmatprep.mubr.f32.mxu0 0.0
  %7121 = vmatmul.mubr.f32.gmra.mrb[0].mxu0 %v5825
  %v7122 = vpop.f32.mrb[0].mxu0
  %v7123 = vadd.f32 %v5846, %v7122
  %v7124 = vpop.f32.mrb[0].mxu0
  %v7125 = vadd.f32 %v5846, %v7124
  %7126 = vmatprep.mubr.f32.mxu0 0.0
  %7127 = vmatmul.mubr.f32.gmra.mrb[0].mxu0 %v5826
  %v7128 = vpop.f32.mrb[0].mxu0
  %v7129 = vadd.f32 %v5851, %v7128
  %v7130 = vpop.f32.mrb[0].mxu0
  %v7131 = vadd.f32 %v5851, %v7130
  %7132 = vmatprep.mubr.f32.mxu0 0.0
  %7133 = vmatmul.mubr.f32.gmra.mrb[0].mxu0 %v5827
  %v7134 = vpop.f32.mrb[0].mxu0
  %v7135 = vadd.f32 %v5856, %v7134
  %v7136 = vpop.f32.mrb[0].mxu0
  %v7137 = vadd.f32 %v5856, %v7136
  %7138 = vmatprep.mubr.f32.mxu0 0.0
  %7139 = vmatmul.mubr.f32.gmra.mrb[0].mxu0 %v5828
  %v7140 = vpop.f32.mrb[0].mxu0
  %v7141 = vadd.f32 %v5861, %v7140
  %v7142 = vpop.f32.mrb[0].mxu0
  %v7143 = vadd.f32 %v5861, %v7142
  %7144 = vmatprep.mubr.f32.mxu0 0.0
  %7145 = vmatmul.mubr.f32.gmra.mrb[0].mxu0 %v5829
  %v7146 = vpop.f32.mrb[0].mxu0
  %v7147 = vadd.f32 %v5866, %v7146
  %v7148 = vpop.f32.mrb[0].mxu0
  %v7149 = vadd.f32 %v5866, %v7148
  %7150 = vmatprep.mubr.f32.mxu0 0.0
  %7151 = vmatmul.mubr.f32.gmra.mrb[0].mxu0 %v5830
  %v7152 = vpop.f32.mrb[0].mxu0
  %v7153 = vadd.f32 %v5871, %v7152
  %v7154 = vpop.f32.mrb[0].mxu0
  %v7155 = vadd.f32 %v5871, %v7154
  %7156 = vdwg.mxu0
  %7157 = vmatprep.subr.mxu0 %v5417
  %7158 = vmatpush1.msra.mxu0 %v5416
  %7159 = vmatprep.subr.mxu0 %v5444
  %7160 = vmatpush1.msra.mxu0 %v5443
  %7161 = vmatprep.subr.mxu0 %v5471
  %7162 = vmatpush1.msra.mxu0 %v5470
  %7163 = vmatprep.subr.mxu0 %v5498
  %7164 = vmatpush1.msra.mxu0 %v5497
  %7165 = vmatprep.subr.mxu0 %v5525
  %7166 = vmatpush1.msra.mxu0 %v5524
  %7167 = vmatprep.subr.mxu0 %v5552
  %7168 = vmatpush1.msra.mxu0 %v5551
  %7169 = vmatprep.subr.mxu0 %v5579
  %7170 = vmatpush1.msra.mxu0 %v5578
  %7171 = vmatprep.subr.mxu0 %v5606
  %7172 = vmatpush1.msra.mxu0 %v5605
  %7173 = vmatprep.subr.mxu0 %v5633
  %7174 = vmatpush1.msra.mxu0 %v5632
  %7175 = vmatprep.subr.mxu0 %v5660
  %7176 = vmatpush1.msra.mxu0 %v5659
  %7177 = vmatprep.subr.mxu0 %v5687
  %7178 = vmatpush1.msra.mxu0 %v5686
  %7179 = vmatprep.subr.mxu0 %v5714
  %7180 = vmatpush1.msra.mxu0 %v5713
  %7181 = vmatprep.subr.mxu0 %v5741
  %7182 = vmatpush1.msra.mxu0 %v5740
  %7183 = vmatprep.subr.mxu0 %v5768
  %7184 = vmatpush1.msra.mxu0 %v5767
  %7185 = vmatprep.subr.mxu0 %v5795
  %7186 = vmatpush1.msra.mxu0 %v5794
  %7187 = vmatprep.subr.mxu0 %v5822
  %7188 = vmatpush1.msra.mxu0 %v5821
  %7189 = vmatprep.subr.mxu0 0.0
  %7190 = vmatpush1.msra.mxu0 0.0
  %7191 = vmatprep.subr.mxu0 0.0
  %7192 = vmatpush1.msra.mxu0 0.0
  %7193 = vmatprep.subr.mxu0 0.0
  %7194 = vmatpush1.msra.mxu0 0.0
  %7195 = vmatprep.subr.mxu0 0.0
  %7196 = vmatpush1.msra.mxu0 0.0
  %7197 = vmatprep.subr.mxu0 0.0
  %7198 = vmatpush1.msra.mxu0 0.0
  %7199 = vmatprep.subr.mxu0 0.0
  %7200 = vmatpush1.msra.mxu0 0.0
  %7201 = vmatprep.subr.mxu0 0.0
  %7202 = vmatpush1.msra.mxu0 0.0
  %7203 = vmatprep.subr.mxu0 0.0
  %7204 = vmatpush1.msra.mxu0 0.0
  %7205 = vmatprep.subr.mxu0 0.0
  %7206 = vmatpush1.msra.mxu0 0.0
  %7207 = vmatprep.subr.mxu0 0.0
  %7208 = vmatpush1.msra.mxu0 0.0
  %7209 = vmatprep.subr.mxu0 0.0
  %7210 = vmatpush1.msra.mxu0 0.0
  %7211 = vmatprep.subr.mxu0 0.0
  %7212 = vmatpush1.msra.mxu0 0.0
  %7213 = vmatprep.subr.mxu0 0.0
  %7214 = vmatpush1.msra.mxu0 0.0
  %7215 = vmatprep.subr.mxu0 0.0
  %7216 = vmatpush1.msra.mxu0 0.0
  %7217 = vmatprep.subr.mxu0 0.0
  %7218 = vmatpush1.msra.mxu0 0.0
  %7219 = vmatprep.subr.mxu0 0.0
  %7220 = vmatpush1.msra.mxu0 0.0
  %7221 = vmatprep.mubr.f32.mxu0 0.0
  %7222 = vmatmul.mubr.f32.gmra.mrb[0].mxu0 %v5824
  %v7223 = vpop.f32.mrb[0].mxu0
  %v7224 = vadd.f32 %v5841, %v7223
  %v7225 = vpop.f32.mrb[0].mxu0
  %v7226 = vadd.f32 %v5841, %v7225
  %7227 = vmatprep.mubr.f32.mxu0 0.0
  %7228 = vmatmul.mubr.f32.gmra.mrb[0].mxu0 %v5825
  %v7229 = vpop.f32.mrb[0].mxu0
  %v7230 = vadd.f32 %v5846, %v7229
  %v7231 = vpop.f32.mrb[0].mxu0
  %v7232 = vadd.f32 %v5846, %v7231
  %7233 = vmatprep.mubr.f32.mxu0 0.0
  %7234 = vmatmul.mubr.f32.gmra.mrb[0].mxu0 %v5826
  %v7235 = vpop.f32.mrb[0].mxu0
  %v7236 = vadd.f32 %v5851, %v7235
  %v7237 = vpop.f32.mrb[0].mxu0
  %v7238 = vadd.f32 %v5851, %v7237
  %7239 = vmatprep.mubr.f32.mxu0 0.0
  %7240 = vmatmul.mubr.f32.gmra.mrb[0].mxu0 %v5827
  %v7241 = vpop.f32.mrb[0].mxu0
  %v7242 = vadd.f32 %v5856, %v7241
  %v7243 = vpop.f32.mrb[0].mxu0
  %v7244 = vadd.f32 %v5856, %v7243
  %7245 = vmatprep.mubr.f32.mxu0 0.0
  %7246 = vmatmul.mubr.f32.gmra.mrb[0].mxu0 %v5828
  %v7247 = vpop.f32.mrb[0].mxu0
  %v7248 = vadd.f32 %v5861, %v7247
  %v7249 = vpop.f32.mrb[0].mxu0
  %v7250 = vadd.f32 %v5861, %v7249
  %7251 = vmatprep.mubr.f32.mxu0 0.0
  %7252 = vmatmul.mubr.f32.gmra.mrb[0].mxu0 %v5829
  %v7253 = vpop.f32.mrb[0].mxu0
  %v7254 = vadd.f32 %v5866, %v7253
  %v7255 = vpop.f32.mrb[0].mxu0
  %v7256 = vadd.f32 %v5866, %v7255
  %7257 = vmatprep.mubr.f32.mxu0 0.0
  %7258 = vmatmul.mubr.f32.gmra.mrb[0].mxu0 %v5830
  %v7259 = vpop.f32.mrb[0].mxu0
  %v7260 = vadd.f32 %v5871, %v7259
  %v7261 = vpop.f32.mrb[0].mxu0
  %v7262 = vadd.f32 %v5871, %v7261
  %7263 = vdwg.mxu0
  %7264 = vmatprep.subr.mxu0 0.0
  %7265 = vmatpush1.msra.mxu0 %v5418
  %7266 = vmatprep.subr.mxu0 0.0
  %7267 = vmatpush1.msra.mxu0 %v5445
  %7268 = vmatprep.subr.mxu0 0.0
  %7269 = vmatpush1.msra.mxu0 %v5472
  %7270 = vmatprep.subr.mxu0 0.0
  %7271 = vmatpush1.msra.mxu0 %v5499
  %7272 = vmatprep.subr.mxu0 0.0
  %7273 = vmatpush1.msra.mxu0 %v5526
  %7274 = vmatprep.subr.mxu0 0.0
  %7275 = vmatpush1.msra.mxu0 %v5553
  %7276 = vmatprep.subr.mxu0 0.0
  %7277 = vmatpush1.msra.mxu0 %v5580
  %7278 = vmatprep.subr.mxu0 0.0
  %7279 = vmatpush1.msra.mxu0 %v5607
  %7280 = vmatprep.subr.mxu0 0.0
  %7281 = vmatpush1.msra.mxu0 %v5634
  %7282 = vmatprep.subr.mxu0 0.0
  %7283 = vmatpush1.msra.mxu0 %v5661
  %7284 = vmatprep.subr.mxu0 0.0
  %7285 = vmatpush1.msra.mxu0 %v5688
  %7286 = vmatprep.subr.mxu0 0.0
  %7287 = vmatpush1.msra.mxu0 %v5715
  %7288 = vmatprep.subr.mxu0 0.0
  %7289 = vmatpush1.msra.mxu0 %v5742
  %7290 = vmatprep.subr.mxu0 0.0
  %7291 = vmatpush1.msra.mxu0 %v5769
  %7292 = vmatprep.subr.mxu0 0.0
  %7293 = vmatpush1.msra.mxu0 %v5796
  %7294 = vmatprep.subr.mxu0 0.0
  %7295 = vmatpush1.msra.mxu0 %v5823
  %7296 = vmatprep.subr.mxu0 0.0
  %7297 = vmatpush1.msra.mxu0 0.0
  %7298 = vmatprep.subr.mxu0 0.0
  %7299 = vmatpush1.msra.mxu0 0.0
  %7300 = vmatprep.subr.mxu0 0.0
  %7301 = vmatpush1.msra.mxu0 0.0
  %7302 = vmatprep.subr.mxu0 0.0
  %7303 = vmatpush1.msra.mxu0 0.0
  %7304 = vmatprep.subr.mxu0 0.0
  %7305 = vmatpush1.msra.mxu0 0.0
  %7306 = vmatprep.subr.mxu0 0.0
  %7307 = vmatpush1.msra.mxu0 0.0
  %7308 = vmatprep.subr.mxu0 0.0
  %7309 = vmatpush1.msra.mxu0 0.0
  %7310 = vmatprep.subr.mxu0 0.0
  %7311 = vmatpush1.msra.mxu0 0.0
  %7312 = vmatprep.subr.mxu0 0.0
  %7313 = vmatpush1.msra.mxu0 0.0
  %7314 = vmatprep.subr.mxu0 0.0
  %7315 = vmatpush1.msra.mxu0 0.0
  %7316 = vmatprep.subr.mxu0 0.0
  %7317 = vmatpush1.msra.mxu0 0.0
  %7318 = vmatprep.subr.mxu0 0.0
  %7319 = vmatpush1.msra.mxu0 0.0
  %7320 = vmatprep.subr.mxu0 0.0
  %7321 = vmatpush1.msra.mxu0 0.0
  %7322 = vmatprep.subr.mxu0 0.0
  %7323 = vmatpush1.msra.mxu0 0.0
  %7324 = vmatprep.subr.mxu0 0.0
  %7325 = vmatpush1.msra.mxu0 0.0
  %7326 = vmatprep.subr.mxu0 0.0
  %7327 = vmatpush1.msra.mxu0 0.0
  %7328 = vmatprep.mubr.f32.mxu0 0.0
  %7329 = vmatmul.mubr.f32.gmra.mrb[0].mxu0 %v5824
  %v7330 = vpop.f32.mrb[0].mxu0
  %v7331 = vadd.f32 %v5841, %v7330
  %v7332 = vpop.f32.mrb[0].mxu0
  %7333 = vmatprep.mubr.f32.mxu0 0.0
  %7334 = vmatmul.mubr.f32.gmra.mrb[0].mxu0 %v5825
  %v7335 = vpop.f32.mrb[0].mxu0
  %v7336 = vadd.f32 %v5846, %v7335
  %v7337 = vpop.f32.mrb[0].mxu0
  %7338 = vmatprep.mubr.f32.mxu0 0.0
  %7339 = vmatmul.mubr.f32.gmra.mrb[0].mxu0 %v5826
  %v7340 = vpop.f32.mrb[0].mxu0
  %v7341 = vadd.f32 %v5851, %v7340
  %v7342 = vpop.f32.mrb[0].mxu0
  %7343 = vmatprep.mubr.f32.mxu0 0.0
  %7344 = vmatmul.mubr.f32.gmra.mrb[0].mxu0 %v5827
  %v7345 = vpop.f32.mrb[0].mxu0
  %v7346 = vadd.f32 %v5856, %v7345
  %v7347 = vpop.f32.mrb[0].mxu0
  %7348 = vmatprep.mubr.f32.mxu0 0.0
  %7349 = vmatmul.mubr.f32.gmra.mrb[0].mxu0 %v5828
  %v7350 = vpop.f32.mrb[0].mxu0
  %v7351 = vadd.f32 %v5861, %v7350
  %v7352 = vpop.f32.mrb[0].mxu0
  %7353 = vmatprep.mubr.f32.mxu0 0.0
  %7354 = vmatmul.mubr.f32.gmra.mrb[0].mxu0 %v5829
  %v7355 = vpop.f32.mrb[0].mxu0
  %v7356 = vadd.f32 %v5866, %v7355
  %v7357 = vpop.f32.mrb[0].mxu0
  %7358 = vmatprep.mubr.f32.mxu0 0.0
  %7359 = vmatmul.mubr.f32.gmra.mrb[0].mxu0 %v5830
  %v7360 = vpop.f32.mrb[0].mxu0
  %v7361 = vadd.f32 %v5871, %v7360
  %v7362 = vpop.f32.mrb[0].mxu0
  %7363 = vdwg.mxu0
  %v7364 = vmax.f32 %v5940, 0.0
  %v7365 = vmax.f32 %v5942, 0.0
  %v7366 = vmax.f32 %v6047, 0.0
  %v7367 = vmax.f32 %v6049, 0.0
  %v7368 = vmax.f32 %v6154, 0.0
  %v7369 = vmax.f32 %v6156, 0.0
  %v7370 = vmax.f32 %v6261, 0.0
  %v7371 = vmax.f32 %v6263, 0.0
  %v7372 = vmax.f32 %v6368, 0.0
  %v7373 = vmax.f32 %v6370, 0.0
  %v7374 = vmax.f32 %v6475, 0.0
  %v7375 = vmax.f32 %v6477, 0.0
  %v7376 = vmax.f32 %v6582, 0.0
  %v7377 = vmax.f32 %v6584, 0.0
  %v7378 = vmax.f32 %v6689, 0.0
  %v7379 = vmax.f32 %v6691, 0.0
  %v7380 = vmax.f32 %v6796, 0.0
  %v7381 = vmax.f32 %v6798, 0.0
  %v7382 = vmax.f32 %v6903, 0.0
  %v7383 = vmax.f32 %v6905, 0.0
  %v7384 = vmax.f32 %v7010, 0.0
  %v7385 = vmax.f32 %v7012, 0.0
  %v7386 = vmax.f32 %v7117, 0.0
  %v7387 = vmax.f32 %v7119, 0.0
  %v7388 = vmax.f32 %v7224, 0.0
  %v7389 = vmax.f32 %v7226, 0.0
  %v7390 = vmax.f32 %v7331, 0.0
  %v7391 = vmax.f32 %v5946, 0.0
  %v7392 = vmax.f32 %v5948, 0.0
  %v7393 = vmax.f32 %v6053, 0.0
  %v7394 = vmax.f32 %v6055, 0.0
  %v7395 = vmax.f32 %v6160, 0.0
  %v7396 = vmax.f32 %v6162, 0.0
  %v7397 = vmax.f32 %v6267, 0.0
  %v7398 = vmax.f32 %v6269, 0.0
  %v7399 = vmax.f32 %v6374, 0.0
  %v7400 = vmax.f32 %v6376, 0.0
  %v7401 = vmax.f32 %v6481, 0.0
  %v7402 = vmax.f32 %v6483, 0.0
  %v7403 = vmax.f32 %v6588, 0.0
  %v7404 = vmax.f32 %v6590, 0.0
  %v7405 = vmax.f32 %v6695, 0.0
  %v7406 = vmax.f32 %v6697, 0.0
  %v7407 = vmax.f32 %v6802, 0.0
  %v7408 = vmax.f32 %v6804, 0.0
  %v7409 = vmax.f32 %v6909, 0.0
  %v7410 = vmax.f32 %v6911, 0.0
  %v7411 = vmax.f32 %v7016, 0.0
  %v7412 = vmax.f32 %v7018, 0.0
  %v7413 = vmax.f32 %v7123, 0.0
  %v7414 = vmax.f32 %v7125, 0.0
  %v7415 = vmax.f32 %v7230, 0.0
  %v7416 = vmax.f32 %v7232, 0.0
  %v7417 = vmax.f32 %v7336, 0.0
  %v7418 = vmax.f32 %v5952, 0.0
  %v7419 = vmax.f32 %v5954, 0.0
  %v7420 = vmax.f32 %v6059, 0.0
  %v7421 = vmax.f32 %v6061, 0.0
  %v7422 = vmax.f32 %v6166, 0.0
  %v7423 = vmax.f32 %v6168, 0.0
  %v7424 = vmax.f32 %v6273, 0.0
  %v7425 = vmax.f32 %v6275, 0.0
  %v7426 = vmax.f32 %v6380, 0.0
  %v7427 = vmax.f32 %v6382, 0.0
  %v7428 = vmax.f32 %v6487, 0.0
  %v7429 = vmax.f32 %v6489, 0.0
  %v7430 = vmax.f32 %v6594, 0.0
  %v7431 = vmax.f32 %v6596, 0.0
  %v7432 = vmax.f32 %v6701, 0.0
  %v7433 = vmax.f32 %v6703, 0.0
  %v7434 = vmax.f32 %v6808, 0.0
  %v7435 = vmax.f32 %v6810, 0.0
  %v7436 = vmax.f32 %v6915, 0.0
  %v7437 = vmax.f32 %v6917, 0.0
  %v7438 = vmax.f32 %v7022, 0.0
  %v7439 = vmax.f32 %v7024, 0.0
  %v7440 = vmax.f32 %v7129, 0.0
  %v7441 = vmax.f32 %v7131, 0.0
  %v7442 = vmax.f32 %v7236, 0.0
  %v7443 = vmax.f32 %v7238, 0.0
  %v7444 = vmax.f32 %v7341, 0.0
  %v7445 = vmax.f32 %v5958, 0.0
  %v7446 = vmax.f32 %v5960, 0.0
  %v7447 = vmax.f32 %v6065, 0.0
  %v7448 = vmax.f32 %v6067, 0.0
  %v7449 = vmax.f32 %v6172, 0.0
  %v7450 = vmax.f32 %v6174, 0.0
  %v7451 = vmax.f32 %v6279, 0.0
  %v7452 = vmax.f32 %v6281, 0.0
  %v7453 = vmax.f32 %v6386, 0.0
  %v7454 = vmax.f32 %v6388, 0.0
  %v7455 = vmax.f32 %v6493, 0.0
  %v7456 = vmax.f32 %v6495, 0.0
  %v7457 = vmax.f32 %v6600, 0.0
  %v7458 = vmax.f32 %v6602, 0.0
  %v7459 = vmax.f32 %v6707, 0.0
  %v7460 = vmax.f32 %v6709, 0.0
  %v7461 = vmax.f32 %v6814, 0.0
  %v7462 = vmax.f32 %v6816, 0.0
  %v7463 = vmax.f32 %v6921, 0.0
  %v7464 = vmax.f32 %v6923, 0.0
  %v7465 = vmax.f32 %v7028, 0.0
  %v7466 = vmax.f32 %v7030, 0.0
  %v7467 = vmax.f32 %v7135, 0.0
  %v7468 = vmax.f32 %v7137, 0.0
  %v7469 = vmax.f32 %v7242, 0.0
  %v7470 = vmax.f32 %v7244, 0.0
  %v7471 = vmax.f32 %v7346, 0.0
  %v7472 = vmax.f32 %v5964, 0.0
  %v7473 = vmax.f32 %v5966, 0.0
  %v7474 = vmax.f32 %v6071, 0.0
  %v7475 = vmax.f32 %v6073, 0.0
  %v7476 = vmax.f32 %v6178, 0.0
  %v7477 = vmax.f32 %v6180, 0.0
  %v7478 = vmax.f32 %v6285, 0.0
  %v7479 = vmax.f32 %v6287, 0.0
  %v7480 = vmax.f32 %v6392, 0.0
  %v7481 = vmax.f32 %v6394, 0.0
  %v7482 = vmax.f32 %v6499, 0.0
  %v7483 = vmax.f32 %v6501, 0.0
  %v7484 = vmax.f32 %v6606, 0.0
  %v7485 = vmax.f32 %v6608, 0.0
  %v7486 = vmax.f32 %v6713, 0.0
  %v7487 = vmax.f32 %v6715, 0.0
  %v7488 = vmax.f32 %v6820, 0.0
  %v7489 = vmax.f32 %v6822, 0.0
  %v7490 = vmax.f32 %v6927, 0.0
  %v7491 = vmax.f32 %v6929, 0.0
  %v7492 = vmax.f32 %v7034, 0.0
  %v7493 = vmax.f32 %v7036, 0.0
  %v7494 = vmax.f32 %v7141, 0.0
  %v7495 = vmax.f32 %v7143, 0.0
  %v7496 = vmax.f32 %v7248, 0.0
  %v7497 = vmax.f32 %v7250, 0.0
  %v7498 = vmax.f32 %v7351, 0.0
  %v7499 = vmax.f32 %v5970, 0.0
  %v7500 = vmax.f32 %v5972, 0.0
  %v7501 = vmax.f32 %v6077, 0.0
  %v7502 = vmax.f32 %v6079, 0.0
  %v7503 = vmax.f32 %v6184, 0.0
  %v7504 = vmax.f32 %v6186, 0.0
  %v7505 = vmax.f32 %v6291, 0.0
  %v7506 = vmax.f32 %v6293, 0.0
  %v7507 = vmax.f32 %v6398, 0.0
  %v7508 = vmax.f32 %v6400, 0.0
  %v7509 = vmax.f32 %v6505, 0.0
  %v7510 = vmax.f32 %v6507, 0.0
  %v7511 = vmax.f32 %v6612, 0.0
  %v7512 = vmax.f32 %v6614, 0.0
  %v7513 = vmax.f32 %v6719, 0.0
  %v7514 = vmax.f32 %v6721, 0.0
  %v7515 = vmax.f32 %v6826, 0.0
  %v7516 = vmax.f32 %v6828, 0.0
  %v7517 = vmax.f32 %v6933, 0.0
  %v7518 = vmax.f32 %v6935, 0.0
  %v7519 = vmax.f32 %v7040, 0.0
  %v7520 = vmax.f32 %v7042, 0.0
  %v7521 = vmax.f32 %v7147, 0.0
  %v7522 = vmax.f32 %v7149, 0.0
  %v7523 = vmax.f32 %v7254, 0.0
  %v7524 = vmax.f32 %v7256, 0.0
  %v7525 = vmax.f32 %v7356, 0.0
  %v7526 = vmax.f32 %v5976, 0.0
  %v7527 = vmax.f32 %v5978, 0.0
  %v7528 = vmax.f32 %v6083, 0.0
  %v7529 = vmax.f32 %v6085, 0.0
  %v7530 = vmax.f32 %v6190, 0.0
  %v7531 = vmax.f32 %v6192, 0.0
  %v7532 = vmax.f32 %v6297, 0.0
  %v7533 = vmax.f32 %v6299, 0.0
  %v7534 = vmax.f32 %v6404, 0.0
  %v7535 = vmax.f32 %v6406, 0.0
  %v7536 = vmax.f32 %v6511, 0.0
  %v7537 = vmax.f32 %v6513, 0.0
  %v7538 = vmax.f32 %v6618, 0.0
  %v7539 = vmax.f32 %v6620, 0.0
  %v7540 = vmax.f32 %v6725, 0.0
  %v7541 = vmax.f32 %v6727, 0.0
  %v7542 = vmax.f32 %v6832, 0.0
  %v7543 = vmax.f32 %v6834, 0.0
  %v7544 = vmax.f32 %v6939, 0.0
  %v7545 = vmax.f32 %v6941, 0.0
  %v7546 = vmax.f32 %v7046, 0.0
  %v7547 = vmax.f32 %v7048, 0.0
  %v7548 = vmax.f32 %v7153, 0.0
  %v7549 = vmax.f32 %v7155, 0.0
  %v7550 = vmax.f32 %v7260, 0.0
  %v7551 = vmax.f32 %v7262, 0.0
  %v7552 = vmax.f32 %v7361, 0.0
  %v7553 = vld [vmem:[%s6] sm:$0xff]
  %v7554 = vld [vmem:[%s6 + $0x8] sm:$0xff]
  %v7555 = vld [vmem:[%s7] sm:$0xff]
  %v7556 = vld [vmem:[%s7 + $0x8] sm:$0xff]
  %7558 = vset.pattern.permute.xlu0 0
  %7559 = vperm.xlu0 %7558, %v7555
  %v7560 = vpop.permute.xlu0 %7559
  %7563 = vset.pattern.permute.xlu0 0
  %7564 = vperm.xlu0 %7563, %v7556
  %v7565 = vpop.permute.xlu0 %7564
  %vm7567 = vcmask 457728
  %v7569 = vsel %vm7567, %v7553, 0
  %v7572 = vsel %vm7567, %v7554, 0
  %7574 = vmatprep.subr.mxu0 %v7365
  %7575 = vmatpush1.msra.mxu0 %v7364
  %7576 = vmatprep.subr.mxu0 %v7392
  %7577 = vmatpush1.msra.mxu0 %v7391
  %7578 = vmatprep.subr.mxu0 %v7419
  %7579 = vmatpush1.msra.mxu0 %v7418
  %7580 = vmatprep.subr.mxu0 %v7446
  %7581 = vmatpush1.msra.mxu0 %v7445
  %7582 = vmatprep.subr.mxu0 %v7473
  %7583 = vmatpush1.msra.mxu0 %v7472
  %7584 = vmatprep.subr.mxu0 %v7500
  %7585 = vmatpush1.msra.mxu0 %v7499
  %7586 = vmatprep.subr.mxu0 %v7527
  %7587 = vmatpush1.msra.mxu0 %v7526
  %7588 = vmatprep.subr.mxu0 0.0
  %7589 = vmatpush1.msra.mxu0 0.0
  %7590 = vmatprep.subr.mxu0 0.0
  %7591 = vmatpush1.msra.mxu0 0.0
  %7592 = vmatprep.subr.mxu0 0.0
  %7593 = vmatpush1.msra.mxu0 0.0
  %7594 = vmatprep.subr.mxu0 0.0
  %7595 = vmatpush1.msra.mxu0 0.0
  %7596 = vmatprep.subr.mxu0 0.0
  %7597 = vmatpush1.msra.mxu0 0.0
  %7598 = vmatprep.subr.mxu0 0.0
  %7599 = vmatpush1.msra.mxu0 0.0
  %7600 = vmatprep.subr.mxu0 0.0
  %7601 = vmatpush1.msra.mxu0 0.0
  %7602 = vmatprep.subr.mxu0 0.0
  %7603 = vmatpush1.msra.mxu0 0.0
  %7604 = vmatprep.subr.mxu0 0.0
  %7605 = vmatpush1.msra.mxu0 0.0
  %7606 = vmatprep.subr.mxu0 0.0
  %7607 = vmatpush1.msra.mxu0 0.0
  %7608 = vmatprep.subr.mxu0 0.0
  %7609 = vmatpush1.msra.mxu0 0.0
  %7610 = vmatprep.subr.mxu0 0.0
  %7611 = vmatpush1.msra.mxu0 0.0
  %7612 = vmatprep.subr.mxu0 0.0
  %7613 = vmatpush1.msra.mxu0 0.0
  %7614 = vmatprep.subr.mxu0 0.0
  %7615 = vmatpush1.msra.mxu0 0.0
  %7616 = vmatprep.subr.mxu0 0.0
  %7617 = vmatpush1.msra.mxu0 0.0
  %7618 = vmatprep.subr.mxu0 0.0
  %7619 = vmatpush1.msra.mxu0 0.0
  %7620 = vmatprep.subr.mxu0 0.0
  %7621 = vmatpush1.msra.mxu0 0.0
  %7622 = vmatprep.subr.mxu0 0.0
  %7623 = vmatpush1.msra.mxu0 0.0
  %7624 = vmatprep.subr.mxu0 0.0
  %7625 = vmatpush1.msra.mxu0 0.0
  %7626 = vmatprep.subr.mxu0 0.0
  %7627 = vmatpush1.msra.mxu0 0.0
  %7628 = vmatprep.subr.mxu0 0.0
  %7629 = vmatpush1.msra.mxu0 0.0
  %7630 = vmatprep.subr.mxu0 0.0
  %7631 = vmatpush1.msra.mxu0 0.0
  %7632 = vmatprep.subr.mxu0 0.0
  %7633 = vmatpush1.msra.mxu0 0.0
  %7634 = vmatprep.subr.mxu0 0.0
  %7635 = vmatpush1.msra.mxu0 0.0
  %7636 = vmatprep.subr.mxu0 0.0
  %7637 = vmatpush1.msra.mxu0 0.0
  %7638 = vmatprep.mubr.f32.mxu0 0.0
  %7639 = vmatmul.mubr.f32.gmra.mrb[0].mxu0 %v7569
  %v7640 = vpop.f32.mrb[0].mxu0
  %v7641 = vadd.f32 %v7560, %v7640
  %v7642 = vpop.f32.mrb[0].mxu0
  %v7643 = vadd.f32 %v7560, %v7642
  %7644 = vmatprep.mubr.f32.mxu0 0.0
  %7645 = vmatmul.mubr.f32.gmra.mrb[0].mxu0 %v7572
  %v7646 = vpop.f32.mrb[0].mxu0
  %v7647 = vadd.f32 %v7565, %v7646
  %v7648 = vpop.f32.mrb[0].mxu0
  %v7649 = vadd.f32 %v7565, %v7648
  %7650 = vdwg.mxu0
  %7651 = vmatprep.subr.mxu0 %v7367
  %7652 = vmatpush1.msra.mxu0 %v7366
  %7653 = vmatprep.subr.mxu0 %v7394
  %7654 = vmatpush1.msra.mxu0 %v7393
  %7655 = vmatprep.subr.mxu0 %v7421
  %7656 = vmatpush1.msra.mxu0 %v7420
  %7657 = vmatprep.subr.mxu0 %v7448
  %7658 = vmatpush1.msra.mxu0 %v7447
  %7659 = vmatprep.subr.mxu0 %v7475
  %7660 = vmatpush1.msra.mxu0 %v7474
  %7661 = vmatprep.subr.mxu0 %v7502
  %7662 = vmatpush1.msra.mxu0 %v7501
  %7663 = vmatprep.subr.mxu0 %v7529
  %7664 = vmatpush1.msra.mxu0 %v7528
  %7665 = vmatprep.subr.mxu0 0.0
  %7666 = vmatpush1.msra.mxu0 0.0
  %7667 = vmatprep.subr.mxu0 0.0
  %7668 = vmatpush1.msra.mxu0 0.0
  %7669 = vmatprep.subr.mxu0 0.0
  %7670 = vmatpush1.msra.mxu0 0.0
  %7671 = vmatprep.subr.mxu0 0.0
  %7672 = vmatpush1.msra.mxu0 0.0
  %7673 = vmatprep.subr.mxu0 0.0
  %7674 = vmatpush1.msra.mxu0 0.0
  %7675 = vmatprep.subr.mxu0 0.0
  %7676 = vmatpush1.msra.mxu0 0.0
  %7677 = vmatprep.subr.mxu0 0.0
  %7678 = vmatpush1.msra.mxu0 0.0
  %7679 = vmatprep.subr.mxu0 0.0
  %7680 = vmatpush1.msra.mxu0 0.0
  %7681 = vmatprep.subr.mxu0 0.0
  %7682 = vmatpush1.msra.mxu0 0.0
  %7683 = vmatprep.subr.mxu0 0.0
  %7684 = vmatpush1.msra.mxu0 0.0
  %7685 = vmatprep.subr.mxu0 0.0
  %7686 = vmatpush1.msra.mxu0 0.0
  %7687 = vmatprep.subr.mxu0 0.0
  %7688 = vmatpush1.msra.mxu0 0.0
  %7689 = vmatprep.subr.mxu0 0.0
  %7690 = vmatpush1.msra.mxu0 0.0
  %7691 = vmatprep.subr.mxu0 0.0
  %7692 = vmatpush1.msra.mxu0 0.0
  %7693 = vmatprep.subr.mxu0 0.0
  %7694 = vmatpush1.msra.mxu0 0.0
  %7695 = vmatprep.subr.mxu0 0.0
  %7696 = vmatpush1.msra.mxu0 0.0
  %7697 = vmatprep.subr.mxu0 0.0
  %7698 = vmatpush1.msra.mxu0 0.0
  %7699 = vmatprep.subr.mxu0 0.0
  %7700 = vmatpush1.msra.mxu0 0.0
  %7701 = vmatprep.subr.mxu0 0.0
  %7702 = vmatpush1.msra.mxu0 0.0
  %7703 = vmatprep.subr.mxu0 0.0
  %7704 = vmatpush1.msra.mxu0 0.0
  %7705 = vmatprep.subr.mxu0 0.0
  %7706 = vmatpush1.msra.mxu0 0.0
  %7707 = vmatprep.subr.mxu0 0.0
  %7708 = vmatpush1.msra.mxu0 0.0
  %7709 = vmatprep.subr.mxu0 0.0
  %7710 = vmatpush1.msra.mxu0 0.0
  %7711 = vmatprep.subr.mxu0 0.0
  %7712 = vmatpush1.msra.mxu0 0.0
  %7713 = vmatprep.subr.mxu0 0.0
  %7714 = vmatpush1.msra.mxu0 0.0
  %7715 = vmatprep.mubr.f32.mxu0 0.0
  %7716 = vmatmul.mubr.f32.gmra.mrb[0].mxu0 %v7569
  %v7717 = vpop.f32.mrb[0].mxu0
  %v7718 = vadd.f32 %v7560, %v7717
  %v7719 = vpop.f32.mrb[0].mxu0
  %v7720 = vadd.f32 %v7560, %v7719
  %7721 = vmatprep.mubr.f32.mxu0 0.0
  %7722 = vmatmul.mubr.f32.gmra.mrb[0].mxu0 %v7572
  %v7723 = vpop.f32.mrb[0].mxu0
  %v7724 = vadd.f32 %v7565, %v7723
  %v7725 = vpop.f32.mrb[0].mxu0
  %v7726 = vadd.f32 %v7565, %v7725
  %7727 = vdwg.mxu0
  %7728 = vmatprep.subr.mxu0 %v7369
  %7729 = vmatpush1.msra.mxu0 %v7368
  %7730 = vmatprep.subr.mxu0 %v7396
  %7731 = vmatpush1.msra.mxu0 %v7395
  %7732 = vmatprep.subr.mxu0 %v7423
  %7733 = vmatpush1.msra.mxu0 %v7422
  %7734 = vmatprep.subr.mxu0 %v7450
  %7735 = vmatpush1.msra.mxu0 %v7449
  %7736 = vmatprep.subr.mxu0 %v7477
  %7737 = vmatpush1.msra.mxu0 %v7476
  %7738 = vmatprep.subr.mxu0 %v7504
  %7739 = vmatpush1.msra.mxu0 %v7503
  %7740 = vmatprep.subr.mxu0 %v7531
  %7741 = vmatpush1.msra.mxu0 %v7530
  %7742 = vmatprep.subr.mxu0 0.0
  %7743 = vmatpush1.msra.mxu0 0.0
  %7744 = vmatprep.subr.mxu0 0.0
  %7745 = vmatpush1.msra.mxu0 0.0
  %7746 = vmatprep.subr.mxu0 0.0
  %7747 = vmatpush1.msra.mxu0 0.0
  %7748 = vmatprep.subr.mxu0 0.0
  %7749 = vmatpush1.msra.mxu0 0.0
  %7750 = vmatprep.subr.mxu0 0.0
  %7751 = vmatpush1.msra.mxu0 0.0
  %7752 = vmatprep.subr.mxu0 0.0
  %7753 = vmatpush1.msra.mxu0 0.0
  %7754 = vmatprep.subr.mxu0 0.0
  %7755 = vmatpush1.msra.mxu0 0.0
  %7756 = vmatprep.subr.mxu0 0.0
  %7757 = vmatpush1.msra.mxu0 0.0
  %7758 = vmatprep.subr.mxu0 0.0
  %7759 = vmatpush1.msra.mxu0 0.0
  %7760 = vmatprep.subr.mxu0 0.0
  %7761 = vmatpush1.msra.mxu0 0.0
  %7762 = vmatprep.subr.mxu0 0.0
  %7763 = vmatpush1.msra.mxu0 0.0
  %7764 = vmatprep.subr.mxu0 0.0
  %7765 = vmatpush1.msra.mxu0 0.0
  %7766 = vmatprep.subr.mxu0 0.0
  %7767 = vmatpush1.msra.mxu0 0.0
  %7768 = vmatprep.subr.mxu0 0.0
  %7769 = vmatpush1.msra.mxu0 0.0
  %7770 = vmatprep.subr.mxu0 0.0
  %7771 = vmatpush1.msra.mxu0 0.0
  %7772 = vmatprep.subr.mxu0 0.0
  %7773 = vmatpush1.msra.mxu0 0.0
  %7774 = vmatprep.subr.mxu0 0.0
  %7775 = vmatpush1.msra.mxu0 0.0
  %7776 = vmatprep.subr.mxu0 0.0
  %7777 = vmatpush1.msra.mxu0 0.0
  %7778 = vmatprep.subr.mxu0 0.0
  %7779 = vmatpush1.msra.mxu0 0.0
  %7780 = vmatprep.subr.mxu0 0.0
  %7781 = vmatpush1.msra.mxu0 0.0
  %7782 = vmatprep.subr.mxu0 0.0
  %7783 = vmatpush1.msra.mxu0 0.0
  %7784 = vmatprep.subr.mxu0 0.0
  %7785 = vmatpush1.msra.mxu0 0.0
  %7786 = vmatprep.subr.mxu0 0.0
  %7787 = vmatpush1.msra.mxu0 0.0
  %7788 = vmatprep.subr.mxu0 0.0
  %7789 = vmatpush1.msra.mxu0 0.0
  %7790 = vmatprep.subr.mxu0 0.0
  %7791 = vmatpush1.msra.mxu0 0.0
  %7792 = vmatprep.mubr.f32.mxu0 0.0
  %7793 = vmatmul.mubr.f32.gmra.mrb[0].mxu0 %v7569
  %v7794 = vpop.f32.mrb[0].mxu0
  %v7795 = vadd.f32 %v7560, %v7794
  %v7796 = vpop.f32.mrb[0].mxu0
  %v7797 = vadd.f32 %v7560, %v7796
  %7798 = vmatprep.mubr.f32.mxu0 0.0
  %7799 = vmatmul.mubr.f32.gmra.mrb[0].mxu0 %v7572
  %v7800 = vpop.f32.mrb[0].mxu0
  %v7801 = vadd.f32 %v7565, %v7800
  %v7802 = vpop.f32.mrb[0].mxu0
  %v7803 = vadd.f32 %v7565, %v7802
  %7804 = vdwg.mxu0
  %7805 = vmatprep.subr.mxu0 %v7371
  %7806 = vmatpush1.msra.mxu0 %v7370
  %7807 = vmatprep.subr.mxu0 %v7398
  %7808 = vmatpush1.msra.mxu0 %v7397
  %7809 = vmatprep.subr.mxu0 %v7425
  %7810 = vmatpush1.msra.mxu0 %v7424
  %7811 = vmatprep.subr.mxu0 %v7452
  %7812 = vmatpush1.msra.mxu0 %v7451
  %7813 = vmatprep.subr.mxu0 %v7479
  %7814 = vmatpush1.msra.mxu0 %v7478
  %7815 = vmatprep.subr.mxu0 %v7506
  %7816 = vmatpush1.msra.mxu0 %v7505
  %7817 = vmatprep.subr.mxu0 %v7533
  %7818 = vmatpush1.msra.mxu0 %v7532
  %7819 = vmatprep.subr.mxu0 0.0
  %7820 = vmatpush1.msra.mxu0 0.0
  %7821 = vmatprep.subr.mxu0 0.0
  %7822 = vmatpush1.msra.mxu0 0.0
  %7823 = vmatprep.subr.mxu0 0.0
  %7824 = vmatpush1.msra.mxu0 0.0
  %7825 = vmatprep.subr.mxu0 0.0
  %7826 = vmatpush1.msra.mxu0 0.0
  %7827 = vmatprep.subr.mxu0 0.0
  %7828 = vmatpush1.msra.mxu0 0.0
  %7829 = vmatprep.subr.mxu0 0.0
  %7830 = vmatpush1.msra.mxu0 0.0
  %7831 = vmatprep.subr.mxu0 0.0
  %7832 = vmatpush1.msra.mxu0 0.0
  %7833 = vmatprep.subr.mxu0 0.0
  %7834 = vmatpush1.msra.mxu0 0.0
  %7835 = vmatprep.subr.mxu0 0.0
  %7836 = vmatpush1.msra.mxu0 0.0
  %7837 = vmatprep.subr.mxu0 0.0
  %7838 = vmatpush1.msra.mxu0 0.0
  %7839 = vmatprep.subr.mxu0 0.0
  %7840 = vmatpush1.msra.mxu0 0.0
  %7841 = vmatprep.subr.mxu0 0.0
  %7842 = vmatpush1.msra.mxu0 0.0
  %7843 = vmatprep.subr.mxu0 0.0
  %7844 = vmatpush1.msra.mxu0 0.0
  %7845 = vmatprep.subr.mxu0 0.0
  %7846 = vmatpush1.msra.mxu0 0.0
  %7847 = vmatprep.subr.mxu0 0.0
  %7848 = vmatpush1.msra.mxu0 0.0
  %7849 = vmatprep.subr.mxu0 0.0
  %7850 = vmatpush1.msra.mxu0 0.0
  %7851 = vmatprep.subr.mxu0 0.0
  %7852 = vmatpush1.msra.mxu0 0.0
  %7853 = vmatprep.subr.mxu0 0.0
  %7854 = vmatpush1.msra.mxu0 0.0
  %7855 = vmatprep.subr.mxu0 0.0
  %7856 = vmatpush1.msra.mxu0 0.0
  %7857 = vmatprep.subr.mxu0 0.0
  %7858 = vmatpush1.msra.mxu0 0.0
  %7859 = vmatprep.subr.mxu0 0.0
  %7860 = vmatpush1.msra.mxu0 0.0
  %7861 = vmatprep.subr.mxu0 0.0
  %7862 = vmatpush1.msra.mxu0 0.0
  %7863 = vmatprep.subr.mxu0 0.0
  %7864 = vmatpush1.msra.mxu0 0.0
  %7865 = vmatprep.subr.mxu0 0.0
  %7866 = vmatpush1.msra.mxu0 0.0
  %7867 = vmatprep.subr.mxu0 0.0
  %7868 = vmatpush1.msra.mxu0 0.0
  %7869 = vmatprep.mubr.f32.mxu0 0.0
  %7870 = vmatmul.mubr.f32.gmra.mrb[0].mxu0 %v7569
  %v7871 = vpop.f32.mrb[0].mxu0
  %v7872 = vadd.f32 %v7560, %v7871
  %v7873 = vpop.f32.mrb[0].mxu0
  %v7874 = vadd.f32 %v7560, %v7873
  %7875 = vmatprep.mubr.f32.mxu0 0.0
  %7876 = vmatmul.mubr.f32.gmra.mrb[0].mxu0 %v7572
  %v7877 = vpop.f32.mrb[0].mxu0
  %v7878 = vadd.f32 %v7565, %v7877
  %v7879 = vpop.f32.mrb[0].mxu0
  %v7880 = vadd.f32 %v7565, %v7879
  %7881 = vdwg.mxu0
  %7882 = vmatprep.subr.mxu0 %v7373
  %7883 = vmatpush1.msra.mxu0 %v7372
  %7884 = vmatprep.subr.mxu0 %v7400
  %7885 = vmatpush1.msra.mxu0 %v7399
  %7886 = vmatprep.subr.mxu0 %v7427
  %7887 = vmatpush1.msra.mxu0 %v7426
  %7888 = vmatprep.subr.mxu0 %v7454
  %7889 = vmatpush1.msra.mxu0 %v7453
  %7890 = vmatprep.subr.mxu0 %v7481
  %7891 = vmatpush1.msra.mxu0 %v7480
  %7892 = vmatprep.subr.mxu0 %v7508
  %7893 = vmatpush1.msra.mxu0 %v7507
  %7894 = vmatprep.subr.mxu0 %v7535
  %7895 = vmatpush1.msra.mxu0 %v7534
  %7896 = vmatprep.subr.mxu0 0.0
  %7897 = vmatpush1.msra.mxu0 0.0
  %7898 = vmatprep.subr.mxu0 0.0
  %7899 = vmatpush1.msra.mxu0 0.0
  %7900 = vmatprep.subr.mxu0 0.0
  %7901 = vmatpush1.msra.mxu0 0.0
  %7902 = vmatprep.subr.mxu0 0.0
  %7903 = vmatpush1.msra.mxu0 0.0
  %7904 = vmatprep.subr.mxu0 0.0
  %7905 = vmatpush1.msra.mxu0 0.0
  %7906 = vmatprep.subr.mxu0 0.0
  %7907 = vmatpush1.msra.mxu0 0.0
  %7908 = vmatprep.subr.mxu0 0.0
  %7909 = vmatpush1.msra.mxu0 0.0
  %7910 = vmatprep.subr.mxu0 0.0
  %7911 = vmatpush1.msra.mxu0 0.0
  %7912 = vmatprep.subr.mxu0 0.0
  %7913 = vmatpush1.msra.mxu0 0.0
  %7914 = vmatprep.subr.mxu0 0.0
  %7915 = vmatpush1.msra.mxu0 0.0
  %7916 = vmatprep.subr.mxu0 0.0
  %7917 = vmatpush1.msra.mxu0 0.0
  %7918 = vmatprep.subr.mxu0 0.0
  %7919 = vmatpush1.msra.mxu0 0.0
  %7920 = vmatprep.subr.mxu0 0.0
  %7921 = vmatpush1.msra.mxu0 0.0
  %7922 = vmatprep.subr.mxu0 0.0
  %7923 = vmatpush1.msra.mxu0 0.0
  %7924 = vmatprep.subr.mxu0 0.0
  %7925 = vmatpush1.msra.mxu0 0.0
  %7926 = vmatprep.subr.mxu0 0.0
  %7927 = vmatpush1.msra.mxu0 0.0
  %7928 = vmatprep.subr.mxu0 0.0
  %7929 = vmatpush1.msra.mxu0 0.0
  %7930 = vmatprep.subr.mxu0 0.0
  %7931 = vmatpush1.msra.mxu0 0.0
  %7932 = vmatprep.subr.mxu0 0.0
  %7933 = vmatpush1.msra.mxu0 0.0
  %7934 = vmatprep.subr.mxu0 0.0
  %7935 = vmatpush1.msra.mxu0 0.0
  %7936 = vmatprep.subr.mxu0 0.0
  %7937 = vmatpush1.msra.mxu0 0.0
  %7938 = vmatprep.subr.mxu0 0.0
  %7939 = vmatpush1.msra.mxu0 0.0
  %7940 = vmatprep.subr.mxu0 0.0
  %7941 = vmatpush1.msra.mxu0 0.0
  %7942 = vmatprep.subr.mxu0 0.0
  %7943 = vmatpush1.msra.mxu0 0.0
  %7944 = vmatprep.subr.mxu0 0.0
  %7945 = vmatpush1.msra.mxu0 0.0
  %7946 = vmatprep.mubr.f32.mxu0 0.0
  %7947 = vmatmul.mubr.f32.gmra.mrb[0].mxu0 %v7569
  %v7948 = vpop.f32.mrb[0].mxu0
  %v7949 = vadd.f32 %v7560, %v7948
  %v7950 = vpop.f32.mrb[0].mxu0
  %v7951 = vadd.f32 %v7560, %v7950
  %7952 = vmatprep.mubr.f32.mxu0 0.0
  %7953 = vmatmul.mubr.f32.gmra.mrb[0].mxu0 %v7572
  %v7954 = vpop.f32.mrb[0].mxu0
  %v7955 = vadd.f32 %v7565, %v7954
  %v7956 = vpop.f32.mrb[0].mxu0
  %v7957 = vadd.f32 %v7565, %v7956
  %7958 = vdwg.mxu0
  %7959 = vmatprep.subr.mxu0 %v7375
  %7960 = vmatpush1.msra.mxu0 %v7374
  %7961 = vmatprep.subr.mxu0 %v7402
  %7962 = vmatpush1.msra.mxu0 %v7401
  %7963 = vmatprep.subr.mxu0 %v7429
  %7964 = vmatpush1.msra.mxu0 %v7428
  %7965 = vmatprep.subr.mxu0 %v7456
  %7966 = vmatpush1.msra.mxu0 %v7455
  %7967 = vmatprep.subr.mxu0 %v7483
  %7968 = vmatpush1.msra.mxu0 %v7482
  %7969 = vmatprep.subr.mxu0 %v7510
  %7970 = vmatpush1.msra.mxu0 %v7509
  %7971 = vmatprep.subr.mxu0 %v7537
  %7972 = vmatpush1.msra.mxu0 %v7536
  %7973 = vmatprep.subr.mxu0 0.0
  %7974 = vmatpush1.msra.mxu0 0.0
  %7975 = vmatprep.subr.mxu0 0.0
  %7976 = vmatpush1.msra.mxu0 0.0
  %7977 = vmatprep.subr.mxu0 0.0
  %7978 = vmatpush1.msra.mxu0 0.0
  %7979 = vmatprep.subr.mxu0 0.0
  %7980 = vmatpush1.msra.mxu0 0.0
  %7981 = vmatprep.subr.mxu0 0.0
  %7982 = vmatpush1.msra.mxu0 0.0
  %7983 = vmatprep.subr.mxu0 0.0
  %7984 = vmatpush1.msra.mxu0 0.0
  %7985 = vmatprep.subr.mxu0 0.0
  %7986 = vmatpush1.msra.mxu0 0.0
  %7987 = vmatprep.subr.mxu0 0.0
  %7988 = vmatpush1.msra.mxu0 0.0
  %7989 = vmatprep.subr.mxu0 0.0
  %7990 = vmatpush1.msra.mxu0 0.0
  %7991 = vmatprep.subr.mxu0 0.0
  %7992 = vmatpush1.msra.mxu0 0.0
  %7993 = vmatprep.subr.mxu0 0.0
  %7994 = vmatpush1.msra.mxu0 0.0
  %7995 = vmatprep.subr.mxu0 0.0
  %7996 = vmatpush1.msra.mxu0 0.0
  %7997 = vmatprep.subr.mxu0 0.0
  %7998 = vmatpush1.msra.mxu0 0.0
  %7999 = vmatprep.subr.mxu0 0.0
  %8000 = vmatpush1.msra.mxu0 0.0
  %8001 = vmatprep.subr.mxu0 0.0
  %8002 = vmatpush1.msra.mxu0 0.0
  %8003 = vmatprep.subr.mxu0 0.0
  %8004 = vmatpush1.msra.mxu0 0.0
  %8005 = vmatprep.subr.mxu0 0.0
  %8006 = vmatpush1.msra.mxu0 0.0
  %8007 = vmatprep.subr.mxu0 0.0
  %8008 = vmatpush1.msra.mxu0 0.0
  %8009 = vmatprep.subr.mxu0 0.0
  %8010 = vmatpush1.msra.mxu0 0.0
  %8011 = vmatprep.subr.mxu0 0.0
  %8012 = vmatpush1.msra.mxu0 0.0
  %8013 = vmatprep.subr.mxu0 0.0
  %8014 = vmatpush1.msra.mxu0 0.0
  %8015 = vmatprep.subr.mxu0 0.0
  %8016 = vmatpush1.msra.mxu0 0.0
  %8017 = vmatprep.subr.mxu0 0.0
  %8018 = vmatpush1.msra.mxu0 0.0
  %8019 = vmatprep.subr.mxu0 0.0
  %8020 = vmatpush1.msra.mxu0 0.0
  %8021 = vmatprep.subr.mxu0 0.0
  %8022 = vmatpush1.msra.mxu0 0.0
  %8023 = vmatprep.mubr.f32.mxu0 0.0
  %8024 = vmatmul.mubr.f32.gmra.mrb[0].mxu0 %v7569
  %v8025 = vpop.f32.mrb[0].mxu0
  %v8026 = vadd.f32 %v7560, %v8025
  %v8027 = vpop.f32.mrb[0].mxu0
  %v8028 = vadd.f32 %v7560, %v8027
  %8029 = vmatprep.mubr.f32.mxu0 0.0
  %8030 = vmatmul.mubr.f32.gmra.mrb[0].mxu0 %v7572
  %v8031 = vpop.f32.mrb[0].mxu0
  %v8032 = vadd.f32 %v7565, %v8031
  %v8033 = vpop.f32.mrb[0].mxu0
  %v8034 = vadd.f32 %v7565, %v8033
  %8035 = vdwg.mxu0
  %8036 = vmatprep.subr.mxu0 %v7377
  %8037 = vmatpush1.msra.mxu0 %v7376
  %8038 = vmatprep.subr.mxu0 %v7404
  %8039 = vmatpush1.msra.mxu0 %v7403
  %8040 = vmatprep.subr.mxu0 %v7431
  %8041 = vmatpush1.msra.mxu0 %v7430
  %8042 = vmatprep.subr.mxu0 %v7458
  %8043 = vmatpush1.msra.mxu0 %v7457
  %8044 = vmatprep.subr.mxu0 %v7485
  %8045 = vmatpush1.msra.mxu0 %v7484
  %8046 = vmatprep.subr.mxu0 %v7512
  %8047 = vmatpush1.msra.mxu0 %v7511
  %8048 = vmatprep.subr.mxu0 %v7539
  %8049 = vmatpush1.msra.mxu0 %v7538
  %8050 = vmatprep.subr.mxu0 0.0
  %8051 = vmatpush1.msra.mxu0 0.0
  %8052 = vmatprep.subr.mxu0 0.0
  %8053 = vmatpush1.msra.mxu0 0.0
  %8054 = vmatprep.subr.mxu0 0.0
  %8055 = vmatpush1.msra.mxu0 0.0
  %8056 = vmatprep.subr.mxu0 0.0
  %8057 = vmatpush1.msra.mxu0 0.0
  %8058 = vmatprep.subr.mxu0 0.0
  %8059 = vmatpush1.msra.mxu0 0.0
  %8060 = vmatprep.subr.mxu0 0.0
  %8061 = vmatpush1.msra.mxu0 0.0
  %8062 = vmatprep.subr.mxu0 0.0
  %8063 = vmatpush1.msra.mxu0 0.0
  %8064 = vmatprep.subr.mxu0 0.0
  %8065 = vmatpush1.msra.mxu0 0.0
  %8066 = vmatprep.subr.mxu0 0.0
  %8067 = vmatpush1.msra.mxu0 0.0
  %8068 = vmatprep.subr.mxu0 0.0
  %8069 = vmatpush1.msra.mxu0 0.0
  %8070 = vmatprep.subr.mxu0 0.0
  %8071 = vmatpush1.msra.mxu0 0.0
  %8072 = vmatprep.subr.mxu0 0.0
  %8073 = vmatpush1.msra.mxu0 0.0
  %8074 = vmatprep.subr.mxu0 0.0
  %8075 = vmatpush1.msra.mxu0 0.0
  %8076 = vmatprep.subr.mxu0 0.0
  %8077 = vmatpush1.msra.mxu0 0.0
  %8078 = vmatprep.subr.mxu0 0.0
  %8079 = vmatpush1.msra.mxu0 0.0
  %8080 = vmatprep.subr.mxu0 0.0
  %8081 = vmatpush1.msra.mxu0 0.0
  %8082 = vmatprep.subr.mxu0 0.0
  %8083 = vmatpush1.msra.mxu0 0.0
  %8084 = vmatprep.subr.mxu0 0.0
  %8085 = vmatpush1.msra.mxu0 0.0
  %8086 = vmatprep.subr.mxu0 0.0
  %8087 = vmatpush1.msra.mxu0 0.0
  %8088 = vmatprep.subr.mxu0 0.0
  %8089 = vmatpush1.msra.mxu0 0.0
  %8090 = vmatprep.subr.mxu0 0.0
  %8091 = vmatpush1.msra.mxu0 0.0
  %8092 = vmatprep.subr.mxu0 0.0
  %8093 = vmatpush1.msra.mxu0 0.0
  %8094 = vmatprep.subr.mxu0 0.0
  %8095 = vmatpush1.msra.mxu0 0.0
  %8096 = vmatprep.subr.mxu0 0.0
  %8097 = vmatpush1.msra.mxu0 0.0
  %8098 = vmatprep.subr.mxu0 0.0
  %8099 = vmatpush1.msra.mxu0 0.0
  %8100 = vmatprep.mubr.f32.mxu0 0.0
  %8101 = vmatmul.mubr.f32.gmra.mrb[0].mxu0 %v7569
  %v8102 = vpop.f32.mrb[0].mxu0
  %v8103 = vadd.f32 %v7560, %v8102
  %v8104 = vpop.f32.mrb[0].mxu0
  %v8105 = vadd.f32 %v7560, %v8104
  %8106 = vmatprep.mubr.f32.mxu0 0.0
  %8107 = vmatmul.mubr.f32.gmra.mrb[0].mxu0 %v7572
  %v8108 = vpop.f32.mrb[0].mxu0
  %v8109 = vadd.f32 %v7565, %v8108
  %v8110 = vpop.f32.mrb[0].mxu0
  %v8111 = vadd.f32 %v7565, %v8110
  %8112 = vdwg.mxu0
  %8113 = vmatprep.subr.mxu0 %v7379
  %8114 = vmatpush1.msra.mxu0 %v7378
  %8115 = vmatprep.subr.mxu0 %v7406
  %8116 = vmatpush1.msra.mxu0 %v7405
  %8117 = vmatprep.subr.mxu0 %v7433
  %8118 = vmatpush1.msra.mxu0 %v7432
  %8119 = vmatprep.subr.mxu0 %v7460
  %8120 = vmatpush1.msra.mxu0 %v7459
  %8121 = vmatprep.subr.mxu0 %v7487
  %8122 = vmatpush1.msra.mxu0 %v7486
  %8123 = vmatprep.subr.mxu0 %v7514
  %8124 = vmatpush1.msra.mxu0 %v7513
  %8125 = vmatprep.subr.mxu0 %v7541
  %8126 = vmatpush1.msra.mxu0 %v7540
  %8127 = vmatprep.subr.mxu0 0.0
  %8128 = vmatpush1.msra.mxu0 0.0
  %8129 = vmatprep.subr.mxu0 0.0
  %8130 = vmatpush1.msra.mxu0 0.0
  %8131 = vmatprep.subr.mxu0 0.0
  %8132 = vmatpush1.msra.mxu0 0.0
  %8133 = vmatprep.subr.mxu0 0.0
  %8134 = vmatpush1.msra.mxu0 0.0
  %8135 = vmatprep.subr.mxu0 0.0
  %8136 = vmatpush1.msra.mxu0 0.0
  %8137 = vmatprep.subr.mxu0 0.0
  %8138 = vmatpush1.msra.mxu0 0.0
  %8139 = vmatprep.subr.mxu0 0.0
  %8140 = vmatpush1.msra.mxu0 0.0
  %8141 = vmatprep.subr.mxu0 0.0
  %8142 = vmatpush1.msra.mxu0 0.0
  %8143 = vmatprep.subr.mxu0 0.0
  %8144 = vmatpush1.msra.mxu0 0.0
  %8145 = vmatprep.subr.mxu0 0.0
  %8146 = vmatpush1.msra.mxu0 0.0
  %8147 = vmatprep.subr.mxu0 0.0
  %8148 = vmatpush1.msra.mxu0 0.0
  %8149 = vmatprep.subr.mxu0 0.0
  %8150 = vmatpush1.msra.mxu0 0.0
  %8151 = vmatprep.subr.mxu0 0.0
  %8152 = vmatpush1.msra.mxu0 0.0
  %8153 = vmatprep.subr.mxu0 0.0
  %8154 = vmatpush1.msra.mxu0 0.0
  %8155 = vmatprep.subr.mxu0 0.0
  %8156 = vmatpush1.msra.mxu0 0.0
  %8157 = vmatprep.subr.mxu0 0.0
  %8158 = vmatpush1.msra.mxu0 0.0
  %8159 = vmatprep.subr.mxu0 0.0
  %8160 = vmatpush1.msra.mxu0 0.0
  %8161 = vmatprep.subr.mxu0 0.0
  %8162 = vmatpush1.msra.mxu0 0.0
  %8163 = vmatprep.subr.mxu0 0.0
  %8164 = vmatpush1.msra.mxu0 0.0
  %8165 = vmatprep.subr.mxu0 0.0
  %8166 = vmatpush1.msra.mxu0 0.0
  %8167 = vmatprep.subr.mxu0 0.0
  %8168 = vmatpush1.msra.mxu0 0.0
  %8169 = vmatprep.subr.mxu0 0.0
  %8170 = vmatpush1.msra.mxu0 0.0
  %8171 = vmatprep.subr.mxu0 0.0
  %8172 = vmatpush1.msra.mxu0 0.0
  %8173 = vmatprep.subr.mxu0 0.0
  %8174 = vmatpush1.msra.mxu0 0.0
  %8175 = vmatprep.subr.mxu0 0.0
  %8176 = vmatpush1.msra.mxu0 0.0
  %8177 = vmatprep.mubr.f32.mxu0 0.0
  %8178 = vmatmul.mubr.f32.gmra.mrb[0].mxu0 %v7569
  %v8179 = vpop.f32.mrb[0].mxu0
  %v8180 = vadd.f32 %v7560, %v8179
  %v8181 = vpop.f32.mrb[0].mxu0
  %v8182 = vadd.f32 %v7560, %v8181
  %8183 = vmatprep.mubr.f32.mxu0 0.0
  %8184 = vmatmul.mubr.f32.gmra.mrb[0].mxu0 %v7572
  %v8185 = vpop.f32.mrb[0].mxu0
  %v8186 = vadd.f32 %v7565, %v8185
  %v8187 = vpop.f32.mrb[0].mxu0
  %v8188 = vadd.f32 %v7565, %v8187
  %8189 = vdwg.mxu0
  %8190 = vmatprep.subr.mxu0 %v7381
  %8191 = vmatpush1.msra.mxu0 %v7380
  %8192 = vmatprep.subr.mxu0 %v7408
  %8193 = vmatpush1.msra.mxu0 %v7407
  %8194 = vmatprep.subr.mxu0 %v7435
  %8195 = vmatpush1.msra.mxu0 %v7434
  %8196 = vmatprep.subr.mxu0 %v7462
  %8197 = vmatpush1.msra.mxu0 %v7461
  %8198 = vmatprep.subr.mxu0 %v7489
  %8199 = vmatpush1.msra.mxu0 %v7488
  %8200 = vmatprep.subr.mxu0 %v7516
  %8201 = vmatpush1.msra.mxu0 %v7515
  %8202 = vmatprep.subr.mxu0 %v7543
  %8203 = vmatpush1.msra.mxu0 %v7542
  %8204 = vmatprep.subr.mxu0 0.0
  %8205 = vmatpush1.msra.mxu0 0.0
  %8206 = vmatprep.subr.mxu0 0.0
  %8207 = vmatpush1.msra.mxu0 0.0
  %8208 = vmatprep.subr.mxu0 0.0
  %8209 = vmatpush1.msra.mxu0 0.0
  %8210 = vmatprep.subr.mxu0 0.0
  %8211 = vmatpush1.msra.mxu0 0.0
  %8212 = vmatprep.subr.mxu0 0.0
  %8213 = vmatpush1.msra.mxu0 0.0
  %8214 = vmatprep.subr.mxu0 0.0
  %8215 = vmatpush1.msra.mxu0 0.0
  %8216 = vmatprep.subr.mxu0 0.0
  %8217 = vmatpush1.msra.mxu0 0.0
  %8218 = vmatprep.subr.mxu0 0.0
  %8219 = vmatpush1.msra.mxu0 0.0
  %8220 = vmatprep.subr.mxu0 0.0
  %8221 = vmatpush1.msra.mxu0 0.0
  %8222 = vmatprep.subr.mxu0 0.0
  %8223 = vmatpush1.msra.mxu0 0.0
  %8224 = vmatprep.subr.mxu0 0.0
  %8225 = vmatpush1.msra.mxu0 0.0
  %8226 = vmatprep.subr.mxu0 0.0
  %8227 = vmatpush1.msra.mxu0 0.0
  %8228 = vmatprep.subr.mxu0 0.0
  %8229 = vmatpush1.msra.mxu0 0.0
  %8230 = vmatprep.subr.mxu0 0.0
  %8231 = vmatpush1.msra.mxu0 0.0
  %8232 = vmatprep.subr.mxu0 0.0
  %8233 = vmatpush1.msra.mxu0 0.0
  %8234 = vmatprep.subr.mxu0 0.0
  %8235 = vmatpush1.msra.mxu0 0.0
  %8236 = vmatprep.subr.mxu0 0.0
  %8237 = vmatpush1.msra.mxu0 0.0
  %8238 = vmatprep.subr.mxu0 0.0
  %8239 = vmatpush1.msra.mxu0 0.0
  %8240 = vmatprep.subr.mxu0 0.0
  %8241 = vmatpush1.msra.mxu0 0.0
  %8242 = vmatprep.subr.mxu0 0.0
  %8243 = vmatpush1.msra.mxu0 0.0
  %8244 = vmatprep.subr.mxu0 0.0
  %8245 = vmatpush1.msra.mxu0 0.0
  %8246 = vmatprep.subr.mxu0 0.0
  %8247 = vmatpush1.msra.mxu0 0.0
  %8248 = vmatprep.subr.mxu0 0.0
  %8249 = vmatpush1.msra.mxu0 0.0
  %8250 = vmatprep.subr.mxu0 0.0
  %8251 = vmatpush1.msra.mxu0 0.0
  %8252 = vmatprep.subr.mxu0 0.0
  %8253 = vmatpush1.msra.mxu0 0.0
  %8254 = vmatprep.mubr.f32.mxu0 0.0
  %8255 = vmatmul.mubr.f32.gmra.mrb[0].mxu0 %v7569
  %v8256 = vpop.f32.mrb[0].mxu0
  %v8257 = vadd.f32 %v7560, %v8256
  %v8258 = vpop.f32.mrb[0].mxu0
  %v8259 = vadd.f32 %v7560, %v8258
  %8260 = vmatprep.mubr.f32.mxu0 0.0
  %8261 = vmatmul.mubr.f32.gmra.mrb[0].mxu0 %v7572
  %v8262 = vpop.f32.mrb[0].mxu0
  %v8263 = vadd.f32 %v7565, %v8262
  %v8264 = vpop.f32.mrb[0].mxu0
  %v8265 = vadd.f32 %v7565, %v8264
  %8266 = vdwg.mxu0
  %8267 = vmatprep.subr.mxu0 %v7383
  %8268 = vmatpush1.msra.mxu0 %v7382
  %8269 = vmatprep.subr.mxu0 %v7410
  %8270 = vmatpush1.msra.mxu0 %v7409
  %8271 = vmatprep.subr.mxu0 %v7437
  %8272 = vmatpush1.msra.mxu0 %v7436
  %8273 = vmatprep.subr.mxu0 %v7464
  %8274 = vmatpush1.msra.mxu0 %v7463
  %8275 = vmatprep.subr.mxu0 %v7491
  %8276 = vmatpush1.msra.mxu0 %v7490
  %8277 = vmatprep.subr.mxu0 %v7518
  %8278 = vmatpush1.msra.mxu0 %v7517
  %8279 = vmatprep.subr.mxu0 %v7545
  %8280 = vmatpush1.msra.mxu0 %v7544
  %8281 = vmatprep.subr.mxu0 0.0
  %8282 = vmatpush1.msra.mxu0 0.0
  %8283 = vmatprep.subr.mxu0 0.0
  %8284 = vmatpush1.msra.mxu0 0.0
  %8285 = vmatprep.subr.mxu0 0.0
  %8286 = vmatpush1.msra.mxu0 0.0
  %8287 = vmatprep.subr.mxu0 0.0
  %8288 = vmatpush1.msra.mxu0 0.0
  %8289 = vmatprep.subr.mxu0 0.0
  %8290 = vmatpush1.msra.mxu0 0.0
  %8291 = vmatprep.subr.mxu0 0.0
  %8292 = vmatpush1.msra.mxu0 0.0
  %8293 = vmatprep.subr.mxu0 0.0
  %8294 = vmatpush1.msra.mxu0 0.0
  %8295 = vmatprep.subr.mxu0 0.0
  %8296 = vmatpush1.msra.mxu0 0.0
  %8297 = vmatprep.subr.mxu0 0.0
  %8298 = vmatpush1.msra.mxu0 0.0
  %8299 = vmatprep.subr.mxu0 0.0
  %8300 = vmatpush1.msra.mxu0 0.0
  %8301 = vmatprep.subr.mxu0 0.0
  %8302 = vmatpush1.msra.mxu0 0.0
  %8303 = vmatprep.subr.mxu0 0.0
  %8304 = vmatpush1.msra.mxu0 0.0
  %8305 = vmatprep.subr.mxu0 0.0
  %8306 = vmatpush1.msra.mxu0 0.0
  %8307 = vmatprep.subr.mxu0 0.0
  %8308 = vmatpush1.msra.mxu0 0.0
  %8309 = vmatprep.subr.mxu0 0.0
  %8310 = vmatpush1.msra.mxu0 0.0
  %8311 = vmatprep.subr.mxu0 0.0
  %8312 = vmatpush1.msra.mxu0 0.0
  %8313 = vmatprep.subr.mxu0 0.0
  %8314 = vmatpush1.msra.mxu0 0.0
  %8315 = vmatprep.subr.mxu0 0.0
  %8316 = vmatpush1.msra.mxu0 0.0
  %8317 = vmatprep.subr.mxu0 0.0
  %8318 = vmatpush1.msra.mxu0 0.0
  %8319 = vmatprep.subr.mxu0 0.0
  %8320 = vmatpush1.msra.mxu0 0.0
  %8321 = vmatprep.subr.mxu0 0.0
  %8322 = vmatpush1.msra.mxu0 0.0
  %8323 = vmatprep.subr.mxu0 0.0
  %8324 = vmatpush1.msra.mxu0 0.0
  %8325 = vmatprep.subr.mxu0 0.0
  %8326 = vmatpush1.msra.mxu0 0.0
  %8327 = vmatprep.subr.mxu0 0.0
  %8328 = vmatpush1.msra.mxu0 0.0
  %8329 = vmatprep.subr.mxu0 0.0
  %8330 = vmatpush1.msra.mxu0 0.0
  %8331 = vmatprep.mubr.f32.mxu0 0.0
  %8332 = vmatmul.mubr.f32.gmra.mrb[0].mxu0 %v7569
  %v8333 = vpop.f32.mrb[0].mxu0
  %v8334 = vadd.f32 %v7560, %v8333
  %v8335 = vpop.f32.mrb[0].mxu0
  %v8336 = vadd.f32 %v7560, %v8335
  %8337 = vmatprep.mubr.f32.mxu0 0.0
  %8338 = vmatmul.mubr.f32.gmra.mrb[0].mxu0 %v7572
  %v8339 = vpop.f32.mrb[0].mxu0
  %v8340 = vadd.f32 %v7565, %v8339
  %v8341 = vpop.f32.mrb[0].mxu0
  %v8342 = vadd.f32 %v7565, %v8341
  %8343 = vdwg.mxu0
  %8344 = vmatprep.subr.mxu0 %v7385
  %8345 = vmatpush1.msra.mxu0 %v7384
  %8346 = vmatprep.subr.mxu0 %v7412
  %8347 = vmatpush1.msra.mxu0 %v7411
  %8348 = vmatprep.subr.mxu0 %v7439
  %8349 = vmatpush1.msra.mxu0 %v7438
  %8350 = vmatprep.subr.mxu0 %v7466
  %8351 = vmatpush1.msra.mxu0 %v7465
  %8352 = vmatprep.subr.mxu0 %v7493
  %8353 = vmatpush1.msra.mxu0 %v7492
  %8354 = vmatprep.subr.mxu0 %v7520
  %8355 = vmatpush1.msra.mxu0 %v7519
  %8356 = vmatprep.subr.mxu0 %v7547
  %8357 = vmatpush1.msra.mxu0 %v7546
  %8358 = vmatprep.subr.mxu0 0.0
  %8359 = vmatpush1.msra.mxu0 0.0
  %8360 = vmatprep.subr.mxu0 0.0
  %8361 = vmatpush1.msra.mxu0 0.0
  %8362 = vmatprep.subr.mxu0 0.0
  %8363 = vmatpush1.msra.mxu0 0.0
  %8364 = vmatprep.subr.mxu0 0.0
  %8365 = vmatpush1.msra.mxu0 0.0
  %8366 = vmatprep.subr.mxu0 0.0
  %8367 = vmatpush1.msra.mxu0 0.0
  %8368 = vmatprep.subr.mxu0 0.0
  %8369 = vmatpush1.msra.mxu0 0.0
  %8370 = vmatprep.subr.mxu0 0.0
  %8371 = vmatpush1.msra.mxu0 0.0
  %8372 = vmatprep.subr.mxu0 0.0
  %8373 = vmatpush1.msra.mxu0 0.0
  %8374 = vmatprep.subr.mxu0 0.0
  %8375 = vmatpush1.msra.mxu0 0.0
  %8376 = vmatprep.subr.mxu0 0.0
  %8377 = vmatpush1.msra.mxu0 0.0
  %8378 = vmatprep.subr.mxu0 0.0
  %8379 = vmatpush1.msra.mxu0 0.0
  %8380 = vmatprep.subr.mxu0 0.0
  %8381 = vmatpush1.msra.mxu0 0.0
  %8382 = vmatprep.subr.mxu0 0.0
  %8383 = vmatpush1.msra.mxu0 0.0
  %8384 = vmatprep.subr.mxu0 0.0
  %8385 = vmatpush1.msra.mxu0 0.0
  %8386 = vmatprep.subr.mxu0 0.0
  %8387 = vmatpush1.msra.mxu0 0.0
  %8388 = vmatprep.subr.mxu0 0.0
  %8389 = vmatpush1.msra.mxu0 0.0
  %8390 = vmatprep.subr.mxu0 0.0
  %8391 = vmatpush1.msra.mxu0 0.0
  %8392 = vmatprep.subr.mxu0 0.0
  %8393 = vmatpush1.msra.mxu0 0.0
  %8394 = vmatprep.subr.mxu0 0.0
  %8395 = vmatpush1.msra.mxu0 0.0
  %8396 = vmatprep.subr.mxu0 0.0
  %8397 = vmatpush1.msra.mxu0 0.0
  %8398 = vmatprep.subr.mxu0 0.0
  %8399 = vmatpush1.msra.mxu0 0.0
  %8400 = vmatprep.subr.mxu0 0.0
  %8401 = vmatpush1.msra.mxu0 0.0
  %8402 = vmatprep.subr.mxu0 0.0
  %8403 = vmatpush1.msra.mxu0 0.0
  %8404 = vmatprep.subr.mxu0 0.0
  %8405 = vmatpush1.msra.mxu0 0.0
  %8406 = vmatprep.subr.mxu0 0.0
  %8407 = vmatpush1.msra.mxu0 0.0
  %8408 = vmatprep.mubr.f32.mxu0 0.0
  %8409 = vmatmul.mubr.f32.gmra.mrb[0].mxu0 %v7569
  %v8410 = vpop.f32.mrb[0].mxu0
  %v8411 = vadd.f32 %v7560, %v8410
  %v8412 = vpop.f32.mrb[0].mxu0
  %v8413 = vadd.f32 %v7560, %v8412
  %8414 = vmatprep.mubr.f32.mxu0 0.0
  %8415 = vmatmul.mubr.f32.gmra.mrb[0].mxu0 %v7572
  %v8416 = vpop.f32.mrb[0].mxu0
  %v8417 = vadd.f32 %v7565, %v8416
  %v8418 = vpop.f32.mrb[0].mxu0
  %v8419 = vadd.f32 %v7565, %v8418
  %8420 = vdwg.mxu0
  %8421 = vmatprep.subr.mxu0 %v7387
  %8422 = vmatpush1.msra.mxu0 %v7386
  %8423 = vmatprep.subr.mxu0 %v7414
  %8424 = vmatpush1.msra.mxu0 %v7413
  %8425 = vmatprep.subr.mxu0 %v7441
  %8426 = vmatpush1.msra.mxu0 %v7440
  %8427 = vmatprep.subr.mxu0 %v7468
  %8428 = vmatpush1.msra.mxu0 %v7467
  %8429 = vmatprep.subr.mxu0 %v7495
  %8430 = vmatpush1.msra.mxu0 %v7494
  %8431 = vmatprep.subr.mxu0 %v7522
  %8432 = vmatpush1.msra.mxu0 %v7521
  %8433 = vmatprep.subr.mxu0 %v7549
  %8434 = vmatpush1.msra.mxu0 %v7548
  %8435 = vmatprep.subr.mxu0 0.0
  %8436 = vmatpush1.msra.mxu0 0.0
  %8437 = vmatprep.subr.mxu0 0.0
  %8438 = vmatpush1.msra.mxu0 0.0
  %8439 = vmatprep.subr.mxu0 0.0
  %8440 = vmatpush1.msra.mxu0 0.0
  %8441 = vmatprep.subr.mxu0 0.0
  %8442 = vmatpush1.msra.mxu0 0.0
  %8443 = vmatprep.subr.mxu0 0.0
  %8444 = vmatpush1.msra.mxu0 0.0
  %8445 = vmatprep.subr.mxu0 0.0
  %8446 = vmatpush1.msra.mxu0 0.0
  %8447 = vmatprep.subr.mxu0 0.0
  %8448 = vmatpush1.msra.mxu0 0.0
  %8449 = vmatprep.subr.mxu0 0.0
  %8450 = vmatpush1.msra.mxu0 0.0
  %8451 = vmatprep.subr.mxu0 0.0
  %8452 = vmatpush1.msra.mxu0 0.0
  %8453 = vmatprep.subr.mxu0 0.0
  %8454 = vmatpush1.msra.mxu0 0.0
  %8455 = vmatprep.subr.mxu0 0.0
  %8456 = vmatpush1.msra.mxu0 0.0
  %8457 = vmatprep.subr.mxu0 0.0
  %8458 = vmatpush1.msra.mxu0 0.0
  %8459 = vmatprep.subr.mxu0 0.0
  %8460 = vmatpush1.msra.mxu0 0.0
  %8461 = vmatprep.subr.mxu0 0.0
  %8462 = vmatpush1.msra.mxu0 0.0
  %8463 = vmatprep.subr.mxu0 0.0
  %8464 = vmatpush1.msra.mxu0 0.0
  %8465 = vmatprep.subr.mxu0 0.0
  %8466 = vmatpush1.msra.mxu0 0.0
  %8467 = vmatprep.subr.mxu0 0.0
  %8468 = vmatpush1.msra.mxu0 0.0
  %8469 = vmatprep.subr.mxu0 0.0
  %8470 = vmatpush1.msra.mxu0 0.0
  %8471 = vmatprep.subr.mxu0 0.0
  %8472 = vmatpush1.msra.mxu0 0.0
  %8473 = vmatprep.subr.mxu0 0.0
  %8474 = vmatpush1.msra.mxu0 0.0
  %8475 = vmatprep.subr.mxu0 0.0
  %8476 = vmatpush1.msra.mxu0 0.0
  %8477 = vmatprep.subr.mxu0 0.0
  %8478 = vmatpush1.msra.mxu0 0.0
  %8479 = vmatprep.subr.mxu0 0.0
  %8480 = vmatpush1.msra.mxu0 0.0
  %8481 = vmatprep.subr.mxu0 0.0
  %8482 = vmatpush1.msra.mxu0 0.0
  %8483 = vmatprep.subr.mxu0 0.0
  %8484 = vmatpush1.msra.mxu0 0.0
  %8485 = vmatprep.mubr.f32.mxu0 0.0
  %8486 = vmatmul.mubr.f32.gmra.mrb[0].mxu0 %v7569
  %v8487 = vpop.f32.mrb[0].mxu0
  %v8488 = vadd.f32 %v7560, %v8487
  %v8489 = vpop.f32.mrb[0].mxu0
  %v8490 = vadd.f32 %v7560, %v8489
  %8491 = vmatprep.mubr.f32.mxu0 0.0
  %8492 = vmatmul.mubr.f32.gmra.mrb[0].mxu0 %v7572
  %v8493 = vpop.f32.mrb[0].mxu0
  %v8494 = vadd.f32 %v7565, %v8493
  %v8495 = vpop.f32.mrb[0].mxu0
  %v8496 = vadd.f32 %v7565, %v8495
  %8497 = vdwg.mxu0
  %8498 = vmatprep.subr.mxu0 %v7389
  %8499 = vmatpush1.msra.mxu0 %v7388
  %8500 = vmatprep.subr.mxu0 %v7416
  %8501 = vmatpush1.msra.mxu0 %v7415
  %8502 = vmatprep.subr.mxu0 %v7443
  %8503 = vmatpush1.msra.mxu0 %v7442
  %8504 = vmatprep.subr.mxu0 %v7470
  %8505 = vmatpush1.msra.mxu0 %v7469
  %8506 = vmatprep.subr.mxu0 %v7497
  %8507 = vmatpush1.msra.mxu0 %v7496
  %8508 = vmatprep.subr.mxu0 %v7524
  %8509 = vmatpush1.msra.mxu0 %v7523
  %8510 = vmatprep.subr.mxu0 %v7551
  %8511 = vmatpush1.msra.mxu0 %v7550
  %8512 = vmatprep.subr.mxu0 0.0
  %8513 = vmatpush1.msra.mxu0 0.0
  %8514 = vmatprep.subr.mxu0 0.0
  %8515 = vmatpush1.msra.mxu0 0.0
  %8516 = vmatprep.subr.mxu0 0.0
  %8517 = vmatpush1.msra.mxu0 0.0
  %8518 = vmatprep.subr.mxu0 0.0
  %8519 = vmatpush1.msra.mxu0 0.0
  %8520 = vmatprep.subr.mxu0 0.0
  %8521 = vmatpush1.msra.mxu0 0.0
  %8522 = vmatprep.subr.mxu0 0.0
  %8523 = vmatpush1.msra.mxu0 0.0
  %8524 = vmatprep.subr.mxu0 0.0
  %8525 = vmatpush1.msra.mxu0 0.0
  %8526 = vmatprep.subr.mxu0 0.0
  %8527 = vmatpush1.msra.mxu0 0.0
  %8528 = vmatprep.subr.mxu0 0.0
  %8529 = vmatpush1.msra.mxu0 0.0
  %8530 = vmatprep.subr.mxu0 0.0
  %8531 = vmatpush1.msra.mxu0 0.0
  %8532 = vmatprep.subr.mxu0 0.0
  %8533 = vmatpush1.msra.mxu0 0.0
  %8534 = vmatprep.subr.mxu0 0.0
  %8535 = vmatpush1.msra.mxu0 0.0
  %8536 = vmatprep.subr.mxu0 0.0
  %8537 = vmatpush1.msra.mxu0 0.0
  %8538 = vmatprep.subr.mxu0 0.0
  %8539 = vmatpush1.msra.mxu0 0.0
  %8540 = vmatprep.subr.mxu0 0.0
  %8541 = vmatpush1.msra.mxu0 0.0
  %8542 = vmatprep.subr.mxu0 0.0
  %8543 = vmatpush1.msra.mxu0 0.0
  %8544 = vmatprep.subr.mxu0 0.0
  %8545 = vmatpush1.msra.mxu0 0.0
  %8546 = vmatprep.subr.mxu0 0.0
  %8547 = vmatpush1.msra.mxu0 0.0
  %8548 = vmatprep.subr.mxu0 0.0
  %8549 = vmatpush1.msra.mxu0 0.0
  %8550 = vmatprep.subr.mxu0 0.0
  %8551 = vmatpush1.msra.mxu0 0.0
  %8552 = vmatprep.subr.mxu0 0.0
  %8553 = vmatpush1.msra.mxu0 0.0
  %8554 = vmatprep.subr.mxu0 0.0
  %8555 = vmatpush1.msra.mxu0 0.0
  %8556 = vmatprep.subr.mxu0 0.0
  %8557 = vmatpush1.msra.mxu0 0.0
  %8558 = vmatprep.subr.mxu0 0.0
  %8559 = vmatpush1.msra.mxu0 0.0
  %8560 = vmatprep.subr.mxu0 0.0
  %8561 = vmatpush1.msra.mxu0 0.0
  %8562 = vmatprep.mubr.f32.mxu0 0.0
  %8563 = vmatmul.mubr.f32.gmra.mrb[0].mxu0 %v7569
  %v8564 = vpop.f32.mrb[0].mxu0
  %v8565 = vadd.f32 %v7560, %v8564
  %v8566 = vpop.f32.mrb[0].mxu0
  %v8567 = vadd.f32 %v7560, %v8566
  %8568 = vmatprep.mubr.f32.mxu0 0.0
  %8569 = vmatmul.mubr.f32.gmra.mrb[0].mxu0 %v7572
  %v8570 = vpop.f32.mrb[0].mxu0
  %v8571 = vadd.f32 %v7565, %v8570
  %v8572 = vpop.f32.mrb[0].mxu0
  %v8573 = vadd.f32 %v7565, %v8572
  %8574 = vdwg.mxu0
  %8575 = vmatprep.subr.mxu0 0.0
  %8576 = vmatpush1.msra.mxu0 %v7390
  %8577 = vmatprep.subr.mxu0 0.0
  %8578 = vmatpush1.msra.mxu0 %v7417
  %8579 = vmatprep.subr.mxu0 0.0
  %8580 = vmatpush1.msra.mxu0 %v7444
  %8581 = vmatprep.subr.mxu0 0.0
  %8582 = vmatpush1.msra.mxu0 %v7471
  %8583 = vmatprep.subr.mxu0 0.0
  %8584 = vmatpush1.msra.mxu0 %v7498
  %8585 = vmatprep.subr.mxu0 0.0
  %8586 = vmatpush1.msra.mxu0 %v7525
  %8587 = vmatprep.subr.mxu0 0.0
  %8588 = vmatpush1.msra.mxu0 %v7552
  %8589 = vmatprep.subr.mxu0 0.0
  %8590 = vmatpush1.msra.mxu0 0.0
  %8591 = vmatprep.subr.mxu0 0.0
  %8592 = vmatpush1.msra.mxu0 0.0
  %8593 = vmatprep.subr.mxu0 0.0
  %8594 = vmatpush1.msra.mxu0 0.0
  %8595 = vmatprep.subr.mxu0 0.0
  %8596 = vmatpush1.msra.mxu0 0.0
  %8597 = vmatprep.subr.mxu0 0.0
  %8598 = vmatpush1.msra.mxu0 0.0
  %8599 = vmatprep.subr.mxu0 0.0
  %8600 = vmatpush1.msra.mxu0 0.0
  %8601 = vmatprep.subr.mxu0 0.0
  %8602 = vmatpush1.msra.mxu0 0.0
  %8603 = vmatprep.subr.mxu0 0.0
  %8604 = vmatpush1.msra.mxu0 0.0
  %8605 = vmatprep.subr.mxu0 0.0
  %8606 = vmatpush1.msra.mxu0 0.0
  %8607 = vmatprep.subr.mxu0 0.0
  %8608 = vmatpush1.msra.mxu0 0.0
  %8609 = vmatprep.subr.mxu0 0.0
  %8610 = vmatpush1.msra.mxu0 0.0
  %8611 = vmatprep.subr.mxu0 0.0
  %8612 = vmatpush1.msra.mxu0 0.0
  %8613 = vmatprep.subr.mxu0 0.0
  %8614 = vmatpush1.msra.mxu0 0.0
  %8615 = vmatprep.subr.mxu0 0.0
  %8616 = vmatpush1.msra.mxu0 0.0
  %8617 = vmatprep.subr.mxu0 0.0
  %8618 = vmatpush1.msra.mxu0 0.0
  %8619 = vmatprep.subr.mxu0 0.0
  %8620 = vmatpush1.msra.mxu0 0.0
  %8621 = vmatprep.subr.mxu0 0.0
  %8622 = vmatpush1.msra.mxu0 0.0
  %8623 = vmatprep.subr.mxu0 0.0
  %8624 = vmatpush1.msra.mxu0 0.0
  %8625 = vmatprep.subr.mxu0 0.0
  %8626 = vmatpush1.msra.mxu0 0.0
  %8627 = vmatprep.subr.mxu0 0.0
  %8628 = vmatpush1.msra.mxu0 0.0
  %8629 = vmatprep.subr.mxu0 0.0
  %8630 = vmatpush1.msra.mxu0 0.0
  %8631 = vmatprep.subr.mxu0 0.0
  %8632 = vmatpush1.msra.mxu0 0.0
  %8633 = vmatprep.subr.mxu0 0.0
  %8634 = vmatpush1.msra.mxu0 0.0
  %8635 = vmatprep.subr.mxu0 0.0
  %8636 = vmatpush1.msra.mxu0 0.0
  %8637 = vmatprep.subr.mxu0 0.0
  %8638 = vmatpush1.msra.mxu0 0.0
  %8639 = vmatprep.mubr.f32.mxu0 0.0
  %8640 = vmatmul.mubr.f32.gmra.mrb[0].mxu0 %v7569
  %v8641 = vpop.f32.mrb[0].mxu0
  %v8642 = vadd.f32 %v7560, %v8641
  %v8643 = vpop.f32.mrb[0].mxu0
  %8644 = vmatprep.mubr.f32.mxu0 0.0
  %8645 = vmatmul.mubr.f32.gmra.mrb[0].mxu0 %v7572
  %v8646 = vpop.f32.mrb[0].mxu0
  %v8647 = vadd.f32 %v7565, %v8646
  %v8648 = vpop.f32.mrb[0].mxu0
  %8649 = vdwg.mxu0
  %v8650 = vmax.f32 %v7641, 0.0
  %v8651 = vmax.f32 %v7643, 0.0
  %v8652 = vmax.f32 %v7718, 0.0
  %v8653 = vmax.f32 %v7720, 0.0
  %v8654 = vmax.f32 %v7795, 0.0
  %v8655 = vmax.f32 %v7797, 0.0
  %v8656 = vmax.f32 %v7872, 0.0
  %v8657 = vmax.f32 %v7874, 0.0
  %v8658 = vmax.f32 %v7949, 0.0
  %v8659 = vmax.f32 %v7951, 0.0
  %v8660 = vmax.f32 %v8026, 0.0
  %v8661 = vmax.f32 %v8028, 0.0
  %v8662 = vmax.f32 %v8103, 0.0
  %v8663 = vmax.f32 %v8105, 0.0
  %v8664 = vmax.f32 %v8180, 0.0
  %v8665 = vmax.f32 %v8182, 0.0
  %v8666 = vmax.f32 %v8257, 0.0
  %v8667 = vmax.f32 %v8259, 0.0
  %v8668 = vmax.f32 %v8334, 0.0
  %v8669 = vmax.f32 %v8336, 0.0
  %v8670 = vmax.f32 %v8411, 0.0
  %v8671 = vmax.f32 %v8413, 0.0
  %v8672 = vmax.f32 %v8488, 0.0
  %v8673 = vmax.f32 %v8490, 0.0
  %v8674 = vmax.f32 %v8565, 0.0
  %v8675 = vmax.f32 %v8567, 0.0
  %v8676 = vmax.f32 %v8642, 0.0
  %v8677 = vmax.f32 %v7647, 0.0
  %v8678 = vmax.f32 %v7649, 0.0
  %v8679 = vmax.f32 %v7724, 0.0
  %v8680 = vmax.f32 %v7726, 0.0
  %v8681 = vmax.f32 %v7801, 0.0
  %v8682 = vmax.f32 %v7803, 0.0
  %v8683 = vmax.f32 %v7878, 0.0
  %v8684 = vmax.f32 %v7880, 0.0
  %v8685 = vmax.f32 %v7955, 0.0
  %v8686 = vmax.f32 %v7957, 0.0
  %v8687 = vmax.f32 %v8032, 0.0
  %v8688 = vmax.f32 %v8034, 0.0
  %v8689 = vmax.f32 %v8109, 0.0
  %v8690 = vmax.f32 %v8111, 0.0
  %v8691 = vmax.f32 %v8186, 0.0
  %v8692 = vmax.f32 %v8188, 0.0
  %v8693 = vmax.f32 %v8263, 0.0
  %v8694 = vmax.f32 %v8265, 0.0
  %v8695 = vmax.f32 %v8340, 0.0
  %v8696 = vmax.f32 %v8342, 0.0
  %v8697 = vmax.f32 %v8417, 0.0
  %v8698 = vmax.f32 %v8419, 0.0
  %v8699 = vmax.f32 %v8494, 0.0
  %v8700 = vmax.f32 %v8496, 0.0
  %v8701 = vmax.f32 %v8571, 0.0
  %v8702 = vmax.f32 %v8573, 0.0
  %v8703 = vmax.f32 %v8647, 0.0
  %v8704 = vld [vmem:[%s8] sm:$0xff]
  %s8705 = scalar_lea.vmem %s8, 8
  %v8706 = vld [vmem:[%s8705] sm:$0xff]
  %vm8707 = vcmask 130048
  %v8709 = vsel %vm8707, %v8706, 0
  %8711 = vmatprep.subr.mxu0 0.0
  %8712 = vmatpush1.msra.mxu0 %v8651
  %8713 = vmatprep.subr.mxu0 0.0
  %8714 = vmatpush1.msra.mxu0 %v8678
  %8715 = vmatprep.subr.mxu0 0.0
  %8716 = vmatpush1.msra.mxu0 0.0
  %8717 = vmatprep.subr.mxu0 0.0
  %8718 = vmatpush1.msra.mxu0 0.0
  %8719 = vmatprep.subr.mxu0 0.0
  %8720 = vmatpush1.msra.mxu0 0.0
  %8721 = vmatprep.subr.mxu0 0.0
  %8722 = vmatpush1.msra.mxu0 0.0
  %8723 = vmatprep.subr.mxu0 0.0
  %8724 = vmatpush1.msra.mxu0 0.0
  %8725 = vmatprep.subr.mxu0 0.0
  %8726 = vmatpush1.msra.mxu0 0.0
  %8727 = vmatprep.subr.mxu0 0.0
  %8728 = vmatpush1.msra.mxu0 0.0
  %8729 = vmatprep.subr.mxu0 0.0
  %8730 = vmatpush1.msra.mxu0 0.0
  %8731 = vmatprep.subr.mxu0 0.0
  %8732 = vmatpush1.msra.mxu0 0.0
  %8733 = vmatprep.subr.mxu0 0.0
  %8734 = vmatpush1.msra.mxu0 0.0
  %8735 = vmatprep.subr.mxu0 0.0
  %8736 = vmatpush1.msra.mxu0 0.0
  %8737 = vmatprep.subr.mxu0 0.0
  %8738 = vmatpush1.msra.mxu0 0.0
  %8739 = vmatprep.subr.mxu0 0.0
  %8740 = vmatpush1.msra.mxu0 0.0
  %8741 = vmatprep.subr.mxu0 0.0
  %8742 = vmatpush1.msra.mxu0 0.0
  %8743 = vmatprep.subr.mxu0 0.0
  %8744 = vmatpush1.msra.mxu0 0.0
  %8745 = vmatprep.subr.mxu0 0.0
  %8746 = vmatpush1.msra.mxu0 0.0
  %8747 = vmatprep.subr.mxu0 0.0
  %8748 = vmatpush1.msra.mxu0 0.0
  %8749 = vmatprep.subr.mxu0 0.0
  %8750 = vmatpush1.msra.mxu0 0.0
  %8751 = vmatprep.subr.mxu0 0.0
  %8752 = vmatpush1.msra.mxu0 0.0
  %8753 = vmatprep.subr.mxu0 0.0
  %8754 = vmatpush1.msra.mxu0 0.0
  %8755 = vmatprep.subr.mxu0 0.0
  %8756 = vmatpush1.msra.mxu0 0.0
  %8757 = vmatprep.subr.mxu0 0.0
  %8758 = vmatpush1.msra.mxu0 0.0
  %8759 = vmatprep.subr.mxu0 0.0
  %8760 = vmatpush1.msra.mxu0 0.0
  %8761 = vmatprep.subr.mxu0 0.0
  %8762 = vmatpush1.msra.mxu0 0.0
  %8763 = vmatprep.subr.mxu0 0.0
  %8764 = vmatpush1.msra.mxu0 0.0
  %8765 = vmatprep.subr.mxu0 0.0
  %8766 = vmatpush1.msra.mxu0 0.0
  %8767 = vmatprep.subr.mxu0 0.0
  %8768 = vmatpush1.msra.mxu0 0.0
  %8769 = vmatprep.subr.mxu0 0.0
  %8770 = vmatpush1.msra.mxu0 0.0
  %8771 = vmatprep.subr.mxu0 0.0
  %8772 = vmatpush1.msra.mxu0 0.0
  %8773 = vmatprep.subr.mxu0 0.0
  %8774 = vmatpush1.msra.mxu0 0.0
  %8775 = vmatprep.mubr.f32.mxu0 0.0
  %8776 = vmatmul.mubr.f32.gmra.mrb[0].mxu0 %v8709
  %v8777 = vpop.f32.mrb[0].mxu0
  %v8778 = vadd.f32 0.0, %v8777
  %v8779 = vpop.f32.mrb[0].mxu0
  %8780 = vdwg.mxu0
  %v8782 = vsel %vm8707, %v8704, 0
  %8784 = vmatprep.subr.mxu0 0.0
  %8785 = vmatpush1.msra.mxu0 %v8650
  %8786 = vmatprep.subr.mxu0 0.0
  %8787 = vmatpush1.msra.mxu0 %v8677
  %8788 = vmatprep.subr.mxu0 0.0
  %8789 = vmatpush1.msra.mxu0 0.0
  %8790 = vmatprep.subr.mxu0 0.0
  %8791 = vmatpush1.msra.mxu0 0.0
  %8792 = vmatprep.subr.mxu0 0.0
  %8793 = vmatpush1.msra.mxu0 0.0
  %8794 = vmatprep.subr.mxu0 0.0
  %8795 = vmatpush1.msra.mxu0 0.0
  %8796 = vmatprep.subr.mxu0 0.0
  %8797 = vmatpush1.msra.mxu0 0.0
  %8798 = vmatprep.subr.mxu0 0.0
  %8799 = vmatpush1.msra.mxu0 0.0
  %8800 = vmatprep.subr.mxu0 0.0
  %8801 = vmatpush1.msra.mxu0 0.0
  %8802 = vmatprep.subr.mxu0 0.0
  %8803 = vmatpush1.msra.mxu0 0.0
  %8804 = vmatprep.subr.mxu0 0.0
  %8805 = vmatpush1.msra.mxu0 0.0
  %8806 = vmatprep.subr.mxu0 0.0
  %8807 = vmatpush1.msra.mxu0 0.0
  %8808 = vmatprep.subr.mxu0 0.0
  %8809 = vmatpush1.msra.mxu0 0.0
  %8810 = vmatprep.subr.mxu0 0.0
  %8811 = vmatpush1.msra.mxu0 0.0
  %8812 = vmatprep.subr.mxu0 0.0
  %8813 = vmatpush1.msra.mxu0 0.0
  %8814 = vmatprep.subr.mxu0 0.0
  %8815 = vmatpush1.msra.mxu0 0.0
  %8816 = vmatprep.subr.mxu0 0.0
  %8817 = vmatpush1.msra.mxu0 0.0
  %8818 = vmatprep.subr.mxu0 0.0
  %8819 = vmatpush1.msra.mxu0 0.0
  %8820 = vmatprep.subr.mxu0 0.0
  %8821 = vmatpush1.msra.mxu0 0.0
  %8822 = vmatprep.subr.mxu0 0.0
  %8823 = vmatpush1.msra.mxu0 0.0
  %8824 = vmatprep.subr.mxu0 0.0
  %8825 = vmatpush1.msra.mxu0 0.0
  %8826 = vmatprep.subr.mxu0 0.0
  %8827 = vmatpush1.msra.mxu0 0.0
  %8828 = vmatprep.subr.mxu0 0.0
  %8829 = vmatpush1.msra.mxu0 0.0
  %8830 = vmatprep.subr.mxu0 0.0
  %8831 = vmatpush1.msra.mxu0 0.0
  %8832 = vmatprep.subr.mxu0 0.0
  %8833 = vmatpush1.msra.mxu0 0.0
  %8834 = vmatprep.subr.mxu0 0.0
  %8835 = vmatpush1.msra.mxu0 0.0
  %8836 = vmatprep.subr.mxu0 0.0
  %8837 = vmatpush1.msra.mxu0 0.0
  %8838 = vmatprep.subr.mxu0 0.0
  %8839 = vmatpush1.msra.mxu0 0.0
  %8840 = vmatprep.subr.mxu0 0.0
  %8841 = vmatpush1.msra.mxu0 0.0
  %8842 = vmatprep.subr.mxu0 0.0
  %8843 = vmatpush1.msra.mxu0 0.0
  %8844 = vmatprep.subr.mxu0 0.0
  %8845 = vmatpush1.msra.mxu0 0.0
  %8846 = vmatprep.subr.mxu0 0.0
  %8847 = vmatpush1.msra.mxu0 0.0
  %8848 = vmatprep.mubr.f32.mxu0 0.0
  %8849 = vmatmul.mubr.f32.gmra.mrb[0].mxu0 %v8782
  %v8850 = vpop.f32.mrb[0].mxu0
  %v8851 = vadd.f32 %v8778, %v8850
  %v8852 = vpop.f32.mrb[0].mxu0
  %8853 = vdwg.mxu0
  %s8854 = scalar_lea.vmem %s8, 16
  %v8855 = vld [vmem:[%s8854] sm:$0xff]
  %v8857 = vsel %vm8707, %v8855, 0
  %8859 = vmatprep.subr.mxu0 0.0
  %8860 = vmatpush1.msra.mxu0 %v8652
  %8861 = vmatprep.subr.mxu0 0.0
  %8862 = vmatpush1.msra.mxu0 %v8679
  %8863 = vmatprep.subr.mxu0 0.0
  %8864 = vmatpush1.msra.mxu0 0.0
  %8865 = vmatprep.subr.mxu0 0.0
  %8866 = vmatpush1.msra.mxu0 0.0
  %8867 = vmatprep.subr.mxu0 0.0
  %8868 = vmatpush1.msra.mxu0 0.0
  %8869 = vmatprep.subr.mxu0 0.0
  %8870 = vmatpush1.msra.mxu0 0.0
  %8871 = vmatprep.subr.mxu0 0.0
  %8872 = vmatpush1.msra.mxu0 0.0
  %8873 = vmatprep.subr.mxu0 0.0
  %8874 = vmatpush1.msra.mxu0 0.0
  %8875 = vmatprep.subr.mxu0 0.0
  %8876 = vmatpush1.msra.mxu0 0.0
  %8877 = vmatprep.subr.mxu0 0.0
  %8878 = vmatpush1.msra.mxu0 0.0
  %8879 = vmatprep.subr.mxu0 0.0
  %8880 = vmatpush1.msra.mxu0 0.0
  %8881 = vmatprep.subr.mxu0 0.0
  %8882 = vmatpush1.msra.mxu0 0.0
  %8883 = vmatprep.subr.mxu0 0.0
  %8884 = vmatpush1.msra.mxu0 0.0
  %8885 = vmatprep.subr.mxu0 0.0
  %8886 = vmatpush1.msra.mxu0 0.0
  %8887 = vmatprep.subr.mxu0 0.0
  %8888 = vmatpush1.msra.mxu0 0.0
  %8889 = vmatprep.subr.mxu0 0.0
  %8890 = vmatpush1.msra.mxu0 0.0
  %8891 = vmatprep.subr.mxu0 0.0
  %8892 = vmatpush1.msra.mxu0 0.0
  %8893 = vmatprep.subr.mxu0 0.0
  %8894 = vmatpush1.msra.mxu0 0.0
  %8895 = vmatprep.subr.mxu0 0.0
  %8896 = vmatpush1.msra.mxu0 0.0
  %8897 = vmatprep.subr.mxu0 0.0
  %8898 = vmatpush1.msra.mxu0 0.0
  %8899 = vmatprep.subr.mxu0 0.0
  %8900 = vmatpush1.msra.mxu0 0.0
  %8901 = vmatprep.subr.mxu0 0.0
  %8902 = vmatpush1.msra.mxu0 0.0
  %8903 = vmatprep.subr.mxu0 0.0
  %8904 = vmatpush1.msra.mxu0 0.0
  %8905 = vmatprep.subr.mxu0 0.0
  %8906 = vmatpush1.msra.mxu0 0.0
  %8907 = vmatprep.subr.mxu0 0.0
  %8908 = vmatpush1.msra.mxu0 0.0
  %8909 = vmatprep.subr.mxu0 0.0
  %8910 = vmatpush1.msra.mxu0 0.0
  %8911 = vmatprep.subr.mxu0 0.0
  %8912 = vmatpush1.msra.mxu0 0.0
  %8913 = vmatprep.subr.mxu0 0.0
  %8914 = vmatpush1.msra.mxu0 0.0
  %8915 = vmatprep.subr.mxu0 0.0
  %8916 = vmatpush1.msra.mxu0 0.0
  %8917 = vmatprep.subr.mxu0 0.0
  %8918 = vmatpush1.msra.mxu0 0.0
  %8919 = vmatprep.subr.mxu0 0.0
  %8920 = vmatpush1.msra.mxu0 0.0
  %8921 = vmatprep.subr.mxu0 0.0
  %8922 = vmatpush1.msra.mxu0 0.0
  %8923 = vmatprep.mubr.f32.mxu0 0.0
  %8924 = vmatmul.mubr.f32.gmra.mrb[0].mxu0 %v8857
  %v8925 = vpop.f32.mrb[0].mxu0
  %v8926 = vadd.f32 0.0, %v8925
  %v8927 = vpop.f32.mrb[0].mxu0
  %8928 = vdwg.mxu0
  %v8929 = vadd.f32 %v8851, %v8926
  %s8930 = scalar_lea.vmem %s8, 24
  %v8931 = vld [vmem:[%s8930] sm:$0xff]
  %v8933 = vsel %vm8707, %v8931, 0
  %8935 = vmatprep.subr.mxu0 0.0
  %8936 = vmatpush1.msra.mxu0 %v8653
  %8937 = vmatprep.subr.mxu0 0.0
  %8938 = vmatpush1.msra.mxu0 %v8680
  %8939 = vmatprep.subr.mxu0 0.0
  %8940 = vmatpush1.msra.mxu0 0.0
  %8941 = vmatprep.subr.mxu0 0.0
  %8942 = vmatpush1.msra.mxu0 0.0
  %8943 = vmatprep.subr.mxu0 0.0
  %8944 = vmatpush1.msra.mxu0 0.0
  %8945 = vmatprep.subr.mxu0 0.0
  %8946 = vmatpush1.msra.mxu0 0.0
  %8947 = vmatprep.subr.mxu0 0.0
  %8948 = vmatpush1.msra.mxu0 0.0
  %8949 = vmatprep.subr.mxu0 0.0
  %8950 = vmatpush1.msra.mxu0 0.0
  %8951 = vmatprep.subr.mxu0 0.0
  %8952 = vmatpush1.msra.mxu0 0.0
  %8953 = vmatprep.subr.mxu0 0.0
  %8954 = vmatpush1.msra.mxu0 0.0
  %8955 = vmatprep.subr.mxu0 0.0
  %8956 = vmatpush1.msra.mxu0 0.0
  %8957 = vmatprep.subr.mxu0 0.0
  %8958 = vmatpush1.msra.mxu0 0.0
  %8959 = vmatprep.subr.mxu0 0.0
  %8960 = vmatpush1.msra.mxu0 0.0
  %8961 = vmatprep.subr.mxu0 0.0
  %8962 = vmatpush1.msra.mxu0 0.0
  %8963 = vmatprep.subr.mxu0 0.0
  %8964 = vmatpush1.msra.mxu0 0.0
  %8965 = vmatprep.subr.mxu0 0.0
  %8966 = vmatpush1.msra.mxu0 0.0
  %8967 = vmatprep.subr.mxu0 0.0
  %8968 = vmatpush1.msra.mxu0 0.0
  %8969 = vmatprep.subr.mxu0 0.0
  %8970 = vmatpush1.msra.mxu0 0.0
  %8971 = vmatprep.subr.mxu0 0.0
  %8972 = vmatpush1.msra.mxu0 0.0
  %8973 = vmatprep.subr.mxu0 0.0
  %8974 = vmatpush1.msra.mxu0 0.0
  %8975 = vmatprep.subr.mxu0 0.0
  %8976 = vmatpush1.msra.mxu0 0.0
  %8977 = vmatprep.subr.mxu0 0.0
  %8978 = vmatpush1.msra.mxu0 0.0
  %8979 = vmatprep.subr.mxu0 0.0
  %8980 = vmatpush1.msra.mxu0 0.0
  %8981 = vmatprep.subr.mxu0 0.0
  %8982 = vmatpush1.msra.mxu0 0.0
  %8983 = vmatprep.subr.mxu0 0.0
  %8984 = vmatpush1.msra.mxu0 0.0
  %8985 = vmatprep.subr.mxu0 0.0
  %8986 = vmatpush1.msra.mxu0 0.0
  %8987 = vmatprep.subr.mxu0 0.0
  %8988 = vmatpush1.msra.mxu0 0.0
  %8989 = vmatprep.subr.mxu0 0.0
  %8990 = vmatpush1.msra.mxu0 0.0
  %8991 = vmatprep.subr.mxu0 0.0
  %8992 = vmatpush1.msra.mxu0 0.0
  %8993 = vmatprep.subr.mxu0 0.0
  %8994 = vmatpush1.msra.mxu0 0.0
  %8995 = vmatprep.subr.mxu0 0.0
  %8996 = vmatpush1.msra.mxu0 0.0
  %8997 = vmatprep.subr.mxu0 0.0
  %8998 = vmatpush1.msra.mxu0 0.0
  %8999 = vmatprep.mubr.f32.mxu0 0.0
  %9000 = vmatmul.mubr.f32.gmra.mrb[0].mxu0 %v8933
  %v9001 = vpop.f32.mrb[0].mxu0
  %v9002 = vadd.f32 0.0, %v9001
  %v9003 = vpop.f32.mrb[0].mxu0
  %9004 = vdwg.mxu0
  %v9005 = vadd.f32 %v8929, %v9002
  %s9006 = scalar_lea.vmem %s8, 32
  %v9007 = vld [vmem:[%s9006] sm:$0xff]
  %v9009 = vsel %vm8707, %v9007, 0
  %9011 = vmatprep.subr.mxu0 0.0
  %9012 = vmatpush1.msra.mxu0 %v8654
  %9013 = vmatprep.subr.mxu0 0.0
  %9014 = vmatpush1.msra.mxu0 %v8681
  %9015 = vmatprep.subr.mxu0 0.0
  %9016 = vmatpush1.msra.mxu0 0.0
  %9017 = vmatprep.subr.mxu0 0.0
  %9018 = vmatpush1.msra.mxu0 0.0
  %9019 = vmatprep.subr.mxu0 0.0
  %9020 = vmatpush1.msra.mxu0 0.0
  %9021 = vmatprep.subr.mxu0 0.0
  %9022 = vmatpush1.msra.mxu0 0.0
  %9023 = vmatprep.subr.mxu0 0.0
  %9024 = vmatpush1.msra.mxu0 0.0
  %9025 = vmatprep.subr.mxu0 0.0
  %9026 = vmatpush1.msra.mxu0 0.0
  %9027 = vmatprep.subr.mxu0 0.0
  %9028 = vmatpush1.msra.mxu0 0.0
  %9029 = vmatprep.subr.mxu0 0.0
  %9030 = vmatpush1.msra.mxu0 0.0
  %9031 = vmatprep.subr.mxu0 0.0
  %9032 = vmatpush1.msra.mxu0 0.0
  %9033 = vmatprep.subr.mxu0 0.0
  %9034 = vmatpush1.msra.mxu0 0.0
  %9035 = vmatprep.subr.mxu0 0.0
  %9036 = vmatpush1.msra.mxu0 0.0
  %9037 = vmatprep.subr.mxu0 0.0
  %9038 = vmatpush1.msra.mxu0 0.0
  %9039 = vmatprep.subr.mxu0 0.0
  %9040 = vmatpush1.msra.mxu0 0.0
  %9041 = vmatprep.subr.mxu0 0.0
  %9042 = vmatpush1.msra.mxu0 0.0
  %9043 = vmatprep.subr.mxu0 0.0
  %9044 = vmatpush1.msra.mxu0 0.0
  %9045 = vmatprep.subr.mxu0 0.0
  %9046 = vmatpush1.msra.mxu0 0.0
  %9047 = vmatprep.subr.mxu0 0.0
  %9048 = vmatpush1.msra.mxu0 0.0
  %9049 = vmatprep.subr.mxu0 0.0
  %9050 = vmatpush1.msra.mxu0 0.0
  %9051 = vmatprep.subr.mxu0 0.0
  %9052 = vmatpush1.msra.mxu0 0.0
  %9053 = vmatprep.subr.mxu0 0.0
  %9054 = vmatpush1.msra.mxu0 0.0
  %9055 = vmatprep.subr.mxu0 0.0
  %9056 = vmatpush1.msra.mxu0 0.0
  %9057 = vmatprep.subr.mxu0 0.0
  %9058 = vmatpush1.msra.mxu0 0.0
  %9059 = vmatprep.subr.mxu0 0.0
  %9060 = vmatpush1.msra.mxu0 0.0
  %9061 = vmatprep.subr.mxu0 0.0
  %9062 = vmatpush1.msra.mxu0 0.0
  %9063 = vmatprep.subr.mxu0 0.0
  %9064 = vmatpush1.msra.mxu0 0.0
  %9065 = vmatprep.subr.mxu0 0.0
  %9066 = vmatpush1.msra.mxu0 0.0
  %9067 = vmatprep.subr.mxu0 0.0
  %9068 = vmatpush1.msra.mxu0 0.0
  %9069 = vmatprep.subr.mxu0 0.0
  %9070 = vmatpush1.msra.mxu0 0.0
  %9071 = vmatprep.subr.mxu0 0.0
  %9072 = vmatpush1.msra.mxu0 0.0
  %9073 = vmatprep.subr.mxu0 0.0
  %9074 = vmatpush1.msra.mxu0 0.0
  %9075 = vmatprep.mubr.f32.mxu0 0.0
  %9076 = vmatmul.mubr.f32.gmra.mrb[0].mxu0 %v9009
  %v9077 = vpop.f32.mrb[0].mxu0
  %v9078 = vadd.f32 0.0, %v9077
  %v9079 = vpop.f32.mrb[0].mxu0
  %9080 = vdwg.mxu0
  %v9081 = vadd.f32 %v9005, %v9078
  %s9082 = scalar_lea.vmem %s8, 40
  %v9083 = vld [vmem:[%s9082] sm:$0xff]
  %v9085 = vsel %vm8707, %v9083, 0
  %9087 = vmatprep.subr.mxu0 0.0
  %9088 = vmatpush1.msra.mxu0 %v8655
  %9089 = vmatprep.subr.mxu0 0.0
  %9090 = vmatpush1.msra.mxu0 %v8682
  %9091 = vmatprep.subr.mxu0 0.0
  %9092 = vmatpush1.msra.mxu0 0.0
  %9093 = vmatprep.subr.mxu0 0.0
  %9094 = vmatpush1.msra.mxu0 0.0
  %9095 = vmatprep.subr.mxu0 0.0
  %9096 = vmatpush1.msra.mxu0 0.0
  %9097 = vmatprep.subr.mxu0 0.0
  %9098 = vmatpush1.msra.mxu0 0.0
  %9099 = vmatprep.subr.mxu0 0.0
  %9100 = vmatpush1.msra.mxu0 0.0
  %9101 = vmatprep.subr.mxu0 0.0
  %9102 = vmatpush1.msra.mxu0 0.0
  %9103 = vmatprep.subr.mxu0 0.0
  %9104 = vmatpush1.msra.mxu0 0.0
  %9105 = vmatprep.subr.mxu0 0.0
  %9106 = vmatpush1.msra.mxu0 0.0
  %9107 = vmatprep.subr.mxu0 0.0
  %9108 = vmatpush1.msra.mxu0 0.0
  %9109 = vmatprep.subr.mxu0 0.0
  %9110 = vmatpush1.msra.mxu0 0.0
  %9111 = vmatprep.subr.mxu0 0.0
  %9112 = vmatpush1.msra.mxu0 0.0
  %9113 = vmatprep.subr.mxu0 0.0
  %9114 = vmatpush1.msra.mxu0 0.0
  %9115 = vmatprep.subr.mxu0 0.0
  %9116 = vmatpush1.msra.mxu0 0.0
  %9117 = vmatprep.subr.mxu0 0.0
  %9118 = vmatpush1.msra.mxu0 0.0
  %9119 = vmatprep.subr.mxu0 0.0
  %9120 = vmatpush1.msra.mxu0 0.0
  %9121 = vmatprep.subr.mxu0 0.0
  %9122 = vmatpush1.msra.mxu0 0.0
  %9123 = vmatprep.subr.mxu0 0.0
  %9124 = vmatpush1.msra.mxu0 0.0
  %9125 = vmatprep.subr.mxu0 0.0
  %9126 = vmatpush1.msra.mxu0 0.0
  %9127 = vmatprep.subr.mxu0 0.0
  %9128 = vmatpush1.msra.mxu0 0.0
  %9129 = vmatprep.subr.mxu0 0.0
  %9130 = vmatpush1.msra.mxu0 0.0
  %9131 = vmatprep.subr.mxu0 0.0
  %9132 = vmatpush1.msra.mxu0 0.0
  %9133 = vmatprep.subr.mxu0 0.0
  %9134 = vmatpush1.msra.mxu0 0.0
  %9135 = vmatprep.subr.mxu0 0.0
  %9136 = vmatpush1.msra.mxu0 0.0
  %9137 = vmatprep.subr.mxu0 0.0
  %9138 = vmatpush1.msra.mxu0 0.0
  %9139 = vmatprep.subr.mxu0 0.0
  %9140 = vmatpush1.msra.mxu0 0.0
  %9141 = vmatprep.subr.mxu0 0.0
  %9142 = vmatpush1.msra.mxu0 0.0
  %9143 = vmatprep.subr.mxu0 0.0
  %9144 = vmatpush1.msra.mxu0 0.0
  %9145 = vmatprep.subr.mxu0 0.0
  %9146 = vmatpush1.msra.mxu0 0.0
  %9147 = vmatprep.subr.mxu0 0.0
  %9148 = vmatpush1.msra.mxu0 0.0
  %9149 = vmatprep.subr.mxu0 0.0
  %9150 = vmatpush1.msra.mxu0 0.0
  %9151 = vmatprep.mubr.f32.mxu0 0.0
  %9152 = vmatmul.mubr.f32.gmra.mrb[0].mxu0 %v9085
  %v9153 = vpop.f32.mrb[0].mxu0
  %v9154 = vadd.f32 0.0, %v9153
  %v9155 = vpop.f32.mrb[0].mxu0
  %9156 = vdwg.mxu0
  %v9157 = vadd.f32 %v9081, %v9154
  %s9158 = scalar_lea.vmem %s8, 48
  %v9159 = vld [vmem:[%s9158] sm:$0xff]
  %v9161 = vsel %vm8707, %v9159, 0
  %9163 = vmatprep.subr.mxu0 0.0
  %9164 = vmatpush1.msra.mxu0 %v8656
  %9165 = vmatprep.subr.mxu0 0.0
  %9166 = vmatpush1.msra.mxu0 %v8683
  %9167 = vmatprep.subr.mxu0 0.0
  %9168 = vmatpush1.msra.mxu0 0.0
  %9169 = vmatprep.subr.mxu0 0.0
  %9170 = vmatpush1.msra.mxu0 0.0
  %9171 = vmatprep.subr.mxu0 0.0
  %9172 = vmatpush1.msra.mxu0 0.0
  %9173 = vmatprep.subr.mxu0 0.0
  %9174 = vmatpush1.msra.mxu0 0.0
  %9175 = vmatprep.subr.mxu0 0.0
  %9176 = vmatpush1.msra.mxu0 0.0
  %9177 = vmatprep.subr.mxu0 0.0
  %9178 = vmatpush1.msra.mxu0 0.0
  %9179 = vmatprep.subr.mxu0 0.0
  %9180 = vmatpush1.msra.mxu0 0.0
  %9181 = vmatprep.subr.mxu0 0.0
  %9182 = vmatpush1.msra.mxu0 0.0
  %9183 = vmatprep.subr.mxu0 0.0
  %9184 = vmatpush1.msra.mxu0 0.0
  %9185 = vmatprep.subr.mxu0 0.0
  %9186 = vmatpush1.msra.mxu0 0.0
  %9187 = vmatprep.subr.mxu0 0.0
  %9188 = vmatpush1.msra.mxu0 0.0
  %9189 = vmatprep.subr.mxu0 0.0
  %9190 = vmatpush1.msra.mxu0 0.0
  %9191 = vmatprep.subr.mxu0 0.0
  %9192 = vmatpush1.msra.mxu0 0.0
  %9193 = vmatprep.subr.mxu0 0.0
  %9194 = vmatpush1.msra.mxu0 0.0
  %9195 = vmatprep.subr.mxu0 0.0
  %9196 = vmatpush1.msra.mxu0 0.0
  %9197 = vmatprep.subr.mxu0 0.0
  %9198 = vmatpush1.msra.mxu0 0.0
  %9199 = vmatprep.subr.mxu0 0.0
  %9200 = vmatpush1.msra.mxu0 0.0
  %9201 = vmatprep.subr.mxu0 0.0
  %9202 = vmatpush1.msra.mxu0 0.0
  %9203 = vmatprep.subr.mxu0 0.0
  %9204 = vmatpush1.msra.mxu0 0.0
  %9205 = vmatprep.subr.mxu0 0.0
  %9206 = vmatpush1.msra.mxu0 0.0
  %9207 = vmatprep.subr.mxu0 0.0
  %9208 = vmatpush1.msra.mxu0 0.0
  %9209 = vmatprep.subr.mxu0 0.0
  %9210 = vmatpush1.msra.mxu0 0.0
  %9211 = vmatprep.subr.mxu0 0.0
  %9212 = vmatpush1.msra.mxu0 0.0
  %9213 = vmatprep.subr.mxu0 0.0
  %9214 = vmatpush1.msra.mxu0 0.0
  %9215 = vmatprep.subr.mxu0 0.0
  %9216 = vmatpush1.msra.mxu0 0.0
  %9217 = vmatprep.subr.mxu0 0.0
  %9218 = vmatpush1.msra.mxu0 0.0
  %9219 = vmatprep.subr.mxu0 0.0
  %9220 = vmatpush1.msra.mxu0 0.0
  %9221 = vmatprep.subr.mxu0 0.0
  %9222 = vmatpush1.msra.mxu0 0.0
  %9223 = vmatprep.subr.mxu0 0.0
  %9224 = vmatpush1.msra.mxu0 0.0
  %9225 = vmatprep.subr.mxu0 0.0
  %9226 = vmatpush1.msra.mxu0 0.0
  %9227 = vmatprep.mubr.f32.mxu0 0.0
  %9228 = vmatmul.mubr.f32.gmra.mrb[0].mxu0 %v9161
  %v9229 = vpop.f32.mrb[0].mxu0
  %v9230 = vadd.f32 0.0, %v9229
  %v9231 = vpop.f32.mrb[0].mxu0
  %9232 = vdwg.mxu0
  %v9233 = vadd.f32 %v9157, %v9230
  %s9234 = scalar_lea.vmem %s8, 56
  %v9235 = vld [vmem:[%s9234] sm:$0xff]
  %v9237 = vsel %vm8707, %v9235, 0
  %9239 = vmatprep.subr.mxu0 0.0
  %9240 = vmatpush1.msra.mxu0 %v8657
  %9241 = vmatprep.subr.mxu0 0.0
  %9242 = vmatpush1.msra.mxu0 %v8684
  %9243 = vmatprep.subr.mxu0 0.0
  %9244 = vmatpush1.msra.mxu0 0.0
  %9245 = vmatprep.subr.mxu0 0.0
  %9246 = vmatpush1.msra.mxu0 0.0
  %9247 = vmatprep.subr.mxu0 0.0
  %9248 = vmatpush1.msra.mxu0 0.0
  %9249 = vmatprep.subr.mxu0 0.0
  %9250 = vmatpush1.msra.mxu0 0.0
  %9251 = vmatprep.subr.mxu0 0.0
  %9252 = vmatpush1.msra.mxu0 0.0
  %9253 = vmatprep.subr.mxu0 0.0
  %9254 = vmatpush1.msra.mxu0 0.0
  %9255 = vmatprep.subr.mxu0 0.0
  %9256 = vmatpush1.msra.mxu0 0.0
  %9257 = vmatprep.subr.mxu0 0.0
  %9258 = vmatpush1.msra.mxu0 0.0
  %9259 = vmatprep.subr.mxu0 0.0
  %9260 = vmatpush1.msra.mxu0 0.0
  %9261 = vmatprep.subr.mxu0 0.0
  %9262 = vmatpush1.msra.mxu0 0.0
  %9263 = vmatprep.subr.mxu0 0.0
  %9264 = vmatpush1.msra.mxu0 0.0
  %9265 = vmatprep.subr.mxu0 0.0
  %9266 = vmatpush1.msra.mxu0 0.0
  %9267 = vmatprep.subr.mxu0 0.0
  %9268 = vmatpush1.msra.mxu0 0.0
  %9269 = vmatprep.subr.mxu0 0.0
  %9270 = vmatpush1.msra.mxu0 0.0
  %9271 = vmatprep.subr.mxu0 0.0
  %9272 = vmatpush1.msra.mxu0 0.0
  %9273 = vmatprep.subr.mxu0 0.0
  %9274 = vmatpush1.msra.mxu0 0.0
  %9275 = vmatprep.subr.mxu0 0.0
  %9276 = vmatpush1.msra.mxu0 0.0
  %9277 = vmatprep.subr.mxu0 0.0
  %9278 = vmatpush1.msra.mxu0 0.0
  %9279 = vmatprep.subr.mxu0 0.0
  %9280 = vmatpush1.msra.mxu0 0.0
  %9281 = vmatprep.subr.mxu0 0.0
  %9282 = vmatpush1.msra.mxu0 0.0
  %9283 = vmatprep.subr.mxu0 0.0
  %9284 = vmatpush1.msra.mxu0 0.0
  %9285 = vmatprep.subr.mxu0 0.0
  %9286 = vmatpush1.msra.mxu0 0.0
  %9287 = vmatprep.subr.mxu0 0.0
  %9288 = vmatpush1.msra.mxu0 0.0
  %9289 = vmatprep.subr.mxu0 0.0
  %9290 = vmatpush1.msra.mxu0 0.0
  %9291 = vmatprep.subr.mxu0 0.0
  %9292 = vmatpush1.msra.mxu0 0.0
  %9293 = vmatprep.subr.mxu0 0.0
  %9294 = vmatpush1.msra.mxu0 0.0
  %9295 = vmatprep.subr.mxu0 0.0
  %9296 = vmatpush1.msra.mxu0 0.0
  %9297 = vmatprep.subr.mxu0 0.0
  %9298 = vmatpush1.msra.mxu0 0.0
  %9299 = vmatprep.subr.mxu0 0.0
  %9300 = vmatpush1.msra.mxu0 0.0
  %9301 = vmatprep.subr.mxu0 0.0
  %9302 = vmatpush1.msra.mxu0 0.0
  %9303 = vmatprep.mubr.f32.mxu0 0.0
  %9304 = vmatmul.mubr.f32.gmra.mrb[0].mxu0 %v9237
  %v9305 = vpop.f32.mrb[0].mxu0
  %v9306 = vadd.f32 0.0, %v9305
  %v9307 = vpop.f32.mrb[0].mxu0
  %9308 = vdwg.mxu0
  %v9309 = vadd.f32 %v9233, %v9306
  %s9310 = scalar_lea.vmem %s8, 64
  %v9311 = vld [vmem:[%s9310] sm:$0xff]
  %v9313 = vsel %vm8707, %v9311, 0
  %9315 = vmatprep.subr.mxu0 0.0
  %9316 = vmatpush1.msra.mxu0 %v8658
  %9317 = vmatprep.subr.mxu0 0.0
  %9318 = vmatpush1.msra.mxu0 %v8685
  %9319 = vmatprep.subr.mxu0 0.0
  %9320 = vmatpush1.msra.mxu0 0.0
  %9321 = vmatprep.subr.mxu0 0.0
  %9322 = vmatpush1.msra.mxu0 0.0
  %9323 = vmatprep.subr.mxu0 0.0
  %9324 = vmatpush1.msra.mxu0 0.0
  %9325 = vmatprep.subr.mxu0 0.0
  %9326 = vmatpush1.msra.mxu0 0.0
  %9327 = vmatprep.subr.mxu0 0.0
  %9328 = vmatpush1.msra.mxu0 0.0
  %9329 = vmatprep.subr.mxu0 0.0
  %9330 = vmatpush1.msra.mxu0 0.0
  %9331 = vmatprep.subr.mxu0 0.0
  %9332 = vmatpush1.msra.mxu0 0.0
  %9333 = vmatprep.subr.mxu0 0.0
  %9334 = vmatpush1.msra.mxu0 0.0
  %9335 = vmatprep.subr.mxu0 0.0
  %9336 = vmatpush1.msra.mxu0 0.0
  %9337 = vmatprep.subr.mxu0 0.0
  %9338 = vmatpush1.msra.mxu0 0.0
  %9339 = vmatprep.subr.mxu0 0.0
  %9340 = vmatpush1.msra.mxu0 0.0
  %9341 = vmatprep.subr.mxu0 0.0
  %9342 = vmatpush1.msra.mxu0 0.0
  %9343 = vmatprep.subr.mxu0 0.0
  %9344 = vmatpush1.msra.mxu0 0.0
  %9345 = vmatprep.subr.mxu0 0.0
  %9346 = vmatpush1.msra.mxu0 0.0
  %9347 = vmatprep.subr.mxu0 0.0
  %9348 = vmatpush1.msra.mxu0 0.0
  %9349 = vmatprep.subr.mxu0 0.0
  %9350 = vmatpush1.msra.mxu0 0.0
  %9351 = vmatprep.subr.mxu0 0.0
  %9352 = vmatpush1.msra.mxu0 0.0
  %9353 = vmatprep.subr.mxu0 0.0
  %9354 = vmatpush1.msra.mxu0 0.0
  %9355 = vmatprep.subr.mxu0 0.0
  %9356 = vmatpush1.msra.mxu0 0.0
  %9357 = vmatprep.subr.mxu0 0.0
  %9358 = vmatpush1.msra.mxu0 0.0
  %9359 = vmatprep.subr.mxu0 0.0
  %9360 = vmatpush1.msra.mxu0 0.0
  %9361 = vmatprep.subr.mxu0 0.0
  %9362 = vmatpush1.msra.mxu0 0.0
  %9363 = vmatprep.subr.mxu0 0.0
  %9364 = vmatpush1.msra.mxu0 0.0
  %9365 = vmatprep.subr.mxu0 0.0
  %9366 = vmatpush1.msra.mxu0 0.0
  %9367 = vmatprep.subr.mxu0 0.0
  %9368 = vmatpush1.msra.mxu0 0.0
  %9369 = vmatprep.subr.mxu0 0.0
  %9370 = vmatpush1.msra.mxu0 0.0
  %9371 = vmatprep.subr.mxu0 0.0
  %9372 = vmatpush1.msra.mxu0 0.0
  %9373 = vmatprep.subr.mxu0 0.0
  %9374 = vmatpush1.msra.mxu0 0.0
  %9375 = vmatprep.subr.mxu0 0.0
  %9376 = vmatpush1.msra.mxu0 0.0
  %9377 = vmatprep.subr.mxu0 0.0
  %9378 = vmatpush1.msra.mxu0 0.0
  %9379 = vmatprep.mubr.f32.mxu0 0.0
  %9380 = vmatmul.mubr.f32.gmra.mrb[0].mxu0 %v9313
  %v9381 = vpop.f32.mrb[0].mxu0
  %v9382 = vadd.f32 0.0, %v9381
  %v9383 = vpop.f32.mrb[0].mxu0
  %9384 = vdwg.mxu0
  %v9385 = vadd.f32 %v9309, %v9382
  %s9386 = scalar_lea.vmem %s8, 72
  %v9387 = vld [vmem:[%s9386] sm:$0xff]
  %v9389 = vsel %vm8707, %v9387, 0
  %9391 = vmatprep.subr.mxu0 0.0
  %9392 = vmatpush1.msra.mxu0 %v8659
  %9393 = vmatprep.subr.mxu0 0.0
  %9394 = vmatpush1.msra.mxu0 %v8686
  %9395 = vmatprep.subr.mxu0 0.0
  %9396 = vmatpush1.msra.mxu0 0.0
  %9397 = vmatprep.subr.mxu0 0.0
  %9398 = vmatpush1.msra.mxu0 0.0
  %9399 = vmatprep.subr.mxu0 0.0
  %9400 = vmatpush1.msra.mxu0 0.0
  %9401 = vmatprep.subr.mxu0 0.0
  %9402 = vmatpush1.msra.mxu0 0.0
  %9403 = vmatprep.subr.mxu0 0.0
  %9404 = vmatpush1.msra.mxu0 0.0
  %9405 = vmatprep.subr.mxu0 0.0
  %9406 = vmatpush1.msra.mxu0 0.0
  %9407 = vmatprep.subr.mxu0 0.0
  %9408 = vmatpush1.msra.mxu0 0.0
  %9409 = vmatprep.subr.mxu0 0.0
  %9410 = vmatpush1.msra.mxu0 0.0
  %9411 = vmatprep.subr.mxu0 0.0
  %9412 = vmatpush1.msra.mxu0 0.0
  %9413 = vmatprep.subr.mxu0 0.0
  %9414 = vmatpush1.msra.mxu0 0.0
  %9415 = vmatprep.subr.mxu0 0.0
  %9416 = vmatpush1.msra.mxu0 0.0
  %9417 = vmatprep.subr.mxu0 0.0
  %9418 = vmatpush1.msra.mxu0 0.0
  %9419 = vmatprep.subr.mxu0 0.0
  %9420 = vmatpush1.msra.mxu0 0.0
  %9421 = vmatprep.subr.mxu0 0.0
  %9422 = vmatpush1.msra.mxu0 0.0
  %9423 = vmatprep.subr.mxu0 0.0
  %9424 = vmatpush1.msra.mxu0 0.0
  %9425 = vmatprep.subr.mxu0 0.0
  %9426 = vmatpush1.msra.mxu0 0.0
  %9427 = vmatprep.subr.mxu0 0.0
  %9428 = vmatpush1.msra.mxu0 0.0
  %9429 = vmatprep.subr.mxu0 0.0
  %9430 = vmatpush1.msra.mxu0 0.0
  %9431 = vmatprep.subr.mxu0 0.0
  %9432 = vmatpush1.msra.mxu0 0.0
  %9433 = vmatprep.subr.mxu0 0.0
  %9434 = vmatpush1.msra.mxu0 0.0
  %9435 = vmatprep.subr.mxu0 0.0
  %9436 = vmatpush1.msra.mxu0 0.0
  %9437 = vmatprep.subr.mxu0 0.0
  %9438 = vmatpush1.msra.mxu0 0.0
  %9439 = vmatprep.subr.mxu0 0.0
  %9440 = vmatpush1.msra.mxu0 0.0
  %9441 = vmatprep.subr.mxu0 0.0
  %9442 = vmatpush1.msra.mxu0 0.0
  %9443 = vmatprep.subr.mxu0 0.0
  %9444 = vmatpush1.msra.mxu0 0.0
  %9445 = vmatprep.subr.mxu0 0.0
  %9446 = vmatpush1.msra.mxu0 0.0
  %9447 = vmatprep.subr.mxu0 0.0
  %9448 = vmatpush1.msra.mxu0 0.0
  %9449 = vmatprep.subr.mxu0 0.0
  %9450 = vmatpush1.msra.mxu0 0.0
  %9451 = vmatprep.subr.mxu0 0.0
  %9452 = vmatpush1.msra.mxu0 0.0
  %9453 = vmatprep.subr.mxu0 0.0
  %9454 = vmatpush1.msra.mxu0 0.0
  %9455 = vmatprep.mubr.f32.mxu0 0.0
  %9456 = vmatmul.mubr.f32.gmra.mrb[0].mxu0 %v9389
  %v9457 = vpop.f32.mrb[0].mxu0
  %v9458 = vadd.f32 0.0, %v9457
  %v9459 = vpop.f32.mrb[0].mxu0
  %9460 = vdwg.mxu0
  %v9461 = vadd.f32 %v9385, %v9458
  %s9462 = scalar_lea.vmem %s8, 80
  %v9463 = vld [vmem:[%s9462] sm:$0xff]
  %v9465 = vsel %vm8707, %v9463, 0
  %9467 = vmatprep.subr.mxu0 0.0
  %9468 = vmatpush1.msra.mxu0 %v8660
  %9469 = vmatprep.subr.mxu0 0.0
  %9470 = vmatpush1.msra.mxu0 %v8687
  %9471 = vmatprep.subr.mxu0 0.0
  %9472 = vmatpush1.msra.mxu0 0.0
  %9473 = vmatprep.subr.mxu0 0.0
  %9474 = vmatpush1.msra.mxu0 0.0
  %9475 = vmatprep.subr.mxu0 0.0
  %9476 = vmatpush1.msra.mxu0 0.0
  %9477 = vmatprep.subr.mxu0 0.0
  %9478 = vmatpush1.msra.mxu0 0.0
  %9479 = vmatprep.subr.mxu0 0.0
  %9480 = vmatpush1.msra.mxu0 0.0
  %9481 = vmatprep.subr.mxu0 0.0
  %9482 = vmatpush1.msra.mxu0 0.0
  %9483 = vmatprep.subr.mxu0 0.0
  %9484 = vmatpush1.msra.mxu0 0.0
  %9485 = vmatprep.subr.mxu0 0.0
  %9486 = vmatpush1.msra.mxu0 0.0
  %9487 = vmatprep.subr.mxu0 0.0
  %9488 = vmatpush1.msra.mxu0 0.0
  %9489 = vmatprep.subr.mxu0 0.0
  %9490 = vmatpush1.msra.mxu0 0.0
  %9491 = vmatprep.subr.mxu0 0.0
  %9492 = vmatpush1.msra.mxu0 0.0
  %9493 = vmatprep.subr.mxu0 0.0
  %9494 = vmatpush1.msra.mxu0 0.0
  %9495 = vmatprep.subr.mxu0 0.0
  %9496 = vmatpush1.msra.mxu0 0.0
  %9497 = vmatprep.subr.mxu0 0.0
  %9498 = vmatpush1.msra.mxu0 0.0
  %9499 = vmatprep.subr.mxu0 0.0
  %9500 = vmatpush1.msra.mxu0 0.0
  %9501 = vmatprep.subr.mxu0 0.0
  %9502 = vmatpush1.msra.mxu0 0.0
  %9503 = vmatprep.subr.mxu0 0.0
  %9504 = vmatpush1.msra.mxu0 0.0
  %9505 = vmatprep.subr.mxu0 0.0
  %9506 = vmatpush1.msra.mxu0 0.0
  %9507 = vmatprep.subr.mxu0 0.0
  %9508 = vmatpush1.msra.mxu0 0.0
  %9509 = vmatprep.subr.mxu0 0.0
  %9510 = vmatpush1.msra.mxu0 0.0
  %9511 = vmatprep.subr.mxu0 0.0
  %9512 = vmatpush1.msra.mxu0 0.0
  %9513 = vmatprep.subr.mxu0 0.0
  %9514 = vmatpush1.msra.mxu0 0.0
  %9515 = vmatprep.subr.mxu0 0.0
  %9516 = vmatpush1.msra.mxu0 0.0
  %9517 = vmatprep.subr.mxu0 0.0
  %9518 = vmatpush1.msra.mxu0 0.0
  %9519 = vmatprep.subr.mxu0 0.0
  %9520 = vmatpush1.msra.mxu0 0.0
  %9521 = vmatprep.subr.mxu0 0.0
  %9522 = vmatpush1.msra.mxu0 0.0
  %9523 = vmatprep.subr.mxu0 0.0
  %9524 = vmatpush1.msra.mxu0 0.0
  %9525 = vmatprep.subr.mxu0 0.0
  %9526 = vmatpush1.msra.mxu0 0.0
  %9527 = vmatprep.subr.mxu0 0.0
  %9528 = vmatpush1.msra.mxu0 0.0
  %9529 = vmatprep.subr.mxu0 0.0
  %9530 = vmatpush1.msra.mxu0 0.0
  %9531 = vmatprep.mubr.f32.mxu0 0.0
  %9532 = vmatmul.mubr.f32.gmra.mrb[0].mxu0 %v9465
  %v9533 = vpop.f32.mrb[0].mxu0
  %v9534 = vadd.f32 0.0, %v9533
  %v9535 = vpop.f32.mrb[0].mxu0
  %9536 = vdwg.mxu0
  %v9537 = vadd.f32 %v9461, %v9534
  %s9538 = scalar_lea.vmem %s8, 88
  %v9539 = vld [vmem:[%s9538] sm:$0xff]
  %v9541 = vsel %vm8707, %v9539, 0
  %9543 = vmatprep.subr.mxu0 0.0
  %9544 = vmatpush1.msra.mxu0 %v8661
  %9545 = vmatprep.subr.mxu0 0.0
  %9546 = vmatpush1.msra.mxu0 %v8688
  %9547 = vmatprep.subr.mxu0 0.0
  %9548 = vmatpush1.msra.mxu0 0.0
  %9549 = vmatprep.subr.mxu0 0.0
  %9550 = vmatpush1.msra.mxu0 0.0
  %9551 = vmatprep.subr.mxu0 0.0
  %9552 = vmatpush1.msra.mxu0 0.0
  %9553 = vmatprep.subr.mxu0 0.0
  %9554 = vmatpush1.msra.mxu0 0.0
  %9555 = vmatprep.subr.mxu0 0.0
  %9556 = vmatpush1.msra.mxu0 0.0
  %9557 = vmatprep.subr.mxu0 0.0
  %9558 = vmatpush1.msra.mxu0 0.0
  %9559 = vmatprep.subr.mxu0 0.0
  %9560 = vmatpush1.msra.mxu0 0.0
  %9561 = vmatprep.subr.mxu0 0.0
  %9562 = vmatpush1.msra.mxu0 0.0
  %9563 = vmatprep.subr.mxu0 0.0
  %9564 = vmatpush1.msra.mxu0 0.0
  %9565 = vmatprep.subr.mxu0 0.0
  %9566 = vmatpush1.msra.mxu0 0.0
  %9567 = vmatprep.subr.mxu0 0.0
  %9568 = vmatpush1.msra.mxu0 0.0
  %9569 = vmatprep.subr.mxu0 0.0
  %9570 = vmatpush1.msra.mxu0 0.0
  %9571 = vmatprep.subr.mxu0 0.0
  %9572 = vmatpush1.msra.mxu0 0.0
  %9573 = vmatprep.subr.mxu0 0.0
  %9574 = vmatpush1.msra.mxu0 0.0
  %9575 = vmatprep.subr.mxu0 0.0
  %9576 = vmatpush1.msra.mxu0 0.0
  %9577 = vmatprep.subr.mxu0 0.0
  %9578 = vmatpush1.msra.mxu0 0.0
  %9579 = vmatprep.subr.mxu0 0.0
  %9580 = vmatpush1.msra.mxu0 0.0
  %9581 = vmatprep.subr.mxu0 0.0
  %9582 = vmatpush1.msra.mxu0 0.0
  %9583 = vmatprep.subr.mxu0 0.0
  %9584 = vmatpush1.msra.mxu0 0.0
  %9585 = vmatprep.subr.mxu0 0.0
  %9586 = vmatpush1.msra.mxu0 0.0
  %9587 = vmatprep.subr.mxu0 0.0
  %9588 = vmatpush1.msra.mxu0 0.0
  %9589 = vmatprep.subr.mxu0 0.0
  %9590 = vmatpush1.msra.mxu0 0.0
  %9591 = vmatprep.subr.mxu0 0.0
  %9592 = vmatpush1.msra.mxu0 0.0
  %9593 = vmatprep.subr.mxu0 0.0
  %9594 = vmatpush1.msra.mxu0 0.0
  %9595 = vmatprep.subr.mxu0 0.0
  %9596 = vmatpush1.msra.mxu0 0.0
  %9597 = vmatprep.subr.mxu0 0.0
  %9598 = vmatpush1.msra.mxu0 0.0
  %9599 = vmatprep.subr.mxu0 0.0
  %9600 = vmatpush1.msra.mxu0 0.0
  %9601 = vmatprep.subr.mxu0 0.0
  %9602 = vmatpush1.msra.mxu0 0.0
  %9603 = vmatprep.subr.mxu0 0.0
  %9604 = vmatpush1.msra.mxu0 0.0
  %9605 = vmatprep.subr.mxu0 0.0
  %9606 = vmatpush1.msra.mxu0 0.0
  %9607 = vmatprep.mubr.f32.mxu0 0.0
  %9608 = vmatmul.mubr.f32.gmra.mrb[0].mxu0 %v9541
  %v9609 = vpop.f32.mrb[0].mxu0
  %v9610 = vadd.f32 0.0, %v9609
  %v9611 = vpop.f32.mrb[0].mxu0
  %9612 = vdwg.mxu0
  %v9613 = vadd.f32 %v9537, %v9610
  %s9614 = scalar_lea.vmem %s8, 96
  %v9615 = vld [vmem:[%s9614] sm:$0xff]
  %v9617 = vsel %vm8707, %v9615, 0
  %9619 = vmatprep.subr.mxu0 0.0
  %9620 = vmatpush1.msra.mxu0 %v8662
  %9621 = vmatprep.subr.mxu0 0.0
  %9622 = vmatpush1.msra.mxu0 %v8689
  %9623 = vmatprep.subr.mxu0 0.0
  %9624 = vmatpush1.msra.mxu0 0.0
  %9625 = vmatprep.subr.mxu0 0.0
  %9626 = vmatpush1.msra.mxu0 0.0
  %9627 = vmatprep.subr.mxu0 0.0
  %9628 = vmatpush1.msra.mxu0 0.0
  %9629 = vmatprep.subr.mxu0 0.0
  %9630 = vmatpush1.msra.mxu0 0.0
  %9631 = vmatprep.subr.mxu0 0.0
  %9632 = vmatpush1.msra.mxu0 0.0
  %9633 = vmatprep.subr.mxu0 0.0
  %9634 = vmatpush1.msra.mxu0 0.0
  %9635 = vmatprep.subr.mxu0 0.0
  %9636 = vmatpush1.msra.mxu0 0.0
  %9637 = vmatprep.subr.mxu0 0.0
  %9638 = vmatpush1.msra.mxu0 0.0
  %9639 = vmatprep.subr.mxu0 0.0
  %9640 = vmatpush1.msra.mxu0 0.0
  %9641 = vmatprep.subr.mxu0 0.0
  %9642 = vmatpush1.msra.mxu0 0.0
  %9643 = vmatprep.subr.mxu0 0.0
  %9644 = vmatpush1.msra.mxu0 0.0
  %9645 = vmatprep.subr.mxu0 0.0
  %9646 = vmatpush1.msra.mxu0 0.0
  %9647 = vmatprep.subr.mxu0 0.0
  %9648 = vmatpush1.msra.mxu0 0.0
  %9649 = vmatprep.subr.mxu0 0.0
  %9650 = vmatpush1.msra.mxu0 0.0
  %9651 = vmatprep.subr.mxu0 0.0
  %9652 = vmatpush1.msra.mxu0 0.0
  %9653 = vmatprep.subr.mxu0 0.0
  %9654 = vmatpush1.msra.mxu0 0.0
  %9655 = vmatprep.subr.mxu0 0.0
  %9656 = vmatpush1.msra.mxu0 0.0
  %9657 = vmatprep.subr.mxu0 0.0
  %9658 = vmatpush1.msra.mxu0 0.0
  %9659 = vmatprep.subr.mxu0 0.0
  %9660 = vmatpush1.msra.mxu0 0.0
  %9661 = vmatprep.subr.mxu0 0.0
  %9662 = vmatpush1.msra.mxu0 0.0
  %9663 = vmatprep.subr.mxu0 0.0
  %9664 = vmatpush1.msra.mxu0 0.0
  %9665 = vmatprep.subr.mxu0 0.0
  %9666 = vmatpush1.msra.mxu0 0.0
  %9667 = vmatprep.subr.mxu0 0.0
  %9668 = vmatpush1.msra.mxu0 0.0
  %9669 = vmatprep.subr.mxu0 0.0
  %9670 = vmatpush1.msra.mxu0 0.0
  %9671 = vmatprep.subr.mxu0 0.0
  %9672 = vmatpush1.msra.mxu0 0.0
  %9673 = vmatprep.subr.mxu0 0.0
  %9674 = vmatpush1.msra.mxu0 0.0
  %9675 = vmatprep.subr.mxu0 0.0
  %9676 = vmatpush1.msra.mxu0 0.0
  %9677 = vmatprep.subr.mxu0 0.0
  %9678 = vmatpush1.msra.mxu0 0.0
  %9679 = vmatprep.subr.mxu0 0.0
  %9680 = vmatpush1.msra.mxu0 0.0
  %9681 = vmatprep.subr.mxu0 0.0
  %9682 = vmatpush1.msra.mxu0 0.0
  %9683 = vmatprep.mubr.f32.mxu0 0.0
  %9684 = vmatmul.mubr.f32.gmra.mrb[0].mxu0 %v9617
  %v9685 = vpop.f32.mrb[0].mxu0
  %v9686 = vadd.f32 0.0, %v9685
  %v9687 = vpop.f32.mrb[0].mxu0
  %9688 = vdwg.mxu0
  %v9689 = vadd.f32 %v9613, %v9686
  %s9690 = scalar_lea.vmem %s8, 104
  %v9691 = vld [vmem:[%s9690] sm:$0xff]
  %v9693 = vsel %vm8707, %v9691, 0
  %9695 = vmatprep.subr.mxu0 0.0
  %9696 = vmatpush1.msra.mxu0 %v8663
  %9697 = vmatprep.subr.mxu0 0.0
  %9698 = vmatpush1.msra.mxu0 %v8690
  %9699 = vmatprep.subr.mxu0 0.0
  %9700 = vmatpush1.msra.mxu0 0.0
  %9701 = vmatprep.subr.mxu0 0.0
  %9702 = vmatpush1.msra.mxu0 0.0
  %9703 = vmatprep.subr.mxu0 0.0
  %9704 = vmatpush1.msra.mxu0 0.0
  %9705 = vmatprep.subr.mxu0 0.0
  %9706 = vmatpush1.msra.mxu0 0.0
  %9707 = vmatprep.subr.mxu0 0.0
  %9708 = vmatpush1.msra.mxu0 0.0
  %9709 = vmatprep.subr.mxu0 0.0
  %9710 = vmatpush1.msra.mxu0 0.0
  %9711 = vmatprep.subr.mxu0 0.0
  %9712 = vmatpush1.msra.mxu0 0.0
  %9713 = vmatprep.subr.mxu0 0.0
  %9714 = vmatpush1.msra.mxu0 0.0
  %9715 = vmatprep.subr.mxu0 0.0
  %9716 = vmatpush1.msra.mxu0 0.0
  %9717 = vmatprep.subr.mxu0 0.0
  %9718 = vmatpush1.msra.mxu0 0.0
  %9719 = vmatprep.subr.mxu0 0.0
  %9720 = vmatpush1.msra.mxu0 0.0
  %9721 = vmatprep.subr.mxu0 0.0
  %9722 = vmatpush1.msra.mxu0 0.0
  %9723 = vmatprep.subr.mxu0 0.0
  %9724 = vmatpush1.msra.mxu0 0.0
  %9725 = vmatprep.subr.mxu0 0.0
  %9726 = vmatpush1.msra.mxu0 0.0
  %9727 = vmatprep.subr.mxu0 0.0
  %9728 = vmatpush1.msra.mxu0 0.0
  %9729 = vmatprep.subr.mxu0 0.0
  %9730 = vmatpush1.msra.mxu0 0.0
  %9731 = vmatprep.subr.mxu0 0.0
  %9732 = vmatpush1.msra.mxu0 0.0
  %9733 = vmatprep.subr.mxu0 0.0
  %9734 = vmatpush1.msra.mxu0 0.0
  %9735 = vmatprep.subr.mxu0 0.0
  %9736 = vmatpush1.msra.mxu0 0.0
  %9737 = vmatprep.subr.mxu0 0.0
  %9738 = vmatpush1.msra.mxu0 0.0
  %9739 = vmatprep.subr.mxu0 0.0
  %9740 = vmatpush1.msra.mxu0 0.0
  %9741 = vmatprep.subr.mxu0 0.0
  %9742 = vmatpush1.msra.mxu0 0.0
  %9743 = vmatprep.subr.mxu0 0.0
  %9744 = vmatpush1.msra.mxu0 0.0
  %9745 = vmatprep.subr.mxu0 0.0
  %9746 = vmatpush1.msra.mxu0 0.0
  %9747 = vmatprep.subr.mxu0 0.0
  %9748 = vmatpush1.msra.mxu0 0.0
  %9749 = vmatprep.subr.mxu0 0.0
  %9750 = vmatpush1.msra.mxu0 0.0
  %9751 = vmatprep.subr.mxu0 0.0
  %9752 = vmatpush1.msra.mxu0 0.0
  %9753 = vmatprep.subr.mxu0 0.0
  %9754 = vmatpush1.msra.mxu0 0.0
  %9755 = vmatprep.subr.mxu0 0.0
  %9756 = vmatpush1.msra.mxu0 0.0
  %9757 = vmatprep.subr.mxu0 0.0
  %9758 = vmatpush1.msra.mxu0 0.0
  %9759 = vmatprep.mubr.f32.mxu0 0.0
  %9760 = vmatmul.mubr.f32.gmra.mrb[0].mxu0 %v9693
  %v9761 = vpop.f32.mrb[0].mxu0
  %v9762 = vadd.f32 0.0, %v9761
  %v9763 = vpop.f32.mrb[0].mxu0
  %9764 = vdwg.mxu0
  %v9765 = vadd.f32 %v9689, %v9762
  %s9766 = scalar_lea.vmem %s8, 112
  %v9767 = vld [vmem:[%s9766] sm:$0xff]
  %v9769 = vsel %vm8707, %v9767, 0
  %9771 = vmatprep.subr.mxu0 0.0
  %9772 = vmatpush1.msra.mxu0 %v8664
  %9773 = vmatprep.subr.mxu0 0.0
  %9774 = vmatpush1.msra.mxu0 %v8691
  %9775 = vmatprep.subr.mxu0 0.0
  %9776 = vmatpush1.msra.mxu0 0.0
  %9777 = vmatprep.subr.mxu0 0.0
  %9778 = vmatpush1.msra.mxu0 0.0
  %9779 = vmatprep.subr.mxu0 0.0
  %9780 = vmatpush1.msra.mxu0 0.0
  %9781 = vmatprep.subr.mxu0 0.0
  %9782 = vmatpush1.msra.mxu0 0.0
  %9783 = vmatprep.subr.mxu0 0.0
  %9784 = vmatpush1.msra.mxu0 0.0
  %9785 = vmatprep.subr.mxu0 0.0
  %9786 = vmatpush1.msra.mxu0 0.0
  %9787 = vmatprep.subr.mxu0 0.0
  %9788 = vmatpush1.msra.mxu0 0.0
  %9789 = vmatprep.subr.mxu0 0.0
  %9790 = vmatpush1.msra.mxu0 0.0
  %9791 = vmatprep.subr.mxu0 0.0
  %9792 = vmatpush1.msra.mxu0 0.0
  %9793 = vmatprep.subr.mxu0 0.0
  %9794 = vmatpush1.msra.mxu0 0.0
  %9795 = vmatprep.subr.mxu0 0.0
  %9796 = vmatpush1.msra.mxu0 0.0
  %9797 = vmatprep.subr.mxu0 0.0
  %9798 = vmatpush1.msra.mxu0 0.0
  %9799 = vmatprep.subr.mxu0 0.0
  %9800 = vmatpush1.msra.mxu0 0.0
  %9801 = vmatprep.subr.mxu0 0.0
  %9802 = vmatpush1.msra.mxu0 0.0
  %9803 = vmatprep.subr.mxu0 0.0
  %9804 = vmatpush1.msra.mxu0 0.0
  %9805 = vmatprep.subr.mxu0 0.0
  %9806 = vmatpush1.msra.mxu0 0.0
  %9807 = vmatprep.subr.mxu0 0.0
  %9808 = vmatpush1.msra.mxu0 0.0
  %9809 = vmatprep.subr.mxu0 0.0
  %9810 = vmatpush1.msra.mxu0 0.0
  %9811 = vmatprep.subr.mxu0 0.0
  %9812 = vmatpush1.msra.mxu0 0.0
  %9813 = vmatprep.subr.mxu0 0.0
  %9814 = vmatpush1.msra.mxu0 0.0
  %9815 = vmatprep.subr.mxu0 0.0
  %9816 = vmatpush1.msra.mxu0 0.0
  %9817 = vmatprep.subr.mxu0 0.0
  %9818 = vmatpush1.msra.mxu0 0.0
  %9819 = vmatprep.subr.mxu0 0.0
  %9820 = vmatpush1.msra.mxu0 0.0
  %9821 = vmatprep.subr.mxu0 0.0
  %9822 = vmatpush1.msra.mxu0 0.0
  %9823 = vmatprep.subr.mxu0 0.0
  %9824 = vmatpush1.msra.mxu0 0.0
  %9825 = vmatprep.subr.mxu0 0.0
  %9826 = vmatpush1.msra.mxu0 0.0
  %9827 = vmatprep.subr.mxu0 0.0
  %9828 = vmatpush1.msra.mxu0 0.0
  %9829 = vmatprep.subr.mxu0 0.0
  %9830 = vmatpush1.msra.mxu0 0.0
  %9831 = vmatprep.subr.mxu0 0.0
  %9832 = vmatpush1.msra.mxu0 0.0
  %9833 = vmatprep.subr.mxu0 0.0
  %9834 = vmatpush1.msra.mxu0 0.0
  %9835 = vmatprep.mubr.f32.mxu0 0.0
  %9836 = vmatmul.mubr.f32.gmra.mrb[0].mxu0 %v9769
  %v9837 = vpop.f32.mrb[0].mxu0
  %v9838 = vadd.f32 0.0, %v9837
  %v9839 = vpop.f32.mrb[0].mxu0
  %9840 = vdwg.mxu0
  %v9841 = vadd.f32 %v9765, %v9838
  %s9842 = scalar_lea.vmem %s8, 120
  %v9843 = vld [vmem:[%s9842] sm:$0xff]
  %v9845 = vsel %vm8707, %v9843, 0
  %9847 = vmatprep.subr.mxu0 0.0
  %9848 = vmatpush1.msra.mxu0 %v8665
  %9849 = vmatprep.subr.mxu0 0.0
  %9850 = vmatpush1.msra.mxu0 %v8692
  %9851 = vmatprep.subr.mxu0 0.0
  %9852 = vmatpush1.msra.mxu0 0.0
  %9853 = vmatprep.subr.mxu0 0.0
  %9854 = vmatpush1.msra.mxu0 0.0
  %9855 = vmatprep.subr.mxu0 0.0
  %9856 = vmatpush1.msra.mxu0 0.0
  %9857 = vmatprep.subr.mxu0 0.0
  %9858 = vmatpush1.msra.mxu0 0.0
  %9859 = vmatprep.subr.mxu0 0.0
  %9860 = vmatpush1.msra.mxu0 0.0
  %9861 = vmatprep.subr.mxu0 0.0
  %9862 = vmatpush1.msra.mxu0 0.0
  %9863 = vmatprep.subr.mxu0 0.0
  %9864 = vmatpush1.msra.mxu0 0.0
  %9865 = vmatprep.subr.mxu0 0.0
  %9866 = vmatpush1.msra.mxu0 0.0
  %9867 = vmatprep.subr.mxu0 0.0
  %9868 = vmatpush1.msra.mxu0 0.0
  %9869 = vmatprep.subr.mxu0 0.0
  %9870 = vmatpush1.msra.mxu0 0.0
  %9871 = vmatprep.subr.mxu0 0.0
  %9872 = vmatpush1.msra.mxu0 0.0
  %9873 = vmatprep.subr.mxu0 0.0
  %9874 = vmatpush1.msra.mxu0 0.0
  %9875 = vmatprep.subr.mxu0 0.0
  %9876 = vmatpush1.msra.mxu0 0.0
  %9877 = vmatprep.subr.mxu0 0.0
  %9878 = vmatpush1.msra.mxu0 0.0
  %9879 = vmatprep.subr.mxu0 0.0
  %9880 = vmatpush1.msra.mxu0 0.0
  %9881 = vmatprep.subr.mxu0 0.0
  %9882 = vmatpush1.msra.mxu0 0.0
  %9883 = vmatprep.subr.mxu0 0.0
  %9884 = vmatpush1.msra.mxu0 0.0
  %9885 = vmatprep.subr.mxu0 0.0
  %9886 = vmatpush1.msra.mxu0 0.0
  %9887 = vmatprep.subr.mxu0 0.0
  %9888 = vmatpush1.msra.mxu0 0.0
  %9889 = vmatprep.subr.mxu0 0.0
  %9890 = vmatpush1.msra.mxu0 0.0
  %9891 = vmatprep.subr.mxu0 0.0
  %9892 = vmatpush1.msra.mxu0 0.0
  %9893 = vmatprep.subr.mxu0 0.0
  %9894 = vmatpush1.msra.mxu0 0.0
  %9895 = vmatprep.subr.mxu0 0.0
  %9896 = vmatpush1.msra.mxu0 0.0
  %9897 = vmatprep.subr.mxu0 0.0
  %9898 = vmatpush1.msra.mxu0 0.0
  %9899 = vmatprep.subr.mxu0 0.0
  %9900 = vmatpush1.msra.mxu0 0.0
  %9901 = vmatprep.subr.mxu0 0.0
  %9902 = vmatpush1.msra.mxu0 0.0
  %9903 = vmatprep.subr.mxu0 0.0
  %9904 = vmatpush1.msra.mxu0 0.0
  %9905 = vmatprep.subr.mxu0 0.0
  %9906 = vmatpush1.msra.mxu0 0.0
  %9907 = vmatprep.subr.mxu0 0.0
  %9908 = vmatpush1.msra.mxu0 0.0
  %9909 = vmatprep.subr.mxu0 0.0
  %9910 = vmatpush1.msra.mxu0 0.0
  %9911 = vmatprep.mubr.f32.mxu0 0.0
  %9912 = vmatmul.mubr.f32.gmra.mrb[0].mxu0 %v9845
  %v9913 = vpop.f32.mrb[0].mxu0
  %v9914 = vadd.f32 0.0, %v9913
  %v9915 = vpop.f32.mrb[0].mxu0
  %9916 = vdwg.mxu0
  %v9917 = vadd.f32 %v9841, %v9914
  %s9918 = scalar_lea.vmem %s8, 128
  %v9919 = vld [vmem:[%s9918] sm:$0xff]
  %v9921 = vsel %vm8707, %v9919, 0
  %9923 = vmatprep.subr.mxu0 0.0
  %9924 = vmatpush1.msra.mxu0 %v8666
  %9925 = vmatprep.subr.mxu0 0.0
  %9926 = vmatpush1.msra.mxu0 %v8693
  %9927 = vmatprep.subr.mxu0 0.0
  %9928 = vmatpush1.msra.mxu0 0.0
  %9929 = vmatprep.subr.mxu0 0.0
  %9930 = vmatpush1.msra.mxu0 0.0
  %9931 = vmatprep.subr.mxu0 0.0
  %9932 = vmatpush1.msra.mxu0 0.0
  %9933 = vmatprep.subr.mxu0 0.0
  %9934 = vmatpush1.msra.mxu0 0.0
  %9935 = vmatprep.subr.mxu0 0.0
  %9936 = vmatpush1.msra.mxu0 0.0
  %9937 = vmatprep.subr.mxu0 0.0
  %9938 = vmatpush1.msra.mxu0 0.0
  %9939 = vmatprep.subr.mxu0 0.0
  %9940 = vmatpush1.msra.mxu0 0.0
  %9941 = vmatprep.subr.mxu0 0.0
  %9942 = vmatpush1.msra.mxu0 0.0
  %9943 = vmatprep.subr.mxu0 0.0
  %9944 = vmatpush1.msra.mxu0 0.0
  %9945 = vmatprep.subr.mxu0 0.0
  %9946 = vmatpush1.msra.mxu0 0.0
  %9947 = vmatprep.subr.mxu0 0.0
  %9948 = vmatpush1.msra.mxu0 0.0
  %9949 = vmatprep.subr.mxu0 0.0
  %9950 = vmatpush1.msra.mxu0 0.0
  %9951 = vmatprep.subr.mxu0 0.0
  %9952 = vmatpush1.msra.mxu0 0.0
  %9953 = vmatprep.subr.mxu0 0.0
  %9954 = vmatpush1.msra.mxu0 0.0
  %9955 = vmatprep.subr.mxu0 0.0
  %9956 = vmatpush1.msra.mxu0 0.0
  %9957 = vmatprep.subr.mxu0 0.0
  %9958 = vmatpush1.msra.mxu0 0.0
  %9959 = vmatprep.subr.mxu0 0.0
  %9960 = vmatpush1.msra.mxu0 0.0
  %9961 = vmatprep.subr.mxu0 0.0
  %9962 = vmatpush1.msra.mxu0 0.0
  %9963 = vmatprep.subr.mxu0 0.0
  %9964 = vmatpush1.msra.mxu0 0.0
  %9965 = vmatprep.subr.mxu0 0.0
  %9966 = vmatpush1.msra.mxu0 0.0
  %9967 = vmatprep.subr.mxu0 0.0
  %9968 = vmatpush1.msra.mxu0 0.0
  %9969 = vmatprep.subr.mxu0 0.0
  %9970 = vmatpush1.msra.mxu0 0.0
  %9971 = vmatprep.subr.mxu0 0.0
  %9972 = vmatpush1.msra.mxu0 0.0
  %9973 = vmatprep.subr.mxu0 0.0
  %9974 = vmatpush1.msra.mxu0 0.0
  %9975 = vmatprep.subr.mxu0 0.0
  %9976 = vmatpush1.msra.mxu0 0.0
  %9977 = vmatprep.subr.mxu0 0.0
  %9978 = vmatpush1.msra.mxu0 0.0
  %9979 = vmatprep.subr.mxu0 0.0
  %9980 = vmatpush1.msra.mxu0 0.0
  %9981 = vmatprep.subr.mxu0 0.0
  %9982 = vmatpush1.msra.mxu0 0.0
  %9983 = vmatprep.subr.mxu0 0.0
  %9984 = vmatpush1.msra.mxu0 0.0
  %9985 = vmatprep.subr.mxu0 0.0
  %9986 = vmatpush1.msra.mxu0 0.0
  %9987 = vmatprep.mubr.f32.mxu0 0.0
  %9988 = vmatmul.mubr.f32.gmra.mrb[0].mxu0 %v9921
  %v9989 = vpop.f32.mrb[0].mxu0
  %v9990 = vadd.f32 0.0, %v9989
  %v9991 = vpop.f32.mrb[0].mxu0
  %9992 = vdwg.mxu0
  %v9993 = vadd.f32 %v9917, %v9990
  %s9994 = scalar_lea.vmem %s8, 136
  %v9995 = vld [vmem:[%s9994] sm:$0xff]
  %v9997 = vsel %vm8707, %v9995, 0
  %9999 = vmatprep.subr.mxu0 0.0
  %10000 = vmatpush1.msra.mxu0 %v8667
  %10001 = vmatprep.subr.mxu0 0.0
  %10002 = vmatpush1.msra.mxu0 %v8694
  %10003 = vmatprep.subr.mxu0 0.0
  %10004 = vmatpush1.msra.mxu0 0.0
  %10005 = vmatprep.subr.mxu0 0.0
  %10006 = vmatpush1.msra.mxu0 0.0
  %10007 = vmatprep.subr.mxu0 0.0
  %10008 = vmatpush1.msra.mxu0 0.0
  %10009 = vmatprep.subr.mxu0 0.0
  %10010 = vmatpush1.msra.mxu0 0.0
  %10011 = vmatprep.subr.mxu0 0.0
  %10012 = vmatpush1.msra.mxu0 0.0
  %10013 = vmatprep.subr.mxu0 0.0
  %10014 = vmatpush1.msra.mxu0 0.0
  %10015 = vmatprep.subr.mxu0 0.0
  %10016 = vmatpush1.msra.mxu0 0.0
  %10017 = vmatprep.subr.mxu0 0.0
  %10018 = vmatpush1.msra.mxu0 0.0
  %10019 = vmatprep.subr.mxu0 0.0
  %10020 = vmatpush1.msra.mxu0 0.0
  %10021 = vmatprep.subr.mxu0 0.0
  %10022 = vmatpush1.msra.mxu0 0.0
  %10023 = vmatprep.subr.mxu0 0.0
  %10024 = vmatpush1.msra.mxu0 0.0
  %10025 = vmatprep.subr.mxu0 0.0
  %10026 = vmatpush1.msra.mxu0 0.0
  %10027 = vmatprep.subr.mxu0 0.0
  %10028 = vmatpush1.msra.mxu0 0.0
  %10029 = vmatprep.subr.mxu0 0.0
  %10030 = vmatpush1.msra.mxu0 0.0
  %10031 = vmatprep.subr.mxu0 0.0
  %10032 = vmatpush1.msra.mxu0 0.0
  %10033 = vmatprep.subr.mxu0 0.0
  %10034 = vmatpush1.msra.mxu0 0.0
  %10035 = vmatprep.subr.mxu0 0.0
  %10036 = vmatpush1.msra.mxu0 0.0
  %10037 = vmatprep.subr.mxu0 0.0
  %10038 = vmatpush1.msra.mxu0 0.0
  %10039 = vmatprep.subr.mxu0 0.0
  %10040 = vmatpush1.msra.mxu0 0.0
  %10041 = vmatprep.subr.mxu0 0.0
  %10042 = vmatpush1.msra.mxu0 0.0
  %10043 = vmatprep.subr.mxu0 0.0
  %10044 = vmatpush1.msra.mxu0 0.0
  %10045 = vmatprep.subr.mxu0 0.0
  %10046 = vmatpush1.msra.mxu0 0.0
  %10047 = vmatprep.subr.mxu0 0.0
  %10048 = vmatpush1.msra.mxu0 0.0
  %10049 = vmatprep.subr.mxu0 0.0
  %10050 = vmatpush1.msra.mxu0 0.0
  %10051 = vmatprep.subr.mxu0 0.0
  %10052 = vmatpush1.msra.mxu0 0.0
  %10053 = vmatprep.subr.mxu0 0.0
  %10054 = vmatpush1.msra.mxu0 0.0
  %10055 = vmatprep.subr.mxu0 0.0
  %10056 = vmatpush1.msra.mxu0 0.0
  %10057 = vmatprep.subr.mxu0 0.0
  %10058 = vmatpush1.msra.mxu0 0.0
  %10059 = vmatprep.subr.mxu0 0.0
  %10060 = vmatpush1.msra.mxu0 0.0
  %10061 = vmatprep.subr.mxu0 0.0
  %10062 = vmatpush1.msra.mxu0 0.0
  %10063 = vmatprep.mubr.f32.mxu0 0.0
  %10064 = vmatmul.mubr.f32.gmra.mrb[0].mxu0 %v9997
  %v10065 = vpop.f32.mrb[0].mxu0
  %v10066 = vadd.f32 0.0, %v10065
  %v10067 = vpop.f32.mrb[0].mxu0
  %10068 = vdwg.mxu0
  %v10069 = vadd.f32 %v9993, %v10066
  %s10070 = scalar_lea.vmem %s8, 144
  %v10071 = vld [vmem:[%s10070] sm:$0xff]
  %v10073 = vsel %vm8707, %v10071, 0
  %10075 = vmatprep.subr.mxu0 0.0
  %10076 = vmatpush1.msra.mxu0 %v8668
  %10077 = vmatprep.subr.mxu0 0.0
  %10078 = vmatpush1.msra.mxu0 %v8695
  %10079 = vmatprep.subr.mxu0 0.0
  %10080 = vmatpush1.msra.mxu0 0.0
  %10081 = vmatprep.subr.mxu0 0.0
  %10082 = vmatpush1.msra.mxu0 0.0
  %10083 = vmatprep.subr.mxu0 0.0
  %10084 = vmatpush1.msra.mxu0 0.0
  %10085 = vmatprep.subr.mxu0 0.0
  %10086 = vmatpush1.msra.mxu0 0.0
  %10087 = vmatprep.subr.mxu0 0.0
  %10088 = vmatpush1.msra.mxu0 0.0
  %10089 = vmatprep.subr.mxu0 0.0
  %10090 = vmatpush1.msra.mxu0 0.0
  %10091 = vmatprep.subr.mxu0 0.0
  %10092 = vmatpush1.msra.mxu0 0.0
  %10093 = vmatprep.subr.mxu0 0.0
  %10094 = vmatpush1.msra.mxu0 0.0
  %10095 = vmatprep.subr.mxu0 0.0
  %10096 = vmatpush1.msra.mxu0 0.0
  %10097 = vmatprep.subr.mxu0 0.0
  %10098 = vmatpush1.msra.mxu0 0.0
  %10099 = vmatprep.subr.mxu0 0.0
  %10100 = vmatpush1.msra.mxu0 0.0
  %10101 = vmatprep.subr.mxu0 0.0
  %10102 = vmatpush1.msra.mxu0 0.0
  %10103 = vmatprep.subr.mxu0 0.0
  %10104 = vmatpush1.msra.mxu0 0.0
  %10105 = vmatprep.subr.mxu0 0.0
  %10106 = vmatpush1.msra.mxu0 0.0
  %10107 = vmatprep.subr.mxu0 0.0
  %10108 = vmatpush1.msra.mxu0 0.0
  %10109 = vmatprep.subr.mxu0 0.0
  %10110 = vmatpush1.msra.mxu0 0.0
  %10111 = vmatprep.subr.mxu0 0.0
  %10112 = vmatpush1.msra.mxu0 0.0
  %10113 = vmatprep.subr.mxu0 0.0
  %10114 = vmatpush1.msra.mxu0 0.0
  %10115 = vmatprep.subr.mxu0 0.0
  %10116 = vmatpush1.msra.mxu0 0.0
  %10117 = vmatprep.subr.mxu0 0.0
  %10118 = vmatpush1.msra.mxu0 0.0
  %10119 = vmatprep.subr.mxu0 0.0
  %10120 = vmatpush1.msra.mxu0 0.0
  %10121 = vmatprep.subr.mxu0 0.0
  %10122 = vmatpush1.msra.mxu0 0.0
  %10123 = vmatprep.subr.mxu0 0.0
  %10124 = vmatpush1.msra.mxu0 0.0
  %10125 = vmatprep.subr.mxu0 0.0
  %10126 = vmatpush1.msra.mxu0 0.0
  %10127 = vmatprep.subr.mxu0 0.0
  %10128 = vmatpush1.msra.mxu0 0.0
  %10129 = vmatprep.subr.mxu0 0.0
  %10130 = vmatpush1.msra.mxu0 0.0
  %10131 = vmatprep.subr.mxu0 0.0
  %10132 = vmatpush1.msra.mxu0 0.0
  %10133 = vmatprep.subr.mxu0 0.0
  %10134 = vmatpush1.msra.mxu0 0.0
  %10135 = vmatprep.subr.mxu0 0.0
  %10136 = vmatpush1.msra.mxu0 0.0
  %10137 = vmatprep.subr.mxu0 0.0
  %10138 = vmatpush1.msra.mxu0 0.0
  %10139 = vmatprep.mubr.f32.mxu0 0.0
  %10140 = vmatmul.mubr.f32.gmra.mrb[0].mxu0 %v10073
  %v10141 = vpop.f32.mrb[0].mxu0
  %v10142 = vadd.f32 0.0, %v10141
  %v10143 = vpop.f32.mrb[0].mxu0
  %10144 = vdwg.mxu0
  %v10145 = vadd.f32 %v10069, %v10142
  %s10146 = scalar_lea.vmem %s8, 152
  %v10147 = vld [vmem:[%s10146] sm:$0xff]
  %v10149 = vsel %vm8707, %v10147, 0
  %10151 = vmatprep.subr.mxu0 0.0
  %10152 = vmatpush1.msra.mxu0 %v8669
  %10153 = vmatprep.subr.mxu0 0.0
  %10154 = vmatpush1.msra.mxu0 %v8696
  %10155 = vmatprep.subr.mxu0 0.0
  %10156 = vmatpush1.msra.mxu0 0.0
  %10157 = vmatprep.subr.mxu0 0.0
  %10158 = vmatpush1.msra.mxu0 0.0
  %10159 = vmatprep.subr.mxu0 0.0
  %10160 = vmatpush1.msra.mxu0 0.0
  %10161 = vmatprep.subr.mxu0 0.0
  %10162 = vmatpush1.msra.mxu0 0.0
  %10163 = vmatprep.subr.mxu0 0.0
  %10164 = vmatpush1.msra.mxu0 0.0
  %10165 = vmatprep.subr.mxu0 0.0
  %10166 = vmatpush1.msra.mxu0 0.0
  %10167 = vmatprep.subr.mxu0 0.0
  %10168 = vmatpush1.msra.mxu0 0.0
  %10169 = vmatprep.subr.mxu0 0.0
  %10170 = vmatpush1.msra.mxu0 0.0
  %10171 = vmatprep.subr.mxu0 0.0
  %10172 = vmatpush1.msra.mxu0 0.0
  %10173 = vmatprep.subr.mxu0 0.0
  %10174 = vmatpush1.msra.mxu0 0.0
  %10175 = vmatprep.subr.mxu0 0.0
  %10176 = vmatpush1.msra.mxu0 0.0
  %10177 = vmatprep.subr.mxu0 0.0
  %10178 = vmatpush1.msra.mxu0 0.0
  %10179 = vmatprep.subr.mxu0 0.0
  %10180 = vmatpush1.msra.mxu0 0.0
  %10181 = vmatprep.subr.mxu0 0.0
  %10182 = vmatpush1.msra.mxu0 0.0
  %10183 = vmatprep.subr.mxu0 0.0
  %10184 = vmatpush1.msra.mxu0 0.0
  %10185 = vmatprep.subr.mxu0 0.0
  %10186 = vmatpush1.msra.mxu0 0.0
  %10187 = vmatprep.subr.mxu0 0.0
  %10188 = vmatpush1.msra.mxu0 0.0
  %10189 = vmatprep.subr.mxu0 0.0
  %10190 = vmatpush1.msra.mxu0 0.0
  %10191 = vmatprep.subr.mxu0 0.0
  %10192 = vmatpush1.msra.mxu0 0.0
  %10193 = vmatprep.subr.mxu0 0.0
  %10194 = vmatpush1.msra.mxu0 0.0
  %10195 = vmatprep.subr.mxu0 0.0
  %10196 = vmatpush1.msra.mxu0 0.0
  %10197 = vmatprep.subr.mxu0 0.0
  %10198 = vmatpush1.msra.mxu0 0.0
  %10199 = vmatprep.subr.mxu0 0.0
  %10200 = vmatpush1.msra.mxu0 0.0
  %10201 = vmatprep.subr.mxu0 0.0
  %10202 = vmatpush1.msra.mxu0 0.0
  %10203 = vmatprep.subr.mxu0 0.0
  %10204 = vmatpush1.msra.mxu0 0.0
  %10205 = vmatprep.subr.mxu0 0.0
  %10206 = vmatpush1.msra.mxu0 0.0
  %10207 = vmatprep.subr.mxu0 0.0
  %10208 = vmatpush1.msra.mxu0 0.0
  %10209 = vmatprep.subr.mxu0 0.0
  %10210 = vmatpush1.msra.mxu0 0.0
  %10211 = vmatprep.subr.mxu0 0.0
  %10212 = vmatpush1.msra.mxu0 0.0
  %10213 = vmatprep.subr.mxu0 0.0
  %10214 = vmatpush1.msra.mxu0 0.0
  %10215 = vmatprep.mubr.f32.mxu0 0.0
  %10216 = vmatmul.mubr.f32.gmra.mrb[0].mxu0 %v10149
  %v10217 = vpop.f32.mrb[0].mxu0
  %v10218 = vadd.f32 0.0, %v10217
  %v10219 = vpop.f32.mrb[0].mxu0
  %10220 = vdwg.mxu0
  %v10221 = vadd.f32 %v10145, %v10218
  %s10222 = scalar_lea.vmem %s8, 160
  %v10223 = vld [vmem:[%s10222] sm:$0xff]
  %v10225 = vsel %vm8707, %v10223, 0
  %10227 = vmatprep.subr.mxu0 0.0
  %10228 = vmatpush1.msra.mxu0 %v8670
  %10229 = vmatprep.subr.mxu0 0.0
  %10230 = vmatpush1.msra.mxu0 %v8697
  %10231 = vmatprep.subr.mxu0 0.0
  %10232 = vmatpush1.msra.mxu0 0.0
  %10233 = vmatprep.subr.mxu0 0.0
  %10234 = vmatpush1.msra.mxu0 0.0
  %10235 = vmatprep.subr.mxu0 0.0
  %10236 = vmatpush1.msra.mxu0 0.0
  %10237 = vmatprep.subr.mxu0 0.0
  %10238 = vmatpush1.msra.mxu0 0.0
  %10239 = vmatprep.subr.mxu0 0.0
  %10240 = vmatpush1.msra.mxu0 0.0
  %10241 = vmatprep.subr.mxu0 0.0
  %10242 = vmatpush1.msra.mxu0 0.0
  %10243 = vmatprep.subr.mxu0 0.0
  %10244 = vmatpush1.msra.mxu0 0.0
  %10245 = vmatprep.subr.mxu0 0.0
  %10246 = vmatpush1.msra.mxu0 0.0
  %10247 = vmatprep.subr.mxu0 0.0
  %10248 = vmatpush1.msra.mxu0 0.0
  %10249 = vmatprep.subr.mxu0 0.0
  %10250 = vmatpush1.msra.mxu0 0.0
  %10251 = vmatprep.subr.mxu0 0.0
  %10252 = vmatpush1.msra.mxu0 0.0
  %10253 = vmatprep.subr.mxu0 0.0
  %10254 = vmatpush1.msra.mxu0 0.0
  %10255 = vmatprep.subr.mxu0 0.0
  %10256 = vmatpush1.msra.mxu0 0.0
  %10257 = vmatprep.subr.mxu0 0.0
  %10258 = vmatpush1.msra.mxu0 0.0
  %10259 = vmatprep.subr.mxu0 0.0
  %10260 = vmatpush1.msra.mxu0 0.0
  %10261 = vmatprep.subr.mxu0 0.0
  %10262 = vmatpush1.msra.mxu0 0.0
  %10263 = vmatprep.subr.mxu0 0.0
  %10264 = vmatpush1.msra.mxu0 0.0
  %10265 = vmatprep.subr.mxu0 0.0
  %10266 = vmatpush1.msra.mxu0 0.0
  %10267 = vmatprep.subr.mxu0 0.0
  %10268 = vmatpush1.msra.mxu0 0.0
  %10269 = vmatprep.subr.mxu0 0.0
  %10270 = vmatpush1.msra.mxu0 0.0
  %10271 = vmatprep.subr.mxu0 0.0
  %10272 = vmatpush1.msra.mxu0 0.0
  %10273 = vmatprep.subr.mxu0 0.0
  %10274 = vmatpush1.msra.mxu0 0.0
  %10275 = vmatprep.subr.mxu0 0.0
  %10276 = vmatpush1.msra.mxu0 0.0
  %10277 = vmatprep.subr.mxu0 0.0
  %10278 = vmatpush1.msra.mxu0 0.0
  %10279 = vmatprep.subr.mxu0 0.0
  %10280 = vmatpush1.msra.mxu0 0.0
  %10281 = vmatprep.subr.mxu0 0.0
  %10282 = vmatpush1.msra.mxu0 0.0
  %10283 = vmatprep.subr.mxu0 0.0
  %10284 = vmatpush1.msra.mxu0 0.0
  %10285 = vmatprep.subr.mxu0 0.0
  %10286 = vmatpush1.msra.mxu0 0.0
  %10287 = vmatprep.subr.mxu0 0.0
  %10288 = vmatpush1.msra.mxu0 0.0
  %10289 = vmatprep.subr.mxu0 0.0
  %10290 = vmatpush1.msra.mxu0 0.0
  %10291 = vmatprep.mubr.f32.mxu0 0.0
  %10292 = vmatmul.mubr.f32.gmra.mrb[0].mxu0 %v10225
  %v10293 = vpop.f32.mrb[0].mxu0
  %v10294 = vadd.f32 0.0, %v10293
  %v10295 = vpop.f32.mrb[0].mxu0
  %10296 = vdwg.mxu0
  %v10297 = vadd.f32 %v10221, %v10294
  %s10298 = scalar_lea.vmem %s8, 168
  %v10299 = vld [vmem:[%s10298] sm:$0xff]
  %v10301 = vsel %vm8707, %v10299, 0
  %10303 = vmatprep.subr.mxu0 0.0
  %10304 = vmatpush1.msra.mxu0 %v8671
  %10305 = vmatprep.subr.mxu0 0.0
  %10306 = vmatpush1.msra.mxu0 %v8698
  %10307 = vmatprep.subr.mxu0 0.0
  %10308 = vmatpush1.msra.mxu0 0.0
  %10309 = vmatprep.subr.mxu0 0.0
  %10310 = vmatpush1.msra.mxu0 0.0
  %10311 = vmatprep.subr.mxu0 0.0
  %10312 = vmatpush1.msra.mxu0 0.0
  %10313 = vmatprep.subr.mxu0 0.0
  %10314 = vmatpush1.msra.mxu0 0.0
  %10315 = vmatprep.subr.mxu0 0.0
  %10316 = vmatpush1.msra.mxu0 0.0
  %10317 = vmatprep.subr.mxu0 0.0
  %10318 = vmatpush1.msra.mxu0 0.0
  %10319 = vmatprep.subr.mxu0 0.0
  %10320 = vmatpush1.msra.mxu0 0.0
  %10321 = vmatprep.subr.mxu0 0.0
  %10322 = vmatpush1.msra.mxu0 0.0
  %10323 = vmatprep.subr.mxu0 0.0
  %10324 = vmatpush1.msra.mxu0 0.0
  %10325 = vmatprep.subr.mxu0 0.0
  %10326 = vmatpush1.msra.mxu0 0.0
  %10327 = vmatprep.subr.mxu0 0.0
  %10328 = vmatpush1.msra.mxu0 0.0
  %10329 = vmatprep.subr.mxu0 0.0
  %10330 = vmatpush1.msra.mxu0 0.0
  %10331 = vmatprep.subr.mxu0 0.0
  %10332 = vmatpush1.msra.mxu0 0.0
  %10333 = vmatprep.subr.mxu0 0.0
  %10334 = vmatpush1.msra.mxu0 0.0
  %10335 = vmatprep.subr.mxu0 0.0
  %10336 = vmatpush1.msra.mxu0 0.0
  %10337 = vmatprep.subr.mxu0 0.0
  %10338 = vmatpush1.msra.mxu0 0.0
  %10339 = vmatprep.subr.mxu0 0.0
  %10340 = vmatpush1.msra.mxu0 0.0
  %10341 = vmatprep.subr.mxu0 0.0
  %10342 = vmatpush1.msra.mxu0 0.0
  %10343 = vmatprep.subr.mxu0 0.0
  %10344 = vmatpush1.msra.mxu0 0.0
  %10345 = vmatprep.subr.mxu0 0.0
  %10346 = vmatpush1.msra.mxu0 0.0
  %10347 = vmatprep.subr.mxu0 0.0
  %10348 = vmatpush1.msra.mxu0 0.0
  %10349 = vmatprep.subr.mxu0 0.0
  %10350 = vmatpush1.msra.mxu0 0.0
  %10351 = vmatprep.subr.mxu0 0.0
  %10352 = vmatpush1.msra.mxu0 0.0
  %10353 = vmatprep.subr.mxu0 0.0
  %10354 = vmatpush1.msra.mxu0 0.0
  %10355 = vmatprep.subr.mxu0 0.0
  %10356 = vmatpush1.msra.mxu0 0.0
  %10357 = vmatprep.subr.mxu0 0.0
  %10358 = vmatpush1.msra.mxu0 0.0
  %10359 = vmatprep.subr.mxu0 0.0
  %10360 = vmatpush1.msra.mxu0 0.0
  %10361 = vmatprep.subr.mxu0 0.0
  %10362 = vmatpush1.msra.mxu0 0.0
  %10363 = vmatprep.subr.mxu0 0.0
  %10364 = vmatpush1.msra.mxu0 0.0
  %10365 = vmatprep.subr.mxu0 0.0
  %10366 = vmatpush1.msra.mxu0 0.0
  %10367 = vmatprep.mubr.f32.mxu0 0.0
  %10368 = vmatmul.mubr.f32.gmra.mrb[0].mxu0 %v10301
  %v10369 = vpop.f32.mrb[0].mxu0
  %v10370 = vadd.f32 0.0, %v10369
  %v10371 = vpop.f32.mrb[0].mxu0
  %10372 = vdwg.mxu0
  %v10373 = vadd.f32 %v10297, %v10370
  %s10374 = scalar_lea.vmem %s8, 176
  %v10375 = vld [vmem:[%s10374] sm:$0xff]
  %v10377 = vsel %vm8707, %v10375, 0
  %10379 = vmatprep.subr.mxu0 0.0
  %10380 = vmatpush1.msra.mxu0 %v8672
  %10381 = vmatprep.subr.mxu0 0.0
  %10382 = vmatpush1.msra.mxu0 %v8699
  %10383 = vmatprep.subr.mxu0 0.0
  %10384 = vmatpush1.msra.mxu0 0.0
  %10385 = vmatprep.subr.mxu0 0.0
  %10386 = vmatpush1.msra.mxu0 0.0
  %10387 = vmatprep.subr.mxu0 0.0
  %10388 = vmatpush1.msra.mxu0 0.0
  %10389 = vmatprep.subr.mxu0 0.0
  %10390 = vmatpush1.msra.mxu0 0.0
  %10391 = vmatprep.subr.mxu0 0.0
  %10392 = vmatpush1.msra.mxu0 0.0
  %10393 = vmatprep.subr.mxu0 0.0
  %10394 = vmatpush1.msra.mxu0 0.0
  %10395 = vmatprep.subr.mxu0 0.0
  %10396 = vmatpush1.msra.mxu0 0.0
  %10397 = vmatprep.subr.mxu0 0.0
  %10398 = vmatpush1.msra.mxu0 0.0
  %10399 = vmatprep.subr.mxu0 0.0
  %10400 = vmatpush1.msra.mxu0 0.0
  %10401 = vmatprep.subr.mxu0 0.0
  %10402 = vmatpush1.msra.mxu0 0.0
  %10403 = vmatprep.subr.mxu0 0.0
  %10404 = vmatpush1.msra.mxu0 0.0
  %10405 = vmatprep.subr.mxu0 0.0
  %10406 = vmatpush1.msra.mxu0 0.0
  %10407 = vmatprep.subr.mxu0 0.0
  %10408 = vmatpush1.msra.mxu0 0.0
  %10409 = vmatprep.subr.mxu0 0.0
  %10410 = vmatpush1.msra.mxu0 0.0
  %10411 = vmatprep.subr.mxu0 0.0
  %10412 = vmatpush1.msra.mxu0 0.0
  %10413 = vmatprep.subr.mxu0 0.0
  %10414 = vmatpush1.msra.mxu0 0.0
  %10415 = vmatprep.subr.mxu0 0.0
  %10416 = vmatpush1.msra.mxu0 0.0
  %10417 = vmatprep.subr.mxu0 0.0
  %10418 = vmatpush1.msra.mxu0 0.0
  %10419 = vmatprep.subr.mxu0 0.0
  %10420 = vmatpush1.msra.mxu0 0.0
  %10421 = vmatprep.subr.mxu0 0.0
  %10422 = vmatpush1.msra.mxu0 0.0
  %10423 = vmatprep.subr.mxu0 0.0
  %10424 = vmatpush1.msra.mxu0 0.0
  %10425 = vmatprep.subr.mxu0 0.0
  %10426 = vmatpush1.msra.mxu0 0.0
  %10427 = vmatprep.subr.mxu0 0.0
  %10428 = vmatpush1.msra.mxu0 0.0
  %10429 = vmatprep.subr.mxu0 0.0
  %10430 = vmatpush1.msra.mxu0 0.0
  %10431 = vmatprep.subr.mxu0 0.0
  %10432 = vmatpush1.msra.mxu0 0.0
  %10433 = vmatprep.subr.mxu0 0.0
  %10434 = vmatpush1.msra.mxu0 0.0
  %10435 = vmatprep.subr.mxu0 0.0
  %10436 = vmatpush1.msra.mxu0 0.0
  %10437 = vmatprep.subr.mxu0 0.0
  %10438 = vmatpush1.msra.mxu0 0.0
  %10439 = vmatprep.subr.mxu0 0.0
  %10440 = vmatpush1.msra.mxu0 0.0
  %10441 = vmatprep.subr.mxu0 0.0
  %10442 = vmatpush1.msra.mxu0 0.0
  %10443 = vmatprep.mubr.f32.mxu0 0.0
  %10444 = vmatmul.mubr.f32.gmra.mrb[0].mxu0 %v10377
  %v10445 = vpop.f32.mrb[0].mxu0
  %v10446 = vadd.f32 0.0, %v10445
  %v10447 = vpop.f32.mrb[0].mxu0
  %10448 = vdwg.mxu0
  %v10449 = vadd.f32 %v10373, %v10446
  %s10450 = scalar_lea.vmem %s8, 184
  %v10451 = vld [vmem:[%s10450] sm:$0xff]
  %v10453 = vsel %vm8707, %v10451, 0
  %10455 = vmatprep.subr.mxu0 0.0
  %10456 = vmatpush1.msra.mxu0 %v8673
  %10457 = vmatprep.subr.mxu0 0.0
  %10458 = vmatpush1.msra.mxu0 %v8700
  %10459 = vmatprep.subr.mxu0 0.0
  %10460 = vmatpush1.msra.mxu0 0.0
  %10461 = vmatprep.subr.mxu0 0.0
  %10462 = vmatpush1.msra.mxu0 0.0
  %10463 = vmatprep.subr.mxu0 0.0
  %10464 = vmatpush1.msra.mxu0 0.0
  %10465 = vmatprep.subr.mxu0 0.0
  %10466 = vmatpush1.msra.mxu0 0.0
  %10467 = vmatprep.subr.mxu0 0.0
  %10468 = vmatpush1.msra.mxu0 0.0
  %10469 = vmatprep.subr.mxu0 0.0
  %10470 = vmatpush1.msra.mxu0 0.0
  %10471 = vmatprep.subr.mxu0 0.0
  %10472 = vmatpush1.msra.mxu0 0.0
  %10473 = vmatprep.subr.mxu0 0.0
  %10474 = vmatpush1.msra.mxu0 0.0
  %10475 = vmatprep.subr.mxu0 0.0
  %10476 = vmatpush1.msra.mxu0 0.0
  %10477 = vmatprep.subr.mxu0 0.0
  %10478 = vmatpush1.msra.mxu0 0.0
  %10479 = vmatprep.subr.mxu0 0.0
  %10480 = vmatpush1.msra.mxu0 0.0
  %10481 = vmatprep.subr.mxu0 0.0
  %10482 = vmatpush1.msra.mxu0 0.0
  %10483 = vmatprep.subr.mxu0 0.0
  %10484 = vmatpush1.msra.mxu0 0.0
  %10485 = vmatprep.subr.mxu0 0.0
  %10486 = vmatpush1.msra.mxu0 0.0
  %10487 = vmatprep.subr.mxu0 0.0
  %10488 = vmatpush1.msra.mxu0 0.0
  %10489 = vmatprep.subr.mxu0 0.0
  %10490 = vmatpush1.msra.mxu0 0.0
  %10491 = vmatprep.subr.mxu0 0.0
  %10492 = vmatpush1.msra.mxu0 0.0
  %10493 = vmatprep.subr.mxu0 0.0
  %10494 = vmatpush1.msra.mxu0 0.0
  %10495 = vmatprep.subr.mxu0 0.0
  %10496 = vmatpush1.msra.mxu0 0.0
  %10497 = vmatprep.subr.mxu0 0.0
  %10498 = vmatpush1.msra.mxu0 0.0
  %10499 = vmatprep.subr.mxu0 0.0
  %10500 = vmatpush1.msra.mxu0 0.0
  %10501 = vmatprep.subr.mxu0 0.0
  %10502 = vmatpush1.msra.mxu0 0.0
  %10503 = vmatprep.subr.mxu0 0.0
  %10504 = vmatpush1.msra.mxu0 0.0
  %10505 = vmatprep.subr.mxu0 0.0
  %10506 = vmatpush1.msra.mxu0 0.0
  %10507 = vmatprep.subr.mxu0 0.0
  %10508 = vmatpush1.msra.mxu0 0.0
  %10509 = vmatprep.subr.mxu0 0.0
  %10510 = vmatpush1.msra.mxu0 0.0
  %10511 = vmatprep.subr.mxu0 0.0
  %10512 = vmatpush1.msra.mxu0 0.0
  %10513 = vmatprep.subr.mxu0 0.0
  %10514 = vmatpush1.msra.mxu0 0.0
  %10515 = vmatprep.subr.mxu0 0.0
  %10516 = vmatpush1.msra.mxu0 0.0
  %10517 = vmatprep.subr.mxu0 0.0
  %10518 = vmatpush1.msra.mxu0 0.0
  %10519 = vmatprep.mubr.f32.mxu0 0.0
  %10520 = vmatmul.mubr.f32.gmra.mrb[0].mxu0 %v10453
  %v10521 = vpop.f32.mrb[0].mxu0
  %v10522 = vadd.f32 0.0, %v10521
  %v10523 = vpop.f32.mrb[0].mxu0
  %10524 = vdwg.mxu0
  %v10525 = vadd.f32 %v10449, %v10522
  %s10526 = scalar_lea.vmem %s8, 192
  %v10527 = vld [vmem:[%s10526] sm:$0xff]
  %v10529 = vsel %vm8707, %v10527, 0
  %10531 = vmatprep.subr.mxu0 0.0
  %10532 = vmatpush1.msra.mxu0 %v8674
  %10533 = vmatprep.subr.mxu0 0.0
  %10534 = vmatpush1.msra.mxu0 %v8701
  %10535 = vmatprep.subr.mxu0 0.0
  %10536 = vmatpush1.msra.mxu0 0.0
  %10537 = vmatprep.subr.mxu0 0.0
  %10538 = vmatpush1.msra.mxu0 0.0
  %10539 = vmatprep.subr.mxu0 0.0
  %10540 = vmatpush1.msra.mxu0 0.0
  %10541 = vmatprep.subr.mxu0 0.0
  %10542 = vmatpush1.msra.mxu0 0.0
  %10543 = vmatprep.subr.mxu0 0.0
  %10544 = vmatpush1.msra.mxu0 0.0
  %10545 = vmatprep.subr.mxu0 0.0
  %10546 = vmatpush1.msra.mxu0 0.0
  %10547 = vmatprep.subr.mxu0 0.0
  %10548 = vmatpush1.msra.mxu0 0.0
  %10549 = vmatprep.subr.mxu0 0.0
  %10550 = vmatpush1.msra.mxu0 0.0
  %10551 = vmatprep.subr.mxu0 0.0
  %10552 = vmatpush1.msra.mxu0 0.0
  %10553 = vmatprep.subr.mxu0 0.0
  %10554 = vmatpush1.msra.mxu0 0.0
  %10555 = vmatprep.subr.mxu0 0.0
  %10556 = vmatpush1.msra.mxu0 0.0
  %10557 = vmatprep.subr.mxu0 0.0
  %10558 = vmatpush1.msra.mxu0 0.0
  %10559 = vmatprep.subr.mxu0 0.0
  %10560 = vmatpush1.msra.mxu0 0.0
  %10561 = vmatprep.subr.mxu0 0.0
  %10562 = vmatpush1.msra.mxu0 0.0
  %10563 = vmatprep.subr.mxu0 0.0
  %10564 = vmatpush1.msra.mxu0 0.0
  %10565 = vmatprep.subr.mxu0 0.0
  %10566 = vmatpush1.msra.mxu0 0.0
  %10567 = vmatprep.subr.mxu0 0.0
  %10568 = vmatpush1.msra.mxu0 0.0
  %10569 = vmatprep.subr.mxu0 0.0
  %10570 = vmatpush1.msra.mxu0 0.0
  %10571 = vmatprep.subr.mxu0 0.0
  %10572 = vmatpush1.msra.mxu0 0.0
  %10573 = vmatprep.subr.mxu0 0.0
  %10574 = vmatpush1.msra.mxu0 0.0
  %10575 = vmatprep.subr.mxu0 0.0
  %10576 = vmatpush1.msra.mxu0 0.0
  %10577 = vmatprep.subr.mxu0 0.0
  %10578 = vmatpush1.msra.mxu0 0.0
  %10579 = vmatprep.subr.mxu0 0.0
  %10580 = vmatpush1.msra.mxu0 0.0
  %10581 = vmatprep.subr.mxu0 0.0
  %10582 = vmatpush1.msra.mxu0 0.0
  %10583 = vmatprep.subr.mxu0 0.0
  %10584 = vmatpush1.msra.mxu0 0.0
  %10585 = vmatprep.subr.mxu0 0.0
  %10586 = vmatpush1.msra.mxu0 0.0
  %10587 = vmatprep.subr.mxu0 0.0
  %10588 = vmatpush1.msra.mxu0 0.0
  %10589 = vmatprep.subr.mxu0 0.0
  %10590 = vmatpush1.msra.mxu0 0.0
  %10591 = vmatprep.subr.mxu0 0.0
  %10592 = vmatpush1.msra.mxu0 0.0
  %10593 = vmatprep.subr.mxu0 0.0
  %10594 = vmatpush1.msra.mxu0 0.0
  %10595 = vmatprep.mubr.f32.mxu0 0.0
  %10596 = vmatmul.mubr.f32.gmra.mrb[0].mxu0 %v10529
  %v10597 = vpop.f32.mrb[0].mxu0
  %v10598 = vadd.f32 0.0, %v10597
  %v10599 = vpop.f32.mrb[0].mxu0
  %10600 = vdwg.mxu0
  %v10601 = vadd.f32 %v10525, %v10598
  %s10602 = scalar_lea.vmem %s8, 200
  %v10603 = vld [vmem:[%s10602] sm:$0xff]
  %v10605 = vsel %vm8707, %v10603, 0
  %10607 = vmatprep.subr.mxu0 0.0
  %10608 = vmatpush1.msra.mxu0 %v8675
  %10609 = vmatprep.subr.mxu0 0.0
  %10610 = vmatpush1.msra.mxu0 %v8702
  %10611 = vmatprep.subr.mxu0 0.0
  %10612 = vmatpush1.msra.mxu0 0.0
  %10613 = vmatprep.subr.mxu0 0.0
  %10614 = vmatpush1.msra.mxu0 0.0
  %10615 = vmatprep.subr.mxu0 0.0
  %10616 = vmatpush1.msra.mxu0 0.0
  %10617 = vmatprep.subr.mxu0 0.0
  %10618 = vmatpush1.msra.mxu0 0.0
  %10619 = vmatprep.subr.mxu0 0.0
  %10620 = vmatpush1.msra.mxu0 0.0
  %10621 = vmatprep.subr.mxu0 0.0
  %10622 = vmatpush1.msra.mxu0 0.0
  %10623 = vmatprep.subr.mxu0 0.0
  %10624 = vmatpush1.msra.mxu0 0.0
  %10625 = vmatprep.subr.mxu0 0.0
  %10626 = vmatpush1.msra.mxu0 0.0
  %10627 = vmatprep.subr.mxu0 0.0
  %10628 = vmatpush1.msra.mxu0 0.0
  %10629 = vmatprep.subr.mxu0 0.0
  %10630 = vmatpush1.msra.mxu0 0.0
  %10631 = vmatprep.subr.mxu0 0.0
  %10632 = vmatpush1.msra.mxu0 0.0
  %10633 = vmatprep.subr.mxu0 0.0
  %10634 = vmatpush1.msra.mxu0 0.0
  %10635 = vmatprep.subr.mxu0 0.0
  %10636 = vmatpush1.msra.mxu0 0.0
  %10637 = vmatprep.subr.mxu0 0.0
  %10638 = vmatpush1.msra.mxu0 0.0
  %10639 = vmatprep.subr.mxu0 0.0
  %10640 = vmatpush1.msra.mxu0 0.0
  %10641 = vmatprep.subr.mxu0 0.0
  %10642 = vmatpush1.msra.mxu0 0.0
  %10643 = vmatprep.subr.mxu0 0.0
  %10644 = vmatpush1.msra.mxu0 0.0
  %10645 = vmatprep.subr.mxu0 0.0
  %10646 = vmatpush1.msra.mxu0 0.0
  %10647 = vmatprep.subr.mxu0 0.0
  %10648 = vmatpush1.msra.mxu0 0.0
  %10649 = vmatprep.subr.mxu0 0.0
  %10650 = vmatpush1.msra.mxu0 0.0
  %10651 = vmatprep.subr.mxu0 0.0
  %10652 = vmatpush1.msra.mxu0 0.0
  %10653 = vmatprep.subr.mxu0 0.0
  %10654 = vmatpush1.msra.mxu0 0.0
  %10655 = vmatprep.subr.mxu0 0.0
  %10656 = vmatpush1.msra.mxu0 0.0
  %10657 = vmatprep.subr.mxu0 0.0
  %10658 = vmatpush1.msra.mxu0 0.0
  %10659 = vmatprep.subr.mxu0 0.0
  %10660 = vmatpush1.msra.mxu0 0.0
  %10661 = vmatprep.subr.mxu0 0.0
  %10662 = vmatpush1.msra.mxu0 0.0
  %10663 = vmatprep.subr.mxu0 0.0
  %10664 = vmatpush1.msra.mxu0 0.0
  %10665 = vmatprep.subr.mxu0 0.0
  %10666 = vmatpush1.msra.mxu0 0.0
  %10667 = vmatprep.subr.mxu0 0.0
  %10668 = vmatpush1.msra.mxu0 0.0
  %10669 = vmatprep.subr.mxu0 0.0
  %10670 = vmatpush1.msra.mxu0 0.0
  %10671 = vmatprep.mubr.f32.mxu0 0.0
  %10672 = vmatmul.mubr.f32.gmra.mrb[0].mxu0 %v10605
  %v10673 = vpop.f32.mrb[0].mxu0
  %v10674 = vadd.f32 0.0, %v10673
  %v10675 = vpop.f32.mrb[0].mxu0
  %10676 = vdwg.mxu0
  %v10677 = vadd.f32 %v10601, %v10674
  %s10678 = scalar_lea.vmem %s8, 208
  %v10679 = vld [vmem:[%s10678] sm:$0xff]
  %v10681 = vsel %vm8707, %v10679, 0
  %10683 = vmatprep.subr.mxu0 0.0
  %10684 = vmatpush1.msra.mxu0 %v8676
  %10685 = vmatprep.subr.mxu0 0.0
  %10686 = vmatpush1.msra.mxu0 %v8703
  %10687 = vmatprep.subr.mxu0 0.0
  %10688 = vmatpush1.msra.mxu0 0.0
  %10689 = vmatprep.subr.mxu0 0.0
  %10690 = vmatpush1.msra.mxu0 0.0
  %10691 = vmatprep.subr.mxu0 0.0
  %10692 = vmatpush1.msra.mxu0 0.0
  %10693 = vmatprep.subr.mxu0 0.0
  %10694 = vmatpush1.msra.mxu0 0.0
  %10695 = vmatprep.subr.mxu0 0.0
  %10696 = vmatpush1.msra.mxu0 0.0
  %10697 = vmatprep.subr.mxu0 0.0
  %10698 = vmatpush1.msra.mxu0 0.0
  %10699 = vmatprep.subr.mxu0 0.0
  %10700 = vmatpush1.msra.mxu0 0.0
  %10701 = vmatprep.subr.mxu0 0.0
  %10702 = vmatpush1.msra.mxu0 0.0
  %10703 = vmatprep.subr.mxu0 0.0
  %10704 = vmatpush1.msra.mxu0 0.0
  %10705 = vmatprep.subr.mxu0 0.0
  %10706 = vmatpush1.msra.mxu0 0.0
  %10707 = vmatprep.subr.mxu0 0.0
  %10708 = vmatpush1.msra.mxu0 0.0
  %10709 = vmatprep.subr.mxu0 0.0
  %10710 = vmatpush1.msra.mxu0 0.0
  %10711 = vmatprep.subr.mxu0 0.0
  %10712 = vmatpush1.msra.mxu0 0.0
  %10713 = vmatprep.subr.mxu0 0.0
  %10714 = vmatpush1.msra.mxu0 0.0
  %10715 = vmatprep.subr.mxu0 0.0
  %10716 = vmatpush1.msra.mxu0 0.0
  %10717 = vmatprep.subr.mxu0 0.0
  %10718 = vmatpush1.msra.mxu0 0.0
  %10719 = vmatprep.subr.mxu0 0.0
  %10720 = vmatpush1.msra.mxu0 0.0
  %10721 = vmatprep.subr.mxu0 0.0
  %10722 = vmatpush1.msra.mxu0 0.0
  %10723 = vmatprep.subr.mxu0 0.0
  %10724 = vmatpush1.msra.mxu0 0.0
  %10725 = vmatprep.subr.mxu0 0.0
  %10726 = vmatpush1.msra.mxu0 0.0
  %10727 = vmatprep.subr.mxu0 0.0
  %10728 = vmatpush1.msra.mxu0 0.0
  %10729 = vmatprep.subr.mxu0 0.0
  %10730 = vmatpush1.msra.mxu0 0.0
  %10731 = vmatprep.subr.mxu0 0.0
  %10732 = vmatpush1.msra.mxu0 0.0
  %10733 = vmatprep.subr.mxu0 0.0
  %10734 = vmatpush1.msra.mxu0 0.0
  %10735 = vmatprep.subr.mxu0 0.0
  %10736 = vmatpush1.msra.mxu0 0.0
  %10737 = vmatprep.subr.mxu0 0.0
  %10738 = vmatpush1.msra.mxu0 0.0
  %10739 = vmatprep.subr.mxu0 0.0
  %10740 = vmatpush1.msra.mxu0 0.0
  %10741 = vmatprep.subr.mxu0 0.0
  %10742 = vmatpush1.msra.mxu0 0.0
  %10743 = vmatprep.subr.mxu0 0.0
  %10744 = vmatpush1.msra.mxu0 0.0
  %10745 = vmatprep.subr.mxu0 0.0
  %10746 = vmatpush1.msra.mxu0 0.0
  %10747 = vmatprep.mubr.f32.mxu0 0.0
  %10748 = vmatmul.mubr.f32.gmra.mrb[0].mxu0 %v10681
  %v10749 = vpop.f32.mrb[0].mxu0
  %v10750 = vadd.f32 0.0, %v10749
  %v10751 = vpop.f32.mrb[0].mxu0
  %10752 = vdwg.mxu0
  %v10753 = vadd.f32 %v10677, %v10750
  %v10754 = vld [vmem:[%s9] sm:$0xff]
  %10756 = vset.pattern.permute.xlu0 0
  %10757 = vperm.xlu0 %10756, %v10754
  %v10758 = vpop.permute.xlu0 %10757
  %v10760 = vadd.f32 %v10753, %v10758
  %10761 = vst [vmem:[%s10] sm:$0xff] %v10760
  // Predicated region
  $region42: #{encoder_blue_forward.1} parent=0 // pred_check
    _
  $region43: #{encoder_blue_forward.1} parent=0 // pred_check_branch
    %10763 = sbr.rel (0) target = $region45
  $region44: #{encoder_blue_forward.1} parent=0 // pred_region
    _
  $region45: #{encoder_blue_forward.1} parent=0 // pred_fallthru
    _
  // Predicated region
  $region46: #{encoder_blue_forward.1} parent=0 // pred_check
    _
  $region47: #{encoder_blue_forward.1} parent=0 // pred_check_branch
    %10765 = sbr.rel (0) target = $region49
  $region48: #{encoder_blue_forward.1} parent=0 // pred_region
    _
  $region49: #{encoder_blue_forward.1} parent=0 // pred_fallthru
    _

</llo_original>
